<compile_context>
chip_gen: v7x
topology: tpu7x:2x2x1
jax: 0.10.0
libtpu: 0.0.40
codegen_flags: <defaults>
</compile_context>

<pallas_src>
import math

import jax
import jax.numpy as jnp
from jax import lax
from jax.experimental import pallas as pl
from jax.experimental.pallas import tpu as pltpu

KSIZE, PAD, COUT = 5, 2, 64
LANE = 128
VMEM_LIMIT = 32 * 1024 * 1024


# ---------------- Pallas kernels ----------------

def _conv_gemm_kernel(a_ref, b_ref, bias_ref, y_ref, stats_ref):
    # conv (as GEMM) + bias + ReLU, plus per-tile BN partial statistics.
    acc = jnp.dot(a_ref[...], b_ref[...], preferred_element_type=jnp.float32)
    acc = jnp.maximum(acc + bias_ref[...], 0.0)
    y_ref[...] = acc
    s = jnp.sum(acc, axis=0, keepdims=True)          # (1, Cp)  per-channel sum
    ss = jnp.sum(acc * acc, axis=0, keepdims=True)   # (1, Cp)  per-channel sum of squares
    stats_ref[...] = jnp.concatenate([s, ss], axis=0)[None, :, :]   # (1, 2, Cp)


def _bn_apply_kernel(y_ref, scale_ref, shift_ref, o_ref):
    o_ref[...] = y_ref[...] * scale_ref[...] + shift_ref[...]


def _fc_fused_kernel(x_ref, w1_ref, b1_ref, w2_ref, b2_ref, w3_ref, b3_ref, o_ref):
    h = jnp.dot(x_ref[...], w1_ref[...], preferred_element_type=jnp.float32)
    h = jnp.maximum(h + b1_ref[...], 0.0)
    h = jnp.dot(h.astype(w2_ref.dtype), w2_ref[...], preferred_element_type=jnp.float32)
    h = jnp.maximum(h + b2_ref[...], 0.0)
    h = jnp.dot(h.astype(w3_ref.dtype), w3_ref[...], preferred_element_type=jnp.float32)
    o_ref[...] = (h + b3_ref[...]).astype(o_ref.dtype)


# ---------------- Pallas wrappers ----------------

def _pick_tm(m):
    # Prefer >=2 tiles so the parallel axis can pipeline / shard across cores.
    for tm in (512, 256, 128):
        if m % tm == 0 and m // tm >= 2:
            return tm
    for tm in (512, 256, 128, 64, 32, 16, 8):
        if m % tm == 0:
            return tm
    return m


def conv_gemm_stats(cols, wmat, bias, *, tm):
    """y = relu(cols @ wmat + bias) tiled over M; also emits per-tile BN partial sums."""
    M, Kp = cols.shape
    Kp2, Cp = wmat.shape
    assert Kp == Kp2 and M % tm == 0
    nt = M // tm
    y, stats = pl.pallas_call(
        _conv_gemm_kernel,
        out_shape=[jax.ShapeDtypeStruct((M, Cp), jnp.float32),
                   jax.ShapeDtypeStruct((nt, 2, Cp), jnp.float32)],
        grid=(nt,),
        in_specs=[pl.BlockSpec((tm, Kp), lambda i: (i, 0)),
                  pl.BlockSpec((Kp, Cp), lambda i: (0, 0)),
                  pl.BlockSpec((1, Cp), lambda i: (0, 0))],
        out_specs=[pl.BlockSpec((tm, Cp), lambda i: (i, 0)),
                   pl.BlockSpec((1, 2, Cp), lambda i: (i, 0, 0))],
        compiler_params=pltpu.CompilerParams(
            dimension_semantics=("parallel",),
            vmem_limit_bytes=VMEM_LIMIT),
    )(cols, wmat, bias)
    return y, stats


def bn_apply(y, scale, shift, *, tm):
    M, Cp = y.shape
    nt = M // tm
    return pl.pallas_call(
        _bn_apply_kernel,
        out_shape=jax.ShapeDtypeStruct((M, Cp), jnp.float32),
        grid=(nt,),
        in_specs=[pl.BlockSpec((tm, Cp), lambda i: (i, 0)),
                  pl.BlockSpec((1, Cp), lambda i: (0, 0)),
                  pl.BlockSpec((1, Cp), lambda i: (0, 0))],
        out_specs=pl.BlockSpec((tm, Cp), lambda i: (i, 0)),
        compiler_params=pltpu.CompilerParams(
            dimension_semantics=("parallel",)),
    )(y, scale, shift)


def fc_fused(x, w1, b1, w2, b2, w3, b3):
    """relu(x@w1+b1) -> relu(@w2+b2) -> @w3+b3, all weights VMEM-resident, one launch."""
    N = x.shape[0]
    n_out = w3.shape[1]
    args = (x, w1, b1, w2, b2, w3, b3)
    return pl.pallas_call(
        _fc_fused_kernel,
        out_shape=jax.ShapeDtypeStruct((N, n_out), jnp.float32),
        grid=(1,),
        in_specs=[pl.BlockSpec(a.shape, lambda i: (0, 0)) for a in args],
        out_specs=pl.BlockSpec((N, n_out), lambda i: (0, 0)),
        compiler_params=pltpu.CompilerParams(
            dimension_semantics=("arbitrary",),
            vmem_limit_bytes=VMEM_LIMIT),
    )(*args)


# ---------------- JAX glue ----------------

def im2col(x_nhwc, k, pad):
    """(N,H,W,C) -> (N*H*W, k*k*C), patch ordering (dy, dx, cin)."""
    N, H, W, C = x_nhwc.shape
    xp = jnp.pad(x_nhwc, ((0, 0), (pad, pad), (pad, pad), (0, 0)))
    cols = []
    for dy in range(k):
        for dx in range(k):
            cols.append(xp[:, dy:dy + H, dx:dx + W, :])
    cols = jnp.stack(cols, axis=3)                      # (N,H,W,k*k,C)
    return cols.reshape(N * H * W, k * k * C)


def max_pool2d_nhwc(x, k=3, stride=2, pad=1):
    # F.max_pool2d(x, 3, 2, 1): pad with -inf, window 3x3, stride 2.
    return lax.reduce_window(
        x, -jnp.inf, lax.max,
        window_dimensions=(1, k, k, 1),
        window_strides=(1, stride, stride, 1),
        padding=((0, 0), (pad, pad), (pad, pad), (0, 0)),
    )


def _bn_scale_shift(stats, gamma, beta, m_rows, eps=1e-5):
    # Combine per-tile partial sums into per-channel affine (training-mode batch
    # statistics, biased variance, matching torch BatchNorm2d forward).
    s = jnp.sum(stats[:, 0, :], axis=0)
    ss = jnp.sum(stats[:, 1, :], axis=0)
    mean = s / m_rows
    var = jnp.maximum(ss / m_rows - mean * mean, 0.0)
    inv = lax.rsqrt(var + eps)
    scale = gamma * inv
    shift = beta - mean * scale
    return scale.reshape(1, -1), shift.reshape(1, -1)


def conv_bn_pool(x_nhwc, cw, cb, cg, cbt):
    N, H, W, _ = x_nhwc.shape
    M = N * H * W
    Kp, Cp = cw.shape                                               # padded GEMM dims
    cols = im2col(x_nhwc, KSIZE, PAD)                               # (M, 25*Cin) f32
    cols = jnp.pad(cols, ((0, 0), (0, Kp - cols.shape[1]))).astype(jnp.bfloat16)
    tm = _pick_tm(M)
    y, stats = conv_gemm_stats(cols, cw, cb, tm=tm)                 # conv+bias+ReLU + BN partials
    scale, shift = _bn_scale_shift(stats, cg, cbt, M)               # tiny XLA reduce
    y = bn_apply(y, scale, shift, tm=tm)                            # (M, Cp), padded channels == 0
    y = y[:, :COUT].reshape(N, H, W, COUT)
    return max_pool2d_nhwc(y)


def forward(packed, x_nchw):
    x = jnp.transpose(x_nchw, (0, 2, 3, 1))                         # NCHW -> NHWC
    x = conv_bn_pool(x, packed["c1_w"], packed["c1_b"], packed["bn1_g"], packed["bn1_b"])
    x = conv_bn_pool(x, packed["c2_w"], packed["c2_b"], packed["bn2_g"], packed["bn2_b"])
    N = x.shape[0]
    x = jnp.transpose(x, (0, 3, 1, 2)).reshape(N, -1)               # flatten in (C,H,W) order
    return fc_fused(x.astype(jnp.bfloat16),
                    packed["fc1_w"], packed["fc1_b"],
                    packed["fc2_w"], packed["fc2_b"],
                    packed["fc3_w"], packed["fc3_b"])


# ---------------- one-time parameter packing (pre-transpose / pad / bf16) ----------------

def _round_up(x, m):
    return (x + m - 1) // m * m


def pack_params(p):
    def conv_pack(w, b, g, bt):
        cout, cin, kh, kw = w.shape
        K = kh * kw * cin
        Kp, Cp = _round_up(K, LANE), _round_up(cout, LANE)
        wmat = jnp.transpose(w, (2, 3, 1, 0)).reshape(K, cout)      # (dy,dx,cin) x cout
        wmat = jnp.pad(wmat, ((0, Kp - K), (0, Cp - cout))).astype(jnp.bfloat16)
        bias = jnp.pad(b, (0, Cp - cout)).reshape(1, Cp).astype(jnp.float32)
        gamma = jnp.pad(g, (0, Cp - cout)).astype(jnp.float32)      # padded gamma/beta = 0
        beta = jnp.pad(bt, (0, Cp - cout)).astype(jnp.float32)
        return wmat, bias, gamma, beta

    out = {}
    out["c1_w"], out["c1_b"], out["bn1_g"], out["bn1_b"] = conv_pack(
        p["conv1_w"], p["conv1_b"], p["bn1_g"], p["bn1_b"])
    out["c2_w"], out["c2_b"], out["bn2_g"], out["bn2_b"] = conv_pack(
        p["conv2_w"], p["conv2_b"], p["bn2_g"], p["bn2_b"])
    for i in (1, 2, 3):
        out[f"fc{i}_w"] = jnp.transpose(p[f"fc{i}_w"]).astype(jnp.bfloat16)   # (in, out)
        out[f"fc{i}_b"] = p[f"fc{i}_b"].reshape(1, -1).astype(jnp.float32)
    return out


# ---------------- pure-JAX f32 reference (numerical sanity) ----------------

def forward_ref(params, x_nchw):
    def mm(a, b, bias, relu):
        y = jnp.dot(a, b, precision=lax.Precision.HIGHEST) + bias.reshape(1, -1)
        return jnp.maximum(y, 0.0) if relu else y

    def bn(x2d, g, bt, eps=1e-5):
        m = jnp.mean(x2d, axis=0, keepdims=True)
        v = jnp.mean(jnp.square(x2d - m), axis=0, keepdims=True)
        return (x2d - m) * lax.rsqrt(v + eps) * g.reshape(1, -1) + bt.reshape(1, -1)

    x = jnp.transpose(x_nchw, (0, 2, 3, 1))
    for wk, bk, gk, btk in (("conv1_w", "conv1_b", "bn1_g", "bn1_b"),
                            ("conv2_w", "conv2_b", "bn2_g", "bn2_b")):
        w = params[wk]
        N, H, W, Cin = x.shape
        cout, _, kh, kw = w.shape
        cols = im2col(x, kh, 2)
        wmat = jnp.transpose(w, (2, 3, 1, 0)).reshape(kh * kw * Cin, cout)
        y = bn(mm(cols, wmat, params[bk], True), params[gk], params[btk])
        x = max_pool2d_nhwc(y.reshape(N, H, W, cout))
    N = x.shape[0]
    x = jnp.transpose(x, (0, 3, 1, 2)).reshape(N, -1)
    x = mm(x, params["fc1_w"].T, params["fc1_b"], True)
    x = mm(x, params["fc2_w"].T, params["fc2_b"], True)
    x = mm(x, params["fc3_w"].T, params["fc3_b"], False)
    return x


# ---------------- deterministic parameter init (matches module __init__) ----------------

def init_params(key):
    ks = jax.random.split(key, 5)
    p = {}
    p["conv1_w"] = 0.01 * jax.random.normal(ks[0], (64, 3, 5, 5), jnp.float32)
    p["conv1_b"] = jnp.zeros((64,), jnp.float32)
    p["conv2_w"] = 0.01 * jax.random.normal(ks[1], (64, 64, 5, 5), jnp.float32)
    p["conv2_b"] = jnp.zeros((64,), jnp.float32)
    p["bn1_g"] = jnp.ones((64,), jnp.float32)
    p["bn1_b"] = jnp.zeros((64,), jnp.float32)
    p["bn2_g"] = jnp.ones((64,), jnp.float32)
    p["bn2_b"] = jnp.zeros((64,), jnp.float32)
    p["fc1_w"] = (0.1 / math.sqrt(64 * 8 * 8)) * jax.random.normal(ks[2], (384, 64 * 8 * 8), jnp.float32)
    p["fc1_b"] = jnp.full((384,), 0.01, jnp.float32)
    p["fc2_w"] = (0.1 / math.sqrt(384)) * jax.random.normal(ks[3], (192, 384), jnp.float32)
    p["fc2_b"] = jnp.full((192,), 0.01, jnp.float32)
    p["fc3_w"] = (0.1 / math.sqrt(192)) * jax.random.normal(ks[4], (10, 192), jnp.float32)
    p["fc3_b"] = jnp.full((10,), 0.01, jnp.float32)
    return p


if __name__ == "__main__":
    key = jax.random.PRNGKey(0)
    pkey, xkey = jax.random.split(key)
    params = init_params(pkey)
    packed = pack_params(params)

    # fc1 expects 64*8*8 features -> spatial must be 32x32 (two stride-2 pools).
    x = jax.random.normal(xkey, (2, 3, 32, 32), jnp.float32)

    out = jax.block_until_ready(jax.jit(forward)(packed, x))
    assert out.shape == (2, 10) and out.dtype == jnp.float32

    ref = jax.block_until_ready(forward_ref(params, x))
    # bf16 MXU operands vs. f32 HIGHEST reference: allow a modest tolerance.
    assert jnp.allclose(out, ref, atol=2e-2, rtol=2e-2), "mismatch vs pure-JAX reference"

    print("KERNEL_OK")
</pallas_src>

<mosaic_0001>
module attributes {stable_mosaic.version = 11 : i64} {
  func.func @_conv_gemm_kernel(%arg0: i32, %arg1: memref<512x128xbf16, #tpu.memory_space<vmem>>, %arg2: memref<128x128xbf16, #tpu.memory_space<vmem>>, %arg3: memref<1x128xf32, #tpu.memory_space<vmem>>, %arg4: memref<512x128xf32, #tpu.memory_space<vmem>>, %arg5: memref<1x2x128xf32, #tpu.memory_space<vmem>>) attributes {dimension_semantics = [#tpu.dimension_semantics<parallel>], iteration_bounds = array<i64: 4>, scalar_prefetch = 0 : i64, scratch_operands = 0 : i64, tpu.core_type = #tpu.core_type<tc>, window_params = [{transform_indices = @transform_0, window_bounds = array<i64: 512, 128>}, {pipeline_mode = #tpu.pipeline_mode<synchronous>, transform_indices = @transform_1, window_bounds = array<i64: 128, 128>}, {pipeline_mode = #tpu.pipeline_mode<synchronous>, transform_indices = @transform_2, window_bounds = array<i64: 1, 128>}, {transform_indices = @transform_3, window_bounds = array<i64: 512, 128>}, {transform_indices = @transform_4, window_bounds = array<i64: 1, 2, 128>}]} {
    %c0 = arith.constant 0 : index
    %c0_0 = arith.constant 0 : index
    %0 = vector.load %arg1[%c0, %c0_0] : memref<512x128xbf16, #tpu.memory_space<vmem>>, vector<512x128xbf16>
    %c0_1 = arith.constant 0 : index
    %c0_2 = arith.constant 0 : index
    %1 = vector.load %arg2[%c0_1, %c0_2] : memref<128x128xbf16, #tpu.memory_space<vmem>>, vector<128x128xbf16>
    %cst = arith.constant dense<0.000000e+00> : vector<512x128xf32>
    %2 = tpu.matmul %0, %1, %cst {dimension_numbers = #tpu.dot_dimension_numbers<[1], [0], [0], [1], [0, 0, 1, 1], [], []>} : vector<512x128xbf16>, vector<128x128xbf16>, vector<512x128xf32> -> vector<512x128xf32>
    %c0_3 = arith.constant 0 : index
    %c0_4 = arith.constant 0 : index
    %3 = vector.load %arg3[%c0_3, %c0_4] : memref<1x128xf32, #tpu.memory_space<vmem>>, vector<1x128xf32>
    %4 = vector.broadcast %3 : vector<1x128xf32> to vector<512x128xf32>
    %5 = arith.addf %2, %4 : vector<512x128xf32>
    %cst_5 = arith.constant 0.000000e+00 : f32
    %6 = vector.broadcast %cst_5 : f32 to vector<512x128xf32>
    %7 = arith.maximumf %5, %6 : vector<512x128xf32>
    %c0_6 = arith.constant 0 : index
    %c0_7 = arith.constant 0 : index
    %8 = vector.load %arg4[%c0_6, %c0_7] : memref<512x128xf32, #tpu.memory_space<vmem>>, vector<512x128xf32>
    tpu.vector_store %arg4[%c0_6, %c0_7], %7 {strides = array<i32>} : memref<512x128xf32, #tpu.memory_space<vmem>>, vector<512x128xf32>,
    %cst_8 = arith.constant dense<0.000000e+00> : vector<128xf32>
    %9 = vector.multi_reduction <add>, %7, %cst_8 [0] : vector<512x128xf32> to vector<128xf32>
    %10 = vector.shape_cast %9 : vector<128xf32> to vector<1x128xf32>
    %11 = arith.mulf %7, %7 : vector<512x128xf32>
    %cst_9 = arith.constant dense<0.000000e+00> : vector<128xf32>
    %12 = vector.multi_reduction <add>, %11, %cst_9 [0] : vector<512x128xf32> to vector<128xf32>
    %13 = vector.shape_cast %12 : vector<128xf32> to vector<1x128xf32>
    %14 = tpu.concatenate %10, %13 in 0 : vector<1x128xf32>, vector<1x128xf32> -> vector<2x128xf32>
    %15 = vector.shape_cast %14 : vector<2x128xf32> to vector<1x2x128xf32>
    %c0_10 = arith.constant 0 : index
    %c0_11 = arith.constant 0 : index
    %c0_12 = arith.constant 0 : index
    %16 = vector.load %arg5[%c0_10, %c0_11, %c0_12] : memref<1x2x128xf32, #tpu.memory_space<vmem>>, vector<1x2x128xf32>
    tpu.vector_store %arg5[%c0_10, %c0_11, %c0_12], %15 {strides = array<i32>} : memref<1x2x128xf32, #tpu.memory_space<vmem>>, vector<1x2x128xf32>,
    return
  }
  func.func @transform_0(%arg0: i32) -> (i32, i32) {
    %c0_i32 = arith.constant 0 : i32
    %c0_i32_0 = arith.constant 0 : i32
    return %arg0, %c0_i32 : i32, i32
  }
  func.func @transform_1(%arg0: i32) -> (i32, i32) {
    %c0_i32 = arith.constant 0 : i32
    %c0_i32_0 = arith.constant 0 : i32
    %c0_i32_1 = arith.constant 0 : i32
    return %c0_i32, %c0_i32_0 : i32, i32
  }
  func.func @transform_2(%arg0: i32) -> (i32, i32) {
    %c0_i32 = arith.constant 0 : i32
    %c0_i32_0 = arith.constant 0 : i32
    %c0_i32_1 = arith.constant 0 : i32
    return %c0_i32, %c0_i32_0 : i32, i32
  }
  func.func @transform_3(%arg0: i32) -> (i32, i32) {
    %c0_i32 = arith.constant 0 : i32
    %c0_i32_0 = arith.constant 0 : i32
    return %arg0, %c0_i32 : i32, i32
  }
  func.func @transform_4(%arg0: i32) -> (i32, i32, i32) {
    %c0_i32 = arith.constant 0 : i32
    %c0_i32_0 = arith.constant 0 : i32
    %c0_i32_1 = arith.constant 0 : i32
    return %arg0, %c0_i32, %c0_i32_0 : i32, i32, i32
  }
}

module attributes {stable_mosaic.version = 11 : i64} {
  func.func @_bn_apply_kernel(%arg0: i32, %arg1: memref<512x128xf32, #tpu.memory_space<vmem>>, %arg2: memref<1x128xf32, #tpu.memory_space<vmem>>, %arg3: memref<1x128xf32, #tpu.memory_space<vmem>>, %arg4: memref<512x128xf32, #tpu.memory_space<vmem>>) attributes {dimension_semantics = [#tpu.dimension_semantics<parallel>], iteration_bounds = array<i64: 4>, scalar_prefetch = 0 : i64, scratch_operands = 0 : i64, tpu.core_type = #tpu.core_type<tc>, window_params = [{transform_indices = @transform_0, window_bounds = array<i64: 512, 128>}, {pipeline_mode = #tpu.pipeline_mode<synchronous>, transform_indices = @transform_1, window_bounds = array<i64: 1, 128>}, {pipeline_mode = #tpu.pipeline_mode<synchronous>, transform_indices = @transform_2, window_bounds = array<i64: 1, 128>}, {transform_indices = @transform_3, window_bounds = array<i64: 512, 128>}]} {
    %c0 = arith.constant 0 : index
    %c0_0 = arith.constant 0 : index
    %0 = vector.load %arg1[%c0, %c0_0] : memref<512x128xf32, #tpu.memory_space<vmem>>, vector<512x128xf32>
    %c0_1 = arith.constant 0 : index
    %c0_2 = arith.constant 0 : index
    %1 = vector.load %arg2[%c0_1, %c0_2] : memref<1x128xf32, #tpu.memory_space<vmem>>, vector<1x128xf32>
    %2 = vector.broadcast %1 : vector<1x128xf32> to vector<512x128xf32>
    %3 = arith.mulf %0, %2 : vector<512x128xf32>
    %c0_3 = arith.constant 0 : index
    %c0_4 = arith.constant 0 : index
    %4 = vector.load %arg3[%c0_3, %c0_4] : memref<1x128xf32, #tpu.memory_space<vmem>>, vector<1x128xf32>
    %5 = vector.broadcast %4 : vector<1x128xf32> to vector<512x128xf32>
    %6 = arith.addf %3, %5 : vector<512x128xf32>
    %c0_5 = arith.constant 0 : index
    %c0_6 = arith.constant 0 : index
    %7 = vector.load %arg4[%c0_5, %c0_6] : memref<512x128xf32, #tpu.memory_space<vmem>>, vector<512x128xf32>
    tpu.vector_store %arg4[%c0_5, %c0_6], %6 {strides = array<i32>} : memref<512x128xf32, #tpu.memory_space<vmem>>, vector<512x128xf32>,
    return
  }
  func.func @transform_0(%arg0: i32) -> (i32, i32) {
    %c0_i32 = arith.constant 0 : i32
    %c0_i32_0 = arith.constant 0 : i32
    return %arg0, %c0_i32 : i32, i32
  }
  func.func @transform_1(%arg0: i32) -> (i32, i32) {
    %c0_i32 = arith.constant 0 : i32
    %c0_i32_0 = arith.constant 0 : i32
    %c0_i32_1 = arith.constant 0 : i32
    return %c0_i32, %c0_i32_0 : i32, i32
  }
  func.func @transform_2(%arg0: i32) -> (i32, i32) {
    %c0_i32 = arith.constant 0 : i32
    %c0_i32_0 = arith.constant 0 : i32
    %c0_i32_1 = arith.constant 0 : i32
    return %c0_i32, %c0_i32_0 : i32, i32
  }
  func.func @transform_3(%arg0: i32) -> (i32, i32) {
    %c0_i32 = arith.constant 0 : i32
    %c0_i32_0 = arith.constant 0 : i32
    return %arg0, %c0_i32 : i32, i32
  }
}

module attributes {stable_mosaic.version = 11 : i64} {
  func.func @_conv_gemm_kernel(%arg0: i32, %arg1: memref<256x1664xbf16, #tpu.memory_space<vmem>>, %arg2: memref<1664x128xbf16, #tpu.memory_space<vmem>>, %arg3: memref<1x128xf32, #tpu.memory_space<vmem>>, %arg4: memref<256x128xf32, #tpu.memory_space<vmem>>, %arg5: memref<1x2x128xf32, #tpu.memory_space<vmem>>) attributes {dimension_semantics = [#tpu.dimension_semantics<parallel>], iteration_bounds = array<i64: 2>, scalar_prefetch = 0 : i64, scratch_operands = 0 : i64, tpu.core_type = #tpu.core_type<tc>, window_params = [{transform_indices = @transform_0, window_bounds = array<i64: 256, 1664>}, {pipeline_mode = #tpu.pipeline_mode<synchronous>, transform_indices = @transform_1, window_bounds = array<i64: 1664, 128>}, {pipeline_mode = #tpu.pipeline_mode<synchronous>, transform_indices = @transform_2, window_bounds = array<i64: 1, 128>}, {transform_indices = @transform_3, window_bounds = array<i64: 256, 128>}, {transform_indices = @transform_4, window_bounds = array<i64: 1, 2, 128>}]} {
    %c0 = arith.constant 0 : index
    %c0_0 = arith.constant 0 : index
    %0 = vector.load %arg1[%c0, %c0_0] : memref<256x1664xbf16, #tpu.memory_space<vmem>>, vector<256x1664xbf16>
    %c0_1 = arith.constant 0 : index
    %c0_2 = arith.constant 0 : index
    %1 = vector.load %arg2[%c0_1, %c0_2] : memref<1664x128xbf16, #tpu.memory_space<vmem>>, vector<1664x128xbf16>
    %cst = arith.constant dense<0.000000e+00> : vector<256x128xf32>
    %2 = tpu.matmul %0, %1, %cst {dimension_numbers = #tpu.dot_dimension_numbers<[1], [0], [0], [1], [0, 0, 1, 1], [], []>} : vector<256x1664xbf16>, vector<1664x128xbf16>, vector<256x128xf32> -> vector<256x128xf32>
    %c0_3 = arith.constant 0 : index
    %c0_4 = arith.constant 0 : index
    %3 = vector.load %arg3[%c0_3, %c0_4] : memref<1x128xf32, #tpu.memory_space<vmem>>, vector<1x128xf32>
    %4 = vector.broadcast %3 : vector<1x128xf32> to vector<256x128xf32>
    %5 = arith.addf %2, %4 : vector<256x128xf32>
    %cst_5 = arith.constant 0.000000e+00 : f32
    %6 = vector.broadcast %cst_5 : f32 to vector<256x128xf32>
    %7 = arith.maximumf %5, %6 : vector<256x128xf32>
    %c0_6 = arith.constant 0 : index
    %c0_7 = arith.constant 0 : index
    %8 = vector.load %arg4[%c0_6, %c0_7] : memref<256x128xf32, #tpu.memory_space<vmem>>, vector<256x128xf32>
    tpu.vector_store %arg4[%c0_6, %c0_7], %7 {strides = array<i32>} : memref<256x128xf32, #tpu.memory_space<vmem>>, vector<256x128xf32>,
    %cst_8 = arith.constant dense<0.000000e+00> : vector<128xf32>
    %9 = vector.multi_reduction <add>, %7, %cst_8 [0] : vector<256x128xf32> to vector<128xf32>
    %10 = vector.shape_cast %9 : vector<128xf32> to vector<1x128xf32>
    %11 = arith.mulf %7, %7 : vector<256x128xf32>
    %cst_9 = arith.constant dense<0.000000e+00> : vector<128xf32>
    %12 = vector.multi_reduction <add>, %11, %cst_9 [0] : vector<256x128xf32> to vector<128xf32>
    %13 = vector.shape_cast %12 : vector<128xf32> to vector<1x128xf32>
    %14 = tpu.concatenate %10, %13 in 0 : vector<1x128xf32>, vector<1x128xf32> -> vector<2x128xf32>
    %15 = vector.shape_cast %14 : vector<2x128xf32> to vector<1x2x128xf32>
    %c0_10 = arith.constant 0 : index
    %c0_11 = arith.constant 0 : index
    %c0_12 = arith.constant 0 : index
    %16 = vector.load %arg5[%c0_10, %c0_11, %c0_12] : memref<1x2x128xf32, #tpu.memory_space<vmem>>, vector<1x2x128xf32>
    tpu.vector_store %arg5[%c0_10, %c0_11, %c0_12], %15 {strides = array<i32>} : memref<1x2x128xf32, #tpu.memory_space<vmem>>, vector<1x2x128xf32>,
    return
  }
  func.func @transform_0(%arg0: i32) -> (i32, i32) {
    %c0_i32 = arith.constant 0 : i32
    %c0_i32_0 = arith.constant 0 : i32
    return %arg0, %c0_i32 : i32, i32
  }
  func.func @transform_1(%arg0: i32) -> (i32, i32) {
    %c0_i32 = arith.constant 0 : i32
    %c0_i32_0 = arith.constant 0 : i32
    %c0_i32_1 = arith.constant 0 : i32
    return %c0_i32, %c0_i32_0 : i32, i32
  }
  func.func @transform_2(%arg0: i32) -> (i32, i32) {
    %c0_i32 = arith.constant 0 : i32
    %c0_i32_0 = arith.constant 0 : i32
    %c0_i32_1 = arith.constant 0 : i32
    return %c0_i32, %c0_i32_0 : i32, i32
  }
  func.func @transform_3(%arg0: i32) -> (i32, i32) {
    %c0_i32 = arith.constant 0 : i32
    %c0_i32_0 = arith.constant 0 : i32
    return %arg0, %c0_i32 : i32, i32
  }
  func.func @transform_4(%arg0: i32) -> (i32, i32, i32) {
    %c0_i32 = arith.constant 0 : i32
    %c0_i32_0 = arith.constant 0 : i32
    %c0_i32_1 = arith.constant 0 : i32
    return %arg0, %c0_i32, %c0_i32_0 : i32, i32, i32
  }
}

module attributes {stable_mosaic.version = 11 : i64} {
  func.func @_bn_apply_kernel(%arg0: i32, %arg1: memref<256x128xf32, #tpu.memory_space<vmem>>, %arg2: memref<1x128xf32, #tpu.memory_space<vmem>>, %arg3: memref<1x128xf32, #tpu.memory_space<vmem>>, %arg4: memref<256x128xf32, #tpu.memory_space<vmem>>) attributes {dimension_semantics = [#tpu.dimension_semantics<parallel>], iteration_bounds = array<i64: 2>, scalar_prefetch = 0 : i64, scratch_operands = 0 : i64, tpu.core_type = #tpu.core_type<tc>, window_params = [{transform_indices = @transform_0, window_bounds = array<i64: 256, 128>}, {pipeline_mode = #tpu.pipeline_mode<synchronous>, transform_indices = @transform_1, window_bounds = array<i64: 1, 128>}, {pipeline_mode = #tpu.pipeline_mode<synchronous>, transform_indices = @transform_2, window_bounds = array<i64: 1, 128>}, {transform_indices = @transform_3, window_bounds = array<i64: 256, 128>}]} {
    %c0 = arith.constant 0 : index
    %c0_0 = arith.constant 0 : index
    %0 = vector.load %arg1[%c0, %c0_0] : memref<256x128xf32, #tpu.memory_space<vmem>>, vector<256x128xf32>
    %c0_1 = arith.constant 0 : index
    %c0_2 = arith.constant 0 : index
    %1 = vector.load %arg2[%c0_1, %c0_2] : memref<1x128xf32, #tpu.memory_space<vmem>>, vector<1x128xf32>
    %2 = vector.broadcast %1 : vector<1x128xf32> to vector<256x128xf32>
    %3 = arith.mulf %0, %2 : vector<256x128xf32>
    %c0_3 = arith.constant 0 : index
    %c0_4 = arith.constant 0 : index
    %4 = vector.load %arg3[%c0_3, %c0_4] : memref<1x128xf32, #tpu.memory_space<vmem>>, vector<1x128xf32>
    %5 = vector.broadcast %4 : vector<1x128xf32> to vector<256x128xf32>
    %6 = arith.addf %3, %5 : vector<256x128xf32>
    %c0_5 = arith.constant 0 : index
    %c0_6 = arith.constant 0 : index
    %7 = vector.load %arg4[%c0_5, %c0_6] : memref<256x128xf32, #tpu.memory_space<vmem>>, vector<256x128xf32>
    tpu.vector_store %arg4[%c0_5, %c0_6], %6 {strides = array<i32>} : memref<256x128xf32, #tpu.memory_space<vmem>>, vector<256x128xf32>,
    return
  }
  func.func @transform_0(%arg0: i32) -> (i32, i32) {
    %c0_i32 = arith.constant 0 : i32
    %c0_i32_0 = arith.constant 0 : i32
    return %arg0, %c0_i32 : i32, i32
  }
  func.func @transform_1(%arg0: i32) -> (i32, i32) {
    %c0_i32 = arith.constant 0 : i32
    %c0_i32_0 = arith.constant 0 : i32
    %c0_i32_1 = arith.constant 0 : i32
    return %c0_i32, %c0_i32_0 : i32, i32
  }
  func.func @transform_2(%arg0: i32) -> (i32, i32) {
    %c0_i32 = arith.constant 0 : i32
    %c0_i32_0 = arith.constant 0 : i32
    %c0_i32_1 = arith.constant 0 : i32
    return %c0_i32, %c0_i32_0 : i32, i32
  }
  func.func @transform_3(%arg0: i32) -> (i32, i32) {
    %c0_i32 = arith.constant 0 : i32
    %c0_i32_0 = arith.constant 0 : i32
    return %arg0, %c0_i32 : i32, i32
  }
}

module attributes {stable_mosaic.version = 11 : i64} {
  func.func @_fc_fused_kernel(%arg0: i32, %arg1: memref<2x4096xbf16, #tpu.memory_space<vmem>>, %arg2: memref<4096x384xbf16, #tpu.memory_space<vmem>>, %arg3: memref<1x384xf32, #tpu.memory_space<vmem>>, %arg4: memref<384x192xbf16, #tpu.memory_space<vmem>>, %arg5: memref<1x192xf32, #tpu.memory_space<vmem>>, %arg6: memref<192x10xbf16, #tpu.memory_space<vmem>>, %arg7: memref<1x10xf32, #tpu.memory_space<vmem>>, %arg8: memref<2x10xf32, #tpu.memory_space<vmem>>) attributes {dimension_semantics = [#tpu.dimension_semantics<arbitrary>], iteration_bounds = array<i64: 1>, scalar_prefetch = 0 : i64, scratch_operands = 0 : i64, tpu.core_type = #tpu.core_type<tc>, window_params = [{pipeline_mode = #tpu.pipeline_mode<synchronous>, transform_indices = @transform_0, window_bounds = array<i64: 2, 4096>}, {pipeline_mode = #tpu.pipeline_mode<synchronous>, transform_indices = @transform_1, window_bounds = array<i64: 4096, 384>}, {pipeline_mode = #tpu.pipeline_mode<synchronous>, transform_indices = @transform_2, window_bounds = array<i64: 1, 384>}, {pipeline_mode = #tpu.pipeline_mode<synchronous>, transform_indices = @transform_3, window_bounds = array<i64: 384, 192>}, {pipeline_mode = #tpu.pipeline_mode<synchronous>, transform_indices = @transform_4, window_bounds = array<i64: 1, 192>}, {pipeline_mode = #tpu.pipeline_mode<synchronous>, transform_indices = @transform_5, window_bounds = array<i64: 192, 10>}, {pipeline_mode = #tpu.pipeline_mode<synchronous>, transform_indices = @transform_6, window_bounds = array<i64: 1, 10>}, {pipeline_mode = #tpu.pipeline_mode<synchronous>, transform_indices = @transform_7, window_bounds = array<i64: 2, 10>}]} {
    %c0 = arith.constant 0 : index
    %c0_0 = arith.constant 0 : index
    %0 = vector.load %arg1[%c0, %c0_0] : memref<2x4096xbf16, #tpu.memory_space<vmem>>, vector<2x4096xbf16>
    %c0_1 = arith.constant 0 : index
    %c0_2 = arith.constant 0 : index
    %1 = vector.load %arg2[%c0_1, %c0_2] : memref<4096x384xbf16, #tpu.memory_space<vmem>>, vector<4096x384xbf16>
    %cst = arith.constant dense<0.000000e+00> : vector<2x384xf32>
    %2 = tpu.matmul %0, %1, %cst {dimension_numbers = #tpu.dot_dimension_numbers<[1], [0], [0], [1], [0, 0, 1, 1], [], []>} : vector<2x4096xbf16>, vector<4096x384xbf16>, vector<2x384xf32> -> vector<2x384xf32>
    %c0_3 = arith.constant 0 : index
    %c0_4 = arith.constant 0 : index
    %3 = vector.load %arg3[%c0_3, %c0_4] : memref<1x384xf32, #tpu.memory_space<vmem>>, vector<1x384xf32>
    %4 = vector.broadcast %3 : vector<1x384xf32> to vector<2x384xf32>
    %5 = arith.addf %2, %4 : vector<2x384xf32>
    %cst_5 = arith.constant 0.000000e+00 : f32
    %6 = vector.broadcast %cst_5 : f32 to vector<2x384xf32>
    %7 = arith.maximumf %5, %6 : vector<2x384xf32>
    %8 = arith.truncf %7 : vector<2x384xf32> to vector<2x384xbf16>
    %c0_6 = arith.constant 0 : index
    %c0_7 = arith.constant 0 : index
    %9 = vector.load %arg4[%c0_6, %c0_7] : memref<384x192xbf16, #tpu.memory_space<vmem>>, vector<384x192xbf16>
    %cst_8 = arith.constant dense<0.000000e+00> : vector<2x192xf32>
    %10 = tpu.matmul %8, %9, %cst_8 {dimension_numbers = #tpu.dot_dimension_numbers<[1], [0], [0], [1], [0, 0, 1, 1], [], []>} : vector<2x384xbf16>, vector<384x192xbf16>, vector<2x192xf32> -> vector<2x192xf32>
    %c0_9 = arith.constant 0 : index
    %c0_10 = arith.constant 0 : index
    %11 = vector.load %arg5[%c0_9, %c0_10] : memref<1x192xf32, #tpu.memory_space<vmem>>, vector<1x192xf32>
    %12 = vector.broadcast %11 : vector<1x192xf32> to vector<2x192xf32>
    %13 = arith.addf %10, %12 : vector<2x192xf32>
    %cst_11 = arith.constant 0.000000e+00 : f32
    %14 = vector.broadcast %cst_11 : f32 to vector<2x192xf32>
    %15 = arith.maximumf %13, %14 : vector<2x192xf32>
    %16 = arith.truncf %15 : vector<2x192xf32> to vector<2x192xbf16>
    %c0_12 = arith.constant 0 : index
    %c0_13 = arith.constant 0 : index
    %17 = vector.load %arg6[%c0_12, %c0_13] : memref<192x10xbf16, #tpu.memory_space<vmem>>, vector<192x10xbf16>
    %cst_14 = arith.constant dense<0.000000e+00> : vector<2x10xf32>
    %18 = tpu.matmul %16, %17, %cst_14 {dimension_numbers = #tpu.dot_dimension_numbers<[1], [0], [0], [1], [0, 0, 1, 1], [], []>} : vector<2x192xbf16>, vector<192x10xbf16>, vector<2x10xf32> -> vector<2x10xf32>
    %c0_15 = arith.constant 0 : index
    %c0_16 = arith.constant 0 : index
    %19 = vector.load %arg7[%c0_15, %c0_16] : memref<1x10xf32, #tpu.memory_space<vmem>>, vector<1x10xf32>
    %20 = vector.broadcast %19 : vector<1x10xf32> to vector<2x10xf32>
    %21 = arith.addf %18, %20 : vector<2x10xf32>
    %c0_17 = arith.constant 0 : index
    %c0_18 = arith.constant 0 : index
    %22 = vector.load %arg8[%c0_17, %c0_18] : memref<2x10xf32, #tpu.memory_space<vmem>>, vector<2x10xf32>
    tpu.vector_store %arg8[%c0_17, %c0_18], %21 {strides = array<i32>} : memref<2x10xf32, #tpu.memory_space<vmem>>, vector<2x10xf32>,
    return
  }
  func.func @transform_0(%arg0: i32) -> (i32, i32) {
    %c0_i32 = arith.constant 0 : i32
    %c0_i32_0 = arith.constant 0 : i32
    %c0_i32_1 = arith.constant 0 : i32
    return %c0_i32, %c0_i32_0 : i32, i32
  }
  func.func @transform_1(%arg0: i32) -> (i32, i32) {
    %c0_i32 = arith.constant 0 : i32
    %c0_i32_0 = arith.constant 0 : i32
    %c0_i32_1 = arith.constant 0 : i32
    return %c0_i32, %c0_i32_0 : i32, i32
  }
  func.func @transform_2(%arg0: i32) -> (i32, i32) {
    %c0_i32 = arith.constant 0 : i32
    %c0_i32_0 = arith.constant 0 : i32
    %c0_i32_1 = arith.constant 0 : i32
    return %c0_i32, %c0_i32_0 : i32, i32
  }
  func.func @transform_3(%arg0: i32) -> (i32, i32) {
    %c0_i32 = arith.constant 0 : i32
    %c0_i32_0 = arith.constant 0 : i32
    %c0_i32_1 = arith.constant 0 : i32
    return %c0_i32, %c0_i32_0 : i32, i32
  }
  func.func @transform_4(%arg0: i32) -> (i32, i32) {
    %c0_i32 = arith.constant 0 : i32
    %c0_i32_0 = arith.constant 0 : i32
    %c0_i32_1 = arith.constant 0 : i32
    return %c0_i32, %c0_i32_0 : i32, i32
  }
  func.func @transform_5(%arg0: i32) -> (i32, i32) {
    %c0_i32 = arith.constant 0 : i32
    %c0_i32_0 = arith.constant 0 : i32
    %c0_i32_1 = arith.constant 0 : i32
    return %c0_i32, %c0_i32_0 : i32, i32
  }
  func.func @transform_6(%arg0: i32) -> (i32, i32) {
    %c0_i32 = arith.constant 0 : i32
    %c0_i32_0 = arith.constant 0 : i32
    %c0_i32_1 = arith.constant 0 : i32
    return %c0_i32, %c0_i32_0 : i32, i32
  }
  func.func @transform_7(%arg0: i32) -> (i32, i32) {
    %c0_i32 = arith.constant 0 : i32
    %c0_i32_0 = arith.constant 0 : i32
    %c0_i32_1 = arith.constant 0 : i32
    return %c0_i32, %c0_i32_0 : i32, i32
  }
}

</mosaic_0001>

<llo_original>
// kernel: forward.6
$region0: #{forward.6}
  #allocation0 [shape = 'u32[]', space=smem, size = 0x4, offset = 0x4, fixed_abs, tag = 'smem constant byte address 0x4 - core index']
  #allocation1 [shape = 'u32[144,128]{1,0:T(1,128)}', space=vmem, size = 0x12000, scoped, tag = 'internal scratch']
  %s0 = inlined_call_operand.vmem [shape: f32[2048,128], index: 0, kind: input, shape index: {}]
  %s1 = inlined_call_operand.vmem [shape: f32[1,128], index: 1, kind: input, shape index: {}]
  %s2 = inlined_call_operand.vmem [shape: f32[1,128], index: 2, kind: input, shape index: {}]
  %s3 = inlined_call_operand.vmem [shape: f32[2048,128], index: 3, kind: output, shape index: {}]
  %s4 = sld [smem:[#allocation0]]
  $region45: #{forward.6} parent=0
    _
  %s6 = ssub.s32 1, %s4
  %s7 = scalar_select 0, %s6, %s4
  loop: start=0, step=1, limit=6
  $region2: #{forward.6} parent=0 // loop_pre_header
    _
  $region3: #{forward.6} parent=0 // loop_header
    %s9 = sphi 0, %s13
    %p10 = scmp.ge.s32.totalorder %s9, 6
    %s19 = sphi 0, %s21
    %s22 = sphi 0, %s19
    %s23 = sphi 0, %s22
    %s39 = sphi 0, %s23
    %s43 = sphi 0, %s43
    %s45 = sphi 0, %s43
    %s46 = sphi 0, %s45
    %s60 = sphi 0, %s46
    %s64 = sphi 0, %s64
    %s66 = sphi 0, %s64
    %s67 = sphi 0, %s66
    %s81 = sphi 0, %s67
    %s87 = sphi 0, %s89
    %s90 = sphi 0, %s87
    %s91 = sphi 0, %s90
    %s107 = sphi 0, %s91
  $region4: #{forward.6} parent=0 // loop_header_branch
    %12 = sbr.rel (%p10) target = $region8
  $region5: #{forward.6} parent=0 // loop_body
    %s14 = ssub.s32 %s9, 1
    %s15 = ssub.s32 %s9, 2
    %s16 = sadd.s32 %s9, 1
    %s17 = ssub.s32 %s9, %s16
    %p18 = scmp.eq.s32.totalorder %s17, 0
    %s20 = sadd.s32 %s19, 1
    %s21 = scalar_select %p18, %s19, %s20
    %p24 = pneg %p18
    %p25 = scmp.eq.s32.totalorder %s9, 3
    %p26 = por %p24, %p25
    %p27 = scmp.ne.s32.totalorder %s19, %s22
    %p28 = scmp.eq.s32.totalorder %s9, 0
    %p29 = por %p27, %p28
    %p30 = scmp.ne.s32.totalorder %s19, %s22
    %p31 = scmp.eq.s32.totalorder %s14, 3
    %p32 = por %p30, %p31
    %p33 = scmp.ne.s32.totalorder %s22, %s23
    %p34 = scmp.eq.s32.totalorder %s14, 0
    %p35 = por %p33, %p34
    %p36 = scmp.ne.s32.totalorder %s22, %s23
    %p37 = scmp.eq.s32.totalorder %s15, 3
    %p38 = por %p36, %p37
    %p40 = scmp.ne.s32.totalorder %s23, %s39
    %p41 = scmp.eq.s32.totalorder %s15, 0
    %p42 = por %p40, %p41
    %s44 = sadd.s32 %s43, 1
    %p47 = scmp.eq.s32.totalorder %s9, 3
    %p48 = scmp.ne.s32.totalorder %s43, %s45
    %p49 = scmp.eq.s32.totalorder %s9, 0
    %p50 = por %p48, %p49
    %p51 = scmp.ne.s32.totalorder %s43, %s45
    %p52 = scmp.eq.s32.totalorder %s14, 3
    %p53 = por %p51, %p52
    %p54 = scmp.ne.s32.totalorder %s45, %s46
    %p55 = scmp.eq.s32.totalorder %s14, 0
    %p56 = por %p54, %p55
    %p57 = scmp.ne.s32.totalorder %s45, %s46
    %p58 = scmp.eq.s32.totalorder %s15, 3
    %p59 = por %p57, %p58
    %p61 = scmp.ne.s32.totalorder %s46, %s60
    %p62 = scmp.eq.s32.totalorder %s15, 0
    %p63 = por %p61, %p62
    %s65 = sadd.s32 %s64, 1
    %p68 = scmp.eq.s32.totalorder %s9, 3
    %p69 = scmp.ne.s32.totalorder %s64, %s66
    %p70 = scmp.eq.s32.totalorder %s9, 0
    %p71 = por %p69, %p70
    %p72 = scmp.ne.s32.totalorder %s64, %s66
    %p73 = scmp.eq.s32.totalorder %s14, 3
    %p74 = por %p72, %p73
    %p75 = scmp.ne.s32.totalorder %s66, %s67
    %p76 = scmp.eq.s32.totalorder %s14, 0
    %p77 = por %p75, %p76
    %p78 = scmp.ne.s32.totalorder %s66, %s67
    %p79 = scmp.eq.s32.totalorder %s15, 3
    %p80 = por %p78, %p79
    %p82 = scmp.ne.s32.totalorder %s67, %s81
    %p83 = scmp.eq.s32.totalorder %s15, 0
    %p84 = por %p82, %p83
    %s85 = ssub.s32 %s9, %s16
    %p86 = scmp.eq.s32.totalorder %s85, 0
    %s88 = sadd.s32 %s87, 1
    %s89 = scalar_select %p86, %s87, %s88
    %p92 = pneg %p86
    %p93 = scmp.eq.s32.totalorder %s9, 3
    %p94 = por %p92, %p93
    %p95 = scmp.ne.s32.totalorder %s87, %s90
    %p96 = scmp.eq.s32.totalorder %s9, 0
    %p97 = por %p95, %p96
    %p98 = scmp.ne.s32.totalorder %s87, %s90
    %p99 = scmp.eq.s32.totalorder %s14, 3
    %p100 = por %p98, %p99
    %p101 = scmp.ne.s32.totalorder %s90, %s91
    %p102 = scmp.eq.s32.totalorder %s14, 0
    %p103 = por %p101, %p102
    %p104 = scmp.ne.s32.totalorder %s90, %s91
    %p105 = scmp.eq.s32.totalorder %s15, 3
    %p106 = por %p104, %p105
    %p108 = scmp.ne.s32.totalorder %s91, %s107
    %p109 = scmp.eq.s32.totalorder %s15, 0
    %p110 = por %p108, %p109
    %p111 = scmp.le.s32.totalorder 1, %s9
    %p112 = scmp.lt.s32.totalorder %s9, 5
    %p113 = pnand %p111, %p112
    %p114 = pneg %p113
    // Predicated region
    $region9: #{forward.6} parent=5 // pred_check
      _
    $region10: #{forward.6} parent=5 // pred_check_branch
      %116 = sbr.rel (%p113) target = $region12
    $region11: #{forward.6} parent=5 // pred_region
      %s117 = ssub.s32 %s9, 1
      // Predicated region
      $region13: #{forward.6} parent=11 // pred_check
        %p118 = pneg %p56
      $region14: #{forward.6} parent=11 // pred_check_branch
        %120 = sbr.rel (%p118) target = $region16
      $region15: #{forward.6} parent=11 // pred_region
        _
      $region16: #{forward.6} parent=11 // pred_fallthru
        _
      // Predicated region
      $region17: #{forward.6} parent=11 // pred_check
        %p121 = pneg %p77
      $region18: #{forward.6} parent=11 // pred_check_branch
        %123 = sbr.rel (%p121) target = $region20
      $region19: #{forward.6} parent=11 // pred_region
        _
      $region20: #{forward.6} parent=11 // pred_fallthru
        _
    $region12: #{forward.6} parent=5 // pred_fallthru
      _
    %p124 = scmp.lt.s32.totalorder %s9, 4
    // Predicated region
    $region21: #{forward.6} parent=5 // pred_check
      %p125 = pneg %p124
    $region22: #{forward.6} parent=5 // pred_check_branch
      %127 = sbr.rel (%p125) target = $region24
    $region23: #{forward.6} parent=5 // pred_region
      // Predicated region
      $region25: #{forward.6} parent=23 // pred_check
        %p128 = pneg %p29
      $region26: #{forward.6} parent=23 // pred_check_branch
        %130 = sbr.rel (%p128) target = $region28
      $region27: #{forward.6} parent=23 // pred_region
        %s131 = smul.u32 64, %s9
        %p132 = scmp.lt.s32.totalorder %s131, 255
        %s133 = scalar_select %p132, %s131, 255
        %s134 = smul.addr %s133, 8
        %s135 = scalar_lea.vmem %s0, %s134
        %s136 = smul.u32 64, %s9
      $region28: #{forward.6} parent=23 // pred_fallthru
        _
    $region24: #{forward.6} parent=5 // pred_fallthru
      _
    %p137 = scmp.le.s32.totalorder 1, %s9
    %p138 = scmp.lt.s32.totalorder %s9, 5
    %p139 = pnand %p137, %p138
    %p140 = pneg %p139
    // Predicated region
    $region29: #{forward.6} parent=5 // pred_check
      _
    $region30: #{forward.6} parent=5 // pred_check_branch
      %142 = sbr.rel (%p139) target = $region32
    $region31: #{forward.6} parent=5 // pred_region
      %s143 = ssub.s32 %s9, 1
      %s144 = smul.u32 64, %s14
      %p145 = scmp.lt.s32.totalorder %s144, 255
      %s146 = scalar_select %p145, %s144, 255
      %s147 = smul.addr %s146, 8
      %s148 = scalar_lea.vmem %s0, %s147
      %p149 = pneg %p35
      %p150 = pneg %p32
      %p151 = pneg %p56
      %p152 = pneg %p53
      %p153 = pneg %p77
      %p154 = pneg %p74
      %p155 = pneg %p103
      %p156 = pneg %p100
      %s157 = smul.u32 64, %s14
      %p158 = scmp.lt.s32.totalorder %s157, 255
      %s159 = scalar_select %p158, %s157, 255
      %s160 = smul.addr %s159, 8
      %s161 = scalar_lea.vmem %s3, %s160
      %s162 = smul.u32 64, %s14
      %p163 = scmp.lt.s32.totalorder %s162, 255
      %s164 = scalar_select %p163, %s162, 255
      %s165 = smul.addr %s164, 8
      %s166 = scalar_lea.vmem %s0, %s165
      %s167 = smul.u32 64, %s14
      %s168 = smul.u32 64, %s14
      %p169 = scmp.lt.s32.totalorder %s168, 255
      %s170 = scalar_select %p169, %s168, 255
      %s171 = smul.addr %s170, 8
      %s172 = scalar_lea.vmem %s3, %s171
      %s173 = smul.u32 64, %s14
      %v174 = vld [vmem:[%s166] sm:$0xff]
      %v175 = vld [vmem:[%s166 + $0x8] sm:$0xff]
      %v176 = vld [vmem:[%s166 + $0x10] sm:$0xff]
      %v177 = vld [vmem:[%s166 + $0x18] sm:$0xff]
      %v178 = vld [vmem:[%s166 + $0x20] sm:$0xff]
      %v179 = vld [vmem:[%s166 + $0x28] sm:$0xff]
      %v180 = vld [vmem:[%s166 + $0x30] sm:$0xff]
      %v181 = vld [vmem:[%s166 + $0x38] sm:$0xff]
      %v182 = vld [vmem:[%s166 + $0x40] sm:$0xff]
      %v183 = vld [vmem:[%s166 + $0x48] sm:$0xff]
      %v184 = vld [vmem:[%s166 + $0x50] sm:$0xff]
      %v185 = vld [vmem:[%s166 + $0x58] sm:$0xff]
      %v186 = vld [vmem:[%s166 + $0x60] sm:$0xff]
      %v187 = vld [vmem:[%s166 + $0x68] sm:$0xff]
      %v188 = vld [vmem:[%s166 + $0x70] sm:$0xff]
      %v189 = vld [vmem:[%s166 + $0x78] sm:$0xff]
      %v190 = vld [vmem:[%s166 + $0x80] sm:$0xff]
      %v191 = vld [vmem:[%s166 + $0x88] sm:$0xff]
      %v192 = vld [vmem:[%s166 + $0x90] sm:$0xff]
      %v193 = vld [vmem:[%s166 + $0x98] sm:$0xff]
      %v194 = vld [vmem:[%s166 + $0xa0] sm:$0xff]
      %v195 = vld [vmem:[%s166 + $0xa8] sm:$0xff]
      %v196 = vld [vmem:[%s166 + $0xb0] sm:$0xff]
      %v197 = vld [vmem:[%s166 + $0xb8] sm:$0xff]
      %v198 = vld [vmem:[%s166 + $0xc0] sm:$0xff]
      %v199 = vld [vmem:[%s166 + $0xc8] sm:$0xff]
      %v200 = vld [vmem:[%s166 + $0xd0] sm:$0xff]
      %v201 = vld [vmem:[%s166 + $0xd8] sm:$0xff]
      %v202 = vld [vmem:[%s166 + $0xe0] sm:$0xff]
      %v203 = vld [vmem:[%s166 + $0xe8] sm:$0xff]
      %v204 = vld [vmem:[%s166 + $0xf0] sm:$0xff]
      %v205 = vld [vmem:[%s166 + $0xf8] sm:$0xff]
      %v206 = vld [vmem:[%s166 + $0x100] sm:$0xff]
      %v207 = vld [vmem:[%s166 + $0x108] sm:$0xff]
      %v208 = vld [vmem:[%s166 + $0x110] sm:$0xff]
      %v209 = vld [vmem:[%s166 + $0x118] sm:$0xff]
      %v210 = vld [vmem:[%s166 + $0x120] sm:$0xff]
      %v211 = vld [vmem:[%s166 + $0x128] sm:$0xff]
      %v212 = vld [vmem:[%s166 + $0x130] sm:$0xff]
      %v213 = vld [vmem:[%s166 + $0x138] sm:$0xff]
      %v214 = vld [vmem:[%s166 + $0x140] sm:$0xff]
      %v215 = vld [vmem:[%s166 + $0x148] sm:$0xff]
      %v216 = vld [vmem:[%s166 + $0x150] sm:$0xff]
      %v217 = vld [vmem:[%s166 + $0x158] sm:$0xff]
      %v218 = vld [vmem:[%s166 + $0x160] sm:$0xff]
      %v219 = vld [vmem:[%s166 + $0x168] sm:$0xff]
      %v220 = vld [vmem:[%s166 + $0x170] sm:$0xff]
      %v221 = vld [vmem:[%s166 + $0x178] sm:$0xff]
      %v222 = vld [vmem:[%s166 + $0x180] sm:$0xff]
      %v223 = vld [vmem:[%s166 + $0x188] sm:$0xff]
      %v224 = vld [vmem:[%s166 + $0x190] sm:$0xff]
      %v225 = vld [vmem:[%s166 + $0x198] sm:$0xff]
      %v226 = vld [vmem:[%s166 + $0x1a0] sm:$0xff]
      %v227 = vld [vmem:[%s166 + $0x1a8] sm:$0xff]
      %v228 = vld [vmem:[%s166 + $0x1b0] sm:$0xff]
      %v229 = vld [vmem:[%s166 + $0x1b8] sm:$0xff]
      %v230 = vld [vmem:[%s166 + $0x1c0] sm:$0xff]
      %v231 = vld [vmem:[%s166 + $0x1c8] sm:$0xff]
      %v232 = vld [vmem:[%s166 + $0x1d0] sm:$0xff]
      %v233 = vld [vmem:[%s166 + $0x1d8] sm:$0xff]
      %v234 = vld [vmem:[%s166 + $0x1e0] sm:$0xff]
      %v235 = vld [vmem:[%s166 + $0x1e8] sm:$0xff]
      %v236 = vld [vmem:[%s166 + $0x1f0] sm:$0xff]
      %v237 = vld [vmem:[%s166 + $0x1f8] sm:$0xff]
      %v238 = vld [vmem:[%s1] sm:$0x1]
      %v240 = vlaneseq
      %v241 = vshrl.u32 %v240, 7
      %v242 = vsub.s32 0, %v241
      %v243 = vrot.slane %v238, %v242
      %v245 = vmul.f32 %v174, %v243
      %v246 = vmul.f32 %v175, %v243
      %v247 = vmul.f32 %v176, %v243
      %v248 = vmul.f32 %v177, %v243
      %v249 = vmul.f32 %v178, %v243
      %v250 = vmul.f32 %v179, %v243
      %v251 = vmul.f32 %v180, %v243
      %v252 = vmul.f32 %v181, %v243
      %v253 = vmul.f32 %v182, %v243
      %v254 = vmul.f32 %v183, %v243
      %v255 = vmul.f32 %v184, %v243
      %v256 = vmul.f32 %v185, %v243
      %v257 = vmul.f32 %v186, %v243
      %v258 = vmul.f32 %v187, %v243
      %v259 = vmul.f32 %v188, %v243
      %v260 = vmul.f32 %v189, %v243
      %v261 = vmul.f32 %v190, %v243
      %v262 = vmul.f32 %v191, %v243
      %v263 = vmul.f32 %v192, %v243
      %v264 = vmul.f32 %v193, %v243
      %v265 = vmul.f32 %v194, %v243
      %v266 = vmul.f32 %v195, %v243
      %v267 = vmul.f32 %v196, %v243
      %v268 = vmul.f32 %v197, %v243
      %v269 = vmul.f32 %v198, %v243
      %v270 = vmul.f32 %v199, %v243
      %v271 = vmul.f32 %v200, %v243
      %v272 = vmul.f32 %v201, %v243
      %v273 = vmul.f32 %v202, %v243
      %v274 = vmul.f32 %v203, %v243
      %v275 = vmul.f32 %v204, %v243
      %v276 = vmul.f32 %v205, %v243
      %v277 = vmul.f32 %v206, %v243
      %v278 = vmul.f32 %v207, %v243
      %v279 = vmul.f32 %v208, %v243
      %v280 = vmul.f32 %v209, %v243
      %v281 = vmul.f32 %v210, %v243
      %v282 = vmul.f32 %v211, %v243
      %v283 = vmul.f32 %v212, %v243
      %v284 = vmul.f32 %v213, %v243
      %v285 = vmul.f32 %v214, %v243
      %v286 = vmul.f32 %v215, %v243
      %v287 = vmul.f32 %v216, %v243
      %v288 = vmul.f32 %v217, %v243
      %v289 = vmul.f32 %v218, %v243
      %v290 = vmul.f32 %v219, %v243
      %v291 = vmul.f32 %v220, %v243
      %v292 = vmul.f32 %v221, %v243
      %v293 = vmul.f32 %v222, %v243
      %v294 = vmul.f32 %v223, %v243
      %v295 = vmul.f32 %v224, %v243
      %v296 = vmul.f32 %v225, %v243
      %v297 = vmul.f32 %v226, %v243
      %v298 = vmul.f32 %v227, %v243
      %v299 = vmul.f32 %v228, %v243
      %v300 = vmul.f32 %v229, %v243
      %v301 = vmul.f32 %v230, %v243
      %v302 = vmul.f32 %v231, %v243
      %v303 = vmul.f32 %v232, %v243
      %v304 = vmul.f32 %v233, %v243
      %v305 = vmul.f32 %v234, %v243
      %v306 = vmul.f32 %v235, %v243
      %v307 = vmul.f32 %v236, %v243
      %v308 = vmul.f32 %v237, %v243
      %v309 = vld [vmem:[%s2] sm:$0x1]
      %v311 = vlaneseq
      %v312 = vshrl.u32 %v311, 7
      %v313 = vsub.s32 0, %v312
      %v314 = vrot.slane %v309, %v313
      %v316 = vadd.f32 %v245, %v314
      %v317 = vadd.f32 %v246, %v314
      %v318 = vadd.f32 %v247, %v314
      %v319 = vadd.f32 %v248, %v314
      %v320 = vadd.f32 %v249, %v314
      %v321 = vadd.f32 %v250, %v314
      %v322 = vadd.f32 %v251, %v314
      %v323 = vadd.f32 %v252, %v314
      %v324 = vadd.f32 %v253, %v314
      %v325 = vadd.f32 %v254, %v314
      %v326 = vadd.f32 %v255, %v314
      %v327 = vadd.f32 %v256, %v314
      %v328 = vadd.f32 %v257, %v314
      %v329 = vadd.f32 %v258, %v314
      %v330 = vadd.f32 %v259, %v314
      %v331 = vadd.f32 %v260, %v314
      %v332 = vadd.f32 %v261, %v314
      %v333 = vadd.f32 %v262, %v314
      %v334 = vadd.f32 %v263, %v314
      %v335 = vadd.f32 %v264, %v314
      %v336 = vadd.f32 %v265, %v314
      %v337 = vadd.f32 %v266, %v314
      %v338 = vadd.f32 %v267, %v314
      %v339 = vadd.f32 %v268, %v314
      %v340 = vadd.f32 %v269, %v314
      %v341 = vadd.f32 %v270, %v314
      %v342 = vadd.f32 %v271, %v314
      %v343 = vadd.f32 %v272, %v314
      %v344 = vadd.f32 %v273, %v314
      %v345 = vadd.f32 %v274, %v314
      %v346 = vadd.f32 %v275, %v314
      %v347 = vadd.f32 %v276, %v314
      %v348 = vadd.f32 %v277, %v314
      %v349 = vadd.f32 %v278, %v314
      %v350 = vadd.f32 %v279, %v314
      %v351 = vadd.f32 %v280, %v314
      %v352 = vadd.f32 %v281, %v314
      %v353 = vadd.f32 %v282, %v314
      %v354 = vadd.f32 %v283, %v314
      %v355 = vadd.f32 %v284, %v314
      %v356 = vadd.f32 %v285, %v314
      %v357 = vadd.f32 %v286, %v314
      %v358 = vadd.f32 %v287, %v314
      %v359 = vadd.f32 %v288, %v314
      %v360 = vadd.f32 %v289, %v314
      %v361 = vadd.f32 %v290, %v314
      %v362 = vadd.f32 %v291, %v314
      %v363 = vadd.f32 %v292, %v314
      %v364 = vadd.f32 %v293, %v314
      %v365 = vadd.f32 %v294, %v314
      %v366 = vadd.f32 %v295, %v314
      %v367 = vadd.f32 %v296, %v314
      %v368 = vadd.f32 %v297, %v314
      %v369 = vadd.f32 %v298, %v314
      %v370 = vadd.f32 %v299, %v314
      %v371 = vadd.f32 %v300, %v314
      %v372 = vadd.f32 %v301, %v314
      %v373 = vadd.f32 %v302, %v314
      %v374 = vadd.f32 %v303, %v314
      %v375 = vadd.f32 %v304, %v314
      %v376 = vadd.f32 %v305, %v314
      %v377 = vadd.f32 %v306, %v314
      %v378 = vadd.f32 %v307, %v314
      %v379 = vadd.f32 %v308, %v314
      %380 = vst [vmem:[%s172] sm:$0xff] %v316
      %381 = vst [vmem:[%s172 + $0x8] sm:$0xff] %v317
      %382 = vst [vmem:[%s172 + $0x10] sm:$0xff] %v318
      %383 = vst [vmem:[%s172 + $0x18] sm:$0xff] %v319
      %384 = vst [vmem:[%s172 + $0x20] sm:$0xff] %v320
      %385 = vst [vmem:[%s172 + $0x28] sm:$0xff] %v321
      %386 = vst [vmem:[%s172 + $0x30] sm:$0xff] %v322
      %387 = vst [vmem:[%s172 + $0x38] sm:$0xff] %v323
      %388 = vst [vmem:[%s172 + $0x40] sm:$0xff] %v324
      %389 = vst [vmem:[%s172 + $0x48] sm:$0xff] %v325
      %390 = vst [vmem:[%s172 + $0x50] sm:$0xff] %v326
      %391 = vst [vmem:[%s172 + $0x58] sm:$0xff] %v327
      %392 = vst [vmem:[%s172 + $0x60] sm:$0xff] %v328
      %393 = vst [vmem:[%s172 + $0x68] sm:$0xff] %v329
      %394 = vst [vmem:[%s172 + $0x70] sm:$0xff] %v330
      %395 = vst [vmem:[%s172 + $0x78] sm:$0xff] %v331
      %396 = vst [vmem:[%s172 + $0x80] sm:$0xff] %v332
      %397 = vst [vmem:[%s172 + $0x88] sm:$0xff] %v333
      %398 = vst [vmem:[%s172 + $0x90] sm:$0xff] %v334
      %399 = vst [vmem:[%s172 + $0x98] sm:$0xff] %v335
      %400 = vst [vmem:[%s172 + $0xa0] sm:$0xff] %v336
      %401 = vst [vmem:[%s172 + $0xa8] sm:$0xff] %v337
      %402 = vst [vmem:[%s172 + $0xb0] sm:$0xff] %v338
      %403 = vst [vmem:[%s172 + $0xb8] sm:$0xff] %v339
      %404 = vst [vmem:[%s172 + $0xc0] sm:$0xff] %v340
      %405 = vst [vmem:[%s172 + $0xc8] sm:$0xff] %v341
      %406 = vst [vmem:[%s172 + $0xd0] sm:$0xff] %v342
      %407 = vst [vmem:[%s172 + $0xd8] sm:$0xff] %v343
      %408 = vst [vmem:[%s172 + $0xe0] sm:$0xff] %v344
      %409 = vst [vmem:[%s172 + $0xe8] sm:$0xff] %v345
      %410 = vst [vmem:[%s172 + $0xf0] sm:$0xff] %v346
      %411 = vst [vmem:[%s172 + $0xf8] sm:$0xff] %v347
      %412 = vst [vmem:[%s172 + $0x100] sm:$0xff] %v348
      %413 = vst [vmem:[%s172 + $0x108] sm:$0xff] %v349
      %414 = vst [vmem:[%s172 + $0x110] sm:$0xff] %v350
      %415 = vst [vmem:[%s172 + $0x118] sm:$0xff] %v351
      %416 = vst [vmem:[%s172 + $0x120] sm:$0xff] %v352
      %417 = vst [vmem:[%s172 + $0x128] sm:$0xff] %v353
      %418 = vst [vmem:[%s172 + $0x130] sm:$0xff] %v354
      %419 = vst [vmem:[%s172 + $0x138] sm:$0xff] %v355
      %420 = vst [vmem:[%s172 + $0x140] sm:$0xff] %v356
      %421 = vst [vmem:[%s172 + $0x148] sm:$0xff] %v357
      %422 = vst [vmem:[%s172 + $0x150] sm:$0xff] %v358
      %423 = vst [vmem:[%s172 + $0x158] sm:$0xff] %v359
      %424 = vst [vmem:[%s172 + $0x160] sm:$0xff] %v360
      %425 = vst [vmem:[%s172 + $0x168] sm:$0xff] %v361
      %426 = vst [vmem:[%s172 + $0x170] sm:$0xff] %v362
      %427 = vst [vmem:[%s172 + $0x178] sm:$0xff] %v363
      %428 = vst [vmem:[%s172 + $0x180] sm:$0xff] %v364
      %429 = vst [vmem:[%s172 + $0x188] sm:$0xff] %v365
      %430 = vst [vmem:[%s172 + $0x190] sm:$0xff] %v366
      %431 = vst [vmem:[%s172 + $0x198] sm:$0xff] %v367
      %432 = vst [vmem:[%s172 + $0x1a0] sm:$0xff] %v368
      %433 = vst [vmem:[%s172 + $0x1a8] sm:$0xff] %v369
      %434 = vst [vmem:[%s172 + $0x1b0] sm:$0xff] %v370
      %435 = vst [vmem:[%s172 + $0x1b8] sm:$0xff] %v371
      %436 = vst [vmem:[%s172 + $0x1c0] sm:$0xff] %v372
      %437 = vst [vmem:[%s172 + $0x1c8] sm:$0xff] %v373
      %438 = vst [vmem:[%s172 + $0x1d0] sm:$0xff] %v374
      %439 = vst [vmem:[%s172 + $0x1d8] sm:$0xff] %v375
      %440 = vst [vmem:[%s172 + $0x1e0] sm:$0xff] %v376
      %441 = vst [vmem:[%s172 + $0x1e8] sm:$0xff] %v377
      %442 = vst [vmem:[%s172 + $0x1f0] sm:$0xff] %v378
      %443 = vst [vmem:[%s172 + $0x1f8] sm:$0xff] %v379
      %s444 = smul.u32 64, %s14
      %p445 = scmp.lt.s32.totalorder %s444, 255
      %s446 = scalar_select %p445, %s444, 255
      %s447 = smul.addr %s446, 8
      %s448 = scalar_lea.vmem %s3, %s447
      // Predicated region
      $region33: #{forward.6} parent=31 // pred_check
        %p449 = pneg %p100
      $region34: #{forward.6} parent=31 // pred_check_branch
        %451 = sbr.rel (%p449) target = $region36
      $region35: #{forward.6} parent=31 // pred_region
        %s452 = smul.u32 64, %s14
      $region36: #{forward.6} parent=31 // pred_fallthru
        _
    $region32: #{forward.6} parent=5 // pred_fallthru
      _
    %p453 = scmp.le.s32.totalorder 2, %s9
    // Predicated region
    $region37: #{forward.6} parent=5 // pred_check
      %p454 = pneg %p453
    $region38: #{forward.6} parent=5 // pred_check_branch
      %456 = sbr.rel (%p454) target = $region40
    $region39: #{forward.6} parent=5 // pred_region
      %s457 = ssub.s32 %s9, 2
      // Predicated region
      $region41: #{forward.6} parent=39 // pred_check
        %p458 = pneg %p106
      $region42: #{forward.6} parent=39 // pred_check_branch
        %460 = sbr.rel (%p458) target = $region44
      $region43: #{forward.6} parent=39 // pred_region
        %s461 = smul.u32 64, %s15
        %p462 = scmp.lt.s32.totalorder %s461, 255
        %s463 = scalar_select %p462, %s461, 255
        %s464 = smul.addr %s463, 8
        %s465 = scalar_lea.vmem %s3, %s464
      $region44: #{forward.6} parent=39 // pred_fallthru
        _
    $region40: #{forward.6} parent=5 // pred_fallthru
      _
  $region6: #{forward.6} parent=0 // loop_footer
    %s13 = sadd.s32 1, %s9
  $region7: #{forward.6} parent=0 // loop_footer_branch
    %8 = sbr.rel target = $region3
  $region8: #{forward.6} parent=0 // loop_exit
    _

// kernel: forward.5
$region0: #{forward.5}
  #allocation0 [shape = 'u32[]', space=smem, size = 0x4, offset = 0x4, fixed_abs, tag = 'smem constant byte address 0x4 - core index']
  #allocation1 [shape = 'u32[144,128]{1,0:T(1,128)}', space=vmem, size = 0x12000, scoped, tag = 'internal scratch']
  %s0 = inlined_call_operand.vmem [shape: bf16[2048,128], index: 0, kind: input, shape index: {}]
  %s1 = inlined_call_operand.vmem [shape: bf16[128,128], index: 1, kind: input, shape index: {}]
  %s2 = inlined_call_operand.vmem [shape: f32[1,128], index: 2, kind: input, shape index: {}]
  %s3 = inlined_call_operand.vmem [shape: f32[2048,128], index: 3, kind: output, shape index: {0}]
  %s4 = inlined_call_operand.vmem [shape: f32[4,2,128], index: 4, kind: output, shape index: {1}]
  %5 = xla_tuple %s3, %s4
  %s6 = sld [smem:[#allocation0]]
  $region53: #{forward.5} parent=0
    _
  %s8 = ssub.s32 1, %s6
  %s9 = scalar_select 0, %s8, %s6
  loop: start=0, step=1, limit=6
  $region2: #{forward.5} parent=0 // loop_pre_header
    _
  $region3: #{forward.5} parent=0 // loop_header
    %s11 = sphi 0, %s15
    %p12 = scmp.ge.s32.totalorder %s11, 6
    %s21 = sphi 0, %s23
    %s24 = sphi 0, %s21
    %s25 = sphi 0, %s24
    %s41 = sphi 0, %s25
    %s45 = sphi 0, %s45
    %s47 = sphi 0, %s45
    %s48 = sphi 0, %s47
    %s62 = sphi 0, %s48
    %s66 = sphi 0, %s66
    %s68 = sphi 0, %s66
    %s69 = sphi 0, %s68
    %s83 = sphi 0, %s69
    %s89 = sphi 0, %s91
    %s92 = sphi 0, %s89
    %s93 = sphi 0, %s92
    %s109 = sphi 0, %s93
    %s115 = sphi 0, %s117
    %s118 = sphi 0, %s115
    %s119 = sphi 0, %s118
    %s135 = sphi 0, %s119
  $region4: #{forward.5} parent=0 // loop_header_branch
    %14 = sbr.rel (%p12) target = $region8
  $region5: #{forward.5} parent=0 // loop_body
    %s16 = ssub.s32 %s11, 1
    %s17 = ssub.s32 %s11, 2
    %s18 = sadd.s32 %s11, 1
    %s19 = ssub.s32 %s11, %s18
    %p20 = scmp.eq.s32.totalorder %s19, 0
    %s22 = sadd.s32 %s21, 1
    %s23 = scalar_select %p20, %s21, %s22
    %p26 = pneg %p20
    %p27 = scmp.eq.s32.totalorder %s11, 3
    %p28 = por %p26, %p27
    %p29 = scmp.ne.s32.totalorder %s21, %s24
    %p30 = scmp.eq.s32.totalorder %s11, 0
    %p31 = por %p29, %p30
    %p32 = scmp.ne.s32.totalorder %s21, %s24
    %p33 = scmp.eq.s32.totalorder %s16, 3
    %p34 = por %p32, %p33
    %p35 = scmp.ne.s32.totalorder %s24, %s25
    %p36 = scmp.eq.s32.totalorder %s16, 0
    %p37 = por %p35, %p36
    %p38 = scmp.ne.s32.totalorder %s24, %s25
    %p39 = scmp.eq.s32.totalorder %s17, 3
    %p40 = por %p38, %p39
    %p42 = scmp.ne.s32.totalorder %s25, %s41
    %p43 = scmp.eq.s32.totalorder %s17, 0
    %p44 = por %p42, %p43
    %s46 = sadd.s32 %s45, 1
    %p49 = scmp.eq.s32.totalorder %s11, 3
    %p50 = scmp.ne.s32.totalorder %s45, %s47
    %p51 = scmp.eq.s32.totalorder %s11, 0
    %p52 = por %p50, %p51
    %p53 = scmp.ne.s32.totalorder %s45, %s47
    %p54 = scmp.eq.s32.totalorder %s16, 3
    %p55 = por %p53, %p54
    %p56 = scmp.ne.s32.totalorder %s47, %s48
    %p57 = scmp.eq.s32.totalorder %s16, 0
    %p58 = por %p56, %p57
    %p59 = scmp.ne.s32.totalorder %s47, %s48
    %p60 = scmp.eq.s32.totalorder %s17, 3
    %p61 = por %p59, %p60
    %p63 = scmp.ne.s32.totalorder %s48, %s62
    %p64 = scmp.eq.s32.totalorder %s17, 0
    %p65 = por %p63, %p64
    %s67 = sadd.s32 %s66, 1
    %p70 = scmp.eq.s32.totalorder %s11, 3
    %p71 = scmp.ne.s32.totalorder %s66, %s68
    %p72 = scmp.eq.s32.totalorder %s11, 0
    %p73 = por %p71, %p72
    %p74 = scmp.ne.s32.totalorder %s66, %s68
    %p75 = scmp.eq.s32.totalorder %s16, 3
    %p76 = por %p74, %p75
    %p77 = scmp.ne.s32.totalorder %s68, %s69
    %p78 = scmp.eq.s32.totalorder %s16, 0
    %p79 = por %p77, %p78
    %p80 = scmp.ne.s32.totalorder %s68, %s69
    %p81 = scmp.eq.s32.totalorder %s17, 3
    %p82 = por %p80, %p81
    %p84 = scmp.ne.s32.totalorder %s69, %s83
    %p85 = scmp.eq.s32.totalorder %s17, 0
    %p86 = por %p84, %p85
    %s87 = ssub.s32 %s11, %s18
    %p88 = scmp.eq.s32.totalorder %s87, 0
    %s90 = sadd.s32 %s89, 1
    %s91 = scalar_select %p88, %s89, %s90
    %p94 = pneg %p88
    %p95 = scmp.eq.s32.totalorder %s11, 3
    %p96 = por %p94, %p95
    %p97 = scmp.ne.s32.totalorder %s89, %s92
    %p98 = scmp.eq.s32.totalorder %s11, 0
    %p99 = por %p97, %p98
    %p100 = scmp.ne.s32.totalorder %s89, %s92
    %p101 = scmp.eq.s32.totalorder %s16, 3
    %p102 = por %p100, %p101
    %p103 = scmp.ne.s32.totalorder %s92, %s93
    %p104 = scmp.eq.s32.totalorder %s16, 0
    %p105 = por %p103, %p104
    %p106 = scmp.ne.s32.totalorder %s92, %s93
    %p107 = scmp.eq.s32.totalorder %s17, 3
    %p108 = por %p106, %p107
    %p110 = scmp.ne.s32.totalorder %s93, %s109
    %p111 = scmp.eq.s32.totalorder %s17, 0
    %p112 = por %p110, %p111
    %s113 = ssub.s32 %s11, %s18
    %p114 = scmp.eq.s32.totalorder %s113, 0
    %s116 = sadd.s32 %s115, 1
    %s117 = scalar_select %p114, %s115, %s116
    %p120 = pneg %p114
    %p121 = scmp.eq.s32.totalorder %s11, 3
    %p122 = por %p120, %p121
    %p123 = scmp.ne.s32.totalorder %s115, %s118
    %p124 = scmp.eq.s32.totalorder %s11, 0
    %p125 = por %p123, %p124
    %p126 = scmp.ne.s32.totalorder %s115, %s118
    %p127 = scmp.eq.s32.totalorder %s16, 3
    %p128 = por %p126, %p127
    %p129 = scmp.ne.s32.totalorder %s118, %s119
    %p130 = scmp.eq.s32.totalorder %s16, 0
    %p131 = por %p129, %p130
    %p132 = scmp.ne.s32.totalorder %s118, %s119
    %p133 = scmp.eq.s32.totalorder %s17, 3
    %p134 = por %p132, %p133
    %p136 = scmp.ne.s32.totalorder %s119, %s135
    %p137 = scmp.eq.s32.totalorder %s17, 0
    %p138 = por %p136, %p137
    %p139 = scmp.le.s32.totalorder 1, %s11
    %p140 = scmp.lt.s32.totalorder %s11, 5
    %p141 = pnand %p139, %p140
    %p142 = pneg %p141
    // Predicated region
    $region9: #{forward.5} parent=5 // pred_check
      _
    $region10: #{forward.5} parent=5 // pred_check_branch
      %144 = sbr.rel (%p141) target = $region12
    $region11: #{forward.5} parent=5 // pred_region
      %s145 = ssub.s32 %s11, 1
      // Predicated region
      $region13: #{forward.5} parent=11 // pred_check
        %p146 = pneg %p58
      $region14: #{forward.5} parent=11 // pred_check_branch
        %148 = sbr.rel (%p146) target = $region16
      $region15: #{forward.5} parent=11 // pred_region
        _
      $region16: #{forward.5} parent=11 // pred_fallthru
        _
      // Predicated region
      $region17: #{forward.5} parent=11 // pred_check
        %p149 = pneg %p79
      $region18: #{forward.5} parent=11 // pred_check_branch
        %151 = sbr.rel (%p149) target = $region20
      $region19: #{forward.5} parent=11 // pred_region
        _
      $region20: #{forward.5} parent=11 // pred_fallthru
        _
    $region12: #{forward.5} parent=5 // pred_fallthru
      _
    %p152 = scmp.lt.s32.totalorder %s11, 4
    // Predicated region
    $region21: #{forward.5} parent=5 // pred_check
      %p153 = pneg %p152
    $region22: #{forward.5} parent=5 // pred_check_branch
      %155 = sbr.rel (%p153) target = $region24
    $region23: #{forward.5} parent=5 // pred_region
      // Predicated region
      $region25: #{forward.5} parent=23 // pred_check
        %p156 = pneg %p31
      $region26: #{forward.5} parent=23 // pred_check_branch
        %158 = sbr.rel (%p156) target = $region28
      $region27: #{forward.5} parent=23 // pred_region
        %s159 = smul.u32 64, %s11
        %p160 = scmp.lt.s32.totalorder %s159, 255
        %s161 = scalar_select %p160, %s159, 255
        %s162 = smul.addr %s161, 4
        %s163 = scalar_lea.vmem %s0, %s162
        %s164 = smul.u32 64, %s11
      $region28: #{forward.5} parent=23 // pred_fallthru
        _
    $region24: #{forward.5} parent=5 // pred_fallthru
      _
    %p165 = scmp.le.s32.totalorder 1, %s11
    %p166 = scmp.lt.s32.totalorder %s11, 5
    %p167 = pnand %p165, %p166
    %p168 = pneg %p167
    // Predicated region
    $region29: #{forward.5} parent=5 // pred_check
      _
    $region30: #{forward.5} parent=5 // pred_check_branch
      %170 = sbr.rel (%p167) target = $region32
    $region31: #{forward.5} parent=5 // pred_region
      %s171 = ssub.s32 %s11, 1
      %s172 = smul.u32 64, %s16
      %p173 = scmp.lt.s32.totalorder %s172, 255
      %s174 = scalar_select %p173, %s172, 255
      %s175 = smul.addr %s174, 4
      %s176 = scalar_lea.vmem %s0, %s175
      %p177 = pneg %p37
      %p178 = pneg %p34
      %p179 = pneg %p58
      %p180 = pneg %p55
      %p181 = pneg %p79
      %p182 = pneg %p76
      %p183 = pneg %p105
      %p184 = pneg %p102
      %s185 = smul.u32 64, %s16
      %p186 = scmp.lt.s32.totalorder %s185, 255
      %s187 = scalar_select %p186, %s185, 255
      %s188 = smul.addr %s187, 8
      %s189 = scalar_lea.vmem %s3, %s188
      %p190 = pneg %p131
      %p191 = pneg %p128
      %p192 = scmp.lt.s32.totalorder %s16, 3
      %s193 = scalar_select %p192, %s16, 3
      %s194 = smul.addr %s193, 2
      %s195 = scalar_lea.vmem %s4, %s194
      %s196 = smul.u32 64, %s16
      %p197 = scmp.lt.s32.totalorder %s196, 255
      %s198 = scalar_select %p197, %s196, 255
      %s199 = smul.addr %s198, 4
      %s200 = scalar_lea.vmem %s0, %s199
      %s201 = smul.u32 64, %s16
      %s202 = smul.u32 64, %s16
      %p203 = scmp.lt.s32.totalorder %s202, 255
      %s204 = scalar_select %p203, %s202, 255
      %s205 = smul.addr %s204, 8
      %s206 = scalar_lea.vmem %s3, %s205
      %s207 = smul.u32 64, %s16
      %p208 = scmp.lt.s32.totalorder %s16, 3
      %s209 = scalar_select %p208, %s16, 3
      %s210 = smul.addr %s209, 2
      %s211 = scalar_lea.vmem %s4, %s210
      %v213 = vld [vmem:[%s200] sm:$0xf]
      %v214 = vld [vmem:[%s200 + $0x4] sm:$0xf]
      %v215 = vld [vmem:[%s200 + $0x8] sm:$0xf]
      %v216 = vld [vmem:[%s200 + $0xc] sm:$0xf]
      %v217 = vld [vmem:[%s200 + $0x10] sm:$0xf]
      %v218 = vld [vmem:[%s200 + $0x14] sm:$0xf]
      %v219 = vld [vmem:[%s200 + $0x18] sm:$0xf]
      %v220 = vld [vmem:[%s200 + $0x1c] sm:$0xf]
      %v221 = vld [vmem:[%s200 + $0x20] sm:$0xf]
      %v222 = vld [vmem:[%s200 + $0x24] sm:$0xf]
      %v223 = vld [vmem:[%s200 + $0x28] sm:$0xf]
      %v224 = vld [vmem:[%s200 + $0x2c] sm:$0xf]
      %v225 = vld [vmem:[%s200 + $0x30] sm:$0xf]
      %v226 = vld [vmem:[%s200 + $0x34] sm:$0xf]
      %v227 = vld [vmem:[%s200 + $0x38] sm:$0xf]
      %v228 = vld [vmem:[%s200 + $0x3c] sm:$0xf]
      %v229 = vld [vmem:[%s200 + $0x40] sm:$0xf]
      %v230 = vld [vmem:[%s200 + $0x44] sm:$0xf]
      %v231 = vld [vmem:[%s200 + $0x48] sm:$0xf]
      %v232 = vld [vmem:[%s200 + $0x4c] sm:$0xf]
      %v233 = vld [vmem:[%s200 + $0x50] sm:$0xf]
      %v234 = vld [vmem:[%s200 + $0x54] sm:$0xf]
      %v235 = vld [vmem:[%s200 + $0x58] sm:$0xf]
      %v236 = vld [vmem:[%s200 + $0x5c] sm:$0xf]
      %v237 = vld [vmem:[%s200 + $0x60] sm:$0xf]
      %v238 = vld [vmem:[%s200 + $0x64] sm:$0xf]
      %v239 = vld [vmem:[%s200 + $0x68] sm:$0xf]
      %v240 = vld [vmem:[%s200 + $0x6c] sm:$0xf]
      %v241 = vld [vmem:[%s200 + $0x70] sm:$0xf]
      %v242 = vld [vmem:[%s200 + $0x74] sm:$0xf]
      %v243 = vld [vmem:[%s200 + $0x78] sm:$0xf]
      %v244 = vld [vmem:[%s200 + $0x7c] sm:$0xf]
      %v245 = vld [vmem:[%s200 + $0x80] sm:$0xf]
      %v246 = vld [vmem:[%s200 + $0x84] sm:$0xf]
      %v247 = vld [vmem:[%s200 + $0x88] sm:$0xf]
      %v248 = vld [vmem:[%s200 + $0x8c] sm:$0xf]
      %v249 = vld [vmem:[%s200 + $0x90] sm:$0xf]
      %v250 = vld [vmem:[%s200 + $0x94] sm:$0xf]
      %v251 = vld [vmem:[%s200 + $0x98] sm:$0xf]
      %v252 = vld [vmem:[%s200 + $0x9c] sm:$0xf]
      %v253 = vld [vmem:[%s200 + $0xa0] sm:$0xf]
      %v254 = vld [vmem:[%s200 + $0xa4] sm:$0xf]
      %v255 = vld [vmem:[%s200 + $0xa8] sm:$0xf]
      %v256 = vld [vmem:[%s200 + $0xac] sm:$0xf]
      %v257 = vld [vmem:[%s200 + $0xb0] sm:$0xf]
      %v258 = vld [vmem:[%s200 + $0xb4] sm:$0xf]
      %v259 = vld [vmem:[%s200 + $0xb8] sm:$0xf]
      %v260 = vld [vmem:[%s200 + $0xbc] sm:$0xf]
      %v261 = vld [vmem:[%s200 + $0xc0] sm:$0xf]
      %v262 = vld [vmem:[%s200 + $0xc4] sm:$0xf]
      %v263 = vld [vmem:[%s200 + $0xc8] sm:$0xf]
      %v264 = vld [vmem:[%s200 + $0xcc] sm:$0xf]
      %v265 = vld [vmem:[%s200 + $0xd0] sm:$0xf]
      %v266 = vld [vmem:[%s200 + $0xd4] sm:$0xf]
      %v267 = vld [vmem:[%s200 + $0xd8] sm:$0xf]
      %v268 = vld [vmem:[%s200 + $0xdc] sm:$0xf]
      %v269 = vld [vmem:[%s200 + $0xe0] sm:$0xf]
      %v270 = vld [vmem:[%s200 + $0xe4] sm:$0xf]
      %v271 = vld [vmem:[%s200 + $0xe8] sm:$0xf]
      %v272 = vld [vmem:[%s200 + $0xec] sm:$0xf]
      %v273 = vld [vmem:[%s200 + $0xf0] sm:$0xf]
      %v274 = vld [vmem:[%s200 + $0xf4] sm:$0xf]
      %v275 = vld [vmem:[%s200 + $0xf8] sm:$0xf]
      %v276 = vld [vmem:[%s200 + $0xfc] sm:$0xf]
      %v277 = vld [vmem:[%s1] sm:$0xf]
      %v278 = vld [vmem:[%s1 + $0x4] sm:$0xf]
      %v279 = vld [vmem:[%s1 + $0x8] sm:$0xf]
      %v280 = vld [vmem:[%s1 + $0xc] sm:$0xf]
      %v281 = vld [vmem:[%s1 + $0x10] sm:$0xf]
      %v282 = vld [vmem:[%s1 + $0x14] sm:$0xf]
      %v283 = vld [vmem:[%s1 + $0x18] sm:$0xf]
      %v284 = vld [vmem:[%s1 + $0x1c] sm:$0xf]
      %v285 = vld [vmem:[%s1 + $0x20] sm:$0xf]
      %v286 = vld [vmem:[%s1 + $0x24] sm:$0xf]
      %v287 = vld [vmem:[%s1 + $0x28] sm:$0xf]
      %v288 = vld [vmem:[%s1 + $0x2c] sm:$0xf]
      %v289 = vld [vmem:[%s1 + $0x30] sm:$0xf]
      %v290 = vld [vmem:[%s1 + $0x34] sm:$0xf]
      %v291 = vld [vmem:[%s1 + $0x38] sm:$0xf]
      %v292 = vld [vmem:[%s1 + $0x3c] sm:$0xf]
      %v293 = vld [vmem:[%s2] sm:$0x1]
      %v295 = vlaneseq
      %v296 = vshrl.u32 %v295, 7
      %v297 = vsub.s32 0, %v296
      %v298 = vrot.slane %v293, %v297
      %v364 = vunpack.c.l.b16 %v213
      %v365 = vunpack.c.l.b16 %v214
      %v366 = vunpack.c.l.b16 %v215
      %v367 = vunpack.c.l.b16 %v216
      %v368 = vunpack.c.l.b16 %v217
      %v369 = vunpack.c.l.b16 %v218
      %v370 = vunpack.c.l.b16 %v219
      %v371 = vunpack.c.l.b16 %v220
      %v372 = vunpack.c.l.b16 %v221
      %v373 = vunpack.c.l.b16 %v222
      %v374 = vunpack.c.l.b16 %v223
      %v375 = vunpack.c.l.b16 %v224
      %v376 = vunpack.c.l.b16 %v225
      %v377 = vunpack.c.l.b16 %v226
      %v378 = vunpack.c.l.b16 %v227
      %v379 = vunpack.c.l.b16 %v228
      %v380 = vunpack.c.l.b16 %v229
      %v381 = vunpack.c.l.b16 %v230
      %v382 = vunpack.c.l.b16 %v231
      %v383 = vunpack.c.l.b16 %v232
      %v384 = vunpack.c.l.b16 %v233
      %v385 = vunpack.c.l.b16 %v234
      %v386 = vunpack.c.l.b16 %v235
      %v387 = vunpack.c.l.b16 %v236
      %v388 = vunpack.c.l.b16 %v237
      %v389 = vunpack.c.l.b16 %v238
      %v390 = vunpack.c.l.b16 %v239
      %v391 = vunpack.c.l.b16 %v240
      %v392 = vunpack.c.l.b16 %v241
      %v393 = vunpack.c.l.b16 %v242
      %v394 = vunpack.c.l.b16 %v243
      %v395 = vunpack.c.l.b16 %v244
      %v396 = vunpack.c.l.b16 %v245
      %v397 = vunpack.c.l.b16 %v246
      %v398 = vunpack.c.l.b16 %v247
      %v399 = vunpack.c.l.b16 %v248
      %v400 = vunpack.c.l.b16 %v249
      %v401 = vunpack.c.l.b16 %v250
      %v402 = vunpack.c.l.b16 %v251
      %v403 = vunpack.c.l.b16 %v252
      %v404 = vunpack.c.l.b16 %v253
      %v405 = vunpack.c.l.b16 %v254
      %v406 = vunpack.c.l.b16 %v255
      %v407 = vunpack.c.l.b16 %v256
      %v408 = vunpack.c.l.b16 %v257
      %v409 = vunpack.c.l.b16 %v258
      %v410 = vunpack.c.l.b16 %v259
      %v411 = vunpack.c.l.b16 %v260
      %v412 = vunpack.c.l.b16 %v261
      %v413 = vunpack.c.l.b16 %v262
      %v414 = vunpack.c.l.b16 %v263
      %v415 = vunpack.c.l.b16 %v264
      %v416 = vunpack.c.l.b16 %v265
      %v417 = vunpack.c.l.b16 %v266
      %v418 = vunpack.c.l.b16 %v267
      %v419 = vunpack.c.l.b16 %v268
      %v420 = vunpack.c.l.b16 %v269
      %v421 = vunpack.c.l.b16 %v270
      %v422 = vunpack.c.l.b16 %v271
      %v423 = vunpack.c.l.b16 %v272
      %v424 = vunpack.c.l.b16 %v273
      %v425 = vunpack.c.l.b16 %v274
      %v426 = vunpack.c.l.b16 %v275
      %v427 = vunpack.c.l.b16 %v276
      %v428 = vpack.c.b16 %v365, %v364
      %v429 = vpack.c.b16 %v367, %v366
      %v430 = vpack.c.b16 %v369, %v368
      %v431 = vpack.c.b16 %v371, %v370
      %v432 = vpack.c.b16 %v373, %v372
      %v433 = vpack.c.b16 %v375, %v374
      %v434 = vpack.c.b16 %v377, %v376
      %v435 = vpack.c.b16 %v379, %v378
      %v436 = vpack.c.b16 %v381, %v380
      %v437 = vpack.c.b16 %v383, %v382
      %v438 = vpack.c.b16 %v385, %v384
      %v439 = vpack.c.b16 %v387, %v386
      %v440 = vpack.c.b16 %v389, %v388
      %v441 = vpack.c.b16 %v391, %v390
      %v442 = vpack.c.b16 %v393, %v392
      %v443 = vpack.c.b16 %v395, %v394
      %v444 = vpack.c.b16 %v397, %v396
      %v445 = vpack.c.b16 %v399, %v398
      %v446 = vpack.c.b16 %v401, %v400
      %v447 = vpack.c.b16 %v403, %v402
      %v448 = vpack.c.b16 %v405, %v404
      %v449 = vpack.c.b16 %v407, %v406
      %v450 = vpack.c.b16 %v409, %v408
      %v451 = vpack.c.b16 %v411, %v410
      %v452 = vpack.c.b16 %v413, %v412
      %v453 = vpack.c.b16 %v415, %v414
      %v454 = vpack.c.b16 %v417, %v416
      %v455 = vpack.c.b16 %v419, %v418
      %v456 = vpack.c.b16 %v421, %v420
      %v457 = vpack.c.b16 %v423, %v422
      %v458 = vpack.c.b16 %v425, %v424
      %v459 = vpack.c.b16 %v427, %v426
      %v508 = vunpack.c.l.b16 %v277
      %v509 = vunpack.c.l.b16 %v278
      %v510 = vunpack.c.l.b16 %v279
      %v511 = vunpack.c.l.b16 %v280
      %v512 = vunpack.c.l.b16 %v281
      %v513 = vunpack.c.l.b16 %v282
      %v514 = vunpack.c.l.b16 %v283
      %v515 = vunpack.c.l.b16 %v284
      %v516 = vunpack.c.l.b16 %v285
      %v517 = vunpack.c.l.b16 %v286
      %v518 = vunpack.c.l.b16 %v287
      %v519 = vunpack.c.l.b16 %v288
      %v520 = vunpack.c.l.b16 %v289
      %v521 = vunpack.c.l.b16 %v290
      %v522 = vunpack.c.l.b16 %v291
      %v523 = vunpack.c.l.b16 %v292
      %v524 = vpack.c.b16 %v509, %v508
      %v525 = vpack.c.b16 %v511, %v510
      %v526 = vpack.c.b16 %v513, %v512
      %v527 = vpack.c.b16 %v515, %v514
      %v528 = vpack.c.b16 %v517, %v516
      %v529 = vpack.c.b16 %v519, %v518
      %v530 = vpack.c.b16 %v521, %v520
      %v531 = vpack.c.b16 %v523, %v522
      %540 = vmatprep.subr.bf16.mxu0 0
      %541 = vmatpush1.bf16.msra.mxu0 %v524
      %542 = vmatprep.subr.bf16.mxu0 0
      %543 = vmatpush1.bf16.msra.mxu0 %v525
      %544 = vmatprep.subr.bf16.mxu0 0
      %545 = vmatpush1.bf16.msra.mxu0 %v526
      %546 = vmatprep.subr.bf16.mxu0 0
      %547 = vmatpush1.bf16.msra.mxu0 %v527
      %548 = vmatprep.subr.bf16.mxu0 0
      %549 = vmatpush1.bf16.msra.mxu0 %v528
      %550 = vmatprep.subr.bf16.mxu0 0
      %551 = vmatpush1.bf16.msra.mxu0 %v529
      %552 = vmatprep.subr.bf16.mxu0 0
      %553 = vmatpush1.bf16.msra.mxu0 %v530
      %554 = vmatprep.subr.bf16.mxu0 0
      %555 = vmatpush1.bf16.msra.mxu0 %v531
      %556 = vmatprep.subr.bf16.mxu0 0
      %557 = vmatpush1.bf16.msra.mxu0 0
      %558 = vmatprep.subr.bf16.mxu0 0
      %559 = vmatpush1.bf16.msra.mxu0 0
      %560 = vmatprep.subr.bf16.mxu0 0
      %561 = vmatpush1.bf16.msra.mxu0 0
      %562 = vmatprep.subr.bf16.mxu0 0
      %563 = vmatpush1.bf16.msra.mxu0 0
      %564 = vmatprep.subr.bf16.mxu0 0
      %565 = vmatpush1.bf16.msra.mxu0 0
      %566 = vmatprep.subr.bf16.mxu0 0
      %567 = vmatpush1.bf16.msra.mxu0 0
      %568 = vmatprep.subr.bf16.mxu0 0
      %569 = vmatpush1.bf16.msra.mxu0 0
      %570 = vmatprep.subr.bf16.mxu0 0
      %571 = vmatpush1.bf16.msra.mxu0 0
      %572 = vmatprep.mubr.bf16.mxu0 0
      %573 = vmatmul.mubr.bf16.gmra.mrb[0].mxu0 %v428
      %v574 = vpop.f32.mrb[0].mxu0
      %v575 = vadd.f32 %v298, %v574
      %v576 = vpop.f32.mrb[0].mxu0
      %v577 = vpop.f32.mrb[0].mxu0
      %v578 = vadd.f32 %v298, %v577
      %v579 = vpop.f32.mrb[0].mxu0
      %580 = vmatprep.mubr.bf16.mxu0 0
      %581 = vmatmul.mubr.bf16.gmra.mrb[0].mxu0 %v429
      %v582 = vpop.f32.mrb[0].mxu0
      %v583 = vadd.f32 %v298, %v582
      %v584 = vpop.f32.mrb[0].mxu0
      %v585 = vpop.f32.mrb[0].mxu0
      %v586 = vadd.f32 %v298, %v585
      %v587 = vpop.f32.mrb[0].mxu0
      %588 = vmatprep.mubr.bf16.mxu0 0
      %589 = vmatmul.mubr.bf16.gmra.mrb[0].mxu0 %v430
      %v590 = vpop.f32.mrb[0].mxu0
      %v591 = vadd.f32 %v298, %v590
      %v592 = vpop.f32.mrb[0].mxu0
      %v593 = vpop.f32.mrb[0].mxu0
      %v594 = vadd.f32 %v298, %v593
      %v595 = vpop.f32.mrb[0].mxu0
      %596 = vmatprep.mubr.bf16.mxu0 0
      %597 = vmatmul.mubr.bf16.gmra.mrb[0].mxu0 %v431
      %v598 = vpop.f32.mrb[0].mxu0
      %v599 = vadd.f32 %v298, %v598
      %v600 = vpop.f32.mrb[0].mxu0
      %v601 = vpop.f32.mrb[0].mxu0
      %v602 = vadd.f32 %v298, %v601
      %v603 = vpop.f32.mrb[0].mxu0
      %604 = vmatprep.mubr.bf16.mxu0 0
      %605 = vmatmul.mubr.bf16.gmra.mrb[0].mxu0 %v432
      %v606 = vpop.f32.mrb[0].mxu0
      %v607 = vadd.f32 %v298, %v606
      %v608 = vpop.f32.mrb[0].mxu0
      %v609 = vpop.f32.mrb[0].mxu0
      %v610 = vadd.f32 %v298, %v609
      %v611 = vpop.f32.mrb[0].mxu0
      %612 = vmatprep.mubr.bf16.mxu0 0
      %613 = vmatmul.mubr.bf16.gmra.mrb[0].mxu0 %v433
      %v614 = vpop.f32.mrb[0].mxu0
      %v615 = vadd.f32 %v298, %v614
      %v616 = vpop.f32.mrb[0].mxu0
      %v617 = vpop.f32.mrb[0].mxu0
      %v618 = vadd.f32 %v298, %v617
      %v619 = vpop.f32.mrb[0].mxu0
      %620 = vmatprep.mubr.bf16.mxu0 0
      %621 = vmatmul.mubr.bf16.gmra.mrb[0].mxu0 %v434
      %v622 = vpop.f32.mrb[0].mxu0
      %v623 = vadd.f32 %v298, %v622
      %v624 = vpop.f32.mrb[0].mxu0
      %v625 = vpop.f32.mrb[0].mxu0
      %v626 = vadd.f32 %v298, %v625
      %v627 = vpop.f32.mrb[0].mxu0
      %628 = vmatprep.mubr.bf16.mxu0 0
      %629 = vmatmul.mubr.bf16.gmra.mrb[0].mxu0 %v435
      %v630 = vpop.f32.mrb[0].mxu0
      %v631 = vadd.f32 %v298, %v630
      %v632 = vpop.f32.mrb[0].mxu0
      %v633 = vpop.f32.mrb[0].mxu0
      %v634 = vadd.f32 %v298, %v633
      %v635 = vpop.f32.mrb[0].mxu0
      %636 = vmatprep.mubr.bf16.mxu0 0
      %637 = vmatmul.mubr.bf16.gmra.mrb[0].mxu0 %v436
      %v638 = vpop.f32.mrb[0].mxu0
      %v639 = vadd.f32 %v298, %v638
      %v640 = vpop.f32.mrb[0].mxu0
      %v641 = vpop.f32.mrb[0].mxu0
      %v642 = vadd.f32 %v298, %v641
      %v643 = vpop.f32.mrb[0].mxu0
      %644 = vmatprep.mubr.bf16.mxu0 0
      %645 = vmatmul.mubr.bf16.gmra.mrb[0].mxu0 %v437
      %v646 = vpop.f32.mrb[0].mxu0
      %v647 = vadd.f32 %v298, %v646
      %v648 = vpop.f32.mrb[0].mxu0
      %v649 = vpop.f32.mrb[0].mxu0
      %v650 = vadd.f32 %v298, %v649
      %v651 = vpop.f32.mrb[0].mxu0
      %652 = vmatprep.mubr.bf16.mxu0 0
      %653 = vmatmul.mubr.bf16.gmra.mrb[0].mxu0 %v438
      %v654 = vpop.f32.mrb[0].mxu0
      %v655 = vadd.f32 %v298, %v654
      %v656 = vpop.f32.mrb[0].mxu0
      %v657 = vpop.f32.mrb[0].mxu0
      %v658 = vadd.f32 %v298, %v657
      %v659 = vpop.f32.mrb[0].mxu0
      %660 = vmatprep.mubr.bf16.mxu0 0
      %661 = vmatmul.mubr.bf16.gmra.mrb[0].mxu0 %v439
      %v662 = vpop.f32.mrb[0].mxu0
      %v663 = vadd.f32 %v298, %v662
      %v664 = vpop.f32.mrb[0].mxu0
      %v665 = vpop.f32.mrb[0].mxu0
      %v666 = vadd.f32 %v298, %v665
      %v667 = vpop.f32.mrb[0].mxu0
      %668 = vmatprep.mubr.bf16.mxu0 0
      %669 = vmatmul.mubr.bf16.gmra.mrb[0].mxu0 %v440
      %v670 = vpop.f32.mrb[0].mxu0
      %v671 = vadd.f32 %v298, %v670
      %v672 = vpop.f32.mrb[0].mxu0
      %v673 = vpop.f32.mrb[0].mxu0
      %v674 = vadd.f32 %v298, %v673
      %v675 = vpop.f32.mrb[0].mxu0
      %676 = vmatprep.mubr.bf16.mxu0 0
      %677 = vmatmul.mubr.bf16.gmra.mrb[0].mxu0 %v441
      %v678 = vpop.f32.mrb[0].mxu0
      %v679 = vadd.f32 %v298, %v678
      %v680 = vpop.f32.mrb[0].mxu0
      %v681 = vpop.f32.mrb[0].mxu0
      %v682 = vadd.f32 %v298, %v681
      %v683 = vpop.f32.mrb[0].mxu0
      %684 = vmatprep.mubr.bf16.mxu0 0
      %685 = vmatmul.mubr.bf16.gmra.mrb[0].mxu0 %v442
      %v686 = vpop.f32.mrb[0].mxu0
      %v687 = vadd.f32 %v298, %v686
      %v688 = vpop.f32.mrb[0].mxu0
      %v689 = vpop.f32.mrb[0].mxu0
      %v690 = vadd.f32 %v298, %v689
      %v691 = vpop.f32.mrb[0].mxu0
      %692 = vmatprep.mubr.bf16.mxu0 0
      %693 = vmatmul.mubr.bf16.gmra.mrb[0].mxu0 %v443
      %v694 = vpop.f32.mrb[0].mxu0
      %v695 = vadd.f32 %v298, %v694
      %v696 = vpop.f32.mrb[0].mxu0
      %v697 = vpop.f32.mrb[0].mxu0
      %v698 = vadd.f32 %v298, %v697
      %v699 = vpop.f32.mrb[0].mxu0
      %700 = vmatprep.mubr.bf16.mxu0 0
      %701 = vmatmul.mubr.bf16.gmra.mrb[0].mxu0 %v444
      %v702 = vpop.f32.mrb[0].mxu0
      %v703 = vadd.f32 %v298, %v702
      %v704 = vpop.f32.mrb[0].mxu0
      %v705 = vpop.f32.mrb[0].mxu0
      %v706 = vadd.f32 %v298, %v705
      %v707 = vpop.f32.mrb[0].mxu0
      %708 = vmatprep.mubr.bf16.mxu0 0
      %709 = vmatmul.mubr.bf16.gmra.mrb[0].mxu0 %v445
      %v710 = vpop.f32.mrb[0].mxu0
      %v711 = vadd.f32 %v298, %v710
      %v712 = vpop.f32.mrb[0].mxu0
      %v713 = vpop.f32.mrb[0].mxu0
      %v714 = vadd.f32 %v298, %v713
      %v715 = vpop.f32.mrb[0].mxu0
      %716 = vmatprep.mubr.bf16.mxu0 0
      %717 = vmatmul.mubr.bf16.gmra.mrb[0].mxu0 %v446
      %v718 = vpop.f32.mrb[0].mxu0
      %v719 = vadd.f32 %v298, %v718
      %v720 = vpop.f32.mrb[0].mxu0
      %v721 = vpop.f32.mrb[0].mxu0
      %v722 = vadd.f32 %v298, %v721
      %v723 = vpop.f32.mrb[0].mxu0
      %724 = vmatprep.mubr.bf16.mxu0 0
      %725 = vmatmul.mubr.bf16.gmra.mrb[0].mxu0 %v447
      %v726 = vpop.f32.mrb[0].mxu0
      %v727 = vadd.f32 %v298, %v726
      %v728 = vpop.f32.mrb[0].mxu0
      %v729 = vpop.f32.mrb[0].mxu0
      %v730 = vadd.f32 %v298, %v729
      %v731 = vpop.f32.mrb[0].mxu0
      %732 = vmatprep.mubr.bf16.mxu0 0
      %733 = vmatmul.mubr.bf16.gmra.mrb[0].mxu0 %v448
      %v734 = vpop.f32.mrb[0].mxu0
      %v735 = vadd.f32 %v298, %v734
      %v736 = vpop.f32.mrb[0].mxu0
      %v737 = vpop.f32.mrb[0].mxu0
      %v738 = vadd.f32 %v298, %v737
      %v739 = vpop.f32.mrb[0].mxu0
      %740 = vmatprep.mubr.bf16.mxu0 0
      %741 = vmatmul.mubr.bf16.gmra.mrb[0].mxu0 %v449
      %v742 = vpop.f32.mrb[0].mxu0
      %v743 = vadd.f32 %v298, %v742
      %v744 = vpop.f32.mrb[0].mxu0
      %v745 = vpop.f32.mrb[0].mxu0
      %v746 = vadd.f32 %v298, %v745
      %v747 = vpop.f32.mrb[0].mxu0
      %748 = vmatprep.mubr.bf16.mxu0 0
      %749 = vmatmul.mubr.bf16.gmra.mrb[0].mxu0 %v450
      %v750 = vpop.f32.mrb[0].mxu0
      %v751 = vadd.f32 %v298, %v750
      %v752 = vpop.f32.mrb[0].mxu0
      %v753 = vpop.f32.mrb[0].mxu0
      %v754 = vadd.f32 %v298, %v753
      %v755 = vpop.f32.mrb[0].mxu0
      %756 = vmatprep.mubr.bf16.mxu0 0
      %757 = vmatmul.mubr.bf16.gmra.mrb[0].mxu0 %v451
      %v758 = vpop.f32.mrb[0].mxu0
      %v759 = vadd.f32 %v298, %v758
      %v760 = vpop.f32.mrb[0].mxu0
      %v761 = vpop.f32.mrb[0].mxu0
      %v762 = vadd.f32 %v298, %v761
      %v763 = vpop.f32.mrb[0].mxu0
      %764 = vmatprep.mubr.bf16.mxu0 0
      %765 = vmatmul.mubr.bf16.gmra.mrb[0].mxu0 %v452
      %v766 = vpop.f32.mrb[0].mxu0
      %v767 = vadd.f32 %v298, %v766
      %v768 = vpop.f32.mrb[0].mxu0
      %v769 = vpop.f32.mrb[0].mxu0
      %v770 = vadd.f32 %v298, %v769
      %v771 = vpop.f32.mrb[0].mxu0
      %772 = vmatprep.mubr.bf16.mxu0 0
      %773 = vmatmul.mubr.bf16.gmra.mrb[0].mxu0 %v453
      %v774 = vpop.f32.mrb[0].mxu0
      %v775 = vadd.f32 %v298, %v774
      %v776 = vpop.f32.mrb[0].mxu0
      %v777 = vpop.f32.mrb[0].mxu0
      %v778 = vadd.f32 %v298, %v777
      %v779 = vpop.f32.mrb[0].mxu0
      %780 = vmatprep.mubr.bf16.mxu0 0
      %781 = vmatmul.mubr.bf16.gmra.mrb[0].mxu0 %v454
      %v782 = vpop.f32.mrb[0].mxu0
      %v783 = vadd.f32 %v298, %v782
      %v784 = vpop.f32.mrb[0].mxu0
      %v785 = vpop.f32.mrb[0].mxu0
      %v786 = vadd.f32 %v298, %v785
      %v787 = vpop.f32.mrb[0].mxu0
      %788 = vmatprep.mubr.bf16.mxu0 0
      %789 = vmatmul.mubr.bf16.gmra.mrb[0].mxu0 %v455
      %v790 = vpop.f32.mrb[0].mxu0
      %v791 = vadd.f32 %v298, %v790
      %v792 = vpop.f32.mrb[0].mxu0
      %v793 = vpop.f32.mrb[0].mxu0
      %v794 = vadd.f32 %v298, %v793
      %v795 = vpop.f32.mrb[0].mxu0
      %796 = vmatprep.mubr.bf16.mxu0 0
      %797 = vmatmul.mubr.bf16.gmra.mrb[0].mxu0 %v456
      %v798 = vpop.f32.mrb[0].mxu0
      %v799 = vadd.f32 %v298, %v798
      %v800 = vpop.f32.mrb[0].mxu0
      %v801 = vpop.f32.mrb[0].mxu0
      %v802 = vadd.f32 %v298, %v801
      %v803 = vpop.f32.mrb[0].mxu0
      %804 = vmatprep.mubr.bf16.mxu0 0
      %805 = vmatmul.mubr.bf16.gmra.mrb[0].mxu0 %v457
      %v806 = vpop.f32.mrb[0].mxu0
      %v807 = vadd.f32 %v298, %v806
      %v808 = vpop.f32.mrb[0].mxu0
      %v809 = vpop.f32.mrb[0].mxu0
      %v810 = vadd.f32 %v298, %v809
      %v811 = vpop.f32.mrb[0].mxu0
      %812 = vmatprep.mubr.bf16.mxu0 0
      %813 = vmatmul.mubr.bf16.gmra.mrb[0].mxu0 %v458
      %v814 = vpop.f32.mrb[0].mxu0
      %v815 = vadd.f32 %v298, %v814
      %v816 = vpop.f32.mrb[0].mxu0
      %v817 = vpop.f32.mrb[0].mxu0
      %v818 = vadd.f32 %v298, %v817
      %v819 = vpop.f32.mrb[0].mxu0
      %820 = vmatprep.mubr.bf16.mxu0 0
      %821 = vmatmul.mubr.bf16.gmra.mrb[0].mxu0 %v459
      %v822 = vpop.f32.mrb[0].mxu0
      %v823 = vadd.f32 %v298, %v822
      %v824 = vpop.f32.mrb[0].mxu0
      %v825 = vpop.f32.mrb[0].mxu0
      %v826 = vadd.f32 %v298, %v825
      %v827 = vpop.f32.mrb[0].mxu0
      %828 = vdwg.mxu0
      %v829 = vmax.f32 %v575, 0.0
      %v830 = vmax.f32 %v578, 0.0
      %v831 = vmax.f32 %v583, 0.0
      %v832 = vmax.f32 %v586, 0.0
      %v833 = vmax.f32 %v591, 0.0
      %v834 = vmax.f32 %v594, 0.0
      %v835 = vmax.f32 %v599, 0.0
      %v836 = vmax.f32 %v602, 0.0
      %v837 = vmax.f32 %v607, 0.0
      %v838 = vmax.f32 %v610, 0.0
      %v839 = vmax.f32 %v615, 0.0
      %v840 = vmax.f32 %v618, 0.0
      %v841 = vmax.f32 %v623, 0.0
      %v842 = vmax.f32 %v626, 0.0
      %v843 = vmax.f32 %v631, 0.0
      %v844 = vmax.f32 %v634, 0.0
      %v845 = vmax.f32 %v639, 0.0
      %v846 = vmax.f32 %v642, 0.0
      %v847 = vmax.f32 %v647, 0.0
      %v848 = vmax.f32 %v650, 0.0
      %v849 = vmax.f32 %v655, 0.0
      %v850 = vmax.f32 %v658, 0.0
      %v851 = vmax.f32 %v663, 0.0
      %v852 = vmax.f32 %v666, 0.0
      %v853 = vmax.f32 %v671, 0.0
      %v854 = vmax.f32 %v674, 0.0
      %v855 = vmax.f32 %v679, 0.0
      %v856 = vmax.f32 %v682, 0.0
      %v857 = vmax.f32 %v687, 0.0
      %v858 = vmax.f32 %v690, 0.0
      %v859 = vmax.f32 %v695, 0.0
      %v860 = vmax.f32 %v698, 0.0
      %v861 = vmax.f32 %v703, 0.0
      %v862 = vmax.f32 %v706, 0.0
      %v863 = vmax.f32 %v711, 0.0
      %v864 = vmax.f32 %v714, 0.0
      %v865 = vmax.f32 %v719, 0.0
      %v866 = vmax.f32 %v722, 0.0
      %v867 = vmax.f32 %v727, 0.0
      %v868 = vmax.f32 %v730, 0.0
      %v869 = vmax.f32 %v735, 0.0
      %v870 = vmax.f32 %v738, 0.0
      %v871 = vmax.f32 %v743, 0.0
      %v872 = vmax.f32 %v746, 0.0
      %v873 = vmax.f32 %v751, 0.0
      %v874 = vmax.f32 %v754, 0.0
      %v875 = vmax.f32 %v759, 0.0
      %v876 = vmax.f32 %v762, 0.0
      %v877 = vmax.f32 %v767, 0.0
      %v878 = vmax.f32 %v770, 0.0
      %v879 = vmax.f32 %v775, 0.0
      %v880 = vmax.f32 %v778, 0.0
      %v881 = vmax.f32 %v783, 0.0
      %v882 = vmax.f32 %v786, 0.0
      %v883 = vmax.f32 %v791, 0.0
      %v884 = vmax.f32 %v794, 0.0
      %v885 = vmax.f32 %v799, 0.0
      %v886 = vmax.f32 %v802, 0.0
      %v887 = vmax.f32 %v807, 0.0
      %v888 = vmax.f32 %v810, 0.0
      %v889 = vmax.f32 %v815, 0.0
      %v890 = vmax.f32 %v818, 0.0
      %v891 = vmax.f32 %v823, 0.0
      %v892 = vmax.f32 %v826, 0.0
      %893 = vst [vmem:[%s206] sm:$0xff] %v829
      %894 = vst [vmem:[%s206 + $0x8] sm:$0xff] %v830
      %895 = vst [vmem:[%s206 + $0x10] sm:$0xff] %v831
      %896 = vst [vmem:[%s206 + $0x18] sm:$0xff] %v832
      %897 = vst [vmem:[%s206 + $0x20] sm:$0xff] %v833
      %898 = vst [vmem:[%s206 + $0x28] sm:$0xff] %v834
      %899 = vst [vmem:[%s206 + $0x30] sm:$0xff] %v835
      %900 = vst [vmem:[%s206 + $0x38] sm:$0xff] %v836
      %901 = vst [vmem:[%s206 + $0x40] sm:$0xff] %v837
      %902 = vst [vmem:[%s206 + $0x48] sm:$0xff] %v838
      %903 = vst [vmem:[%s206 + $0x50] sm:$0xff] %v839
      %904 = vst [vmem:[%s206 + $0x58] sm:$0xff] %v840
      %905 = vst [vmem:[%s206 + $0x60] sm:$0xff] %v841
      %906 = vst [vmem:[%s206 + $0x68] sm:$0xff] %v842
      %907 = vst [vmem:[%s206 + $0x70] sm:$0xff] %v843
      %908 = vst [vmem:[%s206 + $0x78] sm:$0xff] %v844
      %909 = vst [vmem:[%s206 + $0x80] sm:$0xff] %v845
      %910 = vst [vmem:[%s206 + $0x88] sm:$0xff] %v846
      %911 = vst [vmem:[%s206 + $0x90] sm:$0xff] %v847
      %912 = vst [vmem:[%s206 + $0x98] sm:$0xff] %v848
      %913 = vst [vmem:[%s206 + $0xa0] sm:$0xff] %v849
      %914 = vst [vmem:[%s206 + $0xa8] sm:$0xff] %v850
      %915 = vst [vmem:[%s206 + $0xb0] sm:$0xff] %v851
      %916 = vst [vmem:[%s206 + $0xb8] sm:$0xff] %v852
      %917 = vst [vmem:[%s206 + $0xc0] sm:$0xff] %v853
      %918 = vst [vmem:[%s206 + $0xc8] sm:$0xff] %v854
      %919 = vst [vmem:[%s206 + $0xd0] sm:$0xff] %v855
      %920 = vst [vmem:[%s206 + $0xd8] sm:$0xff] %v856
      %921 = vst [vmem:[%s206 + $0xe0] sm:$0xff] %v857
      %922 = vst [vmem:[%s206 + $0xe8] sm:$0xff] %v858
      %923 = vst [vmem:[%s206 + $0xf0] sm:$0xff] %v859
      %924 = vst [vmem:[%s206 + $0xf8] sm:$0xff] %v860
      %925 = vst [vmem:[%s206 + $0x100] sm:$0xff] %v861
      %926 = vst [vmem:[%s206 + $0x108] sm:$0xff] %v862
      %927 = vst [vmem:[%s206 + $0x110] sm:$0xff] %v863
      %928 = vst [vmem:[%s206 + $0x118] sm:$0xff] %v864
      %929 = vst [vmem:[%s206 + $0x120] sm:$0xff] %v865
      %930 = vst [vmem:[%s206 + $0x128] sm:$0xff] %v866
      %931 = vst [vmem:[%s206 + $0x130] sm:$0xff] %v867
      %932 = vst [vmem:[%s206 + $0x138] sm:$0xff] %v868
      %933 = vst [vmem:[%s206 + $0x140] sm:$0xff] %v869
      %934 = vst [vmem:[%s206 + $0x148] sm:$0xff] %v870
      %935 = vst [vmem:[%s206 + $0x150] sm:$0xff] %v871
      %936 = vst [vmem:[%s206 + $0x158] sm:$0xff] %v872
      %937 = vst [vmem:[%s206 + $0x160] sm:$0xff] %v873
      %938 = vst [vmem:[%s206 + $0x168] sm:$0xff] %v874
      %939 = vst [vmem:[%s206 + $0x170] sm:$0xff] %v875
      %940 = vst [vmem:[%s206 + $0x178] sm:$0xff] %v876
      %941 = vst [vmem:[%s206 + $0x180] sm:$0xff] %v877
      %942 = vst [vmem:[%s206 + $0x188] sm:$0xff] %v878
      %943 = vst [vmem:[%s206 + $0x190] sm:$0xff] %v879
      %944 = vst [vmem:[%s206 + $0x198] sm:$0xff] %v880
      %945 = vst [vmem:[%s206 + $0x1a0] sm:$0xff] %v881
      %946 = vst [vmem:[%s206 + $0x1a8] sm:$0xff] %v882
      %947 = vst [vmem:[%s206 + $0x1b0] sm:$0xff] %v883
      %948 = vst [vmem:[%s206 + $0x1b8] sm:$0xff] %v884
      %949 = vst [vmem:[%s206 + $0x1c0] sm:$0xff] %v885
      %950 = vst [vmem:[%s206 + $0x1c8] sm:$0xff] %v886
      %951 = vst [vmem:[%s206 + $0x1d0] sm:$0xff] %v887
      %952 = vst [vmem:[%s206 + $0x1d8] sm:$0xff] %v888
      %953 = vst [vmem:[%s206 + $0x1e0] sm:$0xff] %v889
      %954 = vst [vmem:[%s206 + $0x1e8] sm:$0xff] %v890
      %955 = vst [vmem:[%s206 + $0x1f0] sm:$0xff] %v891
      %956 = vst [vmem:[%s206 + $0x1f8] sm:$0xff] %v892
      %v957 = vadd.f32 %v829, %v830
      %v958 = vadd.f32 %v957, %v831
      %v959 = vadd.f32 %v958, %v832
      %v960 = vadd.f32 %v959, %v833
      %v961 = vadd.f32 %v960, %v834
      %v962 = vadd.f32 %v961, %v835
      %v963 = vadd.f32 %v962, %v836
      %v964 = vadd.f32 %v963, %v837
      %v965 = vadd.f32 %v964, %v838
      %v966 = vadd.f32 %v965, %v839
      %v967 = vadd.f32 %v966, %v840
      %v968 = vadd.f32 %v967, %v841
      %v969 = vadd.f32 %v968, %v842
      %v970 = vadd.f32 %v969, %v843
      %v971 = vadd.f32 %v970, %v844
      %v972 = vadd.f32 %v971, %v845
      %v973 = vadd.f32 %v972, %v846
      %v974 = vadd.f32 %v973, %v847
      %v975 = vadd.f32 %v974, %v848
      %v976 = vadd.f32 %v975, %v849
      %v977 = vadd.f32 %v976, %v850
      %v978 = vadd.f32 %v977, %v851
      %v979 = vadd.f32 %v978, %v852
      %v980 = vadd.f32 %v979, %v853
      %v981 = vadd.f32 %v980, %v854
      %v982 = vadd.f32 %v981, %v855
      %v983 = vadd.f32 %v982, %v856
      %v984 = vadd.f32 %v983, %v857
      %v985 = vadd.f32 %v984, %v858
      %v986 = vadd.f32 %v985, %v859
      %v987 = vadd.f32 %v986, %v860
      %v988 = vadd.f32 %v987, %v861
      %v989 = vadd.f32 %v988, %v862
      %v990 = vadd.f32 %v989, %v863
      %v991 = vadd.f32 %v990, %v864
      %v992 = vadd.f32 %v991, %v865
      %v993 = vadd.f32 %v992, %v866
      %v994 = vadd.f32 %v993, %v867
      %v995 = vadd.f32 %v994, %v868
      %v996 = vadd.f32 %v995, %v869
      %v997 = vadd.f32 %v996, %v870
      %v998 = vadd.f32 %v997, %v871
      %v999 = vadd.f32 %v998, %v872
      %v1000 = vadd.f32 %v999, %v873
      %v1001 = vadd.f32 %v1000, %v874
      %v1002 = vadd.f32 %v1001, %v875
      %v1003 = vadd.f32 %v1002, %v876
      %v1004 = vadd.f32 %v1003, %v877
      %v1005 = vadd.f32 %v1004, %v878
      %v1006 = vadd.f32 %v1005, %v879
      %v1007 = vadd.f32 %v1006, %v880
      %v1008 = vadd.f32 %v1007, %v881
      %v1009 = vadd.f32 %v1008, %v882
      %v1010 = vadd.f32 %v1009, %v883
      %v1011 = vadd.f32 %v1010, %v884
      %v1012 = vadd.f32 %v1011, %v885
      %v1013 = vadd.f32 %v1012, %v886
      %v1014 = vadd.f32 %v1013, %v887
      %v1015 = vadd.f32 %v1014, %v888
      %v1016 = vadd.f32 %v1015, %v889
      %v1017 = vadd.f32 %v1016, %v890
      %v1018 = vadd.f32 %v1017, %v891
      %v1019 = vadd.f32 %v1018, %v892
      %v1020 = vrot.slane %v1019, 4
      %v1021 = vadd.f32 %v1019, %v1020
      %v1022 = vrot.slane %v1021, 2
      %v1023 = vadd.f32 %v1021, %v1022
      %v1024 = vrot.slane %v1023, 1
      %v1025 = vadd.f32 %v1023, %v1024
      %v1026 = vmul.f32 %v829, %v829
      %v1027 = vmul.f32 %v830, %v830
      %v1028 = vmul.f32 %v831, %v831
      %v1029 = vmul.f32 %v832, %v832
      %v1030 = vmul.f32 %v833, %v833
      %v1031 = vmul.f32 %v834, %v834
      %v1032 = vmul.f32 %v835, %v835
      %v1033 = vmul.f32 %v836, %v836
      %v1034 = vmul.f32 %v837, %v837
      %v1035 = vmul.f32 %v838, %v838
      %v1036 = vmul.f32 %v839, %v839
      %v1037 = vmul.f32 %v840, %v840
      %v1038 = vmul.f32 %v841, %v841
      %v1039 = vmul.f32 %v842, %v842
      %v1040 = vmul.f32 %v843, %v843
      %v1041 = vmul.f32 %v844, %v844
      %v1042 = vmul.f32 %v845, %v845
      %v1043 = vmul.f32 %v846, %v846
      %v1044 = vmul.f32 %v847, %v847
      %v1045 = vmul.f32 %v848, %v848
      %v1046 = vmul.f32 %v849, %v849
      %v1047 = vmul.f32 %v850, %v850
      %v1048 = vmul.f32 %v851, %v851
      %v1049 = vmul.f32 %v852, %v852
      %v1050 = vmul.f32 %v853, %v853
      %v1051 = vmul.f32 %v854, %v854
      %v1052 = vmul.f32 %v855, %v855
      %v1053 = vmul.f32 %v856, %v856
      %v1054 = vmul.f32 %v857, %v857
      %v1055 = vmul.f32 %v858, %v858
      %v1056 = vmul.f32 %v859, %v859
      %v1057 = vmul.f32 %v860, %v860
      %v1058 = vmul.f32 %v861, %v861
      %v1059 = vmul.f32 %v862, %v862
      %v1060 = vmul.f32 %v863, %v863
      %v1061 = vmul.f32 %v864, %v864
      %v1062 = vmul.f32 %v865, %v865
      %v1063 = vmul.f32 %v866, %v866
      %v1064 = vmul.f32 %v867, %v867
      %v1065 = vmul.f32 %v868, %v868
      %v1066 = vmul.f32 %v869, %v869
      %v1067 = vmul.f32 %v870, %v870
      %v1068 = vmul.f32 %v871, %v871
      %v1069 = vmul.f32 %v872, %v872
      %v1070 = vmul.f32 %v873, %v873
      %v1071 = vmul.f32 %v874, %v874
      %v1072 = vmul.f32 %v875, %v875
      %v1073 = vmul.f32 %v876, %v876
      %v1074 = vmul.f32 %v877, %v877
      %v1075 = vmul.f32 %v878, %v878
      %v1076 = vmul.f32 %v879, %v879
      %v1077 = vmul.f32 %v880, %v880
      %v1078 = vmul.f32 %v881, %v881
      %v1079 = vmul.f32 %v882, %v882
      %v1080 = vmul.f32 %v883, %v883
      %v1081 = vmul.f32 %v884, %v884
      %v1082 = vmul.f32 %v885, %v885
      %v1083 = vmul.f32 %v886, %v886
      %v1084 = vmul.f32 %v887, %v887
      %v1085 = vmul.f32 %v888, %v888
      %v1086 = vmul.f32 %v889, %v889
      %v1087 = vmul.f32 %v890, %v890
      %v1088 = vmul.f32 %v891, %v891
      %v1089 = vmul.f32 %v892, %v892
      %v1090 = vadd.f32 %v1026, %v1027
      %v1091 = vadd.f32 %v1090, %v1028
      %v1092 = vadd.f32 %v1091, %v1029
      %v1093 = vadd.f32 %v1092, %v1030
      %v1094 = vadd.f32 %v1093, %v1031
      %v1095 = vadd.f32 %v1094, %v1032
      %v1096 = vadd.f32 %v1095, %v1033
      %v1097 = vadd.f32 %v1096, %v1034
      %v1098 = vadd.f32 %v1097, %v1035
      %v1099 = vadd.f32 %v1098, %v1036
      %v1100 = vadd.f32 %v1099, %v1037
      %v1101 = vadd.f32 %v1100, %v1038
      %v1102 = vadd.f32 %v1101, %v1039
      %v1103 = vadd.f32 %v1102, %v1040
      %v1104 = vadd.f32 %v1103, %v1041
      %v1105 = vadd.f32 %v1104, %v1042
      %v1106 = vadd.f32 %v1105, %v1043
      %v1107 = vadd.f32 %v1106, %v1044
      %v1108 = vadd.f32 %v1107, %v1045
      %v1109 = vadd.f32 %v1108, %v1046
      %v1110 = vadd.f32 %v1109, %v1047
      %v1111 = vadd.f32 %v1110, %v1048
      %v1112 = vadd.f32 %v1111, %v1049
      %v1113 = vadd.f32 %v1112, %v1050
      %v1114 = vadd.f32 %v1113, %v1051
      %v1115 = vadd.f32 %v1114, %v1052
      %v1116 = vadd.f32 %v1115, %v1053
      %v1117 = vadd.f32 %v1116, %v1054
      %v1118 = vadd.f32 %v1117, %v1055
      %v1119 = vadd.f32 %v1118, %v1056
      %v1120 = vadd.f32 %v1119, %v1057
      %v1121 = vadd.f32 %v1120, %v1058
      %v1122 = vadd.f32 %v1121, %v1059
      %v1123 = vadd.f32 %v1122, %v1060
      %v1124 = vadd.f32 %v1123, %v1061
      %v1125 = vadd.f32 %v1124, %v1062
      %v1126 = vadd.f32 %v1125, %v1063
      %v1127 = vadd.f32 %v1126, %v1064
      %v1128 = vadd.f32 %v1127, %v1065
      %v1129 = vadd.f32 %v1128, %v1066
      %v1130 = vadd.f32 %v1129, %v1067
      %v1131 = vadd.f32 %v1130, %v1068
      %v1132 = vadd.f32 %v1131, %v1069
      %v1133 = vadd.f32 %v1132, %v1070
      %v1134 = vadd.f32 %v1133, %v1071
      %v1135 = vadd.f32 %v1134, %v1072
      %v1136 = vadd.f32 %v1135, %v1073
      %v1137 = vadd.f32 %v1136, %v1074
      %v1138 = vadd.f32 %v1137, %v1075
      %v1139 = vadd.f32 %v1138, %v1076
      %v1140 = vadd.f32 %v1139, %v1077
      %v1141 = vadd.f32 %v1140, %v1078
      %v1142 = vadd.f32 %v1141, %v1079
      %v1143 = vadd.f32 %v1142, %v1080
      %v1144 = vadd.f32 %v1143, %v1081
      %v1145 = vadd.f32 %v1144, %v1082
      %v1146 = vadd.f32 %v1145, %v1083
      %v1147 = vadd.f32 %v1146, %v1084
      %v1148 = vadd.f32 %v1147, %v1085
      %v1149 = vadd.f32 %v1148, %v1086
      %v1150 = vadd.f32 %v1149, %v1087
      %v1151 = vadd.f32 %v1150, %v1088
      %v1152 = vadd.f32 %v1151, %v1089
      %v1153 = vrot.slane %v1152, 4
      %v1154 = vadd.f32 %v1152, %v1153
      %v1155 = vrot.slane %v1154, 2
      %v1156 = vadd.f32 %v1154, %v1155
      %v1157 = vrot.slane %v1156, 1
      %v1158 = vadd.f32 %v1156, %v1157
      %vm1159 = vcmask 1040384
      %v1160 = vsel %vm1159, %v1025, %v1158
      %1161 = vst [vmem:[%s211] sm:$0x3] %v1160
      %s1162 = smul.u32 64, %s16
      %p1163 = scmp.lt.s32.totalorder %s1162, 255
      %s1164 = scalar_select %p1163, %s1162, 255
      %s1165 = smul.addr %s1164, 8
      %s1166 = scalar_lea.vmem %s3, %s1165
      %p1167 = scmp.lt.s32.totalorder %s16, 3
      %s1168 = scalar_select %p1167, %s16, 3
      %s1169 = smul.addr %s1168, 2
      %s1170 = scalar_lea.vmem %s4, %s1169
      // Predicated region
      $region33: #{forward.5} parent=31 // pred_check
        %p1171 = pneg %p102
      $region34: #{forward.5} parent=31 // pred_check_branch
        %1173 = sbr.rel (%p1171) target = $region36
      $region35: #{forward.5} parent=31 // pred_region
        %s1174 = smul.u32 64, %s16
      $region36: #{forward.5} parent=31 // pred_fallthru
        _
      // Predicated region
      $region37: #{forward.5} parent=31 // pred_check
        %p1175 = pneg %p128
      $region38: #{forward.5} parent=31 // pred_check_branch
        %1177 = sbr.rel (%p1175) target = $region40
      $region39: #{forward.5} parent=31 // pred_region
        _
      $region40: #{forward.5} parent=31 // pred_fallthru
        _
    $region32: #{forward.5} parent=5 // pred_fallthru
      _
    %p1178 = scmp.le.s32.totalorder 2, %s11
    // Predicated region
    $region41: #{forward.5} parent=5 // pred_check
      %p1179 = pneg %p1178
    $region42: #{forward.5} parent=5 // pred_check_branch
      %1181 = sbr.rel (%p1179) target = $region44
    $region43: #{forward.5} parent=5 // pred_region
      %s1182 = ssub.s32 %s11, 2
      // Predicated region
      $region45: #{forward.5} parent=43 // pred_check
        %p1183 = pneg %p108
      $region46: #{forward.5} parent=43 // pred_check_branch
        %1185 = sbr.rel (%p1183) target = $region48
      $region47: #{forward.5} parent=43 // pred_region
        %s1186 = smul.u32 64, %s17
        %p1187 = scmp.lt.s32.totalorder %s1186, 255
        %s1188 = scalar_select %p1187, %s1186, 255
        %s1189 = smul.addr %s1188, 8
        %s1190 = scalar_lea.vmem %s3, %s1189
      $region48: #{forward.5} parent=43 // pred_fallthru
        _
      // Predicated region
      $region49: #{forward.5} parent=43 // pred_check
        %p1191 = pneg %p134
      $region50: #{forward.5} parent=43 // pred_check_branch
        %1193 = sbr.rel (%p1191) target = $region52
      $region51: #{forward.5} parent=43 // pred_region
        %p1194 = scmp.lt.s32.totalorder %s17, 3
        %s1195 = scalar_select %p1194, %s17, 3
        %s1196 = smul.addr %s1195, 2
        %s1197 = scalar_lea.vmem %s4, %s1196
      $region52: #{forward.5} parent=43 // pred_fallthru
        _
    $region44: #{forward.5} parent=5 // pred_fallthru
      _
  $region6: #{forward.5} parent=0 // loop_footer
    %s15 = sadd.s32 1, %s11
  $region7: #{forward.5} parent=0 // loop_footer_branch
    %10 = sbr.rel target = $region3
  $region8: #{forward.5} parent=0 // loop_exit
    _

// kernel: forward.7
$region0: #{forward.7}
  #allocation0 [shape = 'u32[]', space=smem, size = 0x4, offset = 0x4, fixed_abs, tag = 'smem constant byte address 0x4 - core index']
  #allocation1 [shape = 'u32[144,128]{1,0:T(1,128)}', space=vmem, size = 0x12000, scoped, tag = 'internal scratch']
  %s0 = inlined_call_operand.vmem [shape: bf16[512,1664], index: 0, kind: input, shape index: {}]
  %s1 = inlined_call_operand.vmem [shape: bf16[1664,128], index: 1, kind: input, shape index: {}]
  %s2 = inlined_call_operand.vmem [shape: f32[1,128], index: 2, kind: input, shape index: {}]
  %s3 = inlined_call_operand.vmem [shape: f32[512,128], index: 3, kind: output, shape index: {0}]
  %s4 = inlined_call_operand.vmem [shape: f32[2,2,128], index: 4, kind: output, shape index: {1}]
  %5 = xla_tuple %s3, %s4
  %s6 = sld [smem:[#allocation0]]
  $region53: #{forward.7} parent=0
    _
  %s8 = ssub.s32 1, %s6
  %s9 = scalar_select 0, %s8, %s6
  loop: start=0, step=1, limit=4
  $region2: #{forward.7} parent=0 // loop_pre_header
    _
  $region3: #{forward.7} parent=0 // loop_header
    %s11 = sphi 0, %s15
    %p12 = scmp.ge.s32.totalorder %s11, 4
    %s21 = sphi 0, %s23
    %s24 = sphi 0, %s21
    %s25 = sphi 0, %s24
    %s41 = sphi 0, %s25
    %s45 = sphi 0, %s45
    %s47 = sphi 0, %s45
    %s48 = sphi 0, %s47
    %s62 = sphi 0, %s48
    %s66 = sphi 0, %s66
    %s68 = sphi 0, %s66
    %s69 = sphi 0, %s68
    %s83 = sphi 0, %s69
    %s89 = sphi 0, %s91
    %s92 = sphi 0, %s89
    %s93 = sphi 0, %s92
    %s109 = sphi 0, %s93
    %s115 = sphi 0, %s117
    %s118 = sphi 0, %s115
    %s119 = sphi 0, %s118
    %s135 = sphi 0, %s119
  $region4: #{forward.7} parent=0 // loop_header_branch
    %14 = sbr.rel (%p12) target = $region8
  $region5: #{forward.7} parent=0 // loop_body
    %s16 = ssub.s32 %s11, 1
    %s17 = ssub.s32 %s11, 2
    %s18 = sadd.s32 %s11, 1
    %s19 = ssub.s32 %s11, %s18
    %p20 = scmp.eq.s32.totalorder %s19, 0
    %s22 = sadd.s32 %s21, 1
    %s23 = scalar_select %p20, %s21, %s22
    %p26 = pneg %p20
    %p27 = scmp.eq.s32.totalorder %s11, 1
    %p28 = por %p26, %p27
    %p29 = scmp.ne.s32.totalorder %s21, %s24
    %p30 = scmp.eq.s32.totalorder %s11, 0
    %p31 = por %p29, %p30
    %p32 = scmp.ne.s32.totalorder %s21, %s24
    %p33 = scmp.eq.s32.totalorder %s16, 1
    %p34 = por %p32, %p33
    %p35 = scmp.ne.s32.totalorder %s24, %s25
    %p36 = scmp.eq.s32.totalorder %s16, 0
    %p37 = por %p35, %p36
    %p38 = scmp.ne.s32.totalorder %s24, %s25
    %p39 = scmp.eq.s32.totalorder %s17, 1
    %p40 = por %p38, %p39
    %p42 = scmp.ne.s32.totalorder %s25, %s41
    %p43 = scmp.eq.s32.totalorder %s17, 0
    %p44 = por %p42, %p43
    %s46 = sadd.s32 %s45, 1
    %p49 = scmp.eq.s32.totalorder %s11, 1
    %p50 = scmp.ne.s32.totalorder %s45, %s47
    %p51 = scmp.eq.s32.totalorder %s11, 0
    %p52 = por %p50, %p51
    %p53 = scmp.ne.s32.totalorder %s45, %s47
    %p54 = scmp.eq.s32.totalorder %s16, 1
    %p55 = por %p53, %p54
    %p56 = scmp.ne.s32.totalorder %s47, %s48
    %p57 = scmp.eq.s32.totalorder %s16, 0
    %p58 = por %p56, %p57
    %p59 = scmp.ne.s32.totalorder %s47, %s48
    %p60 = scmp.eq.s32.totalorder %s17, 1
    %p61 = por %p59, %p60
    %p63 = scmp.ne.s32.totalorder %s48, %s62
    %p64 = scmp.eq.s32.totalorder %s17, 0
    %p65 = por %p63, %p64
    %s67 = sadd.s32 %s66, 1
    %p70 = scmp.eq.s32.totalorder %s11, 1
    %p71 = scmp.ne.s32.totalorder %s66, %s68
    %p72 = scmp.eq.s32.totalorder %s11, 0
    %p73 = por %p71, %p72
    %p74 = scmp.ne.s32.totalorder %s66, %s68
    %p75 = scmp.eq.s32.totalorder %s16, 1
    %p76 = por %p74, %p75
    %p77 = scmp.ne.s32.totalorder %s68, %s69
    %p78 = scmp.eq.s32.totalorder %s16, 0
    %p79 = por %p77, %p78
    %p80 = scmp.ne.s32.totalorder %s68, %s69
    %p81 = scmp.eq.s32.totalorder %s17, 1
    %p82 = por %p80, %p81
    %p84 = scmp.ne.s32.totalorder %s69, %s83
    %p85 = scmp.eq.s32.totalorder %s17, 0
    %p86 = por %p84, %p85
    %s87 = ssub.s32 %s11, %s18
    %p88 = scmp.eq.s32.totalorder %s87, 0
    %s90 = sadd.s32 %s89, 1
    %s91 = scalar_select %p88, %s89, %s90
    %p94 = pneg %p88
    %p95 = scmp.eq.s32.totalorder %s11, 1
    %p96 = por %p94, %p95
    %p97 = scmp.ne.s32.totalorder %s89, %s92
    %p98 = scmp.eq.s32.totalorder %s11, 0
    %p99 = por %p97, %p98
    %p100 = scmp.ne.s32.totalorder %s89, %s92
    %p101 = scmp.eq.s32.totalorder %s16, 1
    %p102 = por %p100, %p101
    %p103 = scmp.ne.s32.totalorder %s92, %s93
    %p104 = scmp.eq.s32.totalorder %s16, 0
    %p105 = por %p103, %p104
    %p106 = scmp.ne.s32.totalorder %s92, %s93
    %p107 = scmp.eq.s32.totalorder %s17, 1
    %p108 = por %p106, %p107
    %p110 = scmp.ne.s32.totalorder %s93, %s109
    %p111 = scmp.eq.s32.totalorder %s17, 0
    %p112 = por %p110, %p111
    %s113 = ssub.s32 %s11, %s18
    %p114 = scmp.eq.s32.totalorder %s113, 0
    %s116 = sadd.s32 %s115, 1
    %s117 = scalar_select %p114, %s115, %s116
    %p120 = pneg %p114
    %p121 = scmp.eq.s32.totalorder %s11, 1
    %p122 = por %p120, %p121
    %p123 = scmp.ne.s32.totalorder %s115, %s118
    %p124 = scmp.eq.s32.totalorder %s11, 0
    %p125 = por %p123, %p124
    %p126 = scmp.ne.s32.totalorder %s115, %s118
    %p127 = scmp.eq.s32.totalorder %s16, 1
    %p128 = por %p126, %p127
    %p129 = scmp.ne.s32.totalorder %s118, %s119
    %p130 = scmp.eq.s32.totalorder %s16, 0
    %p131 = por %p129, %p130
    %p132 = scmp.ne.s32.totalorder %s118, %s119
    %p133 = scmp.eq.s32.totalorder %s17, 1
    %p134 = por %p132, %p133
    %p136 = scmp.ne.s32.totalorder %s119, %s135
    %p137 = scmp.eq.s32.totalorder %s17, 0
    %p138 = por %p136, %p137
    %p139 = scmp.le.s32.totalorder 1, %s11
    %p140 = scmp.lt.s32.totalorder %s11, 3
    %p141 = pnand %p139, %p140
    %p142 = pneg %p141
    // Predicated region
    $region9: #{forward.7} parent=5 // pred_check
      _
    $region10: #{forward.7} parent=5 // pred_check_branch
      %144 = sbr.rel (%p141) target = $region12
    $region11: #{forward.7} parent=5 // pred_region
      %s145 = ssub.s32 %s11, 1
      // Predicated region
      $region13: #{forward.7} parent=11 // pred_check
        %p146 = pneg %p58
      $region14: #{forward.7} parent=11 // pred_check_branch
        %148 = sbr.rel (%p146) target = $region16
      $region15: #{forward.7} parent=11 // pred_region
        _
      $region16: #{forward.7} parent=11 // pred_fallthru
        _
      // Predicated region
      $region17: #{forward.7} parent=11 // pred_check
        %p149 = pneg %p79
      $region18: #{forward.7} parent=11 // pred_check_branch
        %151 = sbr.rel (%p149) target = $region20
      $region19: #{forward.7} parent=11 // pred_region
        _
      $region20: #{forward.7} parent=11 // pred_fallthru
        _
    $region12: #{forward.7} parent=5 // pred_fallthru
      _
    %p152 = scmp.lt.s32.totalorder %s11, 2
    // Predicated region
    $region21: #{forward.7} parent=5 // pred_check
      %p153 = pneg %p152
    $region22: #{forward.7} parent=5 // pred_check_branch
      %155 = sbr.rel (%p153) target = $region24
    $region23: #{forward.7} parent=5 // pred_region
      // Predicated region
      $region25: #{forward.7} parent=23 // pred_check
        %p156 = pneg %p31
      $region26: #{forward.7} parent=23 // pred_check_branch
        %158 = sbr.rel (%p156) target = $region28
      $region27: #{forward.7} parent=23 // pred_region
        %s159 = smul.u32 32, %s11
        %p160 = scmp.lt.s32.totalorder %s159, 63
        %s161 = scalar_select %p160, %s159, 63
        %s162 = smul.addr %s161, 13
        %s163 = smul.addr %s162, 4
        %s164 = scalar_lea.vmem %s0, %s163
        %s165 = smul.u32 32, %s11
      $region28: #{forward.7} parent=23 // pred_fallthru
        _
    $region24: #{forward.7} parent=5 // pred_fallthru
      _
    %p166 = scmp.le.s32.totalorder 1, %s11
    %p167 = scmp.lt.s32.totalorder %s11, 3
    %p168 = pnand %p166, %p167
    %p169 = pneg %p168
    // Predicated region
    $region29: #{forward.7} parent=5 // pred_check
      _
    $region30: #{forward.7} parent=5 // pred_check_branch
      %171 = sbr.rel (%p168) target = $region32
    $region31: #{forward.7} parent=5 // pred_region
      %s172 = ssub.s32 %s11, 1
      %s173 = smul.u32 32, %s16
      %p174 = scmp.lt.s32.totalorder %s173, 63
      %s175 = scalar_select %p174, %s173, 63
      %s176 = smul.addr %s175, 13
      %s177 = smul.addr %s176, 4
      %s178 = scalar_lea.vmem %s0, %s177
      %p179 = pneg %p37
      %p180 = pneg %p34
      %p181 = pneg %p58
      %p182 = pneg %p55
      %p183 = pneg %p79
      %p184 = pneg %p76
      %p185 = pneg %p105
      %p186 = pneg %p102
      %s187 = smul.u32 32, %s16
      %p188 = scmp.lt.s32.totalorder %s187, 63
      %s189 = scalar_select %p188, %s187, 63
      %s190 = smul.addr %s189, 8
      %s191 = scalar_lea.vmem %s3, %s190
      %p192 = pneg %p131
      %p193 = pneg %p128
      %p194 = scmp.lt.s32.totalorder %s16, 1
      %s195 = scalar_select %p194, %s16, 1
      %s196 = smul.addr %s195, 2
      %s197 = scalar_lea.vmem %s4, %s196
      %s198 = smul.u32 32, %s16
      %p199 = scmp.lt.s32.totalorder %s198, 63
      %s200 = scalar_select %p199, %s198, 63
      %s201 = smul.addr %s200, 13
      %s202 = smul.addr %s201, 4
      %s203 = scalar_lea.vmem %s0, %s202
      %s204 = smul.u32 32, %s16
      %s205 = smul.u32 32, %s16
      %p206 = scmp.lt.s32.totalorder %s205, 63
      %s207 = scalar_select %p206, %s205, 63
      %s208 = smul.addr %s207, 8
      %s209 = scalar_lea.vmem %s3, %s208
      %s210 = smul.u32 32, %s16
      %p211 = scmp.lt.s32.totalorder %s16, 1
      %s212 = scalar_select %p211, %s16, 1
      %s213 = smul.addr %s212, 2
      %s214 = scalar_lea.vmem %s4, %s213
      %v216 = vld [vmem:[%s203] sm:$0xff]
      %v217 = vld [vmem:[%s203 + $0x8] sm:$0xff]
      %v218 = vld [vmem:[%s203 + $0x10] sm:$0xff]
      %v219 = vld [vmem:[%s203 + $0x18] sm:$0xff]
      %v220 = vld [vmem:[%s203 + $0x20] sm:$0xff]
      %v221 = vld [vmem:[%s203 + $0x28] sm:$0xff]
      %v222 = vld [vmem:[%s203 + $0x30] sm:$0xf]
      %v223 = vld [vmem:[%s203 + $0x34] sm:$0xff]
      %v224 = vld [vmem:[%s203 + $0x3c] sm:$0xff]
      %v225 = vld [vmem:[%s203 + $0x44] sm:$0xff]
      %v226 = vld [vmem:[%s203 + $0x4c] sm:$0xff]
      %v227 = vld [vmem:[%s203 + $0x54] sm:$0xff]
      %v228 = vld [vmem:[%s203 + $0x5c] sm:$0xff]
      %v229 = vld [vmem:[%s203 + $0x64] sm:$0xf]
      %v230 = vld [vmem:[%s203 + $0x68] sm:$0xff]
      %v231 = vld [vmem:[%s203 + $0x70] sm:$0xff]
      %v232 = vld [vmem:[%s203 + $0x78] sm:$0xff]
      %v233 = vld [vmem:[%s203 + $0x80] sm:$0xff]
      %v234 = vld [vmem:[%s203 + $0x88] sm:$0xff]
      %v235 = vld [vmem:[%s203 + $0x90] sm:$0xff]
      %v236 = vld [vmem:[%s203 + $0x98] sm:$0xf]
      %v237 = vld [vmem:[%s203 + $0x9c] sm:$0xff]
      %v238 = vld [vmem:[%s203 + $0xa4] sm:$0xff]
      %v239 = vld [vmem:[%s203 + $0xac] sm:$0xff]
      %v240 = vld [vmem:[%s203 + $0xb4] sm:$0xff]
      %v241 = vld [vmem:[%s203 + $0xbc] sm:$0xff]
      %v242 = vld [vmem:[%s203 + $0xc4] sm:$0xff]
      %v243 = vld [vmem:[%s203 + $0xcc] sm:$0xf]
      %v244 = vld [vmem:[%s203 + $0xd0] sm:$0xff]
      %v245 = vld [vmem:[%s203 + $0xd8] sm:$0xff]
      %v246 = vld [vmem:[%s203 + $0xe0] sm:$0xff]
      %v247 = vld [vmem:[%s203 + $0xe8] sm:$0xff]
      %v248 = vld [vmem:[%s203 + $0xf0] sm:$0xff]
      %v249 = vld [vmem:[%s203 + $0xf8] sm:$0xff]
      %v250 = vld [vmem:[%s203 + $0x100] sm:$0xf]
      %v251 = vld [vmem:[%s203 + $0x104] sm:$0xff]
      %v252 = vld [vmem:[%s203 + $0x10c] sm:$0xff]
      %v253 = vld [vmem:[%s203 + $0x114] sm:$0xff]
      %v254 = vld [vmem:[%s203 + $0x11c] sm:$0xff]
      %v255 = vld [vmem:[%s203 + $0x124] sm:$0xff]
      %v256 = vld [vmem:[%s203 + $0x12c] sm:$0xff]
      %v257 = vld [vmem:[%s203 + $0x134] sm:$0xf]
      %v258 = vld [vmem:[%s203 + $0x138] sm:$0xff]
      %v259 = vld [vmem:[%s203 + $0x140] sm:$0xff]
      %v260 = vld [vmem:[%s203 + $0x148] sm:$0xff]
      %v261 = vld [vmem:[%s203 + $0x150] sm:$0xff]
      %v262 = vld [vmem:[%s203 + $0x158] sm:$0xff]
      %v263 = vld [vmem:[%s203 + $0x160] sm:$0xff]
      %v264 = vld [vmem:[%s203 + $0x168] sm:$0xf]
      %v265 = vld [vmem:[%s203 + $0x16c] sm:$0xff]
      %v266 = vld [vmem:[%s203 + $0x174] sm:$0xff]
      %v267 = vld [vmem:[%s203 + $0x17c] sm:$0xff]
      %v268 = vld [vmem:[%s203 + $0x184] sm:$0xff]
      %v269 = vld [vmem:[%s203 + $0x18c] sm:$0xff]
      %v270 = vld [vmem:[%s203 + $0x194] sm:$0xff]
      %v271 = vld [vmem:[%s203 + $0x19c] sm:$0xf]
      %v272 = vld [vmem:[%s203 + $0x1a0] sm:$0xff]
      %v273 = vld [vmem:[%s203 + $0x1a8] sm:$0xff]
      %v274 = vld [vmem:[%s203 + $0x1b0] sm:$0xff]
      %v275 = vld [vmem:[%s203 + $0x1b8] sm:$0xff]
      %v276 = vld [vmem:[%s203 + $0x1c0] sm:$0xff]
      %v277 = vld [vmem:[%s203 + $0x1c8] sm:$0xff]
      %v278 = vld [vmem:[%s203 + $0x1d0] sm:$0xf]
      %v279 = vld [vmem:[%s203 + $0x1d4] sm:$0xff]
      %v280 = vld [vmem:[%s203 + $0x1dc] sm:$0xff]
      %v281 = vld [vmem:[%s203 + $0x1e4] sm:$0xff]
      %v282 = vld [vmem:[%s203 + $0x1ec] sm:$0xff]
      %v283 = vld [vmem:[%s203 + $0x1f4] sm:$0xff]
      %v284 = vld [vmem:[%s203 + $0x1fc] sm:$0xff]
      %v285 = vld [vmem:[%s203 + $0x204] sm:$0xf]
      %v286 = vld [vmem:[%s203 + $0x208] sm:$0xff]
      %v287 = vld [vmem:[%s203 + $0x210] sm:$0xff]
      %v288 = vld [vmem:[%s203 + $0x218] sm:$0xff]
      %v289 = vld [vmem:[%s203 + $0x220] sm:$0xff]
      %v290 = vld [vmem:[%s203 + $0x228] sm:$0xff]
      %v291 = vld [vmem:[%s203 + $0x230] sm:$0xff]
      %v292 = vld [vmem:[%s203 + $0x238] sm:$0xf]
      %v293 = vld [vmem:[%s203 + $0x23c] sm:$0xff]
      %v294 = vld [vmem:[%s203 + $0x244] sm:$0xff]
      %v295 = vld [vmem:[%s203 + $0x24c] sm:$0xff]
      %v296 = vld [vmem:[%s203 + $0x254] sm:$0xff]
      %v297 = vld [vmem:[%s203 + $0x25c] sm:$0xff]
      %v298 = vld [vmem:[%s203 + $0x264] sm:$0xff]
      %v299 = vld [vmem:[%s203 + $0x26c] sm:$0xf]
      %v300 = vld [vmem:[%s203 + $0x270] sm:$0xff]
      %v301 = vld [vmem:[%s203 + $0x278] sm:$0xff]
      %v302 = vld [vmem:[%s203 + $0x280] sm:$0xff]
      %v303 = vld [vmem:[%s203 + $0x288] sm:$0xff]
      %v304 = vld [vmem:[%s203 + $0x290] sm:$0xff]
      %v305 = vld [vmem:[%s203 + $0x298] sm:$0xff]
      %v306 = vld [vmem:[%s203 + $0x2a0] sm:$0xf]
      %v307 = vld [vmem:[%s203 + $0x2a4] sm:$0xff]
      %v308 = vld [vmem:[%s203 + $0x2ac] sm:$0xff]
      %v309 = vld [vmem:[%s203 + $0x2b4] sm:$0xff]
      %v310 = vld [vmem:[%s203 + $0x2bc] sm:$0xff]
      %v311 = vld [vmem:[%s203 + $0x2c4] sm:$0xff]
      %v312 = vld [vmem:[%s203 + $0x2cc] sm:$0xff]
      %v313 = vld [vmem:[%s203 + $0x2d4] sm:$0xf]
      %v314 = vld [vmem:[%s203 + $0x2d8] sm:$0xff]
      %v315 = vld [vmem:[%s203 + $0x2e0] sm:$0xff]
      %v316 = vld [vmem:[%s203 + $0x2e8] sm:$0xff]
      %v317 = vld [vmem:[%s203 + $0x2f0] sm:$0xff]
      %v318 = vld [vmem:[%s203 + $0x2f8] sm:$0xff]
      %v319 = vld [vmem:[%s203 + $0x300] sm:$0xff]
      %v320 = vld [vmem:[%s203 + $0x308] sm:$0xf]
      %v321 = vld [vmem:[%s203 + $0x30c] sm:$0xff]
      %v322 = vld [vmem:[%s203 + $0x314] sm:$0xff]
      %v323 = vld [vmem:[%s203 + $0x31c] sm:$0xff]
      %v324 = vld [vmem:[%s203 + $0x324] sm:$0xff]
      %v325 = vld [vmem:[%s203 + $0x32c] sm:$0xff]
      %v326 = vld [vmem:[%s203 + $0x334] sm:$0xff]
      %v327 = vld [vmem:[%s203 + $0x33c] sm:$0xf]
      %v328 = vld [vmem:[%s203 + $0x340] sm:$0xff]
      %v329 = vld [vmem:[%s203 + $0x348] sm:$0xff]
      %v330 = vld [vmem:[%s203 + $0x350] sm:$0xff]
      %v331 = vld [vmem:[%s203 + $0x358] sm:$0xff]
      %v332 = vld [vmem:[%s203 + $0x360] sm:$0xff]
      %v333 = vld [vmem:[%s203 + $0x368] sm:$0xff]
      %v334 = vld [vmem:[%s203 + $0x370] sm:$0xf]
      %v335 = vld [vmem:[%s203 + $0x374] sm:$0xff]
      %v336 = vld [vmem:[%s203 + $0x37c] sm:$0xff]
      %v337 = vld [vmem:[%s203 + $0x384] sm:$0xff]
      %v338 = vld [vmem:[%s203 + $0x38c] sm:$0xff]
      %v339 = vld [vmem:[%s203 + $0x394] sm:$0xff]
      %v340 = vld [vmem:[%s203 + $0x39c] sm:$0xff]
      %v341 = vld [vmem:[%s203 + $0x3a4] sm:$0xf]
      %v342 = vld [vmem:[%s203 + $0x3a8] sm:$0xff]
      %v343 = vld [vmem:[%s203 + $0x3b0] sm:$0xff]
      %v344 = vld [vmem:[%s203 + $0x3b8] sm:$0xff]
      %v345 = vld [vmem:[%s203 + $0x3c0] sm:$0xff]
      %v346 = vld [vmem:[%s203 + $0x3c8] sm:$0xff]
      %v347 = vld [vmem:[%s203 + $0x3d0] sm:$0xff]
      %v348 = vld [vmem:[%s203 + $0x3d8] sm:$0xf]
      %v349 = vld [vmem:[%s203 + $0x3dc] sm:$0xff]
      %v350 = vld [vmem:[%s203 + $0x3e4] sm:$0xff]
      %v351 = vld [vmem:[%s203 + $0x3ec] sm:$0xff]
      %v352 = vld [vmem:[%s203 + $0x3f4] sm:$0xff]
      %v353 = vld [vmem:[%s203 + $0x3fc] sm:$0xff]
      %v354 = vld [vmem:[%s203 + $0x404] sm:$0xff]
      %v355 = vld [vmem:[%s203 + $0x40c] sm:$0xf]
      %v356 = vld [vmem:[%s203 + $0x410] sm:$0xff]
      %v357 = vld [vmem:[%s203 + $0x418] sm:$0xff]
      %v358 = vld [vmem:[%s203 + $0x420] sm:$0xff]
      %v359 = vld [vmem:[%s203 + $0x428] sm:$0xff]
      %v360 = vld [vmem:[%s203 + $0x430] sm:$0xff]
      %v361 = vld [vmem:[%s203 + $0x438] sm:$0xff]
      %v362 = vld [vmem:[%s203 + $0x440] sm:$0xf]
      %v363 = vld [vmem:[%s203 + $0x444] sm:$0xff]
      %v364 = vld [vmem:[%s203 + $0x44c] sm:$0xff]
      %v365 = vld [vmem:[%s203 + $0x454] sm:$0xff]
      %v366 = vld [vmem:[%s203 + $0x45c] sm:$0xff]
      %v367 = vld [vmem:[%s203 + $0x464] sm:$0xff]
      %v368 = vld [vmem:[%s203 + $0x46c] sm:$0xff]
      %v369 = vld [vmem:[%s203 + $0x474] sm:$0xf]
      %v370 = vld [vmem:[%s203 + $0x478] sm:$0xff]
      %v371 = vld [vmem:[%s203 + $0x480] sm:$0xff]
      %v372 = vld [vmem:[%s203 + $0x488] sm:$0xff]
      %v373 = vld [vmem:[%s203 + $0x490] sm:$0xff]
      %v374 = vld [vmem:[%s203 + $0x498] sm:$0xff]
      %v375 = vld [vmem:[%s203 + $0x4a0] sm:$0xff]
      %v376 = vld [vmem:[%s203 + $0x4a8] sm:$0xf]
      %v377 = vld [vmem:[%s203 + $0x4ac] sm:$0xff]
      %v378 = vld [vmem:[%s203 + $0x4b4] sm:$0xff]
      %v379 = vld [vmem:[%s203 + $0x4bc] sm:$0xff]
      %v380 = vld [vmem:[%s203 + $0x4c4] sm:$0xff]
      %v381 = vld [vmem:[%s203 + $0x4cc] sm:$0xff]
      %v382 = vld [vmem:[%s203 + $0x4d4] sm:$0xff]
      %v383 = vld [vmem:[%s203 + $0x4dc] sm:$0xf]
      %v384 = vld [vmem:[%s203 + $0x4e0] sm:$0xff]
      %v385 = vld [vmem:[%s203 + $0x4e8] sm:$0xff]
      %v386 = vld [vmem:[%s203 + $0x4f0] sm:$0xff]
      %v387 = vld [vmem:[%s203 + $0x4f8] sm:$0xff]
      %v388 = vld [vmem:[%s203 + $0x500] sm:$0xff]
      %v389 = vld [vmem:[%s203 + $0x508] sm:$0xff]
      %v390 = vld [vmem:[%s203 + $0x510] sm:$0xf]
      %v391 = vld [vmem:[%s203 + $0x514] sm:$0xff]
      %v392 = vld [vmem:[%s203 + $0x51c] sm:$0xff]
      %v393 = vld [vmem:[%s203 + $0x524] sm:$0xff]
      %v394 = vld [vmem:[%s203 + $0x52c] sm:$0xff]
      %v395 = vld [vmem:[%s203 + $0x534] sm:$0xff]
      %v396 = vld [vmem:[%s203 + $0x53c] sm:$0xff]
      %v397 = vld [vmem:[%s203 + $0x544] sm:$0xf]
      %v398 = vld [vmem:[%s203 + $0x548] sm:$0xff]
      %v399 = vld [vmem:[%s203 + $0x550] sm:$0xff]
      %v400 = vld [vmem:[%s203 + $0x558] sm:$0xff]
      %v401 = vld [vmem:[%s203 + $0x560] sm:$0xff]
      %v402 = vld [vmem:[%s203 + $0x568] sm:$0xff]
      %v403 = vld [vmem:[%s203 + $0x570] sm:$0xff]
      %v404 = vld [vmem:[%s203 + $0x578] sm:$0xf]
      %v405 = vld [vmem:[%s203 + $0x57c] sm:$0xff]
      %v406 = vld [vmem:[%s203 + $0x584] sm:$0xff]
      %v407 = vld [vmem:[%s203 + $0x58c] sm:$0xff]
      %v408 = vld [vmem:[%s203 + $0x594] sm:$0xff]
      %v409 = vld [vmem:[%s203 + $0x59c] sm:$0xff]
      %v410 = vld [vmem:[%s203 + $0x5a4] sm:$0xff]
      %v411 = vld [vmem:[%s203 + $0x5ac] sm:$0xf]
      %v412 = vld [vmem:[%s203 + $0x5b0] sm:$0xff]
      %v413 = vld [vmem:[%s203 + $0x5b8] sm:$0xff]
      %v414 = vld [vmem:[%s203 + $0x5c0] sm:$0xff]
      %v415 = vld [vmem:[%s203 + $0x5c8] sm:$0xff]
      %v416 = vld [vmem:[%s203 + $0x5d0] sm:$0xff]
      %v417 = vld [vmem:[%s203 + $0x5d8] sm:$0xff]
      %v418 = vld [vmem:[%s203 + $0x5e0] sm:$0xf]
      %v419 = vld [vmem:[%s203 + $0x5e4] sm:$0xff]
      %v420 = vld [vmem:[%s203 + $0x5ec] sm:$0xff]
      %v421 = vld [vmem:[%s203 + $0x5f4] sm:$0xff]
      %v422 = vld [vmem:[%s203 + $0x5fc] sm:$0xff]
      %v423 = vld [vmem:[%s203 + $0x604] sm:$0xff]
      %v424 = vld [vmem:[%s203 + $0x60c] sm:$0xff]
      %v425 = vld [vmem:[%s203 + $0x614] sm:$0xf]
      %v426 = vld [vmem:[%s203 + $0x618] sm:$0xff]
      %v427 = vld [vmem:[%s203 + $0x620] sm:$0xff]
      %v428 = vld [vmem:[%s203 + $0x628] sm:$0xff]
      %v429 = vld [vmem:[%s203 + $0x630] sm:$0xff]
      %v430 = vld [vmem:[%s203 + $0x638] sm:$0xff]
      %v431 = vld [vmem:[%s203 + $0x640] sm:$0xff]
      %v432 = vld [vmem:[%s203 + $0x648] sm:$0xf]
      %v433 = vld [vmem:[%s203 + $0x64c] sm:$0xff]
      %v434 = vld [vmem:[%s203 + $0x654] sm:$0xff]
      %v435 = vld [vmem:[%s203 + $0x65c] sm:$0xff]
      %v436 = vld [vmem:[%s203 + $0x664] sm:$0xff]
      %v437 = vld [vmem:[%s203 + $0x66c] sm:$0xff]
      %v438 = vld [vmem:[%s203 + $0x674] sm:$0xff]
      %v439 = vld [vmem:[%s203 + $0x67c] sm:$0xf]
      %v440 = vld [vmem:[%s1] sm:$0xf]
      %v441 = vld [vmem:[%s1 + $0x4] sm:$0xf]
      %v442 = vld [vmem:[%s1 + $0x8] sm:$0xf]
      %v443 = vld [vmem:[%s1 + $0xc] sm:$0xf]
      %v444 = vld [vmem:[%s1 + $0x10] sm:$0xf]
      %v445 = vld [vmem:[%s1 + $0x14] sm:$0xf]
      %v446 = vld [vmem:[%s1 + $0x18] sm:$0xf]
      %v447 = vld [vmem:[%s1 + $0x1c] sm:$0xf]
      %v448 = vld [vmem:[%s1 + $0x20] sm:$0xf]
      %v449 = vld [vmem:[%s1 + $0x24] sm:$0xf]
      %v450 = vld [vmem:[%s1 + $0x28] sm:$0xf]
      %v451 = vld [vmem:[%s1 + $0x2c] sm:$0xf]
      %v452 = vld [vmem:[%s1 + $0x30] sm:$0xf]
      %v453 = vld [vmem:[%s1 + $0x34] sm:$0xf]
      %v454 = vld [vmem:[%s1 + $0x38] sm:$0xf]
      %v455 = vld [vmem:[%s1 + $0x3c] sm:$0xf]
      %v456 = vld [vmem:[%s1 + $0x40] sm:$0xf]
      %v457 = vld [vmem:[%s1 + $0x44] sm:$0xf]
      %v458 = vld [vmem:[%s1 + $0x48] sm:$0xf]
      %v459 = vld [vmem:[%s1 + $0x4c] sm:$0xf]
      %v460 = vld [vmem:[%s1 + $0x50] sm:$0xf]
      %v461 = vld [vmem:[%s1 + $0x54] sm:$0xf]
      %v462 = vld [vmem:[%s1 + $0x58] sm:$0xf]
      %v463 = vld [vmem:[%s1 + $0x5c] sm:$0xf]
      %v464 = vld [vmem:[%s1 + $0x60] sm:$0xf]
      %v465 = vld [vmem:[%s1 + $0x64] sm:$0xf]
      %v466 = vld [vmem:[%s1 + $0x68] sm:$0xf]
      %v467 = vld [vmem:[%s1 + $0x6c] sm:$0xf]
      %v468 = vld [vmem:[%s1 + $0x70] sm:$0xf]
      %v469 = vld [vmem:[%s1 + $0x74] sm:$0xf]
      %v470 = vld [vmem:[%s1 + $0x78] sm:$0xf]
      %v471 = vld [vmem:[%s1 + $0x7c] sm:$0xf]
      %v472 = vld [vmem:[%s1 + $0x80] sm:$0xf]
      %v473 = vld [vmem:[%s1 + $0x84] sm:$0xf]
      %v474 = vld [vmem:[%s1 + $0x88] sm:$0xf]
      %v475 = vld [vmem:[%s1 + $0x8c] sm:$0xf]
      %v476 = vld [vmem:[%s1 + $0x90] sm:$0xf]
      %v477 = vld [vmem:[%s1 + $0x94] sm:$0xf]
      %v478 = vld [vmem:[%s1 + $0x98] sm:$0xf]
      %v479 = vld [vmem:[%s1 + $0x9c] sm:$0xf]
      %v480 = vld [vmem:[%s1 + $0xa0] sm:$0xf]
      %v481 = vld [vmem:[%s1 + $0xa4] sm:$0xf]
      %v482 = vld [vmem:[%s1 + $0xa8] sm:$0xf]
      %v483 = vld [vmem:[%s1 + $0xac] sm:$0xf]
      %v484 = vld [vmem:[%s1 + $0xb0] sm:$0xf]
      %v485 = vld [vmem:[%s1 + $0xb4] sm:$0xf]
      %v486 = vld [vmem:[%s1 + $0xb8] sm:$0xf]
      %v487 = vld [vmem:[%s1 + $0xbc] sm:$0xf]
      %v488 = vld [vmem:[%s1 + $0xc0] sm:$0xf]
      %v489 = vld [vmem:[%s1 + $0xc4] sm:$0xf]
      %v490 = vld [vmem:[%s1 + $0xc8] sm:$0xf]
      %v491 = vld [vmem:[%s1 + $0xcc] sm:$0xf]
      %v492 = vld [vmem:[%s1 + $0xd0] sm:$0xf]
      %v493 = vld [vmem:[%s1 + $0xd4] sm:$0xf]
      %v494 = vld [vmem:[%s1 + $0xd8] sm:$0xf]
      %v495 = vld [vmem:[%s1 + $0xdc] sm:$0xf]
      %v496 = vld [vmem:[%s1 + $0xe0] sm:$0xf]
      %v497 = vld [vmem:[%s1 + $0xe4] sm:$0xf]
      %v498 = vld [vmem:[%s1 + $0xe8] sm:$0xf]
      %v499 = vld [vmem:[%s1 + $0xec] sm:$0xf]
      %v500 = vld [vmem:[%s1 + $0xf0] sm:$0xf]
      %v501 = vld [vmem:[%s1 + $0xf4] sm:$0xf]
      %v502 = vld [vmem:[%s1 + $0xf8] sm:$0xf]
      %v503 = vld [vmem:[%s1 + $0xfc] sm:$0xf]
      %v504 = vld [vmem:[%s1 + $0x100] sm:$0xf]
      %v505 = vld [vmem:[%s1 + $0x104] sm:$0xf]
      %v506 = vld [vmem:[%s1 + $0x108] sm:$0xf]
      %v507 = vld [vmem:[%s1 + $0x10c] sm:$0xf]
      %v508 = vld [vmem:[%s1 + $0x110] sm:$0xf]
      %v509 = vld [vmem:[%s1 + $0x114] sm:$0xf]
      %v510 = vld [vmem:[%s1 + $0x118] sm:$0xf]
      %v511 = vld [vmem:[%s1 + $0x11c] sm:$0xf]
      %v512 = vld [vmem:[%s1 + $0x120] sm:$0xf]
      %v513 = vld [vmem:[%s1 + $0x124] sm:$0xf]
      %v514 = vld [vmem:[%s1 + $0x128] sm:$0xf]
      %v515 = vld [vmem:[%s1 + $0x12c] sm:$0xf]
      %v516 = vld [vmem:[%s1 + $0x130] sm:$0xf]
      %v517 = vld [vmem:[%s1 + $0x134] sm:$0xf]
      %v518 = vld [vmem:[%s1 + $0x138] sm:$0xf]
      %v519 = vld [vmem:[%s1 + $0x13c] sm:$0xf]
      %v520 = vld [vmem:[%s1 + $0x140] sm:$0xf]
      %v521 = vld [vmem:[%s1 + $0x144] sm:$0xf]
      %v522 = vld [vmem:[%s1 + $0x148] sm:$0xf]
      %v523 = vld [vmem:[%s1 + $0x14c] sm:$0xf]
      %v524 = vld [vmem:[%s1 + $0x150] sm:$0xf]
      %v525 = vld [vmem:[%s1 + $0x154] sm:$0xf]
      %v526 = vld [vmem:[%s1 + $0x158] sm:$0xf]
      %v527 = vld [vmem:[%s1 + $0x15c] sm:$0xf]
      %v528 = vld [vmem:[%s1 + $0x160] sm:$0xf]
      %v529 = vld [vmem:[%s1 + $0x164] sm:$0xf]
      %v530 = vld [vmem:[%s1 + $0x168] sm:$0xf]
      %v531 = vld [vmem:[%s1 + $0x16c] sm:$0xf]
      %v532 = vld [vmem:[%s1 + $0x170] sm:$0xf]
      %v533 = vld [vmem:[%s1 + $0x174] sm:$0xf]
      %v534 = vld [vmem:[%s1 + $0x178] sm:$0xf]
      %v535 = vld [vmem:[%s1 + $0x17c] sm:$0xf]
      %v536 = vld [vmem:[%s1 + $0x180] sm:$0xf]
      %v537 = vld [vmem:[%s1 + $0x184] sm:$0xf]
      %v538 = vld [vmem:[%s1 + $0x188] sm:$0xf]
      %v539 = vld [vmem:[%s1 + $0x18c] sm:$0xf]
      %v540 = vld [vmem:[%s1 + $0x190] sm:$0xf]
      %v541 = vld [vmem:[%s1 + $0x194] sm:$0xf]
      %v542 = vld [vmem:[%s1 + $0x198] sm:$0xf]
      %v543 = vld [vmem:[%s1 + $0x19c] sm:$0xf]
      %v544 = vld [vmem:[%s1 + $0x1a0] sm:$0xf]
      %v545 = vld [vmem:[%s1 + $0x1a4] sm:$0xf]
      %v546 = vld [vmem:[%s1 + $0x1a8] sm:$0xf]
      %v547 = vld [vmem:[%s1 + $0x1ac] sm:$0xf]
      %v548 = vld [vmem:[%s1 + $0x1b0] sm:$0xf]
      %v549 = vld [vmem:[%s1 + $0x1b4] sm:$0xf]
      %v550 = vld [vmem:[%s1 + $0x1b8] sm:$0xf]
      %v551 = vld [vmem:[%s1 + $0x1bc] sm:$0xf]
      %v552 = vld [vmem:[%s1 + $0x1c0] sm:$0xf]
      %v553 = vld [vmem:[%s1 + $0x1c4] sm:$0xf]
      %v554 = vld [vmem:[%s1 + $0x1c8] sm:$0xf]
      %v555 = vld [vmem:[%s1 + $0x1cc] sm:$0xf]
      %v556 = vld [vmem:[%s1 + $0x1d0] sm:$0xf]
      %v557 = vld [vmem:[%s1 + $0x1d4] sm:$0xf]
      %v558 = vld [vmem:[%s1 + $0x1d8] sm:$0xf]
      %v559 = vld [vmem:[%s1 + $0x1dc] sm:$0xf]
      %v560 = vld [vmem:[%s1 + $0x1e0] sm:$0xf]
      %v561 = vld [vmem:[%s1 + $0x1e4] sm:$0xf]
      %v562 = vld [vmem:[%s1 + $0x1e8] sm:$0xf]
      %v563 = vld [vmem:[%s1 + $0x1ec] sm:$0xf]
      %v564 = vld [vmem:[%s1 + $0x1f0] sm:$0xf]
      %v565 = vld [vmem:[%s1 + $0x1f4] sm:$0xf]
      %v566 = vld [vmem:[%s1 + $0x1f8] sm:$0xf]
      %v567 = vld [vmem:[%s1 + $0x1fc] sm:$0xf]
      %v568 = vld [vmem:[%s1 + $0x200] sm:$0xf]
      %v569 = vld [vmem:[%s1 + $0x204] sm:$0xf]
      %v570 = vld [vmem:[%s1 + $0x208] sm:$0xf]
      %v571 = vld [vmem:[%s1 + $0x20c] sm:$0xf]
      %v572 = vld [vmem:[%s1 + $0x210] sm:$0xf]
      %v573 = vld [vmem:[%s1 + $0x214] sm:$0xf]
      %v574 = vld [vmem:[%s1 + $0x218] sm:$0xf]
      %v575 = vld [vmem:[%s1 + $0x21c] sm:$0xf]
      %v576 = vld [vmem:[%s1 + $0x220] sm:$0xf]
      %v577 = vld [vmem:[%s1 + $0x224] sm:$0xf]
      %v578 = vld [vmem:[%s1 + $0x228] sm:$0xf]
      %v579 = vld [vmem:[%s1 + $0x22c] sm:$0xf]
      %v580 = vld [vmem:[%s1 + $0x230] sm:$0xf]
      %v581 = vld [vmem:[%s1 + $0x234] sm:$0xf]
      %v582 = vld [vmem:[%s1 + $0x238] sm:$0xf]
      %v583 = vld [vmem:[%s1 + $0x23c] sm:$0xf]
      %v584 = vld [vmem:[%s1 + $0x240] sm:$0xf]
      %v585 = vld [vmem:[%s1 + $0x244] sm:$0xf]
      %v586 = vld [vmem:[%s1 + $0x248] sm:$0xf]
      %v587 = vld [vmem:[%s1 + $0x24c] sm:$0xf]
      %v588 = vld [vmem:[%s1 + $0x250] sm:$0xf]
      %v589 = vld [vmem:[%s1 + $0x254] sm:$0xf]
      %v590 = vld [vmem:[%s1 + $0x258] sm:$0xf]
      %v591 = vld [vmem:[%s1 + $0x25c] sm:$0xf]
      %v592 = vld [vmem:[%s1 + $0x260] sm:$0xf]
      %v593 = vld [vmem:[%s1 + $0x264] sm:$0xf]
      %v594 = vld [vmem:[%s1 + $0x268] sm:$0xf]
      %v595 = vld [vmem:[%s1 + $0x26c] sm:$0xf]
      %v596 = vld [vmem:[%s1 + $0x270] sm:$0xf]
      %v597 = vld [vmem:[%s1 + $0x274] sm:$0xf]
      %v598 = vld [vmem:[%s1 + $0x278] sm:$0xf]
      %v599 = vld [vmem:[%s1 + $0x27c] sm:$0xf]
      %v600 = vld [vmem:[%s1 + $0x280] sm:$0xf]
      %v601 = vld [vmem:[%s1 + $0x284] sm:$0xf]
      %v602 = vld [vmem:[%s1 + $0x288] sm:$0xf]
      %v603 = vld [vmem:[%s1 + $0x28c] sm:$0xf]
      %v604 = vld [vmem:[%s1 + $0x290] sm:$0xf]
      %v605 = vld [vmem:[%s1 + $0x294] sm:$0xf]
      %v606 = vld [vmem:[%s1 + $0x298] sm:$0xf]
      %v607 = vld [vmem:[%s1 + $0x29c] sm:$0xf]
      %v608 = vld [vmem:[%s1 + $0x2a0] sm:$0xf]
      %v609 = vld [vmem:[%s1 + $0x2a4] sm:$0xf]
      %v610 = vld [vmem:[%s1 + $0x2a8] sm:$0xf]
      %v611 = vld [vmem:[%s1 + $0x2ac] sm:$0xf]
      %v612 = vld [vmem:[%s1 + $0x2b0] sm:$0xf]
      %v613 = vld [vmem:[%s1 + $0x2b4] sm:$0xf]
      %v614 = vld [vmem:[%s1 + $0x2b8] sm:$0xf]
      %v615 = vld [vmem:[%s1 + $0x2bc] sm:$0xf]
      %v616 = vld [vmem:[%s1 + $0x2c0] sm:$0xf]
      %v617 = vld [vmem:[%s1 + $0x2c4] sm:$0xf]
      %v618 = vld [vmem:[%s1 + $0x2c8] sm:$0xf]
      %v619 = vld [vmem:[%s1 + $0x2cc] sm:$0xf]
      %v620 = vld [vmem:[%s1 + $0x2d0] sm:$0xf]
      %v621 = vld [vmem:[%s1 + $0x2d4] sm:$0xf]
      %v622 = vld [vmem:[%s1 + $0x2d8] sm:$0xf]
      %v623 = vld [vmem:[%s1 + $0x2dc] sm:$0xf]
      %v624 = vld [vmem:[%s1 + $0x2e0] sm:$0xf]
      %v625 = vld [vmem:[%s1 + $0x2e4] sm:$0xf]
      %v626 = vld [vmem:[%s1 + $0x2e8] sm:$0xf]
      %v627 = vld [vmem:[%s1 + $0x2ec] sm:$0xf]
      %v628 = vld [vmem:[%s1 + $0x2f0] sm:$0xf]
      %v629 = vld [vmem:[%s1 + $0x2f4] sm:$0xf]
      %v630 = vld [vmem:[%s1 + $0x2f8] sm:$0xf]
      %v631 = vld [vmem:[%s1 + $0x2fc] sm:$0xf]
      %v632 = vld [vmem:[%s1 + $0x300] sm:$0xf]
      %v633 = vld [vmem:[%s1 + $0x304] sm:$0xf]
      %v634 = vld [vmem:[%s1 + $0x308] sm:$0xf]
      %v635 = vld [vmem:[%s1 + $0x30c] sm:$0xf]
      %v636 = vld [vmem:[%s1 + $0x310] sm:$0xf]
      %v637 = vld [vmem:[%s1 + $0x314] sm:$0xf]
      %v638 = vld [vmem:[%s1 + $0x318] sm:$0xf]
      %v639 = vld [vmem:[%s1 + $0x31c] sm:$0xf]
      %v640 = vld [vmem:[%s1 + $0x320] sm:$0xf]
      %v641 = vld [vmem:[%s1 + $0x324] sm:$0xf]
      %v642 = vld [vmem:[%s1 + $0x328] sm:$0xf]
      %v643 = vld [vmem:[%s1 + $0x32c] sm:$0xf]
      %v644 = vld [vmem:[%s1 + $0x330] sm:$0xf]
      %v645 = vld [vmem:[%s1 + $0x334] sm:$0xf]
      %v646 = vld [vmem:[%s1 + $0x338] sm:$0xf]
      %v647 = vld [vmem:[%s1 + $0x33c] sm:$0xf]
      %v648 = vld [vmem:[%s2] sm:$0x1]
      %v650 = vlaneseq
      %v651 = vshrl.u32 %v650, 7
      %v652 = vsub.s32 0, %v651
      %v653 = vrot.slane %v648, %v652
      %v879 = vunpack.c.l.b16 %v216
      %v880 = vunpack.c.h.b16 %v216
      %v881 = vunpack.c.l.b16 %v217
      %v882 = vunpack.c.h.b16 %v217
      %v883 = vunpack.c.l.b16 %v218
      %v884 = vunpack.c.h.b16 %v218
      %v885 = vunpack.c.l.b16 %v219
      %v886 = vunpack.c.h.b16 %v219
      %v887 = vunpack.c.l.b16 %v220
      %v888 = vunpack.c.h.b16 %v220
      %v889 = vunpack.c.l.b16 %v221
      %v890 = vunpack.c.h.b16 %v221
      %v891 = vunpack.c.l.b16 %v222
      %v892 = vunpack.c.l.b16 %v223
      %v893 = vunpack.c.h.b16 %v223
      %v894 = vunpack.c.l.b16 %v224
      %v895 = vunpack.c.h.b16 %v224
      %v896 = vunpack.c.l.b16 %v225
      %v897 = vunpack.c.h.b16 %v225
      %v898 = vunpack.c.l.b16 %v226
      %v899 = vunpack.c.h.b16 %v226
      %v900 = vunpack.c.l.b16 %v227
      %v901 = vunpack.c.h.b16 %v227
      %v902 = vunpack.c.l.b16 %v228
      %v903 = vunpack.c.h.b16 %v228
      %v904 = vunpack.c.l.b16 %v229
      %v905 = vunpack.c.l.b16 %v230
      %v906 = vunpack.c.h.b16 %v230
      %v907 = vunpack.c.l.b16 %v231
      %v908 = vunpack.c.h.b16 %v231
      %v909 = vunpack.c.l.b16 %v232
      %v910 = vunpack.c.h.b16 %v232
      %v911 = vunpack.c.l.b16 %v233
      %v912 = vunpack.c.h.b16 %v233
      %v913 = vunpack.c.l.b16 %v234
      %v914 = vunpack.c.h.b16 %v234
      %v915 = vunpack.c.l.b16 %v235
      %v916 = vunpack.c.h.b16 %v235
      %v917 = vunpack.c.l.b16 %v236
      %v918 = vunpack.c.l.b16 %v237
      %v919 = vunpack.c.h.b16 %v237
      %v920 = vunpack.c.l.b16 %v238
      %v921 = vunpack.c.h.b16 %v238
      %v922 = vunpack.c.l.b16 %v239
      %v923 = vunpack.c.h.b16 %v239
      %v924 = vunpack.c.l.b16 %v240
      %v925 = vunpack.c.h.b16 %v240
      %v926 = vunpack.c.l.b16 %v241
      %v927 = vunpack.c.h.b16 %v241
      %v928 = vunpack.c.l.b16 %v242
      %v929 = vunpack.c.h.b16 %v242
      %v930 = vunpack.c.l.b16 %v243
      %v931 = vunpack.c.l.b16 %v244
      %v932 = vunpack.c.h.b16 %v244
      %v933 = vunpack.c.l.b16 %v245
      %v934 = vunpack.c.h.b16 %v245
      %v935 = vunpack.c.l.b16 %v246
      %v936 = vunpack.c.h.b16 %v246
      %v937 = vunpack.c.l.b16 %v247
      %v938 = vunpack.c.h.b16 %v247
      %v939 = vunpack.c.l.b16 %v248
      %v940 = vunpack.c.h.b16 %v248
      %v941 = vunpack.c.l.b16 %v249
      %v942 = vunpack.c.h.b16 %v249
      %v943 = vunpack.c.l.b16 %v250
      %v944 = vunpack.c.l.b16 %v251
      %v945 = vunpack.c.h.b16 %v251
      %v946 = vunpack.c.l.b16 %v252
      %v947 = vunpack.c.h.b16 %v252
      %v948 = vunpack.c.l.b16 %v253
      %v949 = vunpack.c.h.b16 %v253
      %v950 = vunpack.c.l.b16 %v254
      %v951 = vunpack.c.h.b16 %v254
      %v952 = vunpack.c.l.b16 %v255
      %v953 = vunpack.c.h.b16 %v255
      %v954 = vunpack.c.l.b16 %v256
      %v955 = vunpack.c.h.b16 %v256
      %v956 = vunpack.c.l.b16 %v257
      %v957 = vunpack.c.l.b16 %v258
      %v958 = vunpack.c.h.b16 %v258
      %v959 = vunpack.c.l.b16 %v259
      %v960 = vunpack.c.h.b16 %v259
      %v961 = vunpack.c.l.b16 %v260
      %v962 = vunpack.c.h.b16 %v260
      %v963 = vunpack.c.l.b16 %v261
      %v964 = vunpack.c.h.b16 %v261
      %v965 = vunpack.c.l.b16 %v262
      %v966 = vunpack.c.h.b16 %v262
      %v967 = vunpack.c.l.b16 %v263
      %v968 = vunpack.c.h.b16 %v263
      %v969 = vunpack.c.l.b16 %v264
      %v970 = vunpack.c.l.b16 %v265
      %v971 = vunpack.c.h.b16 %v265
      %v972 = vunpack.c.l.b16 %v266
      %v973 = vunpack.c.h.b16 %v266
      %v974 = vunpack.c.l.b16 %v267
      %v975 = vunpack.c.h.b16 %v267
      %v976 = vunpack.c.l.b16 %v268
      %v977 = vunpack.c.h.b16 %v268
      %v978 = vunpack.c.l.b16 %v269
      %v979 = vunpack.c.h.b16 %v269
      %v980 = vunpack.c.l.b16 %v270
      %v981 = vunpack.c.h.b16 %v270
      %v982 = vunpack.c.l.b16 %v271
      %v983 = vunpack.c.l.b16 %v272
      %v984 = vunpack.c.h.b16 %v272
      %v985 = vunpack.c.l.b16 %v273
      %v986 = vunpack.c.h.b16 %v273
      %v987 = vunpack.c.l.b16 %v274
      %v988 = vunpack.c.h.b16 %v274
      %v989 = vunpack.c.l.b16 %v275
      %v990 = vunpack.c.h.b16 %v275
      %v991 = vunpack.c.l.b16 %v276
      %v992 = vunpack.c.h.b16 %v276
      %v993 = vunpack.c.l.b16 %v277
      %v994 = vunpack.c.h.b16 %v277
      %v995 = vunpack.c.l.b16 %v278
      %v996 = vunpack.c.l.b16 %v279
      %v997 = vunpack.c.h.b16 %v279
      %v998 = vunpack.c.l.b16 %v280
      %v999 = vunpack.c.h.b16 %v280
      %v1000 = vunpack.c.l.b16 %v281
      %v1001 = vunpack.c.h.b16 %v281
      %v1002 = vunpack.c.l.b16 %v282
      %v1003 = vunpack.c.h.b16 %v282
      %v1004 = vunpack.c.l.b16 %v283
      %v1005 = vunpack.c.h.b16 %v283
      %v1006 = vunpack.c.l.b16 %v284
      %v1007 = vunpack.c.h.b16 %v284
      %v1008 = vunpack.c.l.b16 %v285
      %v1009 = vunpack.c.l.b16 %v286
      %v1010 = vunpack.c.h.b16 %v286
      %v1011 = vunpack.c.l.b16 %v287
      %v1012 = vunpack.c.h.b16 %v287
      %v1013 = vunpack.c.l.b16 %v288
      %v1014 = vunpack.c.h.b16 %v288
      %v1015 = vunpack.c.l.b16 %v289
      %v1016 = vunpack.c.h.b16 %v289
      %v1017 = vunpack.c.l.b16 %v290
      %v1018 = vunpack.c.h.b16 %v290
      %v1019 = vunpack.c.l.b16 %v291
      %v1020 = vunpack.c.h.b16 %v291
      %v1021 = vunpack.c.l.b16 %v292
      %v1022 = vunpack.c.l.b16 %v293
      %v1023 = vunpack.c.h.b16 %v293
      %v1024 = vunpack.c.l.b16 %v294
      %v1025 = vunpack.c.h.b16 %v294
      %v1026 = vunpack.c.l.b16 %v295
      %v1027 = vunpack.c.h.b16 %v295
      %v1028 = vunpack.c.l.b16 %v296
      %v1029 = vunpack.c.h.b16 %v296
      %v1030 = vunpack.c.l.b16 %v297
      %v1031 = vunpack.c.h.b16 %v297
      %v1032 = vunpack.c.l.b16 %v298
      %v1033 = vunpack.c.h.b16 %v298
      %v1034 = vunpack.c.l.b16 %v299
      %v1035 = vunpack.c.l.b16 %v300
      %v1036 = vunpack.c.h.b16 %v300
      %v1037 = vunpack.c.l.b16 %v301
      %v1038 = vunpack.c.h.b16 %v301
      %v1039 = vunpack.c.l.b16 %v302
      %v1040 = vunpack.c.h.b16 %v302
      %v1041 = vunpack.c.l.b16 %v303
      %v1042 = vunpack.c.h.b16 %v303
      %v1043 = vunpack.c.l.b16 %v304
      %v1044 = vunpack.c.h.b16 %v304
      %v1045 = vunpack.c.l.b16 %v305
      %v1046 = vunpack.c.h.b16 %v305
      %v1047 = vunpack.c.l.b16 %v306
      %v1048 = vunpack.c.l.b16 %v307
      %v1049 = vunpack.c.h.b16 %v307
      %v1050 = vunpack.c.l.b16 %v308
      %v1051 = vunpack.c.h.b16 %v308
      %v1052 = vunpack.c.l.b16 %v309
      %v1053 = vunpack.c.h.b16 %v309
      %v1054 = vunpack.c.l.b16 %v310
      %v1055 = vunpack.c.h.b16 %v310
      %v1056 = vunpack.c.l.b16 %v311
      %v1057 = vunpack.c.h.b16 %v311
      %v1058 = vunpack.c.l.b16 %v312
      %v1059 = vunpack.c.h.b16 %v312
      %v1060 = vunpack.c.l.b16 %v313
      %v1061 = vunpack.c.l.b16 %v314
      %v1062 = vunpack.c.h.b16 %v314
      %v1063 = vunpack.c.l.b16 %v315
      %v1064 = vunpack.c.h.b16 %v315
      %v1065 = vunpack.c.l.b16 %v316
      %v1066 = vunpack.c.h.b16 %v316
      %v1067 = vunpack.c.l.b16 %v317
      %v1068 = vunpack.c.h.b16 %v317
      %v1069 = vunpack.c.l.b16 %v318
      %v1070 = vunpack.c.h.b16 %v318
      %v1071 = vunpack.c.l.b16 %v319
      %v1072 = vunpack.c.h.b16 %v319
      %v1073 = vunpack.c.l.b16 %v320
      %v1074 = vunpack.c.l.b16 %v321
      %v1075 = vunpack.c.h.b16 %v321
      %v1076 = vunpack.c.l.b16 %v322
      %v1077 = vunpack.c.h.b16 %v322
      %v1078 = vunpack.c.l.b16 %v323
      %v1079 = vunpack.c.h.b16 %v323
      %v1080 = vunpack.c.l.b16 %v324
      %v1081 = vunpack.c.h.b16 %v324
      %v1082 = vunpack.c.l.b16 %v325
      %v1083 = vunpack.c.h.b16 %v325
      %v1084 = vunpack.c.l.b16 %v326
      %v1085 = vunpack.c.h.b16 %v326
      %v1086 = vunpack.c.l.b16 %v327
      %v1087 = vunpack.c.l.b16 %v328
      %v1088 = vunpack.c.h.b16 %v328
      %v1089 = vunpack.c.l.b16 %v329
      %v1090 = vunpack.c.h.b16 %v329
      %v1091 = vunpack.c.l.b16 %v330
      %v1092 = vunpack.c.h.b16 %v330
      %v1093 = vunpack.c.l.b16 %v331
      %v1094 = vunpack.c.h.b16 %v331
      %v1095 = vunpack.c.l.b16 %v332
      %v1096 = vunpack.c.h.b16 %v332
      %v1097 = vunpack.c.l.b16 %v333
      %v1098 = vunpack.c.h.b16 %v333
      %v1099 = vunpack.c.l.b16 %v334
      %v1100 = vunpack.c.l.b16 %v335
      %v1101 = vunpack.c.h.b16 %v335
      %v1102 = vunpack.c.l.b16 %v336
      %v1103 = vunpack.c.h.b16 %v336
      %v1104 = vunpack.c.l.b16 %v337
      %v1105 = vunpack.c.h.b16 %v337
      %v1106 = vunpack.c.l.b16 %v338
      %v1107 = vunpack.c.h.b16 %v338
      %v1108 = vunpack.c.l.b16 %v339
      %v1109 = vunpack.c.h.b16 %v339
      %v1110 = vunpack.c.l.b16 %v340
      %v1111 = vunpack.c.h.b16 %v340
      %v1112 = vunpack.c.l.b16 %v341
      %v1113 = vunpack.c.l.b16 %v342
      %v1114 = vunpack.c.h.b16 %v342
      %v1115 = vunpack.c.l.b16 %v343
      %v1116 = vunpack.c.h.b16 %v343
      %v1117 = vunpack.c.l.b16 %v344
      %v1118 = vunpack.c.h.b16 %v344
      %v1119 = vunpack.c.l.b16 %v345
      %v1120 = vunpack.c.h.b16 %v345
      %v1121 = vunpack.c.l.b16 %v346
      %v1122 = vunpack.c.h.b16 %v346
      %v1123 = vunpack.c.l.b16 %v347
      %v1124 = vunpack.c.h.b16 %v347
      %v1125 = vunpack.c.l.b16 %v348
      %v1126 = vunpack.c.l.b16 %v349
      %v1127 = vunpack.c.h.b16 %v349
      %v1128 = vunpack.c.l.b16 %v350
      %v1129 = vunpack.c.h.b16 %v350
      %v1130 = vunpack.c.l.b16 %v351
      %v1131 = vunpack.c.h.b16 %v351
      %v1132 = vunpack.c.l.b16 %v352
      %v1133 = vunpack.c.h.b16 %v352
      %v1134 = vunpack.c.l.b16 %v353
      %v1135 = vunpack.c.h.b16 %v353
      %v1136 = vunpack.c.l.b16 %v354
      %v1137 = vunpack.c.h.b16 %v354
      %v1138 = vunpack.c.l.b16 %v355
      %v1139 = vunpack.c.l.b16 %v356
      %v1140 = vunpack.c.h.b16 %v356
      %v1141 = vunpack.c.l.b16 %v357
      %v1142 = vunpack.c.h.b16 %v357
      %v1143 = vunpack.c.l.b16 %v358
      %v1144 = vunpack.c.h.b16 %v358
      %v1145 = vunpack.c.l.b16 %v359
      %v1146 = vunpack.c.h.b16 %v359
      %v1147 = vunpack.c.l.b16 %v360
      %v1148 = vunpack.c.h.b16 %v360
      %v1149 = vunpack.c.l.b16 %v361
      %v1150 = vunpack.c.h.b16 %v361
      %v1151 = vunpack.c.l.b16 %v362
      %v1152 = vunpack.c.l.b16 %v363
      %v1153 = vunpack.c.h.b16 %v363
      %v1154 = vunpack.c.l.b16 %v364
      %v1155 = vunpack.c.h.b16 %v364
      %v1156 = vunpack.c.l.b16 %v365
      %v1157 = vunpack.c.h.b16 %v365
      %v1158 = vunpack.c.l.b16 %v366
      %v1159 = vunpack.c.h.b16 %v366
      %v1160 = vunpack.c.l.b16 %v367
      %v1161 = vunpack.c.h.b16 %v367
      %v1162 = vunpack.c.l.b16 %v368
      %v1163 = vunpack.c.h.b16 %v368
      %v1164 = vunpack.c.l.b16 %v369
      %v1165 = vunpack.c.l.b16 %v370
      %v1166 = vunpack.c.h.b16 %v370
      %v1167 = vunpack.c.l.b16 %v371
      %v1168 = vunpack.c.h.b16 %v371
      %v1169 = vunpack.c.l.b16 %v372
      %v1170 = vunpack.c.h.b16 %v372
      %v1171 = vunpack.c.l.b16 %v373
      %v1172 = vunpack.c.h.b16 %v373
      %v1173 = vunpack.c.l.b16 %v374
      %v1174 = vunpack.c.h.b16 %v374
      %v1175 = vunpack.c.l.b16 %v375
      %v1176 = vunpack.c.h.b16 %v375
      %v1177 = vunpack.c.l.b16 %v376
      %v1178 = vunpack.c.l.b16 %v377
      %v1179 = vunpack.c.h.b16 %v377
      %v1180 = vunpack.c.l.b16 %v378
      %v1181 = vunpack.c.h.b16 %v378
      %v1182 = vunpack.c.l.b16 %v379
      %v1183 = vunpack.c.h.b16 %v379
      %v1184 = vunpack.c.l.b16 %v380
      %v1185 = vunpack.c.h.b16 %v380
      %v1186 = vunpack.c.l.b16 %v381
      %v1187 = vunpack.c.h.b16 %v381
      %v1188 = vunpack.c.l.b16 %v382
      %v1189 = vunpack.c.h.b16 %v382
      %v1190 = vunpack.c.l.b16 %v383
      %v1191 = vunpack.c.l.b16 %v384
      %v1192 = vunpack.c.h.b16 %v384
      %v1193 = vunpack.c.l.b16 %v385
      %v1194 = vunpack.c.h.b16 %v385
      %v1195 = vunpack.c.l.b16 %v386
      %v1196 = vunpack.c.h.b16 %v386
      %v1197 = vunpack.c.l.b16 %v387
      %v1198 = vunpack.c.h.b16 %v387
      %v1199 = vunpack.c.l.b16 %v388
      %v1200 = vunpack.c.h.b16 %v388
      %v1201 = vunpack.c.l.b16 %v389
      %v1202 = vunpack.c.h.b16 %v389
      %v1203 = vunpack.c.l.b16 %v390
      %v1204 = vunpack.c.l.b16 %v391
      %v1205 = vunpack.c.h.b16 %v391
      %v1206 = vunpack.c.l.b16 %v392
      %v1207 = vunpack.c.h.b16 %v392
      %v1208 = vunpack.c.l.b16 %v393
      %v1209 = vunpack.c.h.b16 %v393
      %v1210 = vunpack.c.l.b16 %v394
      %v1211 = vunpack.c.h.b16 %v394
      %v1212 = vunpack.c.l.b16 %v395
      %v1213 = vunpack.c.h.b16 %v395
      %v1214 = vunpack.c.l.b16 %v396
      %v1215 = vunpack.c.h.b16 %v396
      %v1216 = vunpack.c.l.b16 %v397
      %v1217 = vunpack.c.l.b16 %v398
      %v1218 = vunpack.c.h.b16 %v398
      %v1219 = vunpack.c.l.b16 %v399
      %v1220 = vunpack.c.h.b16 %v399
      %v1221 = vunpack.c.l.b16 %v400
      %v1222 = vunpack.c.h.b16 %v400
      %v1223 = vunpack.c.l.b16 %v401
      %v1224 = vunpack.c.h.b16 %v401
      %v1225 = vunpack.c.l.b16 %v402
      %v1226 = vunpack.c.h.b16 %v402
      %v1227 = vunpack.c.l.b16 %v403
      %v1228 = vunpack.c.h.b16 %v403
      %v1229 = vunpack.c.l.b16 %v404
      %v1230 = vunpack.c.l.b16 %v405
      %v1231 = vunpack.c.h.b16 %v405
      %v1232 = vunpack.c.l.b16 %v406
      %v1233 = vunpack.c.h.b16 %v406
      %v1234 = vunpack.c.l.b16 %v407
      %v1235 = vunpack.c.h.b16 %v407
      %v1236 = vunpack.c.l.b16 %v408
      %v1237 = vunpack.c.h.b16 %v408
      %v1238 = vunpack.c.l.b16 %v409
      %v1239 = vunpack.c.h.b16 %v409
      %v1240 = vunpack.c.l.b16 %v410
      %v1241 = vunpack.c.h.b16 %v410
      %v1242 = vunpack.c.l.b16 %v411
      %v1243 = vunpack.c.l.b16 %v412
      %v1244 = vunpack.c.h.b16 %v412
      %v1245 = vunpack.c.l.b16 %v413
      %v1246 = vunpack.c.h.b16 %v413
      %v1247 = vunpack.c.l.b16 %v414
      %v1248 = vunpack.c.h.b16 %v414
      %v1249 = vunpack.c.l.b16 %v415
      %v1250 = vunpack.c.h.b16 %v415
      %v1251 = vunpack.c.l.b16 %v416
      %v1252 = vunpack.c.h.b16 %v416
      %v1253 = vunpack.c.l.b16 %v417
      %v1254 = vunpack.c.h.b16 %v417
      %v1255 = vunpack.c.l.b16 %v418
      %v1256 = vunpack.c.l.b16 %v419
      %v1257 = vunpack.c.h.b16 %v419
      %v1258 = vunpack.c.l.b16 %v420
      %v1259 = vunpack.c.h.b16 %v420
      %v1260 = vunpack.c.l.b16 %v421
      %v1261 = vunpack.c.h.b16 %v421
      %v1262 = vunpack.c.l.b16 %v422
      %v1263 = vunpack.c.h.b16 %v422
      %v1264 = vunpack.c.l.b16 %v423
      %v1265 = vunpack.c.h.b16 %v423
      %v1266 = vunpack.c.l.b16 %v424
      %v1267 = vunpack.c.h.b16 %v424
      %v1268 = vunpack.c.l.b16 %v425
      %v1269 = vunpack.c.l.b16 %v426
      %v1270 = vunpack.c.h.b16 %v426
      %v1271 = vunpack.c.l.b16 %v427
      %v1272 = vunpack.c.h.b16 %v427
      %v1273 = vunpack.c.l.b16 %v428
      %v1274 = vunpack.c.h.b16 %v428
      %v1275 = vunpack.c.l.b16 %v429
      %v1276 = vunpack.c.h.b16 %v429
      %v1277 = vunpack.c.l.b16 %v430
      %v1278 = vunpack.c.h.b16 %v430
      %v1279 = vunpack.c.l.b16 %v431
      %v1280 = vunpack.c.h.b16 %v431
      %v1281 = vunpack.c.l.b16 %v432
      %v1282 = vunpack.c.l.b16 %v433
      %v1283 = vunpack.c.h.b16 %v433
      %v1284 = vunpack.c.l.b16 %v434
      %v1285 = vunpack.c.h.b16 %v434
      %v1286 = vunpack.c.l.b16 %v435
      %v1287 = vunpack.c.h.b16 %v435
      %v1288 = vunpack.c.l.b16 %v436
      %v1289 = vunpack.c.h.b16 %v436
      %v1290 = vunpack.c.l.b16 %v437
      %v1291 = vunpack.c.h.b16 %v437
      %v1292 = vunpack.c.l.b16 %v438
      %v1293 = vunpack.c.h.b16 %v438
      %v1294 = vunpack.c.l.b16 %v439
      %v1295 = vpack.c.b16 %v892, %v879
      %v1296 = vpack.c.b16 %v893, %v880
      %v1297 = vpack.c.b16 %v894, %v881
      %v1298 = vpack.c.b16 %v895, %v882
      %v1299 = vpack.c.b16 %v896, %v883
      %v1300 = vpack.c.b16 %v897, %v884
      %v1301 = vpack.c.b16 %v898, %v885
      %v1302 = vpack.c.b16 %v899, %v886
      %v1303 = vpack.c.b16 %v900, %v887
      %v1304 = vpack.c.b16 %v901, %v888
      %v1305 = vpack.c.b16 %v902, %v889
      %v1306 = vpack.c.b16 %v903, %v890
      %v1307 = vpack.c.b16 %v904, %v891
      %v1308 = vpack.c.b16 %v918, %v905
      %v1309 = vpack.c.b16 %v919, %v906
      %v1310 = vpack.c.b16 %v920, %v907
      %v1311 = vpack.c.b16 %v921, %v908
      %v1312 = vpack.c.b16 %v922, %v909
      %v1313 = vpack.c.b16 %v923, %v910
      %v1314 = vpack.c.b16 %v924, %v911
      %v1315 = vpack.c.b16 %v925, %v912
      %v1316 = vpack.c.b16 %v926, %v913
      %v1317 = vpack.c.b16 %v927, %v914
      %v1318 = vpack.c.b16 %v928, %v915
      %v1319 = vpack.c.b16 %v929, %v916
      %v1320 = vpack.c.b16 %v930, %v917
      %v1321 = vpack.c.b16 %v944, %v931
      %v1322 = vpack.c.b16 %v945, %v932
      %v1323 = vpack.c.b16 %v946, %v933
      %v1324 = vpack.c.b16 %v947, %v934
      %v1325 = vpack.c.b16 %v948, %v935
      %v1326 = vpack.c.b16 %v949, %v936
      %v1327 = vpack.c.b16 %v950, %v937
      %v1328 = vpack.c.b16 %v951, %v938
      %v1329 = vpack.c.b16 %v952, %v939
      %v1330 = vpack.c.b16 %v953, %v940
      %v1331 = vpack.c.b16 %v954, %v941
      %v1332 = vpack.c.b16 %v955, %v942
      %v1333 = vpack.c.b16 %v956, %v943
      %v1334 = vpack.c.b16 %v970, %v957
      %v1335 = vpack.c.b16 %v971, %v958
      %v1336 = vpack.c.b16 %v972, %v959
      %v1337 = vpack.c.b16 %v973, %v960
      %v1338 = vpack.c.b16 %v974, %v961
      %v1339 = vpack.c.b16 %v975, %v962
      %v1340 = vpack.c.b16 %v976, %v963
      %v1341 = vpack.c.b16 %v977, %v964
      %v1342 = vpack.c.b16 %v978, %v965
      %v1343 = vpack.c.b16 %v979, %v966
      %v1344 = vpack.c.b16 %v980, %v967
      %v1345 = vpack.c.b16 %v981, %v968
      %v1346 = vpack.c.b16 %v982, %v969
      %v1347 = vpack.c.b16 %v996, %v983
      %v1348 = vpack.c.b16 %v997, %v984
      %v1349 = vpack.c.b16 %v998, %v985
      %v1350 = vpack.c.b16 %v999, %v986
      %v1351 = vpack.c.b16 %v1000, %v987
      %v1352 = vpack.c.b16 %v1001, %v988
      %v1353 = vpack.c.b16 %v1002, %v989
      %v1354 = vpack.c.b16 %v1003, %v990
      %v1355 = vpack.c.b16 %v1004, %v991
      %v1356 = vpack.c.b16 %v1005, %v992
      %v1357 = vpack.c.b16 %v1006, %v993
      %v1358 = vpack.c.b16 %v1007, %v994
      %v1359 = vpack.c.b16 %v1008, %v995
      %v1360 = vpack.c.b16 %v1022, %v1009
      %v1361 = vpack.c.b16 %v1023, %v1010
      %v1362 = vpack.c.b16 %v1024, %v1011
      %v1363 = vpack.c.b16 %v1025, %v1012
      %v1364 = vpack.c.b16 %v1026, %v1013
      %v1365 = vpack.c.b16 %v1027, %v1014
      %v1366 = vpack.c.b16 %v1028, %v1015
      %v1367 = vpack.c.b16 %v1029, %v1016
      %v1368 = vpack.c.b16 %v1030, %v1017
      %v1369 = vpack.c.b16 %v1031, %v1018
      %v1370 = vpack.c.b16 %v1032, %v1019
      %v1371 = vpack.c.b16 %v1033, %v1020
      %v1372 = vpack.c.b16 %v1034, %v1021
      %v1373 = vpack.c.b16 %v1048, %v1035
      %v1374 = vpack.c.b16 %v1049, %v1036
      %v1375 = vpack.c.b16 %v1050, %v1037
      %v1376 = vpack.c.b16 %v1051, %v1038
      %v1377 = vpack.c.b16 %v1052, %v1039
      %v1378 = vpack.c.b16 %v1053, %v1040
      %v1379 = vpack.c.b16 %v1054, %v1041
      %v1380 = vpack.c.b16 %v1055, %v1042
      %v1381 = vpack.c.b16 %v1056, %v1043
      %v1382 = vpack.c.b16 %v1057, %v1044
      %v1383 = vpack.c.b16 %v1058, %v1045
      %v1384 = vpack.c.b16 %v1059, %v1046
      %v1385 = vpack.c.b16 %v1060, %v1047
      %v1386 = vpack.c.b16 %v1074, %v1061
      %v1387 = vpack.c.b16 %v1075, %v1062
      %v1388 = vpack.c.b16 %v1076, %v1063
      %v1389 = vpack.c.b16 %v1077, %v1064
      %v1390 = vpack.c.b16 %v1078, %v1065
      %v1391 = vpack.c.b16 %v1079, %v1066
      %v1392 = vpack.c.b16 %v1080, %v1067
      %v1393 = vpack.c.b16 %v1081, %v1068
      %v1394 = vpack.c.b16 %v1082, %v1069
      %v1395 = vpack.c.b16 %v1083, %v1070
      %v1396 = vpack.c.b16 %v1084, %v1071
      %v1397 = vpack.c.b16 %v1085, %v1072
      %v1398 = vpack.c.b16 %v1086, %v1073
      %v1399 = vpack.c.b16 %v1100, %v1087
      %v1400 = vpack.c.b16 %v1101, %v1088
      %v1401 = vpack.c.b16 %v1102, %v1089
      %v1402 = vpack.c.b16 %v1103, %v1090
      %v1403 = vpack.c.b16 %v1104, %v1091
      %v1404 = vpack.c.b16 %v1105, %v1092
      %v1405 = vpack.c.b16 %v1106, %v1093
      %v1406 = vpack.c.b16 %v1107, %v1094
      %v1407 = vpack.c.b16 %v1108, %v1095
      %v1408 = vpack.c.b16 %v1109, %v1096
      %v1409 = vpack.c.b16 %v1110, %v1097
      %v1410 = vpack.c.b16 %v1111, %v1098
      %v1411 = vpack.c.b16 %v1112, %v1099
      %v1412 = vpack.c.b16 %v1126, %v1113
      %v1413 = vpack.c.b16 %v1127, %v1114
      %v1414 = vpack.c.b16 %v1128, %v1115
      %v1415 = vpack.c.b16 %v1129, %v1116
      %v1416 = vpack.c.b16 %v1130, %v1117
      %v1417 = vpack.c.b16 %v1131, %v1118
      %v1418 = vpack.c.b16 %v1132, %v1119
      %v1419 = vpack.c.b16 %v1133, %v1120
      %v1420 = vpack.c.b16 %v1134, %v1121
      %v1421 = vpack.c.b16 %v1135, %v1122
      %v1422 = vpack.c.b16 %v1136, %v1123
      %v1423 = vpack.c.b16 %v1137, %v1124
      %v1424 = vpack.c.b16 %v1138, %v1125
      %v1425 = vpack.c.b16 %v1152, %v1139
      %v1426 = vpack.c.b16 %v1153, %v1140
      %v1427 = vpack.c.b16 %v1154, %v1141
      %v1428 = vpack.c.b16 %v1155, %v1142
      %v1429 = vpack.c.b16 %v1156, %v1143
      %v1430 = vpack.c.b16 %v1157, %v1144
      %v1431 = vpack.c.b16 %v1158, %v1145
      %v1432 = vpack.c.b16 %v1159, %v1146
      %v1433 = vpack.c.b16 %v1160, %v1147
      %v1434 = vpack.c.b16 %v1161, %v1148
      %v1435 = vpack.c.b16 %v1162, %v1149
      %v1436 = vpack.c.b16 %v1163, %v1150
      %v1437 = vpack.c.b16 %v1164, %v1151
      %v1438 = vpack.c.b16 %v1178, %v1165
      %v1439 = vpack.c.b16 %v1179, %v1166
      %v1440 = vpack.c.b16 %v1180, %v1167
      %v1441 = vpack.c.b16 %v1181, %v1168
      %v1442 = vpack.c.b16 %v1182, %v1169
      %v1443 = vpack.c.b16 %v1183, %v1170
      %v1444 = vpack.c.b16 %v1184, %v1171
      %v1445 = vpack.c.b16 %v1185, %v1172
      %v1446 = vpack.c.b16 %v1186, %v1173
      %v1447 = vpack.c.b16 %v1187, %v1174
      %v1448 = vpack.c.b16 %v1188, %v1175
      %v1449 = vpack.c.b16 %v1189, %v1176
      %v1450 = vpack.c.b16 %v1190, %v1177
      %v1451 = vpack.c.b16 %v1204, %v1191
      %v1452 = vpack.c.b16 %v1205, %v1192
      %v1453 = vpack.c.b16 %v1206, %v1193
      %v1454 = vpack.c.b16 %v1207, %v1194
      %v1455 = vpack.c.b16 %v1208, %v1195
      %v1456 = vpack.c.b16 %v1209, %v1196
      %v1457 = vpack.c.b16 %v1210, %v1197
      %v1458 = vpack.c.b16 %v1211, %v1198
      %v1459 = vpack.c.b16 %v1212, %v1199
      %v1460 = vpack.c.b16 %v1213, %v1200
      %v1461 = vpack.c.b16 %v1214, %v1201
      %v1462 = vpack.c.b16 %v1215, %v1202
      %v1463 = vpack.c.b16 %v1216, %v1203
      %v1464 = vpack.c.b16 %v1230, %v1217
      %v1465 = vpack.c.b16 %v1231, %v1218
      %v1466 = vpack.c.b16 %v1232, %v1219
      %v1467 = vpack.c.b16 %v1233, %v1220
      %v1468 = vpack.c.b16 %v1234, %v1221
      %v1469 = vpack.c.b16 %v1235, %v1222
      %v1470 = vpack.c.b16 %v1236, %v1223
      %v1471 = vpack.c.b16 %v1237, %v1224
      %v1472 = vpack.c.b16 %v1238, %v1225
      %v1473 = vpack.c.b16 %v1239, %v1226
      %v1474 = vpack.c.b16 %v1240, %v1227
      %v1475 = vpack.c.b16 %v1241, %v1228
      %v1476 = vpack.c.b16 %v1242, %v1229
      %v1477 = vpack.c.b16 %v1256, %v1243
      %v1478 = vpack.c.b16 %v1257, %v1244
      %v1479 = vpack.c.b16 %v1258, %v1245
      %v1480 = vpack.c.b16 %v1259, %v1246
      %v1481 = vpack.c.b16 %v1260, %v1247
      %v1482 = vpack.c.b16 %v1261, %v1248
      %v1483 = vpack.c.b16 %v1262, %v1249
      %v1484 = vpack.c.b16 %v1263, %v1250
      %v1485 = vpack.c.b16 %v1264, %v1251
      %v1486 = vpack.c.b16 %v1265, %v1252
      %v1487 = vpack.c.b16 %v1266, %v1253
      %v1488 = vpack.c.b16 %v1267, %v1254
      %v1489 = vpack.c.b16 %v1268, %v1255
      %v1490 = vpack.c.b16 %v1282, %v1269
      %v1491 = vpack.c.b16 %v1283, %v1270
      %v1492 = vpack.c.b16 %v1284, %v1271
      %v1493 = vpack.c.b16 %v1285, %v1272
      %v1494 = vpack.c.b16 %v1286, %v1273
      %v1495 = vpack.c.b16 %v1287, %v1274
      %v1496 = vpack.c.b16 %v1288, %v1275
      %v1497 = vpack.c.b16 %v1289, %v1276
      %v1498 = vpack.c.b16 %v1290, %v1277
      %v1499 = vpack.c.b16 %v1291, %v1278
      %v1500 = vpack.c.b16 %v1292, %v1279
      %v1501 = vpack.c.b16 %v1293, %v1280
      %v1502 = vpack.c.b16 %v1294, %v1281
      %v1919 = vunpack.c.l.b16 %v440
      %v1920 = vunpack.c.l.b16 %v441
      %v1921 = vunpack.c.l.b16 %v442
      %v1922 = vunpack.c.l.b16 %v443
      %v1923 = vunpack.c.l.b16 %v444
      %v1924 = vunpack.c.l.b16 %v445
      %v1925 = vunpack.c.l.b16 %v446
      %v1926 = vunpack.c.l.b16 %v447
      %v1927 = vunpack.c.l.b16 %v448
      %v1928 = vunpack.c.l.b16 %v449
      %v1929 = vunpack.c.l.b16 %v450
      %v1930 = vunpack.c.l.b16 %v451
      %v1931 = vunpack.c.l.b16 %v452
      %v1932 = vunpack.c.l.b16 %v453
      %v1933 = vunpack.c.l.b16 %v454
      %v1934 = vunpack.c.l.b16 %v455
      %v1935 = vunpack.c.l.b16 %v456
      %v1936 = vunpack.c.l.b16 %v457
      %v1937 = vunpack.c.l.b16 %v458
      %v1938 = vunpack.c.l.b16 %v459
      %v1939 = vunpack.c.l.b16 %v460
      %v1940 = vunpack.c.l.b16 %v461
      %v1941 = vunpack.c.l.b16 %v462
      %v1942 = vunpack.c.l.b16 %v463
      %v1943 = vunpack.c.l.b16 %v464
      %v1944 = vunpack.c.l.b16 %v465
      %v1945 = vunpack.c.l.b16 %v466
      %v1946 = vunpack.c.l.b16 %v467
      %v1947 = vunpack.c.l.b16 %v468
      %v1948 = vunpack.c.l.b16 %v469
      %v1949 = vunpack.c.l.b16 %v470
      %v1950 = vunpack.c.l.b16 %v471
      %v1951 = vunpack.c.l.b16 %v472
      %v1952 = vunpack.c.l.b16 %v473
      %v1953 = vunpack.c.l.b16 %v474
      %v1954 = vunpack.c.l.b16 %v475
      %v1955 = vunpack.c.l.b16 %v476
      %v1956 = vunpack.c.l.b16 %v477
      %v1957 = vunpack.c.l.b16 %v478
      %v1958 = vunpack.c.l.b16 %v479
      %v1959 = vunpack.c.l.b16 %v480
      %v1960 = vunpack.c.l.b16 %v481
      %v1961 = vunpack.c.l.b16 %v482
      %v1962 = vunpack.c.l.b16 %v483
      %v1963 = vunpack.c.l.b16 %v484
      %v1964 = vunpack.c.l.b16 %v485
      %v1965 = vunpack.c.l.b16 %v486
      %v1966 = vunpack.c.l.b16 %v487
      %v1967 = vunpack.c.l.b16 %v488
      %v1968 = vunpack.c.l.b16 %v489
      %v1969 = vunpack.c.l.b16 %v490
      %v1970 = vunpack.c.l.b16 %v491
      %v1971 = vunpack.c.l.b16 %v492
      %v1972 = vunpack.c.l.b16 %v493
      %v1973 = vunpack.c.l.b16 %v494
      %v1974 = vunpack.c.l.b16 %v495
      %v1975 = vunpack.c.l.b16 %v496
      %v1976 = vunpack.c.l.b16 %v497
      %v1977 = vunpack.c.l.b16 %v498
      %v1978 = vunpack.c.l.b16 %v499
      %v1979 = vunpack.c.l.b16 %v500
      %v1980 = vunpack.c.l.b16 %v501
      %v1981 = vunpack.c.l.b16 %v502
      %v1982 = vunpack.c.l.b16 %v503
      %v1983 = vunpack.c.l.b16 %v504
      %v1984 = vunpack.c.l.b16 %v505
      %v1985 = vunpack.c.l.b16 %v506
      %v1986 = vunpack.c.l.b16 %v507
      %v1987 = vunpack.c.l.b16 %v508
      %v1988 = vunpack.c.l.b16 %v509
      %v1989 = vunpack.c.l.b16 %v510
      %v1990 = vunpack.c.l.b16 %v511
      %v1991 = vunpack.c.l.b16 %v512
      %v1992 = vunpack.c.l.b16 %v513
      %v1993 = vunpack.c.l.b16 %v514
      %v1994 = vunpack.c.l.b16 %v515
      %v1995 = vunpack.c.l.b16 %v516
      %v1996 = vunpack.c.l.b16 %v517
      %v1997 = vunpack.c.l.b16 %v518
      %v1998 = vunpack.c.l.b16 %v519
      %v1999 = vunpack.c.l.b16 %v520
      %v2000 = vunpack.c.l.b16 %v521
      %v2001 = vunpack.c.l.b16 %v522
      %v2002 = vunpack.c.l.b16 %v523
      %v2003 = vunpack.c.l.b16 %v524
      %v2004 = vunpack.c.l.b16 %v525
      %v2005 = vunpack.c.l.b16 %v526
      %v2006 = vunpack.c.l.b16 %v527
      %v2007 = vunpack.c.l.b16 %v528
      %v2008 = vunpack.c.l.b16 %v529
      %v2009 = vunpack.c.l.b16 %v530
      %v2010 = vunpack.c.l.b16 %v531
      %v2011 = vunpack.c.l.b16 %v532
      %v2012 = vunpack.c.l.b16 %v533
      %v2013 = vunpack.c.l.b16 %v534
      %v2014 = vunpack.c.l.b16 %v535
      %v2015 = vunpack.c.l.b16 %v536
      %v2016 = vunpack.c.l.b16 %v537
      %v2017 = vunpack.c.l.b16 %v538
      %v2018 = vunpack.c.l.b16 %v539
      %v2019 = vunpack.c.l.b16 %v540
      %v2020 = vunpack.c.l.b16 %v541
      %v2021 = vunpack.c.l.b16 %v542
      %v2022 = vunpack.c.l.b16 %v543
      %v2023 = vunpack.c.l.b16 %v544
      %v2024 = vunpack.c.l.b16 %v545
      %v2025 = vunpack.c.l.b16 %v546
      %v2026 = vunpack.c.l.b16 %v547
      %v2027 = vunpack.c.l.b16 %v548
      %v2028 = vunpack.c.l.b16 %v549
      %v2029 = vunpack.c.l.b16 %v550
      %v2030 = vunpack.c.l.b16 %v551
      %v2031 = vunpack.c.l.b16 %v552
      %v2032 = vunpack.c.l.b16 %v553
      %v2033 = vunpack.c.l.b16 %v554
      %v2034 = vunpack.c.l.b16 %v555
      %v2035 = vunpack.c.l.b16 %v556
      %v2036 = vunpack.c.l.b16 %v557
      %v2037 = vunpack.c.l.b16 %v558
      %v2038 = vunpack.c.l.b16 %v559
      %v2039 = vunpack.c.l.b16 %v560
      %v2040 = vunpack.c.l.b16 %v561
      %v2041 = vunpack.c.l.b16 %v562
      %v2042 = vunpack.c.l.b16 %v563
      %v2043 = vunpack.c.l.b16 %v564
      %v2044 = vunpack.c.l.b16 %v565
      %v2045 = vunpack.c.l.b16 %v566
      %v2046 = vunpack.c.l.b16 %v567
      %v2047 = vunpack.c.l.b16 %v568
      %v2048 = vunpack.c.l.b16 %v569
      %v2049 = vunpack.c.l.b16 %v570
      %v2050 = vunpack.c.l.b16 %v571
      %v2051 = vunpack.c.l.b16 %v572
      %v2052 = vunpack.c.l.b16 %v573
      %v2053 = vunpack.c.l.b16 %v574
      %v2054 = vunpack.c.l.b16 %v575
      %v2055 = vunpack.c.l.b16 %v576
      %v2056 = vunpack.c.l.b16 %v577
      %v2057 = vunpack.c.l.b16 %v578
      %v2058 = vunpack.c.l.b16 %v579
      %v2059 = vunpack.c.l.b16 %v580
      %v2060 = vunpack.c.l.b16 %v581
      %v2061 = vunpack.c.l.b16 %v582
      %v2062 = vunpack.c.l.b16 %v583
      %v2063 = vunpack.c.l.b16 %v584
      %v2064 = vunpack.c.l.b16 %v585
      %v2065 = vunpack.c.l.b16 %v586
      %v2066 = vunpack.c.l.b16 %v587
      %v2067 = vunpack.c.l.b16 %v588
      %v2068 = vunpack.c.l.b16 %v589
      %v2069 = vunpack.c.l.b16 %v590
      %v2070 = vunpack.c.l.b16 %v591
      %v2071 = vunpack.c.l.b16 %v592
      %v2072 = vunpack.c.l.b16 %v593
      %v2073 = vunpack.c.l.b16 %v594
      %v2074 = vunpack.c.l.b16 %v595
      %v2075 = vunpack.c.l.b16 %v596
      %v2076 = vunpack.c.l.b16 %v597
      %v2077 = vunpack.c.l.b16 %v598
      %v2078 = vunpack.c.l.b16 %v599
      %v2079 = vunpack.c.l.b16 %v600
      %v2080 = vunpack.c.l.b16 %v601
      %v2081 = vunpack.c.l.b16 %v602
      %v2082 = vunpack.c.l.b16 %v603
      %v2083 = vunpack.c.l.b16 %v604
      %v2084 = vunpack.c.l.b16 %v605
      %v2085 = vunpack.c.l.b16 %v606
      %v2086 = vunpack.c.l.b16 %v607
      %v2087 = vunpack.c.l.b16 %v608
      %v2088 = vunpack.c.l.b16 %v609
      %v2089 = vunpack.c.l.b16 %v610
      %v2090 = vunpack.c.l.b16 %v611
      %v2091 = vunpack.c.l.b16 %v612
      %v2092 = vunpack.c.l.b16 %v613
      %v2093 = vunpack.c.l.b16 %v614
      %v2094 = vunpack.c.l.b16 %v615
      %v2095 = vunpack.c.l.b16 %v616
      %v2096 = vunpack.c.l.b16 %v617
      %v2097 = vunpack.c.l.b16 %v618
      %v2098 = vunpack.c.l.b16 %v619
      %v2099 = vunpack.c.l.b16 %v620
      %v2100 = vunpack.c.l.b16 %v621
      %v2101 = vunpack.c.l.b16 %v622
      %v2102 = vunpack.c.l.b16 %v623
      %v2103 = vunpack.c.l.b16 %v624
      %v2104 = vunpack.c.l.b16 %v625
      %v2105 = vunpack.c.l.b16 %v626
      %v2106 = vunpack.c.l.b16 %v627
      %v2107 = vunpack.c.l.b16 %v628
      %v2108 = vunpack.c.l.b16 %v629
      %v2109 = vunpack.c.l.b16 %v630
      %v2110 = vunpack.c.l.b16 %v631
      %v2111 = vunpack.c.l.b16 %v632
      %v2112 = vunpack.c.l.b16 %v633
      %v2113 = vunpack.c.l.b16 %v634
      %v2114 = vunpack.c.l.b16 %v635
      %v2115 = vunpack.c.l.b16 %v636
      %v2116 = vunpack.c.l.b16 %v637
      %v2117 = vunpack.c.l.b16 %v638
      %v2118 = vunpack.c.l.b16 %v639
      %v2119 = vunpack.c.l.b16 %v640
      %v2120 = vunpack.c.l.b16 %v641
      %v2121 = vunpack.c.l.b16 %v642
      %v2122 = vunpack.c.l.b16 %v643
      %v2123 = vunpack.c.l.b16 %v644
      %v2124 = vunpack.c.l.b16 %v645
      %v2125 = vunpack.c.l.b16 %v646
      %v2126 = vunpack.c.l.b16 %v647
      %v2127 = vpack.c.b16 %v1920, %v1919
      %v2128 = vpack.c.b16 %v1922, %v1921
      %v2129 = vpack.c.b16 %v1924, %v1923
      %v2130 = vpack.c.b16 %v1926, %v1925
      %v2131 = vpack.c.b16 %v1928, %v1927
      %v2132 = vpack.c.b16 %v1930, %v1929
      %v2133 = vpack.c.b16 %v1932, %v1931
      %v2134 = vpack.c.b16 %v1934, %v1933
      %v2135 = vpack.c.b16 %v1936, %v1935
      %v2136 = vpack.c.b16 %v1938, %v1937
      %v2137 = vpack.c.b16 %v1940, %v1939
      %v2138 = vpack.c.b16 %v1942, %v1941
      %v2139 = vpack.c.b16 %v1944, %v1943
      %v2140 = vpack.c.b16 %v1946, %v1945
      %v2141 = vpack.c.b16 %v1948, %v1947
      %v2142 = vpack.c.b16 %v1950, %v1949
      %v2143 = vpack.c.b16 %v1952, %v1951
      %v2144 = vpack.c.b16 %v1954, %v1953
      %v2145 = vpack.c.b16 %v1956, %v1955
      %v2146 = vpack.c.b16 %v1958, %v1957
      %v2147 = vpack.c.b16 %v1960, %v1959
      %v2148 = vpack.c.b16 %v1962, %v1961
      %v2149 = vpack.c.b16 %v1964, %v1963
      %v2150 = vpack.c.b16 %v1966, %v1965
      %v2151 = vpack.c.b16 %v1968, %v1967
      %v2152 = vpack.c.b16 %v1970, %v1969
      %v2153 = vpack.c.b16 %v1972, %v1971
      %v2154 = vpack.c.b16 %v1974, %v1973
      %v2155 = vpack.c.b16 %v1976, %v1975
      %v2156 = vpack.c.b16 %v1978, %v1977
      %v2157 = vpack.c.b16 %v1980, %v1979
      %v2158 = vpack.c.b16 %v1982, %v1981
      %v2159 = vpack.c.b16 %v1984, %v1983
      %v2160 = vpack.c.b16 %v1986, %v1985
      %v2161 = vpack.c.b16 %v1988, %v1987
      %v2162 = vpack.c.b16 %v1990, %v1989
      %v2163 = vpack.c.b16 %v1992, %v1991
      %v2164 = vpack.c.b16 %v1994, %v1993
      %v2165 = vpack.c.b16 %v1996, %v1995
      %v2166 = vpack.c.b16 %v1998, %v1997
      %v2167 = vpack.c.b16 %v2000, %v1999
      %v2168 = vpack.c.b16 %v2002, %v2001
      %v2169 = vpack.c.b16 %v2004, %v2003
      %v2170 = vpack.c.b16 %v2006, %v2005
      %v2171 = vpack.c.b16 %v2008, %v2007
      %v2172 = vpack.c.b16 %v2010, %v2009
      %v2173 = vpack.c.b16 %v2012, %v2011
      %v2174 = vpack.c.b16 %v2014, %v2013
      %v2175 = vpack.c.b16 %v2016, %v2015
      %v2176 = vpack.c.b16 %v2018, %v2017
      %v2177 = vpack.c.b16 %v2020, %v2019
      %v2178 = vpack.c.b16 %v2022, %v2021
      %v2179 = vpack.c.b16 %v2024, %v2023
      %v2180 = vpack.c.b16 %v2026, %v2025
      %v2181 = vpack.c.b16 %v2028, %v2027
      %v2182 = vpack.c.b16 %v2030, %v2029
      %v2183 = vpack.c.b16 %v2032, %v2031
      %v2184 = vpack.c.b16 %v2034, %v2033
      %v2185 = vpack.c.b16 %v2036, %v2035
      %v2186 = vpack.c.b16 %v2038, %v2037
      %v2187 = vpack.c.b16 %v2040, %v2039
      %v2188 = vpack.c.b16 %v2042, %v2041
      %v2189 = vpack.c.b16 %v2044, %v2043
      %v2190 = vpack.c.b16 %v2046, %v2045
      %v2191 = vpack.c.b16 %v2048, %v2047
      %v2192 = vpack.c.b16 %v2050, %v2049
      %v2193 = vpack.c.b16 %v2052, %v2051
      %v2194 = vpack.c.b16 %v2054, %v2053
      %v2195 = vpack.c.b16 %v2056, %v2055
      %v2196 = vpack.c.b16 %v2058, %v2057
      %v2197 = vpack.c.b16 %v2060, %v2059
      %v2198 = vpack.c.b16 %v2062, %v2061
      %v2199 = vpack.c.b16 %v2064, %v2063
      %v2200 = vpack.c.b16 %v2066, %v2065
      %v2201 = vpack.c.b16 %v2068, %v2067
      %v2202 = vpack.c.b16 %v2070, %v2069
      %v2203 = vpack.c.b16 %v2072, %v2071
      %v2204 = vpack.c.b16 %v2074, %v2073
      %v2205 = vpack.c.b16 %v2076, %v2075
      %v2206 = vpack.c.b16 %v2078, %v2077
      %v2207 = vpack.c.b16 %v2080, %v2079
      %v2208 = vpack.c.b16 %v2082, %v2081
      %v2209 = vpack.c.b16 %v2084, %v2083
      %v2210 = vpack.c.b16 %v2086, %v2085
      %v2211 = vpack.c.b16 %v2088, %v2087
      %v2212 = vpack.c.b16 %v2090, %v2089
      %v2213 = vpack.c.b16 %v2092, %v2091
      %v2214 = vpack.c.b16 %v2094, %v2093
      %v2215 = vpack.c.b16 %v2096, %v2095
      %v2216 = vpack.c.b16 %v2098, %v2097
      %v2217 = vpack.c.b16 %v2100, %v2099
      %v2218 = vpack.c.b16 %v2102, %v2101
      %v2219 = vpack.c.b16 %v2104, %v2103
      %v2220 = vpack.c.b16 %v2106, %v2105
      %v2221 = vpack.c.b16 %v2108, %v2107
      %v2222 = vpack.c.b16 %v2110, %v2109
      %v2223 = vpack.c.b16 %v2112, %v2111
      %v2224 = vpack.c.b16 %v2114, %v2113
      %v2225 = vpack.c.b16 %v2116, %v2115
      %v2226 = vpack.c.b16 %v2118, %v2117
      %v2227 = vpack.c.b16 %v2120, %v2119
      %v2228 = vpack.c.b16 %v2122, %v2121
      %v2229 = vpack.c.b16 %v2124, %v2123
      %v2230 = vpack.c.b16 %v2126, %v2125
      %2335 = vmatprep.subr.bf16.mxu0 0
      %2336 = vmatpush1.bf16.msra.mxu0 %v2127
      %2337 = vmatprep.subr.bf16.mxu0 0
      %2338 = vmatpush1.bf16.msra.mxu0 %v2128
      %2339 = vmatprep.subr.bf16.mxu0 0
      %2340 = vmatpush1.bf16.msra.mxu0 %v2129
      %2341 = vmatprep.subr.bf16.mxu0 0
      %2342 = vmatpush1.bf16.msra.mxu0 %v2130
      %2343 = vmatprep.subr.bf16.mxu0 0
      %2344 = vmatpush1.bf16.msra.mxu0 %v2131
      %2345 = vmatprep.subr.bf16.mxu0 0
      %2346 = vmatpush1.bf16.msra.mxu0 %v2132
      %2347 = vmatprep.subr.bf16.mxu0 0
      %2348 = vmatpush1.bf16.msra.mxu0 %v2133
      %2349 = vmatprep.subr.bf16.mxu0 0
      %2350 = vmatpush1.bf16.msra.mxu0 %v2134
      %2351 = vmatprep.subr.bf16.mxu0 0
      %2352 = vmatpush1.bf16.msra.mxu0 %v2135
      %2353 = vmatprep.subr.bf16.mxu0 0
      %2354 = vmatpush1.bf16.msra.mxu0 %v2136
      %2355 = vmatprep.subr.bf16.mxu0 0
      %2356 = vmatpush1.bf16.msra.mxu0 %v2137
      %2357 = vmatprep.subr.bf16.mxu0 0
      %2358 = vmatpush1.bf16.msra.mxu0 %v2138
      %2359 = vmatprep.subr.bf16.mxu0 0
      %2360 = vmatpush1.bf16.msra.mxu0 %v2139
      %2361 = vmatprep.subr.bf16.mxu0 0
      %2362 = vmatpush1.bf16.msra.mxu0 %v2140
      %2363 = vmatprep.subr.bf16.mxu0 0
      %2364 = vmatpush1.bf16.msra.mxu0 %v2141
      %2365 = vmatprep.subr.bf16.mxu0 0
      %2366 = vmatpush1.bf16.msra.mxu0 %v2142
      %2367 = vmatprep.mubr.bf16.mxu0 %v1296
      %2368 = vmatmul.mubr.bf16.gmra.mrb[0].mxu0 %v1295
      %v2369 = vpop.f32.mrb[0].mxu0
      %v2370 = vadd.f32 %v653, %v2369
      %v2371 = vpop.f32.mrb[0].mxu0
      %v2372 = vpop.f32.mrb[0].mxu0
      %v2373 = vadd.f32 %v653, %v2372
      %v2374 = vpop.f32.mrb[0].mxu0
      %2375 = vmatprep.mubr.bf16.mxu0 %v1309
      %2376 = vmatmul.mubr.bf16.gmra.mrb[0].mxu0 %v1308
      %v2377 = vpop.f32.mrb[0].mxu0
      %v2378 = vadd.f32 %v653, %v2377
      %v2379 = vpop.f32.mrb[0].mxu0
      %v2380 = vpop.f32.mrb[0].mxu0
      %v2381 = vadd.f32 %v653, %v2380
      %v2382 = vpop.f32.mrb[0].mxu0
      %2383 = vmatprep.mubr.bf16.mxu0 %v1322
      %2384 = vmatmul.mubr.bf16.gmra.mrb[0].mxu0 %v1321
      %v2385 = vpop.f32.mrb[0].mxu0
      %v2386 = vadd.f32 %v653, %v2385
      %v2387 = vpop.f32.mrb[0].mxu0
      %v2388 = vpop.f32.mrb[0].mxu0
      %v2389 = vadd.f32 %v653, %v2388
      %v2390 = vpop.f32.mrb[0].mxu0
      %2391 = vmatprep.mubr.bf16.mxu0 %v1335
      %2392 = vmatmul.mubr.bf16.gmra.mrb[0].mxu0 %v1334
      %v2393 = vpop.f32.mrb[0].mxu0
      %v2394 = vadd.f32 %v653, %v2393
      %v2395 = vpop.f32.mrb[0].mxu0
      %v2396 = vpop.f32.mrb[0].mxu0
      %v2397 = vadd.f32 %v653, %v2396
      %v2398 = vpop.f32.mrb[0].mxu0
      %2399 = vmatprep.mubr.bf16.mxu0 %v1348
      %2400 = vmatmul.mubr.bf16.gmra.mrb[0].mxu0 %v1347
      %v2401 = vpop.f32.mrb[0].mxu0
      %v2402 = vadd.f32 %v653, %v2401
      %v2403 = vpop.f32.mrb[0].mxu0
      %v2404 = vpop.f32.mrb[0].mxu0
      %v2405 = vadd.f32 %v653, %v2404
      %v2406 = vpop.f32.mrb[0].mxu0
      %2407 = vmatprep.mubr.bf16.mxu0 %v1361
      %2408 = vmatmul.mubr.bf16.gmra.mrb[0].mxu0 %v1360
      %v2409 = vpop.f32.mrb[0].mxu0
      %v2410 = vadd.f32 %v653, %v2409
      %v2411 = vpop.f32.mrb[0].mxu0
      %v2412 = vpop.f32.mrb[0].mxu0
      %v2413 = vadd.f32 %v653, %v2412
      %v2414 = vpop.f32.mrb[0].mxu0
      %2415 = vmatprep.mubr.bf16.mxu0 %v1374
      %2416 = vmatmul.mubr.bf16.gmra.mrb[0].mxu0 %v1373
      %v2417 = vpop.f32.mrb[0].mxu0
      %v2418 = vadd.f32 %v653, %v2417
      %v2419 = vpop.f32.mrb[0].mxu0
      %v2420 = vpop.f32.mrb[0].mxu0
      %v2421 = vadd.f32 %v653, %v2420
      %v2422 = vpop.f32.mrb[0].mxu0
      %2423 = vmatprep.mubr.bf16.mxu0 %v1387
      %2424 = vmatmul.mubr.bf16.gmra.mrb[0].mxu0 %v1386
      %v2425 = vpop.f32.mrb[0].mxu0
      %v2426 = vadd.f32 %v653, %v2425
      %v2427 = vpop.f32.mrb[0].mxu0
      %v2428 = vpop.f32.mrb[0].mxu0
      %v2429 = vadd.f32 %v653, %v2428
      %v2430 = vpop.f32.mrb[0].mxu0
      %2431 = vmatprep.mubr.bf16.mxu0 %v1400
      %2432 = vmatmul.mubr.bf16.gmra.mrb[0].mxu0 %v1399
      %v2433 = vpop.f32.mrb[0].mxu0
      %v2434 = vadd.f32 %v653, %v2433
      %v2435 = vpop.f32.mrb[0].mxu0
      %v2436 = vpop.f32.mrb[0].mxu0
      %v2437 = vadd.f32 %v653, %v2436
      %v2438 = vpop.f32.mrb[0].mxu0
      %2439 = vmatprep.mubr.bf16.mxu0 %v1413
      %2440 = vmatmul.mubr.bf16.gmra.mrb[0].mxu0 %v1412
      %v2441 = vpop.f32.mrb[0].mxu0
      %v2442 = vadd.f32 %v653, %v2441
      %v2443 = vpop.f32.mrb[0].mxu0
      %v2444 = vpop.f32.mrb[0].mxu0
      %v2445 = vadd.f32 %v653, %v2444
      %v2446 = vpop.f32.mrb[0].mxu0
      %2447 = vmatprep.mubr.bf16.mxu0 %v1426
      %2448 = vmatmul.mubr.bf16.gmra.mrb[0].mxu0 %v1425
      %v2449 = vpop.f32.mrb[0].mxu0
      %v2450 = vadd.f32 %v653, %v2449
      %v2451 = vpop.f32.mrb[0].mxu0
      %v2452 = vpop.f32.mrb[0].mxu0
      %v2453 = vadd.f32 %v653, %v2452
      %v2454 = vpop.f32.mrb[0].mxu0
      %2455 = vmatprep.mubr.bf16.mxu0 %v1439
      %2456 = vmatmul.mubr.bf16.gmra.mrb[0].mxu0 %v1438
      %v2457 = vpop.f32.mrb[0].mxu0
      %v2458 = vadd.f32 %v653, %v2457
      %v2459 = vpop.f32.mrb[0].mxu0
      %v2460 = vpop.f32.mrb[0].mxu0
      %v2461 = vadd.f32 %v653, %v2460
      %v2462 = vpop.f32.mrb[0].mxu0
      %2463 = vmatprep.mubr.bf16.mxu0 %v1452
      %2464 = vmatmul.mubr.bf16.gmra.mrb[0].mxu0 %v1451
      %v2465 = vpop.f32.mrb[0].mxu0
      %v2466 = vadd.f32 %v653, %v2465
      %v2467 = vpop.f32.mrb[0].mxu0
      %v2468 = vpop.f32.mrb[0].mxu0
      %v2469 = vadd.f32 %v653, %v2468
      %v2470 = vpop.f32.mrb[0].mxu0
      %2471 = vmatprep.mubr.bf16.mxu0 %v1465
      %2472 = vmatmul.mubr.bf16.gmra.mrb[0].mxu0 %v1464
      %v2473 = vpop.f32.mrb[0].mxu0
      %v2474 = vadd.f32 %v653, %v2473
      %v2475 = vpop.f32.mrb[0].mxu0
      %v2476 = vpop.f32.mrb[0].mxu0
      %v2477 = vadd.f32 %v653, %v2476
      %v2478 = vpop.f32.mrb[0].mxu0
      %2479 = vmatprep.mubr.bf16.mxu0 %v1478
      %2480 = vmatmul.mubr.bf16.gmra.mrb[0].mxu0 %v1477
      %v2481 = vpop.f32.mrb[0].mxu0
      %v2482 = vadd.f32 %v653, %v2481
      %v2483 = vpop.f32.mrb[0].mxu0
      %v2484 = vpop.f32.mrb[0].mxu0
      %v2485 = vadd.f32 %v653, %v2484
      %v2486 = vpop.f32.mrb[0].mxu0
      %2487 = vmatprep.mubr.bf16.mxu0 %v1491
      %2488 = vmatmul.mubr.bf16.gmra.mrb[0].mxu0 %v1490
      %v2489 = vpop.f32.mrb[0].mxu0
      %v2490 = vadd.f32 %v653, %v2489
      %v2491 = vpop.f32.mrb[0].mxu0
      %v2492 = vpop.f32.mrb[0].mxu0
      %v2493 = vadd.f32 %v653, %v2492
      %v2494 = vpop.f32.mrb[0].mxu0
      %2495 = vdwg.mxu0
      %2496 = vmatprep.subr.bf16.mxu0 0
      %2497 = vmatpush1.bf16.msra.mxu0 %v2143
      %2498 = vmatprep.subr.bf16.mxu0 0
      %2499 = vmatpush1.bf16.msra.mxu0 %v2144
      %2500 = vmatprep.subr.bf16.mxu0 0
      %2501 = vmatpush1.bf16.msra.mxu0 %v2145
      %2502 = vmatprep.subr.bf16.mxu0 0
      %2503 = vmatpush1.bf16.msra.mxu0 %v2146
      %2504 = vmatprep.subr.bf16.mxu0 0
      %2505 = vmatpush1.bf16.msra.mxu0 %v2147
      %2506 = vmatprep.subr.bf16.mxu0 0
      %2507 = vmatpush1.bf16.msra.mxu0 %v2148
      %2508 = vmatprep.subr.bf16.mxu0 0
      %2509 = vmatpush1.bf16.msra.mxu0 %v2149
      %2510 = vmatprep.subr.bf16.mxu0 0
      %2511 = vmatpush1.bf16.msra.mxu0 %v2150
      %2512 = vmatprep.subr.bf16.mxu0 0
      %2513 = vmatpush1.bf16.msra.mxu0 %v2151
      %2514 = vmatprep.subr.bf16.mxu0 0
      %2515 = vmatpush1.bf16.msra.mxu0 %v2152
      %2516 = vmatprep.subr.bf16.mxu0 0
      %2517 = vmatpush1.bf16.msra.mxu0 %v2153
      %2518 = vmatprep.subr.bf16.mxu0 0
      %2519 = vmatpush1.bf16.msra.mxu0 %v2154
      %2520 = vmatprep.subr.bf16.mxu0 0
      %2521 = vmatpush1.bf16.msra.mxu0 %v2155
      %2522 = vmatprep.subr.bf16.mxu0 0
      %2523 = vmatpush1.bf16.msra.mxu0 %v2156
      %2524 = vmatprep.subr.bf16.mxu0 0
      %2525 = vmatpush1.bf16.msra.mxu0 %v2157
      %2526 = vmatprep.subr.bf16.mxu0 0
      %2527 = vmatpush1.bf16.msra.mxu0 %v2158
      %2528 = vmatprep.mubr.bf16.mxu0 %v1298
      %2529 = vmatmul.mubr.bf16.gmra.mrb[0].mxu0 %v1297
      %v2530 = vpop.f32.mrb[0].mxu0
      %v2531 = vadd.f32 %v2370, %v2530
      %v2532 = vpop.f32.mrb[0].mxu0
      %v2533 = vpop.f32.mrb[0].mxu0
      %v2534 = vadd.f32 %v2373, %v2533
      %v2535 = vpop.f32.mrb[0].mxu0
      %2536 = vmatprep.mubr.bf16.mxu0 %v1311
      %2537 = vmatmul.mubr.bf16.gmra.mrb[0].mxu0 %v1310
      %v2538 = vpop.f32.mrb[0].mxu0
      %v2539 = vadd.f32 %v2378, %v2538
      %v2540 = vpop.f32.mrb[0].mxu0
      %v2541 = vpop.f32.mrb[0].mxu0
      %v2542 = vadd.f32 %v2381, %v2541
      %v2543 = vpop.f32.mrb[0].mxu0
      %2544 = vmatprep.mubr.bf16.mxu0 %v1324
      %2545 = vmatmul.mubr.bf16.gmra.mrb[0].mxu0 %v1323
      %v2546 = vpop.f32.mrb[0].mxu0
      %v2547 = vadd.f32 %v2386, %v2546
      %v2548 = vpop.f32.mrb[0].mxu0
      %v2549 = vpop.f32.mrb[0].mxu0
      %v2550 = vadd.f32 %v2389, %v2549
      %v2551 = vpop.f32.mrb[0].mxu0
      %2552 = vmatprep.mubr.bf16.mxu0 %v1337
      %2553 = vmatmul.mubr.bf16.gmra.mrb[0].mxu0 %v1336
      %v2554 = vpop.f32.mrb[0].mxu0
      %v2555 = vadd.f32 %v2394, %v2554
      %v2556 = vpop.f32.mrb[0].mxu0
      %v2557 = vpop.f32.mrb[0].mxu0
      %v2558 = vadd.f32 %v2397, %v2557
      %v2559 = vpop.f32.mrb[0].mxu0
      %2560 = vmatprep.mubr.bf16.mxu0 %v1350
      %2561 = vmatmul.mubr.bf16.gmra.mrb[0].mxu0 %v1349
      %v2562 = vpop.f32.mrb[0].mxu0
      %v2563 = vadd.f32 %v2402, %v2562
      %v2564 = vpop.f32.mrb[0].mxu0
      %v2565 = vpop.f32.mrb[0].mxu0
      %v2566 = vadd.f32 %v2405, %v2565
      %v2567 = vpop.f32.mrb[0].mxu0
      %2568 = vmatprep.mubr.bf16.mxu0 %v1363
      %2569 = vmatmul.mubr.bf16.gmra.mrb[0].mxu0 %v1362
      %v2570 = vpop.f32.mrb[0].mxu0
      %v2571 = vadd.f32 %v2410, %v2570
      %v2572 = vpop.f32.mrb[0].mxu0
      %v2573 = vpop.f32.mrb[0].mxu0
      %v2574 = vadd.f32 %v2413, %v2573
      %v2575 = vpop.f32.mrb[0].mxu0
      %2576 = vmatprep.mubr.bf16.mxu0 %v1376
      %2577 = vmatmul.mubr.bf16.gmra.mrb[0].mxu0 %v1375
      %v2578 = vpop.f32.mrb[0].mxu0
      %v2579 = vadd.f32 %v2418, %v2578
      %v2580 = vpop.f32.mrb[0].mxu0
      %v2581 = vpop.f32.mrb[0].mxu0
      %v2582 = vadd.f32 %v2421, %v2581
      %v2583 = vpop.f32.mrb[0].mxu0
      %2584 = vmatprep.mubr.bf16.mxu0 %v1389
      %2585 = vmatmul.mubr.bf16.gmra.mrb[0].mxu0 %v1388
      %v2586 = vpop.f32.mrb[0].mxu0
      %v2587 = vadd.f32 %v2426, %v2586
      %v2588 = vpop.f32.mrb[0].mxu0
      %v2589 = vpop.f32.mrb[0].mxu0
      %v2590 = vadd.f32 %v2429, %v2589
      %v2591 = vpop.f32.mrb[0].mxu0
      %2592 = vmatprep.mubr.bf16.mxu0 %v1402
      %2593 = vmatmul.mubr.bf16.gmra.mrb[0].mxu0 %v1401
      %v2594 = vpop.f32.mrb[0].mxu0
      %v2595 = vadd.f32 %v2434, %v2594
      %v2596 = vpop.f32.mrb[0].mxu0
      %v2597 = vpop.f32.mrb[0].mxu0
      %v2598 = vadd.f32 %v2437, %v2597
      %v2599 = vpop.f32.mrb[0].mxu0
      %2600 = vmatprep.mubr.bf16.mxu0 %v1415
      %2601 = vmatmul.mubr.bf16.gmra.mrb[0].mxu0 %v1414
      %v2602 = vpop.f32.mrb[0].mxu0
      %v2603 = vadd.f32 %v2442, %v2602
      %v2604 = vpop.f32.mrb[0].mxu0
      %v2605 = vpop.f32.mrb[0].mxu0
      %v2606 = vadd.f32 %v2445, %v2605
      %v2607 = vpop.f32.mrb[0].mxu0
      %2608 = vmatprep.mubr.bf16.mxu0 %v1428
      %2609 = vmatmul.mubr.bf16.gmra.mrb[0].mxu0 %v1427
      %v2610 = vpop.f32.mrb[0].mxu0
      %v2611 = vadd.f32 %v2450, %v2610
      %v2612 = vpop.f32.mrb[0].mxu0
      %v2613 = vpop.f32.mrb[0].mxu0
      %v2614 = vadd.f32 %v2453, %v2613
      %v2615 = vpop.f32.mrb[0].mxu0
      %2616 = vmatprep.mubr.bf16.mxu0 %v1441
      %2617 = vmatmul.mubr.bf16.gmra.mrb[0].mxu0 %v1440
      %v2618 = vpop.f32.mrb[0].mxu0
      %v2619 = vadd.f32 %v2458, %v2618
      %v2620 = vpop.f32.mrb[0].mxu0
      %v2621 = vpop.f32.mrb[0].mxu0
      %v2622 = vadd.f32 %v2461, %v2621
      %v2623 = vpop.f32.mrb[0].mxu0
      %2624 = vmatprep.mubr.bf16.mxu0 %v1454
      %2625 = vmatmul.mubr.bf16.gmra.mrb[0].mxu0 %v1453
      %v2626 = vpop.f32.mrb[0].mxu0
      %v2627 = vadd.f32 %v2466, %v2626
      %v2628 = vpop.f32.mrb[0].mxu0
      %v2629 = vpop.f32.mrb[0].mxu0
      %v2630 = vadd.f32 %v2469, %v2629
      %v2631 = vpop.f32.mrb[0].mxu0
      %2632 = vmatprep.mubr.bf16.mxu0 %v1467
      %2633 = vmatmul.mubr.bf16.gmra.mrb[0].mxu0 %v1466
      %v2634 = vpop.f32.mrb[0].mxu0
      %v2635 = vadd.f32 %v2474, %v2634
      %v2636 = vpop.f32.mrb[0].mxu0
      %v2637 = vpop.f32.mrb[0].mxu0
      %v2638 = vadd.f32 %v2477, %v2637
      %v2639 = vpop.f32.mrb[0].mxu0
      %2640 = vmatprep.mubr.bf16.mxu0 %v1480
      %2641 = vmatmul.mubr.bf16.gmra.mrb[0].mxu0 %v1479
      %v2642 = vpop.f32.mrb[0].mxu0
      %v2643 = vadd.f32 %v2482, %v2642
      %v2644 = vpop.f32.mrb[0].mxu0
      %v2645 = vpop.f32.mrb[0].mxu0
      %v2646 = vadd.f32 %v2485, %v2645
      %v2647 = vpop.f32.mrb[0].mxu0
      %2648 = vmatprep.mubr.bf16.mxu0 %v1493
      %2649 = vmatmul.mubr.bf16.gmra.mrb[0].mxu0 %v1492
      %v2650 = vpop.f32.mrb[0].mxu0
      %v2651 = vadd.f32 %v2490, %v2650
      %v2652 = vpop.f32.mrb[0].mxu0
      %v2653 = vpop.f32.mrb[0].mxu0
      %v2654 = vadd.f32 %v2493, %v2653
      %v2655 = vpop.f32.mrb[0].mxu0
      %2656 = vdwg.mxu0
      %2657 = vmatprep.subr.bf16.mxu0 0
      %2658 = vmatpush1.bf16.msra.mxu0 %v2159
      %2659 = vmatprep.subr.bf16.mxu0 0
      %2660 = vmatpush1.bf16.msra.mxu0 %v2160
      %2661 = vmatprep.subr.bf16.mxu0 0
      %2662 = vmatpush1.bf16.msra.mxu0 %v2161
      %2663 = vmatprep.subr.bf16.mxu0 0
      %2664 = vmatpush1.bf16.msra.mxu0 %v2162
      %2665 = vmatprep.subr.bf16.mxu0 0
      %2666 = vmatpush1.bf16.msra.mxu0 %v2163
      %2667 = vmatprep.subr.bf16.mxu0 0
      %2668 = vmatpush1.bf16.msra.mxu0 %v2164
      %2669 = vmatprep.subr.bf16.mxu0 0
      %2670 = vmatpush1.bf16.msra.mxu0 %v2165
      %2671 = vmatprep.subr.bf16.mxu0 0
      %2672 = vmatpush1.bf16.msra.mxu0 %v2166
      %2673 = vmatprep.subr.bf16.mxu0 0
      %2674 = vmatpush1.bf16.msra.mxu0 %v2167
      %2675 = vmatprep.subr.bf16.mxu0 0
      %2676 = vmatpush1.bf16.msra.mxu0 %v2168
      %2677 = vmatprep.subr.bf16.mxu0 0
      %2678 = vmatpush1.bf16.msra.mxu0 %v2169
      %2679 = vmatprep.subr.bf16.mxu0 0
      %2680 = vmatpush1.bf16.msra.mxu0 %v2170
      %2681 = vmatprep.subr.bf16.mxu0 0
      %2682 = vmatpush1.bf16.msra.mxu0 %v2171
      %2683 = vmatprep.subr.bf16.mxu0 0
      %2684 = vmatpush1.bf16.msra.mxu0 %v2172
      %2685 = vmatprep.subr.bf16.mxu0 0
      %2686 = vmatpush1.bf16.msra.mxu0 %v2173
      %2687 = vmatprep.subr.bf16.mxu0 0
      %2688 = vmatpush1.bf16.msra.mxu0 %v2174
      %2689 = vmatprep.mubr.bf16.mxu0 %v1300
      %2690 = vmatmul.mubr.bf16.gmra.mrb[0].mxu0 %v1299
      %v2691 = vpop.f32.mrb[0].mxu0
      %v2692 = vadd.f32 %v2531, %v2691
      %v2693 = vpop.f32.mrb[0].mxu0
      %v2694 = vpop.f32.mrb[0].mxu0
      %v2695 = vadd.f32 %v2534, %v2694
      %v2696 = vpop.f32.mrb[0].mxu0
      %2697 = vmatprep.mubr.bf16.mxu0 %v1313
      %2698 = vmatmul.mubr.bf16.gmra.mrb[0].mxu0 %v1312
      %v2699 = vpop.f32.mrb[0].mxu0
      %v2700 = vadd.f32 %v2539, %v2699
      %v2701 = vpop.f32.mrb[0].mxu0
      %v2702 = vpop.f32.mrb[0].mxu0
      %v2703 = vadd.f32 %v2542, %v2702
      %v2704 = vpop.f32.mrb[0].mxu0
      %2705 = vmatprep.mubr.bf16.mxu0 %v1326
      %2706 = vmatmul.mubr.bf16.gmra.mrb[0].mxu0 %v1325
      %v2707 = vpop.f32.mrb[0].mxu0
      %v2708 = vadd.f32 %v2547, %v2707
      %v2709 = vpop.f32.mrb[0].mxu0
      %v2710 = vpop.f32.mrb[0].mxu0
      %v2711 = vadd.f32 %v2550, %v2710
      %v2712 = vpop.f32.mrb[0].mxu0
      %2713 = vmatprep.mubr.bf16.mxu0 %v1339
      %2714 = vmatmul.mubr.bf16.gmra.mrb[0].mxu0 %v1338
      %v2715 = vpop.f32.mrb[0].mxu0
      %v2716 = vadd.f32 %v2555, %v2715
      %v2717 = vpop.f32.mrb[0].mxu0
      %v2718 = vpop.f32.mrb[0].mxu0
      %v2719 = vadd.f32 %v2558, %v2718
      %v2720 = vpop.f32.mrb[0].mxu0
      %2721 = vmatprep.mubr.bf16.mxu0 %v1352
      %2722 = vmatmul.mubr.bf16.gmra.mrb[0].mxu0 %v1351
      %v2723 = vpop.f32.mrb[0].mxu0
      %v2724 = vadd.f32 %v2563, %v2723
      %v2725 = vpop.f32.mrb[0].mxu0
      %v2726 = vpop.f32.mrb[0].mxu0
      %v2727 = vadd.f32 %v2566, %v2726
      %v2728 = vpop.f32.mrb[0].mxu0
      %2729 = vmatprep.mubr.bf16.mxu0 %v1365
      %2730 = vmatmul.mubr.bf16.gmra.mrb[0].mxu0 %v1364
      %v2731 = vpop.f32.mrb[0].mxu0
      %v2732 = vadd.f32 %v2571, %v2731
      %v2733 = vpop.f32.mrb[0].mxu0
      %v2734 = vpop.f32.mrb[0].mxu0
      %v2735 = vadd.f32 %v2574, %v2734
      %v2736 = vpop.f32.mrb[0].mxu0
      %2737 = vmatprep.mubr.bf16.mxu0 %v1378
      %2738 = vmatmul.mubr.bf16.gmra.mrb[0].mxu0 %v1377
      %v2739 = vpop.f32.mrb[0].mxu0
      %v2740 = vadd.f32 %v2579, %v2739
      %v2741 = vpop.f32.mrb[0].mxu0
      %v2742 = vpop.f32.mrb[0].mxu0
      %v2743 = vadd.f32 %v2582, %v2742
      %v2744 = vpop.f32.mrb[0].mxu0
      %2745 = vmatprep.mubr.bf16.mxu0 %v1391
      %2746 = vmatmul.mubr.bf16.gmra.mrb[0].mxu0 %v1390
      %v2747 = vpop.f32.mrb[0].mxu0
      %v2748 = vadd.f32 %v2587, %v2747
      %v2749 = vpop.f32.mrb[0].mxu0
      %v2750 = vpop.f32.mrb[0].mxu0
      %v2751 = vadd.f32 %v2590, %v2750
      %v2752 = vpop.f32.mrb[0].mxu0
      %2753 = vmatprep.mubr.bf16.mxu0 %v1404
      %2754 = vmatmul.mubr.bf16.gmra.mrb[0].mxu0 %v1403
      %v2755 = vpop.f32.mrb[0].mxu0
      %v2756 = vadd.f32 %v2595, %v2755
      %v2757 = vpop.f32.mrb[0].mxu0
      %v2758 = vpop.f32.mrb[0].mxu0
      %v2759 = vadd.f32 %v2598, %v2758
      %v2760 = vpop.f32.mrb[0].mxu0
      %2761 = vmatprep.mubr.bf16.mxu0 %v1417
      %2762 = vmatmul.mubr.bf16.gmra.mrb[0].mxu0 %v1416
      %v2763 = vpop.f32.mrb[0].mxu0
      %v2764 = vadd.f32 %v2603, %v2763
      %v2765 = vpop.f32.mrb[0].mxu0
      %v2766 = vpop.f32.mrb[0].mxu0
      %v2767 = vadd.f32 %v2606, %v2766
      %v2768 = vpop.f32.mrb[0].mxu0
      %2769 = vmatprep.mubr.bf16.mxu0 %v1430
      %2770 = vmatmul.mubr.bf16.gmra.mrb[0].mxu0 %v1429
      %v2771 = vpop.f32.mrb[0].mxu0
      %v2772 = vadd.f32 %v2611, %v2771
      %v2773 = vpop.f32.mrb[0].mxu0
      %v2774 = vpop.f32.mrb[0].mxu0
      %v2775 = vadd.f32 %v2614, %v2774
      %v2776 = vpop.f32.mrb[0].mxu0
      %2777 = vmatprep.mubr.bf16.mxu0 %v1443
      %2778 = vmatmul.mubr.bf16.gmra.mrb[0].mxu0 %v1442
      %v2779 = vpop.f32.mrb[0].mxu0
      %v2780 = vadd.f32 %v2619, %v2779
      %v2781 = vpop.f32.mrb[0].mxu0
      %v2782 = vpop.f32.mrb[0].mxu0
      %v2783 = vadd.f32 %v2622, %v2782
      %v2784 = vpop.f32.mrb[0].mxu0
      %2785 = vmatprep.mubr.bf16.mxu0 %v1456
      %2786 = vmatmul.mubr.bf16.gmra.mrb[0].mxu0 %v1455
      %v2787 = vpop.f32.mrb[0].mxu0
      %v2788 = vadd.f32 %v2627, %v2787
      %v2789 = vpop.f32.mrb[0].mxu0
      %v2790 = vpop.f32.mrb[0].mxu0
      %v2791 = vadd.f32 %v2630, %v2790
      %v2792 = vpop.f32.mrb[0].mxu0
      %2793 = vmatprep.mubr.bf16.mxu0 %v1469
      %2794 = vmatmul.mubr.bf16.gmra.mrb[0].mxu0 %v1468
      %v2795 = vpop.f32.mrb[0].mxu0
      %v2796 = vadd.f32 %v2635, %v2795
      %v2797 = vpop.f32.mrb[0].mxu0
      %v2798 = vpop.f32.mrb[0].mxu0
      %v2799 = vadd.f32 %v2638, %v2798
      %v2800 = vpop.f32.mrb[0].mxu0
      %2801 = vmatprep.mubr.bf16.mxu0 %v1482
      %2802 = vmatmul.mubr.bf16.gmra.mrb[0].mxu0 %v1481
      %v2803 = vpop.f32.mrb[0].mxu0
      %v2804 = vadd.f32 %v2643, %v2803
      %v2805 = vpop.f32.mrb[0].mxu0
      %v2806 = vpop.f32.mrb[0].mxu0
      %v2807 = vadd.f32 %v2646, %v2806
      %v2808 = vpop.f32.mrb[0].mxu0
      %2809 = vmatprep.mubr.bf16.mxu0 %v1495
      %2810 = vmatmul.mubr.bf16.gmra.mrb[0].mxu0 %v1494
      %v2811 = vpop.f32.mrb[0].mxu0
      %v2812 = vadd.f32 %v2651, %v2811
      %v2813 = vpop.f32.mrb[0].mxu0
      %v2814 = vpop.f32.mrb[0].mxu0
      %v2815 = vadd.f32 %v2654, %v2814
      %v2816 = vpop.f32.mrb[0].mxu0
      %2817 = vdwg.mxu0
      %2818 = vmatprep.subr.bf16.mxu0 0
      %2819 = vmatpush1.bf16.msra.mxu0 %v2175
      %2820 = vmatprep.subr.bf16.mxu0 0
      %2821 = vmatpush1.bf16.msra.mxu0 %v2176
      %2822 = vmatprep.subr.bf16.mxu0 0
      %2823 = vmatpush1.bf16.msra.mxu0 %v2177
      %2824 = vmatprep.subr.bf16.mxu0 0
      %2825 = vmatpush1.bf16.msra.mxu0 %v2178
      %2826 = vmatprep.subr.bf16.mxu0 0
      %2827 = vmatpush1.bf16.msra.mxu0 %v2179
      %2828 = vmatprep.subr.bf16.mxu0 0
      %2829 = vmatpush1.bf16.msra.mxu0 %v2180
      %2830 = vmatprep.subr.bf16.mxu0 0
      %2831 = vmatpush1.bf16.msra.mxu0 %v2181
      %2832 = vmatprep.subr.bf16.mxu0 0
      %2833 = vmatpush1.bf16.msra.mxu0 %v2182
      %2834 = vmatprep.subr.bf16.mxu0 0
      %2835 = vmatpush1.bf16.msra.mxu0 %v2183
      %2836 = vmatprep.subr.bf16.mxu0 0
      %2837 = vmatpush1.bf16.msra.mxu0 %v2184
      %2838 = vmatprep.subr.bf16.mxu0 0
      %2839 = vmatpush1.bf16.msra.mxu0 %v2185
      %2840 = vmatprep.subr.bf16.mxu0 0
      %2841 = vmatpush1.bf16.msra.mxu0 %v2186
      %2842 = vmatprep.subr.bf16.mxu0 0
      %2843 = vmatpush1.bf16.msra.mxu0 %v2187
      %2844 = vmatprep.subr.bf16.mxu0 0
      %2845 = vmatpush1.bf16.msra.mxu0 %v2188
      %2846 = vmatprep.subr.bf16.mxu0 0
      %2847 = vmatpush1.bf16.msra.mxu0 %v2189
      %2848 = vmatprep.subr.bf16.mxu0 0
      %2849 = vmatpush1.bf16.msra.mxu0 %v2190
      %2850 = vmatprep.mubr.bf16.mxu0 %v1302
      %2851 = vmatmul.mubr.bf16.gmra.mrb[0].mxu0 %v1301
      %v2852 = vpop.f32.mrb[0].mxu0
      %v2853 = vadd.f32 %v2692, %v2852
      %v2854 = vpop.f32.mrb[0].mxu0
      %v2855 = vpop.f32.mrb[0].mxu0
      %v2856 = vadd.f32 %v2695, %v2855
      %v2857 = vpop.f32.mrb[0].mxu0
      %2858 = vmatprep.mubr.bf16.mxu0 %v1315
      %2859 = vmatmul.mubr.bf16.gmra.mrb[0].mxu0 %v1314
      %v2860 = vpop.f32.mrb[0].mxu0
      %v2861 = vadd.f32 %v2700, %v2860
      %v2862 = vpop.f32.mrb[0].mxu0
      %v2863 = vpop.f32.mrb[0].mxu0
      %v2864 = vadd.f32 %v2703, %v2863
      %v2865 = vpop.f32.mrb[0].mxu0
      %2866 = vmatprep.mubr.bf16.mxu0 %v1328
      %2867 = vmatmul.mubr.bf16.gmra.mrb[0].mxu0 %v1327
      %v2868 = vpop.f32.mrb[0].mxu0
      %v2869 = vadd.f32 %v2708, %v2868
      %v2870 = vpop.f32.mrb[0].mxu0
      %v2871 = vpop.f32.mrb[0].mxu0
      %v2872 = vadd.f32 %v2711, %v2871
      %v2873 = vpop.f32.mrb[0].mxu0
      %2874 = vmatprep.mubr.bf16.mxu0 %v1341
      %2875 = vmatmul.mubr.bf16.gmra.mrb[0].mxu0 %v1340
      %v2876 = vpop.f32.mrb[0].mxu0
      %v2877 = vadd.f32 %v2716, %v2876
      %v2878 = vpop.f32.mrb[0].mxu0
      %v2879 = vpop.f32.mrb[0].mxu0
      %v2880 = vadd.f32 %v2719, %v2879
      %v2881 = vpop.f32.mrb[0].mxu0
      %2882 = vmatprep.mubr.bf16.mxu0 %v1354
      %2883 = vmatmul.mubr.bf16.gmra.mrb[0].mxu0 %v1353
      %v2884 = vpop.f32.mrb[0].mxu0
      %v2885 = vadd.f32 %v2724, %v2884
      %v2886 = vpop.f32.mrb[0].mxu0
      %v2887 = vpop.f32.mrb[0].mxu0
      %v2888 = vadd.f32 %v2727, %v2887
      %v2889 = vpop.f32.mrb[0].mxu0
      %2890 = vmatprep.mubr.bf16.mxu0 %v1367
      %2891 = vmatmul.mubr.bf16.gmra.mrb[0].mxu0 %v1366
      %v2892 = vpop.f32.mrb[0].mxu0
      %v2893 = vadd.f32 %v2732, %v2892
      %v2894 = vpop.f32.mrb[0].mxu0
      %v2895 = vpop.f32.mrb[0].mxu0
      %v2896 = vadd.f32 %v2735, %v2895
      %v2897 = vpop.f32.mrb[0].mxu0
      %2898 = vmatprep.mubr.bf16.mxu0 %v1380
      %2899 = vmatmul.mubr.bf16.gmra.mrb[0].mxu0 %v1379
      %v2900 = vpop.f32.mrb[0].mxu0
      %v2901 = vadd.f32 %v2740, %v2900
      %v2902 = vpop.f32.mrb[0].mxu0
      %v2903 = vpop.f32.mrb[0].mxu0
      %v2904 = vadd.f32 %v2743, %v2903
      %v2905 = vpop.f32.mrb[0].mxu0
      %2906 = vmatprep.mubr.bf16.mxu0 %v1393
      %2907 = vmatmul.mubr.bf16.gmra.mrb[0].mxu0 %v1392
      %v2908 = vpop.f32.mrb[0].mxu0
      %v2909 = vadd.f32 %v2748, %v2908
      %v2910 = vpop.f32.mrb[0].mxu0
      %v2911 = vpop.f32.mrb[0].mxu0
      %v2912 = vadd.f32 %v2751, %v2911
      %v2913 = vpop.f32.mrb[0].mxu0
      %2914 = vmatprep.mubr.bf16.mxu0 %v1406
      %2915 = vmatmul.mubr.bf16.gmra.mrb[0].mxu0 %v1405
      %v2916 = vpop.f32.mrb[0].mxu0
      %v2917 = vadd.f32 %v2756, %v2916
      %v2918 = vpop.f32.mrb[0].mxu0
      %v2919 = vpop.f32.mrb[0].mxu0
      %v2920 = vadd.f32 %v2759, %v2919
      %v2921 = vpop.f32.mrb[0].mxu0
      %2922 = vmatprep.mubr.bf16.mxu0 %v1419
      %2923 = vmatmul.mubr.bf16.gmra.mrb[0].mxu0 %v1418
      %v2924 = vpop.f32.mrb[0].mxu0
      %v2925 = vadd.f32 %v2764, %v2924
      %v2926 = vpop.f32.mrb[0].mxu0
      %v2927 = vpop.f32.mrb[0].mxu0
      %v2928 = vadd.f32 %v2767, %v2927
      %v2929 = vpop.f32.mrb[0].mxu0
      %2930 = vmatprep.mubr.bf16.mxu0 %v1432
      %2931 = vmatmul.mubr.bf16.gmra.mrb[0].mxu0 %v1431
      %v2932 = vpop.f32.mrb[0].mxu0
      %v2933 = vadd.f32 %v2772, %v2932
      %v2934 = vpop.f32.mrb[0].mxu0
      %v2935 = vpop.f32.mrb[0].mxu0
      %v2936 = vadd.f32 %v2775, %v2935
      %v2937 = vpop.f32.mrb[0].mxu0
      %2938 = vmatprep.mubr.bf16.mxu0 %v1445
      %2939 = vmatmul.mubr.bf16.gmra.mrb[0].mxu0 %v1444
      %v2940 = vpop.f32.mrb[0].mxu0
      %v2941 = vadd.f32 %v2780, %v2940
      %v2942 = vpop.f32.mrb[0].mxu0
      %v2943 = vpop.f32.mrb[0].mxu0
      %v2944 = vadd.f32 %v2783, %v2943
      %v2945 = vpop.f32.mrb[0].mxu0
      %2946 = vmatprep.mubr.bf16.mxu0 %v1458
      %2947 = vmatmul.mubr.bf16.gmra.mrb[0].mxu0 %v1457
      %v2948 = vpop.f32.mrb[0].mxu0
      %v2949 = vadd.f32 %v2788, %v2948
      %v2950 = vpop.f32.mrb[0].mxu0
      %v2951 = vpop.f32.mrb[0].mxu0
      %v2952 = vadd.f32 %v2791, %v2951
      %v2953 = vpop.f32.mrb[0].mxu0
      %2954 = vmatprep.mubr.bf16.mxu0 %v1471
      %2955 = vmatmul.mubr.bf16.gmra.mrb[0].mxu0 %v1470
      %v2956 = vpop.f32.mrb[0].mxu0
      %v2957 = vadd.f32 %v2796, %v2956
      %v2958 = vpop.f32.mrb[0].mxu0
      %v2959 = vpop.f32.mrb[0].mxu0
      %v2960 = vadd.f32 %v2799, %v2959
      %v2961 = vpop.f32.mrb[0].mxu0
      %2962 = vmatprep.mubr.bf16.mxu0 %v1484
      %2963 = vmatmul.mubr.bf16.gmra.mrb[0].mxu0 %v1483
      %v2964 = vpop.f32.mrb[0].mxu0
      %v2965 = vadd.f32 %v2804, %v2964
      %v2966 = vpop.f32.mrb[0].mxu0
      %v2967 = vpop.f32.mrb[0].mxu0
      %v2968 = vadd.f32 %v2807, %v2967
      %v2969 = vpop.f32.mrb[0].mxu0
      %2970 = vmatprep.mubr.bf16.mxu0 %v1497
      %2971 = vmatmul.mubr.bf16.gmra.mrb[0].mxu0 %v1496
      %v2972 = vpop.f32.mrb[0].mxu0
      %v2973 = vadd.f32 %v2812, %v2972
      %v2974 = vpop.f32.mrb[0].mxu0
      %v2975 = vpop.f32.mrb[0].mxu0
      %v2976 = vadd.f32 %v2815, %v2975
      %v2977 = vpop.f32.mrb[0].mxu0
      %2978 = vdwg.mxu0
      %2979 = vmatprep.subr.bf16.mxu0 0
      %2980 = vmatpush1.bf16.msra.mxu0 %v2191
      %2981 = vmatprep.subr.bf16.mxu0 0
      %2982 = vmatpush1.bf16.msra.mxu0 %v2192
      %2983 = vmatprep.subr.bf16.mxu0 0
      %2984 = vmatpush1.bf16.msra.mxu0 %v2193
      %2985 = vmatprep.subr.bf16.mxu0 0
      %2986 = vmatpush1.bf16.msra.mxu0 %v2194
      %2987 = vmatprep.subr.bf16.mxu0 0
      %2988 = vmatpush1.bf16.msra.mxu0 %v2195
      %2989 = vmatprep.subr.bf16.mxu0 0
      %2990 = vmatpush1.bf16.msra.mxu0 %v2196
      %2991 = vmatprep.subr.bf16.mxu0 0
      %2992 = vmatpush1.bf16.msra.mxu0 %v2197
      %2993 = vmatprep.subr.bf16.mxu0 0
      %2994 = vmatpush1.bf16.msra.mxu0 %v2198
      %2995 = vmatprep.subr.bf16.mxu0 0
      %2996 = vmatpush1.bf16.msra.mxu0 %v2199
      %2997 = vmatprep.subr.bf16.mxu0 0
      %2998 = vmatpush1.bf16.msra.mxu0 %v2200
      %2999 = vmatprep.subr.bf16.mxu0 0
      %3000 = vmatpush1.bf16.msra.mxu0 %v2201
      %3001 = vmatprep.subr.bf16.mxu0 0
      %3002 = vmatpush1.bf16.msra.mxu0 %v2202
      %3003 = vmatprep.subr.bf16.mxu0 0
      %3004 = vmatpush1.bf16.msra.mxu0 %v2203
      %3005 = vmatprep.subr.bf16.mxu0 0
      %3006 = vmatpush1.bf16.msra.mxu0 %v2204
      %3007 = vmatprep.subr.bf16.mxu0 0
      %3008 = vmatpush1.bf16.msra.mxu0 %v2205
      %3009 = vmatprep.subr.bf16.mxu0 0
      %3010 = vmatpush1.bf16.msra.mxu0 %v2206
      %3011 = vmatprep.mubr.bf16.mxu0 %v1304
      %3012 = vmatmul.mubr.bf16.gmra.mrb[0].mxu0 %v1303
      %v3013 = vpop.f32.mrb[0].mxu0
      %v3014 = vadd.f32 %v2853, %v3013
      %v3015 = vpop.f32.mrb[0].mxu0
      %v3016 = vpop.f32.mrb[0].mxu0
      %v3017 = vadd.f32 %v2856, %v3016
      %v3018 = vpop.f32.mrb[0].mxu0
      %3019 = vmatprep.mubr.bf16.mxu0 %v1317
      %3020 = vmatmul.mubr.bf16.gmra.mrb[0].mxu0 %v1316
      %v3021 = vpop.f32.mrb[0].mxu0
      %v3022 = vadd.f32 %v2861, %v3021
      %v3023 = vpop.f32.mrb[0].mxu0
      %v3024 = vpop.f32.mrb[0].mxu0
      %v3025 = vadd.f32 %v2864, %v3024
      %v3026 = vpop.f32.mrb[0].mxu0
      %3027 = vmatprep.mubr.bf16.mxu0 %v1330
      %3028 = vmatmul.mubr.bf16.gmra.mrb[0].mxu0 %v1329
      %v3029 = vpop.f32.mrb[0].mxu0
      %v3030 = vadd.f32 %v2869, %v3029
      %v3031 = vpop.f32.mrb[0].mxu0
      %v3032 = vpop.f32.mrb[0].mxu0
      %v3033 = vadd.f32 %v2872, %v3032
      %v3034 = vpop.f32.mrb[0].mxu0
      %3035 = vmatprep.mubr.bf16.mxu0 %v1343
      %3036 = vmatmul.mubr.bf16.gmra.mrb[0].mxu0 %v1342
      %v3037 = vpop.f32.mrb[0].mxu0
      %v3038 = vadd.f32 %v2877, %v3037
      %v3039 = vpop.f32.mrb[0].mxu0
      %v3040 = vpop.f32.mrb[0].mxu0
      %v3041 = vadd.f32 %v2880, %v3040
      %v3042 = vpop.f32.mrb[0].mxu0
      %3043 = vmatprep.mubr.bf16.mxu0 %v1356
      %3044 = vmatmul.mubr.bf16.gmra.mrb[0].mxu0 %v1355
      %v3045 = vpop.f32.mrb[0].mxu0
      %v3046 = vadd.f32 %v2885, %v3045
      %v3047 = vpop.f32.mrb[0].mxu0
      %v3048 = vpop.f32.mrb[0].mxu0
      %v3049 = vadd.f32 %v2888, %v3048
      %v3050 = vpop.f32.mrb[0].mxu0
      %3051 = vmatprep.mubr.bf16.mxu0 %v1369
      %3052 = vmatmul.mubr.bf16.gmra.mrb[0].mxu0 %v1368
      %v3053 = vpop.f32.mrb[0].mxu0
      %v3054 = vadd.f32 %v2893, %v3053
      %v3055 = vpop.f32.mrb[0].mxu0
      %v3056 = vpop.f32.mrb[0].mxu0
      %v3057 = vadd.f32 %v2896, %v3056
      %v3058 = vpop.f32.mrb[0].mxu0
      %3059 = vmatprep.mubr.bf16.mxu0 %v1382
      %3060 = vmatmul.mubr.bf16.gmra.mrb[0].mxu0 %v1381
      %v3061 = vpop.f32.mrb[0].mxu0
      %v3062 = vadd.f32 %v2901, %v3061
      %v3063 = vpop.f32.mrb[0].mxu0
      %v3064 = vpop.f32.mrb[0].mxu0
      %v3065 = vadd.f32 %v2904, %v3064
      %v3066 = vpop.f32.mrb[0].mxu0
      %3067 = vmatprep.mubr.bf16.mxu0 %v1395
      %3068 = vmatmul.mubr.bf16.gmra.mrb[0].mxu0 %v1394
      %v3069 = vpop.f32.mrb[0].mxu0
      %v3070 = vadd.f32 %v2909, %v3069
      %v3071 = vpop.f32.mrb[0].mxu0
      %v3072 = vpop.f32.mrb[0].mxu0
      %v3073 = vadd.f32 %v2912, %v3072
      %v3074 = vpop.f32.mrb[0].mxu0
      %3075 = vmatprep.mubr.bf16.mxu0 %v1408
      %3076 = vmatmul.mubr.bf16.gmra.mrb[0].mxu0 %v1407
      %v3077 = vpop.f32.mrb[0].mxu0
      %v3078 = vadd.f32 %v2917, %v3077
      %v3079 = vpop.f32.mrb[0].mxu0
      %v3080 = vpop.f32.mrb[0].mxu0
      %v3081 = vadd.f32 %v2920, %v3080
      %v3082 = vpop.f32.mrb[0].mxu0
      %3083 = vmatprep.mubr.bf16.mxu0 %v1421
      %3084 = vmatmul.mubr.bf16.gmra.mrb[0].mxu0 %v1420
      %v3085 = vpop.f32.mrb[0].mxu0
      %v3086 = vadd.f32 %v2925, %v3085
      %v3087 = vpop.f32.mrb[0].mxu0
      %v3088 = vpop.f32.mrb[0].mxu0
      %v3089 = vadd.f32 %v2928, %v3088
      %v3090 = vpop.f32.mrb[0].mxu0
      %3091 = vmatprep.mubr.bf16.mxu0 %v1434
      %3092 = vmatmul.mubr.bf16.gmra.mrb[0].mxu0 %v1433
      %v3093 = vpop.f32.mrb[0].mxu0
      %v3094 = vadd.f32 %v2933, %v3093
      %v3095 = vpop.f32.mrb[0].mxu0
      %v3096 = vpop.f32.mrb[0].mxu0
      %v3097 = vadd.f32 %v2936, %v3096
      %v3098 = vpop.f32.mrb[0].mxu0
      %3099 = vmatprep.mubr.bf16.mxu0 %v1447
      %3100 = vmatmul.mubr.bf16.gmra.mrb[0].mxu0 %v1446
      %v3101 = vpop.f32.mrb[0].mxu0
      %v3102 = vadd.f32 %v2941, %v3101
      %v3103 = vpop.f32.mrb[0].mxu0
      %v3104 = vpop.f32.mrb[0].mxu0
      %v3105 = vadd.f32 %v2944, %v3104
      %v3106 = vpop.f32.mrb[0].mxu0
      %3107 = vmatprep.mubr.bf16.mxu0 %v1460
      %3108 = vmatmul.mubr.bf16.gmra.mrb[0].mxu0 %v1459
      %v3109 = vpop.f32.mrb[0].mxu0
      %v3110 = vadd.f32 %v2949, %v3109
      %v3111 = vpop.f32.mrb[0].mxu0
      %v3112 = vpop.f32.mrb[0].mxu0
      %v3113 = vadd.f32 %v2952, %v3112
      %v3114 = vpop.f32.mrb[0].mxu0
      %3115 = vmatprep.mubr.bf16.mxu0 %v1473
      %3116 = vmatmul.mubr.bf16.gmra.mrb[0].mxu0 %v1472
      %v3117 = vpop.f32.mrb[0].mxu0
      %v3118 = vadd.f32 %v2957, %v3117
      %v3119 = vpop.f32.mrb[0].mxu0
      %v3120 = vpop.f32.mrb[0].mxu0
      %v3121 = vadd.f32 %v2960, %v3120
      %v3122 = vpop.f32.mrb[0].mxu0
      %3123 = vmatprep.mubr.bf16.mxu0 %v1486
      %3124 = vmatmul.mubr.bf16.gmra.mrb[0].mxu0 %v1485
      %v3125 = vpop.f32.mrb[0].mxu0
      %v3126 = vadd.f32 %v2965, %v3125
      %v3127 = vpop.f32.mrb[0].mxu0
      %v3128 = vpop.f32.mrb[0].mxu0
      %v3129 = vadd.f32 %v2968, %v3128
      %v3130 = vpop.f32.mrb[0].mxu0
      %3131 = vmatprep.mubr.bf16.mxu0 %v1499
      %3132 = vmatmul.mubr.bf16.gmra.mrb[0].mxu0 %v1498
      %v3133 = vpop.f32.mrb[0].mxu0
      %v3134 = vadd.f32 %v2973, %v3133
      %v3135 = vpop.f32.mrb[0].mxu0
      %v3136 = vpop.f32.mrb[0].mxu0
      %v3137 = vadd.f32 %v2976, %v3136
      %v3138 = vpop.f32.mrb[0].mxu0
      %3139 = vdwg.mxu0
      %3140 = vmatprep.subr.bf16.mxu0 0
      %3141 = vmatpush1.bf16.msra.mxu0 %v2207
      %3142 = vmatprep.subr.bf16.mxu0 0
      %3143 = vmatpush1.bf16.msra.mxu0 %v2208
      %3144 = vmatprep.subr.bf16.mxu0 0
      %3145 = vmatpush1.bf16.msra.mxu0 %v2209
      %3146 = vmatprep.subr.bf16.mxu0 0
      %3147 = vmatpush1.bf16.msra.mxu0 %v2210
      %3148 = vmatprep.subr.bf16.mxu0 0
      %3149 = vmatpush1.bf16.msra.mxu0 %v2211
      %3150 = vmatprep.subr.bf16.mxu0 0
      %3151 = vmatpush1.bf16.msra.mxu0 %v2212
      %3152 = vmatprep.subr.bf16.mxu0 0
      %3153 = vmatpush1.bf16.msra.mxu0 %v2213
      %3154 = vmatprep.subr.bf16.mxu0 0
      %3155 = vmatpush1.bf16.msra.mxu0 %v2214
      %3156 = vmatprep.subr.bf16.mxu0 0
      %3157 = vmatpush1.bf16.msra.mxu0 %v2215
      %3158 = vmatprep.subr.bf16.mxu0 0
      %3159 = vmatpush1.bf16.msra.mxu0 %v2216
      %3160 = vmatprep.subr.bf16.mxu0 0
      %3161 = vmatpush1.bf16.msra.mxu0 %v2217
      %3162 = vmatprep.subr.bf16.mxu0 0
      %3163 = vmatpush1.bf16.msra.mxu0 %v2218
      %3164 = vmatprep.subr.bf16.mxu0 0
      %3165 = vmatpush1.bf16.msra.mxu0 %v2219
      %3166 = vmatprep.subr.bf16.mxu0 0
      %3167 = vmatpush1.bf16.msra.mxu0 %v2220
      %3168 = vmatprep.subr.bf16.mxu0 0
      %3169 = vmatpush1.bf16.msra.mxu0 %v2221
      %3170 = vmatprep.subr.bf16.mxu0 0
      %3171 = vmatpush1.bf16.msra.mxu0 %v2222
      %3172 = vmatprep.mubr.bf16.mxu0 %v1306
      %3173 = vmatmul.mubr.bf16.gmra.mrb[0].mxu0 %v1305
      %v3174 = vpop.f32.mrb[0].mxu0
      %v3175 = vadd.f32 %v3014, %v3174
      %v3176 = vpop.f32.mrb[0].mxu0
      %v3177 = vpop.f32.mrb[0].mxu0
      %v3178 = vadd.f32 %v3017, %v3177
      %v3179 = vpop.f32.mrb[0].mxu0
      %3180 = vmatprep.mubr.bf16.mxu0 %v1319
      %3181 = vmatmul.mubr.bf16.gmra.mrb[0].mxu0 %v1318
      %v3182 = vpop.f32.mrb[0].mxu0
      %v3183 = vadd.f32 %v3022, %v3182
      %v3184 = vpop.f32.mrb[0].mxu0
      %v3185 = vpop.f32.mrb[0].mxu0
      %v3186 = vadd.f32 %v3025, %v3185
      %v3187 = vpop.f32.mrb[0].mxu0
      %3188 = vmatprep.mubr.bf16.mxu0 %v1332
      %3189 = vmatmul.mubr.bf16.gmra.mrb[0].mxu0 %v1331
      %v3190 = vpop.f32.mrb[0].mxu0
      %v3191 = vadd.f32 %v3030, %v3190
      %v3192 = vpop.f32.mrb[0].mxu0
      %v3193 = vpop.f32.mrb[0].mxu0
      %v3194 = vadd.f32 %v3033, %v3193
      %v3195 = vpop.f32.mrb[0].mxu0
      %3196 = vmatprep.mubr.bf16.mxu0 %v1345
      %3197 = vmatmul.mubr.bf16.gmra.mrb[0].mxu0 %v1344
      %v3198 = vpop.f32.mrb[0].mxu0
      %v3199 = vadd.f32 %v3038, %v3198
      %v3200 = vpop.f32.mrb[0].mxu0
      %v3201 = vpop.f32.mrb[0].mxu0
      %v3202 = vadd.f32 %v3041, %v3201
      %v3203 = vpop.f32.mrb[0].mxu0
      %3204 = vmatprep.mubr.bf16.mxu0 %v1358
      %3205 = vmatmul.mubr.bf16.gmra.mrb[0].mxu0 %v1357
      %v3206 = vpop.f32.mrb[0].mxu0
      %v3207 = vadd.f32 %v3046, %v3206
      %v3208 = vpop.f32.mrb[0].mxu0
      %v3209 = vpop.f32.mrb[0].mxu0
      %v3210 = vadd.f32 %v3049, %v3209
      %v3211 = vpop.f32.mrb[0].mxu0
      %3212 = vmatprep.mubr.bf16.mxu0 %v1371
      %3213 = vmatmul.mubr.bf16.gmra.mrb[0].mxu0 %v1370
      %v3214 = vpop.f32.mrb[0].mxu0
      %v3215 = vadd.f32 %v3054, %v3214
      %v3216 = vpop.f32.mrb[0].mxu0
      %v3217 = vpop.f32.mrb[0].mxu0
      %v3218 = vadd.f32 %v3057, %v3217
      %v3219 = vpop.f32.mrb[0].mxu0
      %3220 = vmatprep.mubr.bf16.mxu0 %v1384
      %3221 = vmatmul.mubr.bf16.gmra.mrb[0].mxu0 %v1383
      %v3222 = vpop.f32.mrb[0].mxu0
      %v3223 = vadd.f32 %v3062, %v3222
      %v3224 = vpop.f32.mrb[0].mxu0
      %v3225 = vpop.f32.mrb[0].mxu0
      %v3226 = vadd.f32 %v3065, %v3225
      %v3227 = vpop.f32.mrb[0].mxu0
      %3228 = vmatprep.mubr.bf16.mxu0 %v1397
      %3229 = vmatmul.mubr.bf16.gmra.mrb[0].mxu0 %v1396
      %v3230 = vpop.f32.mrb[0].mxu0
      %v3231 = vadd.f32 %v3070, %v3230
      %v3232 = vpop.f32.mrb[0].mxu0
      %v3233 = vpop.f32.mrb[0].mxu0
      %v3234 = vadd.f32 %v3073, %v3233
      %v3235 = vpop.f32.mrb[0].mxu0
      %3236 = vmatprep.mubr.bf16.mxu0 %v1410
      %3237 = vmatmul.mubr.bf16.gmra.mrb[0].mxu0 %v1409
      %v3238 = vpop.f32.mrb[0].mxu0
      %v3239 = vadd.f32 %v3078, %v3238
      %v3240 = vpop.f32.mrb[0].mxu0
      %v3241 = vpop.f32.mrb[0].mxu0
      %v3242 = vadd.f32 %v3081, %v3241
      %v3243 = vpop.f32.mrb[0].mxu0
      %3244 = vmatprep.mubr.bf16.mxu0 %v1423
      %3245 = vmatmul.mubr.bf16.gmra.mrb[0].mxu0 %v1422
      %v3246 = vpop.f32.mrb[0].mxu0
      %v3247 = vadd.f32 %v3086, %v3246
      %v3248 = vpop.f32.mrb[0].mxu0
      %v3249 = vpop.f32.mrb[0].mxu0
      %v3250 = vadd.f32 %v3089, %v3249
      %v3251 = vpop.f32.mrb[0].mxu0
      %3252 = vmatprep.mubr.bf16.mxu0 %v1436
      %3253 = vmatmul.mubr.bf16.gmra.mrb[0].mxu0 %v1435
      %v3254 = vpop.f32.mrb[0].mxu0
      %v3255 = vadd.f32 %v3094, %v3254
      %v3256 = vpop.f32.mrb[0].mxu0
      %v3257 = vpop.f32.mrb[0].mxu0
      %v3258 = vadd.f32 %v3097, %v3257
      %v3259 = vpop.f32.mrb[0].mxu0
      %3260 = vmatprep.mubr.bf16.mxu0 %v1449
      %3261 = vmatmul.mubr.bf16.gmra.mrb[0].mxu0 %v1448
      %v3262 = vpop.f32.mrb[0].mxu0
      %v3263 = vadd.f32 %v3102, %v3262
      %v3264 = vpop.f32.mrb[0].mxu0
      %v3265 = vpop.f32.mrb[0].mxu0
      %v3266 = vadd.f32 %v3105, %v3265
      %v3267 = vpop.f32.mrb[0].mxu0
      %3268 = vmatprep.mubr.bf16.mxu0 %v1462
      %3269 = vmatmul.mubr.bf16.gmra.mrb[0].mxu0 %v1461
      %v3270 = vpop.f32.mrb[0].mxu0
      %v3271 = vadd.f32 %v3110, %v3270
      %v3272 = vpop.f32.mrb[0].mxu0
      %v3273 = vpop.f32.mrb[0].mxu0
      %v3274 = vadd.f32 %v3113, %v3273
      %v3275 = vpop.f32.mrb[0].mxu0
      %3276 = vmatprep.mubr.bf16.mxu0 %v1475
      %3277 = vmatmul.mubr.bf16.gmra.mrb[0].mxu0 %v1474
      %v3278 = vpop.f32.mrb[0].mxu0
      %v3279 = vadd.f32 %v3118, %v3278
      %v3280 = vpop.f32.mrb[0].mxu0
      %v3281 = vpop.f32.mrb[0].mxu0
      %v3282 = vadd.f32 %v3121, %v3281
      %v3283 = vpop.f32.mrb[0].mxu0
      %3284 = vmatprep.mubr.bf16.mxu0 %v1488
      %3285 = vmatmul.mubr.bf16.gmra.mrb[0].mxu0 %v1487
      %v3286 = vpop.f32.mrb[0].mxu0
      %v3287 = vadd.f32 %v3126, %v3286
      %v3288 = vpop.f32.mrb[0].mxu0
      %v3289 = vpop.f32.mrb[0].mxu0
      %v3290 = vadd.f32 %v3129, %v3289
      %v3291 = vpop.f32.mrb[0].mxu0
      %3292 = vmatprep.mubr.bf16.mxu0 %v1501
      %3293 = vmatmul.mubr.bf16.gmra.mrb[0].mxu0 %v1500
      %v3294 = vpop.f32.mrb[0].mxu0
      %v3295 = vadd.f32 %v3134, %v3294
      %v3296 = vpop.f32.mrb[0].mxu0
      %v3297 = vpop.f32.mrb[0].mxu0
      %v3298 = vadd.f32 %v3137, %v3297
      %v3299 = vpop.f32.mrb[0].mxu0
      %3300 = vdwg.mxu0
      %3301 = vmatprep.subr.bf16.mxu0 0
      %3302 = vmatpush1.bf16.msra.mxu0 %v2223
      %3303 = vmatprep.subr.bf16.mxu0 0
      %3304 = vmatpush1.bf16.msra.mxu0 %v2224
      %3305 = vmatprep.subr.bf16.mxu0 0
      %3306 = vmatpush1.bf16.msra.mxu0 %v2225
      %3307 = vmatprep.subr.bf16.mxu0 0
      %3308 = vmatpush1.bf16.msra.mxu0 %v2226
      %3309 = vmatprep.subr.bf16.mxu0 0
      %3310 = vmatpush1.bf16.msra.mxu0 %v2227
      %3311 = vmatprep.subr.bf16.mxu0 0
      %3312 = vmatpush1.bf16.msra.mxu0 %v2228
      %3313 = vmatprep.subr.bf16.mxu0 0
      %3314 = vmatpush1.bf16.msra.mxu0 %v2229
      %3315 = vmatprep.subr.bf16.mxu0 0
      %3316 = vmatpush1.bf16.msra.mxu0 %v2230
      %3317 = vmatprep.subr.bf16.mxu0 0
      %3318 = vmatpush1.bf16.msra.mxu0 0
      %3319 = vmatprep.subr.bf16.mxu0 0
      %3320 = vmatpush1.bf16.msra.mxu0 0
      %3321 = vmatprep.subr.bf16.mxu0 0
      %3322 = vmatpush1.bf16.msra.mxu0 0
      %3323 = vmatprep.subr.bf16.mxu0 0
      %3324 = vmatpush1.bf16.msra.mxu0 0
      %3325 = vmatprep.subr.bf16.mxu0 0
      %3326 = vmatpush1.bf16.msra.mxu0 0
      %3327 = vmatprep.subr.bf16.mxu0 0
      %3328 = vmatpush1.bf16.msra.mxu0 0
      %3329 = vmatprep.subr.bf16.mxu0 0
      %3330 = vmatpush1.bf16.msra.mxu0 0
      %3331 = vmatprep.subr.bf16.mxu0 0
      %3332 = vmatpush1.bf16.msra.mxu0 0
      %3333 = vmatprep.mubr.bf16.mxu0 0
      %3334 = vmatmul.mubr.bf16.gmra.mrb[0].mxu0 %v1307
      %v3335 = vpop.f32.mrb[0].mxu0
      %v3336 = vadd.f32 %v3175, %v3335
      %v3337 = vpop.f32.mrb[0].mxu0
      %v3338 = vpop.f32.mrb[0].mxu0
      %v3339 = vadd.f32 %v3178, %v3338
      %v3340 = vpop.f32.mrb[0].mxu0
      %3341 = vmatprep.mubr.bf16.mxu0 0
      %3342 = vmatmul.mubr.bf16.gmra.mrb[0].mxu0 %v1320
      %v3343 = vpop.f32.mrb[0].mxu0
      %v3344 = vadd.f32 %v3183, %v3343
      %v3345 = vpop.f32.mrb[0].mxu0
      %v3346 = vpop.f32.mrb[0].mxu0
      %v3347 = vadd.f32 %v3186, %v3346
      %v3348 = vpop.f32.mrb[0].mxu0
      %3349 = vmatprep.mubr.bf16.mxu0 0
      %3350 = vmatmul.mubr.bf16.gmra.mrb[0].mxu0 %v1333
      %v3351 = vpop.f32.mrb[0].mxu0
      %v3352 = vadd.f32 %v3191, %v3351
      %v3353 = vpop.f32.mrb[0].mxu0
      %v3354 = vpop.f32.mrb[0].mxu0
      %v3355 = vadd.f32 %v3194, %v3354
      %v3356 = vpop.f32.mrb[0].mxu0
      %3357 = vmatprep.mubr.bf16.mxu0 0
      %3358 = vmatmul.mubr.bf16.gmra.mrb[0].mxu0 %v1346
      %v3359 = vpop.f32.mrb[0].mxu0
      %v3360 = vadd.f32 %v3199, %v3359
      %v3361 = vpop.f32.mrb[0].mxu0
      %v3362 = vpop.f32.mrb[0].mxu0
      %v3363 = vadd.f32 %v3202, %v3362
      %v3364 = vpop.f32.mrb[0].mxu0
      %3365 = vmatprep.mubr.bf16.mxu0 0
      %3366 = vmatmul.mubr.bf16.gmra.mrb[0].mxu0 %v1359
      %v3367 = vpop.f32.mrb[0].mxu0
      %v3368 = vadd.f32 %v3207, %v3367
      %v3369 = vpop.f32.mrb[0].mxu0
      %v3370 = vpop.f32.mrb[0].mxu0
      %v3371 = vadd.f32 %v3210, %v3370
      %v3372 = vpop.f32.mrb[0].mxu0
      %3373 = vmatprep.mubr.bf16.mxu0 0
      %3374 = vmatmul.mubr.bf16.gmra.mrb[0].mxu0 %v1372
      %v3375 = vpop.f32.mrb[0].mxu0
      %v3376 = vadd.f32 %v3215, %v3375
      %v3377 = vpop.f32.mrb[0].mxu0
      %v3378 = vpop.f32.mrb[0].mxu0
      %v3379 = vadd.f32 %v3218, %v3378
      %v3380 = vpop.f32.mrb[0].mxu0
      %3381 = vmatprep.mubr.bf16.mxu0 0
      %3382 = vmatmul.mubr.bf16.gmra.mrb[0].mxu0 %v1385
      %v3383 = vpop.f32.mrb[0].mxu0
      %v3384 = vadd.f32 %v3223, %v3383
      %v3385 = vpop.f32.mrb[0].mxu0
      %v3386 = vpop.f32.mrb[0].mxu0
      %v3387 = vadd.f32 %v3226, %v3386
      %v3388 = vpop.f32.mrb[0].mxu0
      %3389 = vmatprep.mubr.bf16.mxu0 0
      %3390 = vmatmul.mubr.bf16.gmra.mrb[0].mxu0 %v1398
      %v3391 = vpop.f32.mrb[0].mxu0
      %v3392 = vadd.f32 %v3231, %v3391
      %v3393 = vpop.f32.mrb[0].mxu0
      %v3394 = vpop.f32.mrb[0].mxu0
      %v3395 = vadd.f32 %v3234, %v3394
      %v3396 = vpop.f32.mrb[0].mxu0
      %3397 = vmatprep.mubr.bf16.mxu0 0
      %3398 = vmatmul.mubr.bf16.gmra.mrb[0].mxu0 %v1411
      %v3399 = vpop.f32.mrb[0].mxu0
      %v3400 = vadd.f32 %v3239, %v3399
      %v3401 = vpop.f32.mrb[0].mxu0
      %v3402 = vpop.f32.mrb[0].mxu0
      %v3403 = vadd.f32 %v3242, %v3402
      %v3404 = vpop.f32.mrb[0].mxu0
      %3405 = vmatprep.mubr.bf16.mxu0 0
      %3406 = vmatmul.mubr.bf16.gmra.mrb[0].mxu0 %v1424
      %v3407 = vpop.f32.mrb[0].mxu0
      %v3408 = vadd.f32 %v3247, %v3407
      %v3409 = vpop.f32.mrb[0].mxu0
      %v3410 = vpop.f32.mrb[0].mxu0
      %v3411 = vadd.f32 %v3250, %v3410
      %v3412 = vpop.f32.mrb[0].mxu0
      %3413 = vmatprep.mubr.bf16.mxu0 0
      %3414 = vmatmul.mubr.bf16.gmra.mrb[0].mxu0 %v1437
      %v3415 = vpop.f32.mrb[0].mxu0
      %v3416 = vadd.f32 %v3255, %v3415
      %v3417 = vpop.f32.mrb[0].mxu0
      %v3418 = vpop.f32.mrb[0].mxu0
      %v3419 = vadd.f32 %v3258, %v3418
      %v3420 = vpop.f32.mrb[0].mxu0
      %3421 = vmatprep.mubr.bf16.mxu0 0
      %3422 = vmatmul.mubr.bf16.gmra.mrb[0].mxu0 %v1450
      %v3423 = vpop.f32.mrb[0].mxu0
      %v3424 = vadd.f32 %v3263, %v3423
      %v3425 = vpop.f32.mrb[0].mxu0
      %v3426 = vpop.f32.mrb[0].mxu0
      %v3427 = vadd.f32 %v3266, %v3426
      %v3428 = vpop.f32.mrb[0].mxu0
      %3429 = vmatprep.mubr.bf16.mxu0 0
      %3430 = vmatmul.mubr.bf16.gmra.mrb[0].mxu0 %v1463
      %v3431 = vpop.f32.mrb[0].mxu0
      %v3432 = vadd.f32 %v3271, %v3431
      %v3433 = vpop.f32.mrb[0].mxu0
      %v3434 = vpop.f32.mrb[0].mxu0
      %v3435 = vadd.f32 %v3274, %v3434
      %v3436 = vpop.f32.mrb[0].mxu0
      %3437 = vmatprep.mubr.bf16.mxu0 0
      %3438 = vmatmul.mubr.bf16.gmra.mrb[0].mxu0 %v1476
      %v3439 = vpop.f32.mrb[0].mxu0
      %v3440 = vadd.f32 %v3279, %v3439
      %v3441 = vpop.f32.mrb[0].mxu0
      %v3442 = vpop.f32.mrb[0].mxu0
      %v3443 = vadd.f32 %v3282, %v3442
      %v3444 = vpop.f32.mrb[0].mxu0
      %3445 = vmatprep.mubr.bf16.mxu0 0
      %3446 = vmatmul.mubr.bf16.gmra.mrb[0].mxu0 %v1489
      %v3447 = vpop.f32.mrb[0].mxu0
      %v3448 = vadd.f32 %v3287, %v3447
      %v3449 = vpop.f32.mrb[0].mxu0
      %v3450 = vpop.f32.mrb[0].mxu0
      %v3451 = vadd.f32 %v3290, %v3450
      %v3452 = vpop.f32.mrb[0].mxu0
      %3453 = vmatprep.mubr.bf16.mxu0 0
      %3454 = vmatmul.mubr.bf16.gmra.mrb[0].mxu0 %v1502
      %v3455 = vpop.f32.mrb[0].mxu0
      %v3456 = vadd.f32 %v3295, %v3455
      %v3457 = vpop.f32.mrb[0].mxu0
      %v3458 = vpop.f32.mrb[0].mxu0
      %v3459 = vadd.f32 %v3298, %v3458
      %v3460 = vpop.f32.mrb[0].mxu0
      %3461 = vdwg.mxu0
      %v3462 = vmax.f32 %v3336, 0.0
      %v3463 = vmax.f32 %v3339, 0.0
      %v3464 = vmax.f32 %v3344, 0.0
      %v3465 = vmax.f32 %v3347, 0.0
      %v3466 = vmax.f32 %v3352, 0.0
      %v3467 = vmax.f32 %v3355, 0.0
      %v3468 = vmax.f32 %v3360, 0.0
      %v3469 = vmax.f32 %v3363, 0.0
      %v3470 = vmax.f32 %v3368, 0.0
      %v3471 = vmax.f32 %v3371, 0.0
      %v3472 = vmax.f32 %v3376, 0.0
      %v3473 = vmax.f32 %v3379, 0.0
      %v3474 = vmax.f32 %v3384, 0.0
      %v3475 = vmax.f32 %v3387, 0.0
      %v3476 = vmax.f32 %v3392, 0.0
      %v3477 = vmax.f32 %v3395, 0.0
      %v3478 = vmax.f32 %v3400, 0.0
      %v3479 = vmax.f32 %v3403, 0.0
      %v3480 = vmax.f32 %v3408, 0.0
      %v3481 = vmax.f32 %v3411, 0.0
      %v3482 = vmax.f32 %v3416, 0.0
      %v3483 = vmax.f32 %v3419, 0.0
      %v3484 = vmax.f32 %v3424, 0.0
      %v3485 = vmax.f32 %v3427, 0.0
      %v3486 = vmax.f32 %v3432, 0.0
      %v3487 = vmax.f32 %v3435, 0.0
      %v3488 = vmax.f32 %v3440, 0.0
      %v3489 = vmax.f32 %v3443, 0.0
      %v3490 = vmax.f32 %v3448, 0.0
      %v3491 = vmax.f32 %v3451, 0.0
      %v3492 = vmax.f32 %v3456, 0.0
      %v3493 = vmax.f32 %v3459, 0.0
      %3494 = vst [vmem:[%s209] sm:$0xff] %v3462
      %3495 = vst [vmem:[%s209 + $0x8] sm:$0xff] %v3463
      %3496 = vst [vmem:[%s209 + $0x10] sm:$0xff] %v3464
      %3497 = vst [vmem:[%s209 + $0x18] sm:$0xff] %v3465
      %3498 = vst [vmem:[%s209 + $0x20] sm:$0xff] %v3466
      %3499 = vst [vmem:[%s209 + $0x28] sm:$0xff] %v3467
      %3500 = vst [vmem:[%s209 + $0x30] sm:$0xff] %v3468
      %3501 = vst [vmem:[%s209 + $0x38] sm:$0xff] %v3469
      %3502 = vst [vmem:[%s209 + $0x40] sm:$0xff] %v3470
      %3503 = vst [vmem:[%s209 + $0x48] sm:$0xff] %v3471
      %3504 = vst [vmem:[%s209 + $0x50] sm:$0xff] %v3472
      %3505 = vst [vmem:[%s209 + $0x58] sm:$0xff] %v3473
      %3506 = vst [vmem:[%s209 + $0x60] sm:$0xff] %v3474
      %3507 = vst [vmem:[%s209 + $0x68] sm:$0xff] %v3475
      %3508 = vst [vmem:[%s209 + $0x70] sm:$0xff] %v3476
      %3509 = vst [vmem:[%s209 + $0x78] sm:$0xff] %v3477
      %3510 = vst [vmem:[%s209 + $0x80] sm:$0xff] %v3478
      %3511 = vst [vmem:[%s209 + $0x88] sm:$0xff] %v3479
      %3512 = vst [vmem:[%s209 + $0x90] sm:$0xff] %v3480
      %3513 = vst [vmem:[%s209 + $0x98] sm:$0xff] %v3481
      %3514 = vst [vmem:[%s209 + $0xa0] sm:$0xff] %v3482
      %3515 = vst [vmem:[%s209 + $0xa8] sm:$0xff] %v3483
      %3516 = vst [vmem:[%s209 + $0xb0] sm:$0xff] %v3484
      %3517 = vst [vmem:[%s209 + $0xb8] sm:$0xff] %v3485
      %3518 = vst [vmem:[%s209 + $0xc0] sm:$0xff] %v3486
      %3519 = vst [vmem:[%s209 + $0xc8] sm:$0xff] %v3487
      %3520 = vst [vmem:[%s209 + $0xd0] sm:$0xff] %v3488
      %3521 = vst [vmem:[%s209 + $0xd8] sm:$0xff] %v3489
      %3522 = vst [vmem:[%s209 + $0xe0] sm:$0xff] %v3490
      %3523 = vst [vmem:[%s209 + $0xe8] sm:$0xff] %v3491
      %3524 = vst [vmem:[%s209 + $0xf0] sm:$0xff] %v3492
      %3525 = vst [vmem:[%s209 + $0xf8] sm:$0xff] %v3493
      %v3526 = vadd.f32 %v3462, %v3463
      %v3527 = vadd.f32 %v3526, %v3464
      %v3528 = vadd.f32 %v3527, %v3465
      %v3529 = vadd.f32 %v3528, %v3466
      %v3530 = vadd.f32 %v3529, %v3467
      %v3531 = vadd.f32 %v3530, %v3468
      %v3532 = vadd.f32 %v3531, %v3469
      %v3533 = vadd.f32 %v3532, %v3470
      %v3534 = vadd.f32 %v3533, %v3471
      %v3535 = vadd.f32 %v3534, %v3472
      %v3536 = vadd.f32 %v3535, %v3473
      %v3537 = vadd.f32 %v3536, %v3474
      %v3538 = vadd.f32 %v3537, %v3475
      %v3539 = vadd.f32 %v3538, %v3476
      %v3540 = vadd.f32 %v3539, %v3477
      %v3541 = vadd.f32 %v3540, %v3478
      %v3542 = vadd.f32 %v3541, %v3479
      %v3543 = vadd.f32 %v3542, %v3480
      %v3544 = vadd.f32 %v3543, %v3481
      %v3545 = vadd.f32 %v3544, %v3482
      %v3546 = vadd.f32 %v3545, %v3483
      %v3547 = vadd.f32 %v3546, %v3484
      %v3548 = vadd.f32 %v3547, %v3485
      %v3549 = vadd.f32 %v3548, %v3486
      %v3550 = vadd.f32 %v3549, %v3487
      %v3551 = vadd.f32 %v3550, %v3488
      %v3552 = vadd.f32 %v3551, %v3489
      %v3553 = vadd.f32 %v3552, %v3490
      %v3554 = vadd.f32 %v3553, %v3491
      %v3555 = vadd.f32 %v3554, %v3492
      %v3556 = vadd.f32 %v3555, %v3493
      %v3557 = vrot.slane %v3556, 4
      %v3558 = vadd.f32 %v3556, %v3557
      %v3559 = vrot.slane %v3558, 2
      %v3560 = vadd.f32 %v3558, %v3559
      %v3561 = vrot.slane %v3560, 1
      %v3562 = vadd.f32 %v3560, %v3561
      %v3563 = vmul.f32 %v3462, %v3462
      %v3564 = vmul.f32 %v3463, %v3463
      %v3565 = vmul.f32 %v3464, %v3464
      %v3566 = vmul.f32 %v3465, %v3465
      %v3567 = vmul.f32 %v3466, %v3466
      %v3568 = vmul.f32 %v3467, %v3467
      %v3569 = vmul.f32 %v3468, %v3468
      %v3570 = vmul.f32 %v3469, %v3469
      %v3571 = vmul.f32 %v3470, %v3470
      %v3572 = vmul.f32 %v3471, %v3471
      %v3573 = vmul.f32 %v3472, %v3472
      %v3574 = vmul.f32 %v3473, %v3473
      %v3575 = vmul.f32 %v3474, %v3474
      %v3576 = vmul.f32 %v3475, %v3475
      %v3577 = vmul.f32 %v3476, %v3476
      %v3578 = vmul.f32 %v3477, %v3477
      %v3579 = vmul.f32 %v3478, %v3478
      %v3580 = vmul.f32 %v3479, %v3479
      %v3581 = vmul.f32 %v3480, %v3480
      %v3582 = vmul.f32 %v3481, %v3481
      %v3583 = vmul.f32 %v3482, %v3482
      %v3584 = vmul.f32 %v3483, %v3483
      %v3585 = vmul.f32 %v3484, %v3484
      %v3586 = vmul.f32 %v3485, %v3485
      %v3587 = vmul.f32 %v3486, %v3486
      %v3588 = vmul.f32 %v3487, %v3487
      %v3589 = vmul.f32 %v3488, %v3488
      %v3590 = vmul.f32 %v3489, %v3489
      %v3591 = vmul.f32 %v3490, %v3490
      %v3592 = vmul.f32 %v3491, %v3491
      %v3593 = vmul.f32 %v3492, %v3492
      %v3594 = vmul.f32 %v3493, %v3493
      %v3595 = vadd.f32 %v3563, %v3564
      %v3596 = vadd.f32 %v3595, %v3565
      %v3597 = vadd.f32 %v3596, %v3566
      %v3598 = vadd.f32 %v3597, %v3567
      %v3599 = vadd.f32 %v3598, %v3568
      %v3600 = vadd.f32 %v3599, %v3569
      %v3601 = vadd.f32 %v3600, %v3570
      %v3602 = vadd.f32 %v3601, %v3571
      %v3603 = vadd.f32 %v3602, %v3572
      %v3604 = vadd.f32 %v3603, %v3573
      %v3605 = vadd.f32 %v3604, %v3574
      %v3606 = vadd.f32 %v3605, %v3575
      %v3607 = vadd.f32 %v3606, %v3576
      %v3608 = vadd.f32 %v3607, %v3577
      %v3609 = vadd.f32 %v3608, %v3578
      %v3610 = vadd.f32 %v3609, %v3579
      %v3611 = vadd.f32 %v3610, %v3580
      %v3612 = vadd.f32 %v3611, %v3581
      %v3613 = vadd.f32 %v3612, %v3582
      %v3614 = vadd.f32 %v3613, %v3583
      %v3615 = vadd.f32 %v3614, %v3584
      %v3616 = vadd.f32 %v3615, %v3585
      %v3617 = vadd.f32 %v3616, %v3586
      %v3618 = vadd.f32 %v3617, %v3587
      %v3619 = vadd.f32 %v3618, %v3588
      %v3620 = vadd.f32 %v3619, %v3589
      %v3621 = vadd.f32 %v3620, %v3590
      %v3622 = vadd.f32 %v3621, %v3591
      %v3623 = vadd.f32 %v3622, %v3592
      %v3624 = vadd.f32 %v3623, %v3593
      %v3625 = vadd.f32 %v3624, %v3594
      %v3626 = vrot.slane %v3625, 4
      %v3627 = vadd.f32 %v3625, %v3626
      %v3628 = vrot.slane %v3627, 2
      %v3629 = vadd.f32 %v3627, %v3628
      %v3630 = vrot.slane %v3629, 1
      %v3631 = vadd.f32 %v3629, %v3630
      %vm3632 = vcmask 1040384
      %v3633 = vsel %vm3632, %v3562, %v3631
      %3634 = vst [vmem:[%s214] sm:$0x3] %v3633
      %s3635 = smul.u32 32, %s16
      %p3636 = scmp.lt.s32.totalorder %s3635, 63
      %s3637 = scalar_select %p3636, %s3635, 63
      %s3638 = smul.addr %s3637, 8
      %s3639 = scalar_lea.vmem %s3, %s3638
      %p3640 = scmp.lt.s32.totalorder %s16, 1
      %s3641 = scalar_select %p3640, %s16, 1
      %s3642 = smul.addr %s3641, 2
      %s3643 = scalar_lea.vmem %s4, %s3642
      // Predicated region
      $region33: #{forward.7} parent=31 // pred_check
        %p3644 = pneg %p102
      $region34: #{forward.7} parent=31 // pred_check_branch
        %3646 = sbr.rel (%p3644) target = $region36
      $region35: #{forward.7} parent=31 // pred_region
        %s3647 = smul.u32 32, %s16
      $region36: #{forward.7} parent=31 // pred_fallthru
        _
      // Predicated region
      $region37: #{forward.7} parent=31 // pred_check
        %p3648 = pneg %p128
      $region38: #{forward.7} parent=31 // pred_check_branch
        %3650 = sbr.rel (%p3648) target = $region40
      $region39: #{forward.7} parent=31 // pred_region
        _
      $region40: #{forward.7} parent=31 // pred_fallthru
        _
    $region32: #{forward.7} parent=5 // pred_fallthru
      _
    %p3651 = scmp.le.s32.totalorder 2, %s11
    // Predicated region
    $region41: #{forward.7} parent=5 // pred_check
      %p3652 = pneg %p3651
    $region42: #{forward.7} parent=5 // pred_check_branch
      %3654 = sbr.rel (%p3652) target = $region44
    $region43: #{forward.7} parent=5 // pred_region
      %s3655 = ssub.s32 %s11, 2
      // Predicated region
      $region45: #{forward.7} parent=43 // pred_check
        %p3656 = pneg %p108
      $region46: #{forward.7} parent=43 // pred_check_branch
        %3658 = sbr.rel (%p3656) target = $region48
      $region47: #{forward.7} parent=43 // pred_region
        %s3659 = smul.u32 32, %s17
        %p3660 = scmp.lt.s32.totalorder %s3659, 63
        %s3661 = scalar_select %p3660, %s3659, 63
        %s3662 = smul.addr %s3661, 8
        %s3663 = scalar_lea.vmem %s3, %s3662
      $region48: #{forward.7} parent=43 // pred_fallthru
        _
      // Predicated region
      $region49: #{forward.7} parent=43 // pred_check
        %p3664 = pneg %p134
      $region50: #{forward.7} parent=43 // pred_check_branch
        %3666 = sbr.rel (%p3664) target = $region52
      $region51: #{forward.7} parent=43 // pred_region
        %p3667 = scmp.lt.s32.totalorder %s17, 1
        %s3668 = scalar_select %p3667, %s17, 1
        %s3669 = smul.addr %s3668, 2
        %s3670 = scalar_lea.vmem %s4, %s3669
      $region52: #{forward.7} parent=43 // pred_fallthru
        _
    $region44: #{forward.7} parent=5 // pred_fallthru
      _
  $region6: #{forward.7} parent=0 // loop_footer
    %s15 = sadd.s32 1, %s11
  $region7: #{forward.7} parent=0 // loop_footer_branch
    %10 = sbr.rel target = $region3
  $region8: #{forward.7} parent=0 // loop_exit
    _

// kernel: forward.8
$region0: #{forward.8}
  #allocation0 [shape = 'u32[]', space=smem, size = 0x4, offset = 0x4, fixed_abs, tag = 'smem constant byte address 0x4 - core index']
  #allocation1 [shape = 'u32[144,128]{1,0:T(1,128)}', space=vmem, size = 0x12000, scoped, tag = 'internal scratch']
  %s0 = inlined_call_operand.vmem [shape: f32[512,128], index: 0, kind: input, shape index: {}]
  %s1 = inlined_call_operand.vmem [shape: f32[1,128], index: 1, kind: input, shape index: {}]
  %s2 = inlined_call_operand.vmem [shape: f32[1,128], index: 2, kind: input, shape index: {}]
  %s3 = inlined_call_operand.vmem [shape: f32[512,128], index: 3, kind: output, shape index: {}]
  %s4 = sld [smem:[#allocation0]]
  $region45: #{forward.8} parent=0
    _
  %s6 = ssub.s32 1, %s4
  %s7 = scalar_select 0, %s6, %s4
  loop: start=0, step=1, limit=4
  $region2: #{forward.8} parent=0 // loop_pre_header
    _
  $region3: #{forward.8} parent=0 // loop_header
    %s9 = sphi 0, %s13
    %p10 = scmp.ge.s32.totalorder %s9, 4
    %s19 = sphi 0, %s21
    %s22 = sphi 0, %s19
    %s23 = sphi 0, %s22
    %s39 = sphi 0, %s23
    %s43 = sphi 0, %s43
    %s45 = sphi 0, %s43
    %s46 = sphi 0, %s45
    %s60 = sphi 0, %s46
    %s64 = sphi 0, %s64
    %s66 = sphi 0, %s64
    %s67 = sphi 0, %s66
    %s81 = sphi 0, %s67
    %s87 = sphi 0, %s89
    %s90 = sphi 0, %s87
    %s91 = sphi 0, %s90
    %s107 = sphi 0, %s91
  $region4: #{forward.8} parent=0 // loop_header_branch
    %12 = sbr.rel (%p10) target = $region8
  $region5: #{forward.8} parent=0 // loop_body
    %s14 = ssub.s32 %s9, 1
    %s15 = ssub.s32 %s9, 2
    %s16 = sadd.s32 %s9, 1
    %s17 = ssub.s32 %s9, %s16
    %p18 = scmp.eq.s32.totalorder %s17, 0
    %s20 = sadd.s32 %s19, 1
    %s21 = scalar_select %p18, %s19, %s20
    %p24 = pneg %p18
    %p25 = scmp.eq.s32.totalorder %s9, 1
    %p26 = por %p24, %p25
    %p27 = scmp.ne.s32.totalorder %s19, %s22
    %p28 = scmp.eq.s32.totalorder %s9, 0
    %p29 = por %p27, %p28
    %p30 = scmp.ne.s32.totalorder %s19, %s22
    %p31 = scmp.eq.s32.totalorder %s14, 1
    %p32 = por %p30, %p31
    %p33 = scmp.ne.s32.totalorder %s22, %s23
    %p34 = scmp.eq.s32.totalorder %s14, 0
    %p35 = por %p33, %p34
    %p36 = scmp.ne.s32.totalorder %s22, %s23
    %p37 = scmp.eq.s32.totalorder %s15, 1
    %p38 = por %p36, %p37
    %p40 = scmp.ne.s32.totalorder %s23, %s39
    %p41 = scmp.eq.s32.totalorder %s15, 0
    %p42 = por %p40, %p41
    %s44 = sadd.s32 %s43, 1
    %p47 = scmp.eq.s32.totalorder %s9, 1
    %p48 = scmp.ne.s32.totalorder %s43, %s45
    %p49 = scmp.eq.s32.totalorder %s9, 0
    %p50 = por %p48, %p49
    %p51 = scmp.ne.s32.totalorder %s43, %s45
    %p52 = scmp.eq.s32.totalorder %s14, 1
    %p53 = por %p51, %p52
    %p54 = scmp.ne.s32.totalorder %s45, %s46
    %p55 = scmp.eq.s32.totalorder %s14, 0
    %p56 = por %p54, %p55
    %p57 = scmp.ne.s32.totalorder %s45, %s46
    %p58 = scmp.eq.s32.totalorder %s15, 1
    %p59 = por %p57, %p58
    %p61 = scmp.ne.s32.totalorder %s46, %s60
    %p62 = scmp.eq.s32.totalorder %s15, 0
    %p63 = por %p61, %p62
    %s65 = sadd.s32 %s64, 1
    %p68 = scmp.eq.s32.totalorder %s9, 1
    %p69 = scmp.ne.s32.totalorder %s64, %s66
    %p70 = scmp.eq.s32.totalorder %s9, 0
    %p71 = por %p69, %p70
    %p72 = scmp.ne.s32.totalorder %s64, %s66
    %p73 = scmp.eq.s32.totalorder %s14, 1
    %p74 = por %p72, %p73
    %p75 = scmp.ne.s32.totalorder %s66, %s67
    %p76 = scmp.eq.s32.totalorder %s14, 0
    %p77 = por %p75, %p76
    %p78 = scmp.ne.s32.totalorder %s66, %s67
    %p79 = scmp.eq.s32.totalorder %s15, 1
    %p80 = por %p78, %p79
    %p82 = scmp.ne.s32.totalorder %s67, %s81
    %p83 = scmp.eq.s32.totalorder %s15, 0
    %p84 = por %p82, %p83
    %s85 = ssub.s32 %s9, %s16
    %p86 = scmp.eq.s32.totalorder %s85, 0
    %s88 = sadd.s32 %s87, 1
    %s89 = scalar_select %p86, %s87, %s88
    %p92 = pneg %p86
    %p93 = scmp.eq.s32.totalorder %s9, 1
    %p94 = por %p92, %p93
    %p95 = scmp.ne.s32.totalorder %s87, %s90
    %p96 = scmp.eq.s32.totalorder %s9, 0
    %p97 = por %p95, %p96
    %p98 = scmp.ne.s32.totalorder %s87, %s90
    %p99 = scmp.eq.s32.totalorder %s14, 1
    %p100 = por %p98, %p99
    %p101 = scmp.ne.s32.totalorder %s90, %s91
    %p102 = scmp.eq.s32.totalorder %s14, 0
    %p103 = por %p101, %p102
    %p104 = scmp.ne.s32.totalorder %s90, %s91
    %p105 = scmp.eq.s32.totalorder %s15, 1
    %p106 = por %p104, %p105
    %p108 = scmp.ne.s32.totalorder %s91, %s107
    %p109 = scmp.eq.s32.totalorder %s15, 0
    %p110 = por %p108, %p109
    %p111 = scmp.le.s32.totalorder 1, %s9
    %p112 = scmp.lt.s32.totalorder %s9, 3
    %p113 = pnand %p111, %p112
    %p114 = pneg %p113
    // Predicated region
    $region9: #{forward.8} parent=5 // pred_check
      _
    $region10: #{forward.8} parent=5 // pred_check_branch
      %116 = sbr.rel (%p113) target = $region12
    $region11: #{forward.8} parent=5 // pred_region
      %s117 = ssub.s32 %s9, 1
      // Predicated region
      $region13: #{forward.8} parent=11 // pred_check
        %p118 = pneg %p56
      $region14: #{forward.8} parent=11 // pred_check_branch
        %120 = sbr.rel (%p118) target = $region16
      $region15: #{forward.8} parent=11 // pred_region
        _
      $region16: #{forward.8} parent=11 // pred_fallthru
        _
      // Predicated region
      $region17: #{forward.8} parent=11 // pred_check
        %p121 = pneg %p77
      $region18: #{forward.8} parent=11 // pred_check_branch
        %123 = sbr.rel (%p121) target = $region20
      $region19: #{forward.8} parent=11 // pred_region
        _
      $region20: #{forward.8} parent=11 // pred_fallthru
        _
    $region12: #{forward.8} parent=5 // pred_fallthru
      _
    %p124 = scmp.lt.s32.totalorder %s9, 2
    // Predicated region
    $region21: #{forward.8} parent=5 // pred_check
      %p125 = pneg %p124
    $region22: #{forward.8} parent=5 // pred_check_branch
      %127 = sbr.rel (%p125) target = $region24
    $region23: #{forward.8} parent=5 // pred_region
      // Predicated region
      $region25: #{forward.8} parent=23 // pred_check
        %p128 = pneg %p29
      $region26: #{forward.8} parent=23 // pred_check_branch
        %130 = sbr.rel (%p128) target = $region28
      $region27: #{forward.8} parent=23 // pred_region
        %s131 = smul.u32 32, %s9
        %p132 = scmp.lt.s32.totalorder %s131, 63
        %s133 = scalar_select %p132, %s131, 63
        %s134 = smul.addr %s133, 8
        %s135 = scalar_lea.vmem %s0, %s134
        %s136 = smul.u32 32, %s9
      $region28: #{forward.8} parent=23 // pred_fallthru
        _
    $region24: #{forward.8} parent=5 // pred_fallthru
      _
    %p137 = scmp.le.s32.totalorder 1, %s9
    %p138 = scmp.lt.s32.totalorder %s9, 3
    %p139 = pnand %p137, %p138
    %p140 = pneg %p139
    // Predicated region
    $region29: #{forward.8} parent=5 // pred_check
      _
    $region30: #{forward.8} parent=5 // pred_check_branch
      %142 = sbr.rel (%p139) target = $region32
    $region31: #{forward.8} parent=5 // pred_region
      %s143 = ssub.s32 %s9, 1
      %s144 = smul.u32 32, %s14
      %p145 = scmp.lt.s32.totalorder %s144, 63
      %s146 = scalar_select %p145, %s144, 63
      %s147 = smul.addr %s146, 8
      %s148 = scalar_lea.vmem %s0, %s147
      %p149 = pneg %p35
      %p150 = pneg %p32
      %p151 = pneg %p56
      %p152 = pneg %p53
      %p153 = pneg %p77
      %p154 = pneg %p74
      %p155 = pneg %p103
      %p156 = pneg %p100
      %s157 = smul.u32 32, %s14
      %p158 = scmp.lt.s32.totalorder %s157, 63
      %s159 = scalar_select %p158, %s157, 63
      %s160 = smul.addr %s159, 8
      %s161 = scalar_lea.vmem %s3, %s160
      %s162 = smul.u32 32, %s14
      %p163 = scmp.lt.s32.totalorder %s162, 63
      %s164 = scalar_select %p163, %s162, 63
      %s165 = smul.addr %s164, 8
      %s166 = scalar_lea.vmem %s0, %s165
      %s167 = smul.u32 32, %s14
      %s168 = smul.u32 32, %s14
      %p169 = scmp.lt.s32.totalorder %s168, 63
      %s170 = scalar_select %p169, %s168, 63
      %s171 = smul.addr %s170, 8
      %s172 = scalar_lea.vmem %s3, %s171
      %s173 = smul.u32 32, %s14
      %v174 = vld [vmem:[%s166] sm:$0xff]
      %v175 = vld [vmem:[%s166 + $0x8] sm:$0xff]
      %v176 = vld [vmem:[%s166 + $0x10] sm:$0xff]
      %v177 = vld [vmem:[%s166 + $0x18] sm:$0xff]
      %v178 = vld [vmem:[%s166 + $0x20] sm:$0xff]
      %v179 = vld [vmem:[%s166 + $0x28] sm:$0xff]
      %v180 = vld [vmem:[%s166 + $0x30] sm:$0xff]
      %v181 = vld [vmem:[%s166 + $0x38] sm:$0xff]
      %v182 = vld [vmem:[%s166 + $0x40] sm:$0xff]
      %v183 = vld [vmem:[%s166 + $0x48] sm:$0xff]
      %v184 = vld [vmem:[%s166 + $0x50] sm:$0xff]
      %v185 = vld [vmem:[%s166 + $0x58] sm:$0xff]
      %v186 = vld [vmem:[%s166 + $0x60] sm:$0xff]
      %v187 = vld [vmem:[%s166 + $0x68] sm:$0xff]
      %v188 = vld [vmem:[%s166 + $0x70] sm:$0xff]
      %v189 = vld [vmem:[%s166 + $0x78] sm:$0xff]
      %v190 = vld [vmem:[%s166 + $0x80] sm:$0xff]
      %v191 = vld [vmem:[%s166 + $0x88] sm:$0xff]
      %v192 = vld [vmem:[%s166 + $0x90] sm:$0xff]
      %v193 = vld [vmem:[%s166 + $0x98] sm:$0xff]
      %v194 = vld [vmem:[%s166 + $0xa0] sm:$0xff]
      %v195 = vld [vmem:[%s166 + $0xa8] sm:$0xff]
      %v196 = vld [vmem:[%s166 + $0xb0] sm:$0xff]
      %v197 = vld [vmem:[%s166 + $0xb8] sm:$0xff]
      %v198 = vld [vmem:[%s166 + $0xc0] sm:$0xff]
      %v199 = vld [vmem:[%s166 + $0xc8] sm:$0xff]
      %v200 = vld [vmem:[%s166 + $0xd0] sm:$0xff]
      %v201 = vld [vmem:[%s166 + $0xd8] sm:$0xff]
      %v202 = vld [vmem:[%s166 + $0xe0] sm:$0xff]
      %v203 = vld [vmem:[%s166 + $0xe8] sm:$0xff]
      %v204 = vld [vmem:[%s166 + $0xf0] sm:$0xff]
      %v205 = vld [vmem:[%s166 + $0xf8] sm:$0xff]
      %v206 = vld [vmem:[%s1] sm:$0x1]
      %v208 = vlaneseq
      %v209 = vshrl.u32 %v208, 7
      %v210 = vsub.s32 0, %v209
      %v211 = vrot.slane %v206, %v210
      %v213 = vmul.f32 %v174, %v211
      %v214 = vmul.f32 %v175, %v211
      %v215 = vmul.f32 %v176, %v211
      %v216 = vmul.f32 %v177, %v211
      %v217 = vmul.f32 %v178, %v211
      %v218 = vmul.f32 %v179, %v211
      %v219 = vmul.f32 %v180, %v211
      %v220 = vmul.f32 %v181, %v211
      %v221 = vmul.f32 %v182, %v211
      %v222 = vmul.f32 %v183, %v211
      %v223 = vmul.f32 %v184, %v211
      %v224 = vmul.f32 %v185, %v211
      %v225 = vmul.f32 %v186, %v211
      %v226 = vmul.f32 %v187, %v211
      %v227 = vmul.f32 %v188, %v211
      %v228 = vmul.f32 %v189, %v211
      %v229 = vmul.f32 %v190, %v211
      %v230 = vmul.f32 %v191, %v211
      %v231 = vmul.f32 %v192, %v211
      %v232 = vmul.f32 %v193, %v211
      %v233 = vmul.f32 %v194, %v211
      %v234 = vmul.f32 %v195, %v211
      %v235 = vmul.f32 %v196, %v211
      %v236 = vmul.f32 %v197, %v211
      %v237 = vmul.f32 %v198, %v211
      %v238 = vmul.f32 %v199, %v211
      %v239 = vmul.f32 %v200, %v211
      %v240 = vmul.f32 %v201, %v211
      %v241 = vmul.f32 %v202, %v211
      %v242 = vmul.f32 %v203, %v211
      %v243 = vmul.f32 %v204, %v211
      %v244 = vmul.f32 %v205, %v211
      %v245 = vld [vmem:[%s2] sm:$0x1]
      %v247 = vlaneseq
      %v248 = vshrl.u32 %v247, 7
      %v249 = vsub.s32 0, %v248
      %v250 = vrot.slane %v245, %v249
      %v252 = vadd.f32 %v213, %v250
      %v253 = vadd.f32 %v214, %v250
      %v254 = vadd.f32 %v215, %v250
      %v255 = vadd.f32 %v216, %v250
      %v256 = vadd.f32 %v217, %v250
      %v257 = vadd.f32 %v218, %v250
      %v258 = vadd.f32 %v219, %v250
      %v259 = vadd.f32 %v220, %v250
      %v260 = vadd.f32 %v221, %v250
      %v261 = vadd.f32 %v222, %v250
      %v262 = vadd.f32 %v223, %v250
      %v263 = vadd.f32 %v224, %v250
      %v264 = vadd.f32 %v225, %v250
      %v265 = vadd.f32 %v226, %v250
      %v266 = vadd.f32 %v227, %v250
      %v267 = vadd.f32 %v228, %v250
      %v268 = vadd.f32 %v229, %v250
      %v269 = vadd.f32 %v230, %v250
      %v270 = vadd.f32 %v231, %v250
      %v271 = vadd.f32 %v232, %v250
      %v272 = vadd.f32 %v233, %v250
      %v273 = vadd.f32 %v234, %v250
      %v274 = vadd.f32 %v235, %v250
      %v275 = vadd.f32 %v236, %v250
      %v276 = vadd.f32 %v237, %v250
      %v277 = vadd.f32 %v238, %v250
      %v278 = vadd.f32 %v239, %v250
      %v279 = vadd.f32 %v240, %v250
      %v280 = vadd.f32 %v241, %v250
      %v281 = vadd.f32 %v242, %v250
      %v282 = vadd.f32 %v243, %v250
      %v283 = vadd.f32 %v244, %v250
      %284 = vst [vmem:[%s172] sm:$0xff] %v252
      %285 = vst [vmem:[%s172 + $0x8] sm:$0xff] %v253
      %286 = vst [vmem:[%s172 + $0x10] sm:$0xff] %v254
      %287 = vst [vmem:[%s172 + $0x18] sm:$0xff] %v255
      %288 = vst [vmem:[%s172 + $0x20] sm:$0xff] %v256
      %289 = vst [vmem:[%s172 + $0x28] sm:$0xff] %v257
      %290 = vst [vmem:[%s172 + $0x30] sm:$0xff] %v258
      %291 = vst [vmem:[%s172 + $0x38] sm:$0xff] %v259
      %292 = vst [vmem:[%s172 + $0x40] sm:$0xff] %v260
      %293 = vst [vmem:[%s172 + $0x48] sm:$0xff] %v261
      %294 = vst [vmem:[%s172 + $0x50] sm:$0xff] %v262
      %295 = vst [vmem:[%s172 + $0x58] sm:$0xff] %v263
      %296 = vst [vmem:[%s172 + $0x60] sm:$0xff] %v264
      %297 = vst [vmem:[%s172 + $0x68] sm:$0xff] %v265
      %298 = vst [vmem:[%s172 + $0x70] sm:$0xff] %v266
      %299 = vst [vmem:[%s172 + $0x78] sm:$0xff] %v267
      %300 = vst [vmem:[%s172 + $0x80] sm:$0xff] %v268
      %301 = vst [vmem:[%s172 + $0x88] sm:$0xff] %v269
      %302 = vst [vmem:[%s172 + $0x90] sm:$0xff] %v270
      %303 = vst [vmem:[%s172 + $0x98] sm:$0xff] %v271
      %304 = vst [vmem:[%s172 + $0xa0] sm:$0xff] %v272
      %305 = vst [vmem:[%s172 + $0xa8] sm:$0xff] %v273
      %306 = vst [vmem:[%s172 + $0xb0] sm:$0xff] %v274
      %307 = vst [vmem:[%s172 + $0xb8] sm:$0xff] %v275
      %308 = vst [vmem:[%s172 + $0xc0] sm:$0xff] %v276
      %309 = vst [vmem:[%s172 + $0xc8] sm:$0xff] %v277
      %310 = vst [vmem:[%s172 + $0xd0] sm:$0xff] %v278
      %311 = vst [vmem:[%s172 + $0xd8] sm:$0xff] %v279
      %312 = vst [vmem:[%s172 + $0xe0] sm:$0xff] %v280
      %313 = vst [vmem:[%s172 + $0xe8] sm:$0xff] %v281
      %314 = vst [vmem:[%s172 + $0xf0] sm:$0xff] %v282
      %315 = vst [vmem:[%s172 + $0xf8] sm:$0xff] %v283
      %s316 = smul.u32 32, %s14
      %p317 = scmp.lt.s32.totalorder %s316, 63
      %s318 = scalar_select %p317, %s316, 63
      %s319 = smul.addr %s318, 8
      %s320 = scalar_lea.vmem %s3, %s319
      // Predicated region
      $region33: #{forward.8} parent=31 // pred_check
        %p321 = pneg %p100
      $region34: #{forward.8} parent=31 // pred_check_branch
        %323 = sbr.rel (%p321) target = $region36
      $region35: #{forward.8} parent=31 // pred_region
        %s324 = smul.u32 32, %s14
      $region36: #{forward.8} parent=31 // pred_fallthru
        _
    $region32: #{forward.8} parent=5 // pred_fallthru
      _
    %p325 = scmp.le.s32.totalorder 2, %s9
    // Predicated region
    $region37: #{forward.8} parent=5 // pred_check
      %p326 = pneg %p325
    $region38: #{forward.8} parent=5 // pred_check_branch
      %328 = sbr.rel (%p326) target = $region40
    $region39: #{forward.8} parent=5 // pred_region
      %s329 = ssub.s32 %s9, 2
      // Predicated region
      $region41: #{forward.8} parent=39 // pred_check
        %p330 = pneg %p106
      $region42: #{forward.8} parent=39 // pred_check_branch
        %332 = sbr.rel (%p330) target = $region44
      $region43: #{forward.8} parent=39 // pred_region
        %s333 = smul.u32 32, %s15
        %p334 = scmp.lt.s32.totalorder %s333, 63
        %s335 = scalar_select %p334, %s333, 63
        %s336 = smul.addr %s335, 8
        %s337 = scalar_lea.vmem %s3, %s336
      $region44: #{forward.8} parent=39 // pred_fallthru
        _
    $region40: #{forward.8} parent=5 // pred_fallthru
      _
  $region6: #{forward.8} parent=0 // loop_footer
    %s13 = sadd.s32 1, %s9
  $region7: #{forward.8} parent=0 // loop_footer_branch
    %8 = sbr.rel target = $region3
  $region8: #{forward.8} parent=0 // loop_exit
    _

// kernel: forward.9
$region0: #{forward.9}
  #allocation0 [shape = 'u32[]', space=smem, size = 0x4, offset = 0x4, fixed_abs, tag = 'smem constant byte address 0x4 - core index']
  #allocation1 [shape = 'u32[144,128]{1,0:T(1,128)}', space=vmem, size = 0x12000, scoped, tag = 'internal scratch']
  %s0 = inlined_call_operand.vmem [shape: bf16[2,4096], index: 0, kind: input, shape index: {}]
  %s1 = inlined_call_operand.vmem [shape: bf16[4096,384], index: 1, kind: input, shape index: {}]
  %s2 = inlined_call_operand.vmem [shape: f32[1,384], index: 2, kind: input, shape index: {}]
  %s3 = inlined_call_operand.vmem [shape: bf16[384,192], index: 3, kind: input, shape index: {}]
  %s4 = inlined_call_operand.vmem [shape: f32[1,192], index: 4, kind: input, shape index: {}]
  %s5 = inlined_call_operand.vmem [shape: bf16[192,10], index: 5, kind: input, shape index: {}]
  %s6 = inlined_call_operand.vmem [shape: f32[1,10], index: 6, kind: input, shape index: {}]
  %s7 = inlined_call_operand.hbm [shape: f32[2,10], index: 7, kind: output, shape index: {}]
  %s8 = sld [smem:[#allocation0]]
  $region38: #{forward.9} parent=0
    _
  %s10 = ssub.s32 1, %s8
  %s11 = scalar_select 0, %s10, %s8
  $region1: #{forward.9} parent=0
    #allocation2 [shape = 'u8[1024]{0}', space=vmem, size = 0x400, scoped, tag = 'output window, operand 0, single buffered']
    #allocation3 [shape = 's32[1]{0}', space=sflag, size = 0x4, scoped, tag = 'scoped memory for forward.9']
    %12 = vsyncpa [#allocation3], 0
    // Predicated region
    $region2: #{forward.9} parent=1 // pred_check
      _
    $region3: #{forward.9} parent=1 // pred_check_branch
      %14 = sbr.rel (0) target = $region5
    $region4: #{forward.9} parent=1 // pred_region
      _
    $region5: #{forward.9} parent=1 // pred_fallthru
      _
    // Predicated region
    $region6: #{forward.9} parent=1 // pred_check
      _
    $region7: #{forward.9} parent=1 // pred_check_branch
      %16 = sbr.rel (0) target = $region9
    $region8: #{forward.9} parent=1 // pred_region
      _
    $region9: #{forward.9} parent=1 // pred_fallthru
      _
    // Predicated region
    $region10: #{forward.9} parent=1 // pred_check
      _
    $region11: #{forward.9} parent=1 // pred_check_branch
      %18 = sbr.rel (0) target = $region13
    $region12: #{forward.9} parent=1 // pred_region
      _
    $region13: #{forward.9} parent=1 // pred_fallthru
      _
    // Predicated region
    $region14: #{forward.9} parent=1 // pred_check
      _
    $region15: #{forward.9} parent=1 // pred_check_branch
      %20 = sbr.rel (0) target = $region17
    $region16: #{forward.9} parent=1 // pred_region
      _
    $region17: #{forward.9} parent=1 // pred_fallthru
      _
    // Predicated region
    $region18: #{forward.9} parent=1 // pred_check
      _
    $region19: #{forward.9} parent=1 // pred_check_branch
      %22 = sbr.rel (0) target = $region21
    $region20: #{forward.9} parent=1 // pred_region
      _
    $region21: #{forward.9} parent=1 // pred_fallthru
      _
    // Predicated region
    $region22: #{forward.9} parent=1 // pred_check
      _
    $region23: #{forward.9} parent=1 // pred_check_branch
      %24 = sbr.rel (0) target = $region25
    $region24: #{forward.9} parent=1 // pred_region
      _
    $region25: #{forward.9} parent=1 // pred_fallthru
      _
    // Predicated region
    $region26: #{forward.9} parent=1 // pred_check
      _
    $region27: #{forward.9} parent=1 // pred_check_branch
      %26 = sbr.rel (0) target = $region29
    $region28: #{forward.9} parent=1 // pred_region
      _
    $region29: #{forward.9} parent=1 // pred_fallthru
      _
    %v28 = vld [vmem:[%s0] sm:$0xff]
    %v29 = vld [vmem:[%s0 + $0x8] sm:$0xff]
    %v30 = vld [vmem:[%s0 + $0x10] sm:$0xff]
    %v31 = vld [vmem:[%s0 + $0x18] sm:$0xff]
    %v32 = vld [vmem:[%s1] sm:$0xff]
    %v33 = vld [vmem:[%s1 + $0x8] sm:$0xf]
    %v34 = vld [vmem:[%s1 + $0xc] sm:$0xff]
    %v35 = vld [vmem:[%s1 + $0x14] sm:$0xf]
    %v36 = vld [vmem:[%s1 + $0x18] sm:$0xff]
    %v37 = vld [vmem:[%s1 + $0x20] sm:$0xf]
    %v38 = vld [vmem:[%s1 + $0x24] sm:$0xff]
    %v39 = vld [vmem:[%s1 + $0x2c] sm:$0xf]
    %v40 = vld [vmem:[%s1 + $0x30] sm:$0xff]
    %v41 = vld [vmem:[%s1 + $0x38] sm:$0xf]
    %v42 = vld [vmem:[%s1 + $0x3c] sm:$0xff]
    %v43 = vld [vmem:[%s1 + $0x44] sm:$0xf]
    %v44 = vld [vmem:[%s1 + $0x48] sm:$0xff]
    %v45 = vld [vmem:[%s1 + $0x50] sm:$0xf]
    %v46 = vld [vmem:[%s1 + $0x54] sm:$0xff]
    %v47 = vld [vmem:[%s1 + $0x5c] sm:$0xf]
    %v48 = vld [vmem:[%s1 + $0x60] sm:$0xff]
    %v49 = vld [vmem:[%s1 + $0x68] sm:$0xf]
    %v50 = vld [vmem:[%s1 + $0x6c] sm:$0xff]
    %v51 = vld [vmem:[%s1 + $0x74] sm:$0xf]
    %v52 = vld [vmem:[%s1 + $0x78] sm:$0xff]
    %v53 = vld [vmem:[%s1 + $0x80] sm:$0xf]
    %v54 = vld [vmem:[%s1 + $0x84] sm:$0xff]
    %v55 = vld [vmem:[%s1 + $0x8c] sm:$0xf]
    %v56 = vld [vmem:[%s1 + $0x90] sm:$0xff]
    %v57 = vld [vmem:[%s1 + $0x98] sm:$0xf]
    %v58 = vld [vmem:[%s1 + $0x9c] sm:$0xff]
    %v59 = vld [vmem:[%s1 + $0xa4] sm:$0xf]
    %v60 = vld [vmem:[%s1 + $0xa8] sm:$0xff]
    %v61 = vld [vmem:[%s1 + $0xb0] sm:$0xf]
    %v62 = vld [vmem:[%s1 + $0xb4] sm:$0xff]
    %v63 = vld [vmem:[%s1 + $0xbc] sm:$0xf]
    %v64 = vld [vmem:[%s1 + $0xc0] sm:$0xff]
    %v65 = vld [vmem:[%s1 + $0xc8] sm:$0xf]
    %v66 = vld [vmem:[%s1 + $0xcc] sm:$0xff]
    %v67 = vld [vmem:[%s1 + $0xd4] sm:$0xf]
    %v68 = vld [vmem:[%s1 + $0xd8] sm:$0xff]
    %v69 = vld [vmem:[%s1 + $0xe0] sm:$0xf]
    %v70 = vld [vmem:[%s1 + $0xe4] sm:$0xff]
    %v71 = vld [vmem:[%s1 + $0xec] sm:$0xf]
    %v72 = vld [vmem:[%s1 + $0xf0] sm:$0xff]
    %v73 = vld [vmem:[%s1 + $0xf8] sm:$0xf]
    %v74 = vld [vmem:[%s1 + $0xfc] sm:$0xff]
    %v75 = vld [vmem:[%s1 + $0x104] sm:$0xf]
    %v76 = vld [vmem:[%s1 + $0x108] sm:$0xff]
    %v77 = vld [vmem:[%s1 + $0x110] sm:$0xf]
    %v78 = vld [vmem:[%s1 + $0x114] sm:$0xff]
    %v79 = vld [vmem:[%s1 + $0x11c] sm:$0xf]
    %v80 = vld [vmem:[%s1 + $0x120] sm:$0xff]
    %v81 = vld [vmem:[%s1 + $0x128] sm:$0xf]
    %v82 = vld [vmem:[%s1 + $0x12c] sm:$0xff]
    %v83 = vld [vmem:[%s1 + $0x134] sm:$0xf]
    %v84 = vld [vmem:[%s1 + $0x138] sm:$0xff]
    %v85 = vld [vmem:[%s1 + $0x140] sm:$0xf]
    %v86 = vld [vmem:[%s1 + $0x144] sm:$0xff]
    %v87 = vld [vmem:[%s1 + $0x14c] sm:$0xf]
    %v88 = vld [vmem:[%s1 + $0x150] sm:$0xff]
    %v89 = vld [vmem:[%s1 + $0x158] sm:$0xf]
    %v90 = vld [vmem:[%s1 + $0x15c] sm:$0xff]
    %v91 = vld [vmem:[%s1 + $0x164] sm:$0xf]
    %v92 = vld [vmem:[%s1 + $0x168] sm:$0xff]
    %v93 = vld [vmem:[%s1 + $0x170] sm:$0xf]
    %v94 = vld [vmem:[%s1 + $0x174] sm:$0xff]
    %v95 = vld [vmem:[%s1 + $0x17c] sm:$0xf]
    %v96 = vld [vmem:[%s1 + $0x180] sm:$0xff]
    %v97 = vld [vmem:[%s1 + $0x188] sm:$0xf]
    %v98 = vld [vmem:[%s1 + $0x18c] sm:$0xff]
    %v99 = vld [vmem:[%s1 + $0x194] sm:$0xf]
    %v100 = vld [vmem:[%s1 + $0x198] sm:$0xff]
    %v101 = vld [vmem:[%s1 + $0x1a0] sm:$0xf]
    %v102 = vld [vmem:[%s1 + $0x1a4] sm:$0xff]
    %v103 = vld [vmem:[%s1 + $0x1ac] sm:$0xf]
    %v104 = vld [vmem:[%s1 + $0x1b0] sm:$0xff]
    %v105 = vld [vmem:[%s1 + $0x1b8] sm:$0xf]
    %v106 = vld [vmem:[%s1 + $0x1bc] sm:$0xff]
    %v107 = vld [vmem:[%s1 + $0x1c4] sm:$0xf]
    %v108 = vld [vmem:[%s1 + $0x1c8] sm:$0xff]
    %v109 = vld [vmem:[%s1 + $0x1d0] sm:$0xf]
    %v110 = vld [vmem:[%s1 + $0x1d4] sm:$0xff]
    %v111 = vld [vmem:[%s1 + $0x1dc] sm:$0xf]
    %v112 = vld [vmem:[%s1 + $0x1e0] sm:$0xff]
    %v113 = vld [vmem:[%s1 + $0x1e8] sm:$0xf]
    %v114 = vld [vmem:[%s1 + $0x1ec] sm:$0xff]
    %v115 = vld [vmem:[%s1 + $0x1f4] sm:$0xf]
    %v116 = vld [vmem:[%s1 + $0x1f8] sm:$0xff]
    %v117 = vld [vmem:[%s1 + $0x200] sm:$0xf]
    %v118 = vld [vmem:[%s1 + $0x204] sm:$0xff]
    %v119 = vld [vmem:[%s1 + $0x20c] sm:$0xf]
    %v120 = vld [vmem:[%s1 + $0x210] sm:$0xff]
    %v121 = vld [vmem:[%s1 + $0x218] sm:$0xf]
    %v122 = vld [vmem:[%s1 + $0x21c] sm:$0xff]
    %v123 = vld [vmem:[%s1 + $0x224] sm:$0xf]
    %v124 = vld [vmem:[%s1 + $0x228] sm:$0xff]
    %v125 = vld [vmem:[%s1 + $0x230] sm:$0xf]
    %v126 = vld [vmem:[%s1 + $0x234] sm:$0xff]
    %v127 = vld [vmem:[%s1 + $0x23c] sm:$0xf]
    %v128 = vld [vmem:[%s1 + $0x240] sm:$0xff]
    %v129 = vld [vmem:[%s1 + $0x248] sm:$0xf]
    %v130 = vld [vmem:[%s1 + $0x24c] sm:$0xff]
    %v131 = vld [vmem:[%s1 + $0x254] sm:$0xf]
    %v132 = vld [vmem:[%s1 + $0x258] sm:$0xff]
    %v133 = vld [vmem:[%s1 + $0x260] sm:$0xf]
    %v134 = vld [vmem:[%s1 + $0x264] sm:$0xff]
    %v135 = vld [vmem:[%s1 + $0x26c] sm:$0xf]
    %v136 = vld [vmem:[%s1 + $0x270] sm:$0xff]
    %v137 = vld [vmem:[%s1 + $0x278] sm:$0xf]
    %v138 = vld [vmem:[%s1 + $0x27c] sm:$0xff]
    %v139 = vld [vmem:[%s1 + $0x284] sm:$0xf]
    %v140 = vld [vmem:[%s1 + $0x288] sm:$0xff]
    %v141 = vld [vmem:[%s1 + $0x290] sm:$0xf]
    %v142 = vld [vmem:[%s1 + $0x294] sm:$0xff]
    %v143 = vld [vmem:[%s1 + $0x29c] sm:$0xf]
    %v144 = vld [vmem:[%s1 + $0x2a0] sm:$0xff]
    %v145 = vld [vmem:[%s1 + $0x2a8] sm:$0xf]
    %v146 = vld [vmem:[%s1 + $0x2ac] sm:$0xff]
    %v147 = vld [vmem:[%s1 + $0x2b4] sm:$0xf]
    %v148 = vld [vmem:[%s1 + $0x2b8] sm:$0xff]
    %v149 = vld [vmem:[%s1 + $0x2c0] sm:$0xf]
    %v150 = vld [vmem:[%s1 + $0x2c4] sm:$0xff]
    %v151 = vld [vmem:[%s1 + $0x2cc] sm:$0xf]
    %v152 = vld [vmem:[%s1 + $0x2d0] sm:$0xff]
    %v153 = vld [vmem:[%s1 + $0x2d8] sm:$0xf]
    %v154 = vld [vmem:[%s1 + $0x2dc] sm:$0xff]
    %v155 = vld [vmem:[%s1 + $0x2e4] sm:$0xf]
    %v156 = vld [vmem:[%s1 + $0x2e8] sm:$0xff]
    %v157 = vld [vmem:[%s1 + $0x2f0] sm:$0xf]
    %v158 = vld [vmem:[%s1 + $0x2f4] sm:$0xff]
    %v159 = vld [vmem:[%s1 + $0x2fc] sm:$0xf]
    %v160 = vld [vmem:[%s1 + $0x300] sm:$0xff]
    %v161 = vld [vmem:[%s1 + $0x308] sm:$0xf]
    %v162 = vld [vmem:[%s1 + $0x30c] sm:$0xff]
    %v163 = vld [vmem:[%s1 + $0x314] sm:$0xf]
    %v164 = vld [vmem:[%s1 + $0x318] sm:$0xff]
    %v165 = vld [vmem:[%s1 + $0x320] sm:$0xf]
    %v166 = vld [vmem:[%s1 + $0x324] sm:$0xff]
    %v167 = vld [vmem:[%s1 + $0x32c] sm:$0xf]
    %v168 = vld [vmem:[%s1 + $0x330] sm:$0xff]
    %v169 = vld [vmem:[%s1 + $0x338] sm:$0xf]
    %v170 = vld [vmem:[%s1 + $0x33c] sm:$0xff]
    %v171 = vld [vmem:[%s1 + $0x344] sm:$0xf]
    %v172 = vld [vmem:[%s1 + $0x348] sm:$0xff]
    %v173 = vld [vmem:[%s1 + $0x350] sm:$0xf]
    %v174 = vld [vmem:[%s1 + $0x354] sm:$0xff]
    %v175 = vld [vmem:[%s1 + $0x35c] sm:$0xf]
    %v176 = vld [vmem:[%s1 + $0x360] sm:$0xff]
    %v177 = vld [vmem:[%s1 + $0x368] sm:$0xf]
    %v178 = vld [vmem:[%s1 + $0x36c] sm:$0xff]
    %v179 = vld [vmem:[%s1 + $0x374] sm:$0xf]
    %v180 = vld [vmem:[%s1 + $0x378] sm:$0xff]
    %v181 = vld [vmem:[%s1 + $0x380] sm:$0xf]
    %v182 = vld [vmem:[%s1 + $0x384] sm:$0xff]
    %v183 = vld [vmem:[%s1 + $0x38c] sm:$0xf]
    %v184 = vld [vmem:[%s1 + $0x390] sm:$0xff]
    %v185 = vld [vmem:[%s1 + $0x398] sm:$0xf]
    %v186 = vld [vmem:[%s1 + $0x39c] sm:$0xff]
    %v187 = vld [vmem:[%s1 + $0x3a4] sm:$0xf]
    %v188 = vld [vmem:[%s1 + $0x3a8] sm:$0xff]
    %v189 = vld [vmem:[%s1 + $0x3b0] sm:$0xf]
    %v190 = vld [vmem:[%s1 + $0x3b4] sm:$0xff]
    %v191 = vld [vmem:[%s1 + $0x3bc] sm:$0xf]
    %v192 = vld [vmem:[%s1 + $0x3c0] sm:$0xff]
    %v193 = vld [vmem:[%s1 + $0x3c8] sm:$0xf]
    %v194 = vld [vmem:[%s1 + $0x3cc] sm:$0xff]
    %v195 = vld [vmem:[%s1 + $0x3d4] sm:$0xf]
    %v196 = vld [vmem:[%s1 + $0x3d8] sm:$0xff]
    %v197 = vld [vmem:[%s1 + $0x3e0] sm:$0xf]
    %v198 = vld [vmem:[%s1 + $0x3e4] sm:$0xff]
    %v199 = vld [vmem:[%s1 + $0x3ec] sm:$0xf]
    %v200 = vld [vmem:[%s1 + $0x3f0] sm:$0xff]
    %v201 = vld [vmem:[%s1 + $0x3f8] sm:$0xf]
    %v202 = vld [vmem:[%s1 + $0x3fc] sm:$0xff]
    %v203 = vld [vmem:[%s1 + $0x404] sm:$0xf]
    %v204 = vld [vmem:[%s1 + $0x408] sm:$0xff]
    %v205 = vld [vmem:[%s1 + $0x410] sm:$0xf]
    %v206 = vld [vmem:[%s1 + $0x414] sm:$0xff]
    %v207 = vld [vmem:[%s1 + $0x41c] sm:$0xf]
    %v208 = vld [vmem:[%s1 + $0x420] sm:$0xff]
    %v209 = vld [vmem:[%s1 + $0x428] sm:$0xf]
    %v210 = vld [vmem:[%s1 + $0x42c] sm:$0xff]
    %v211 = vld [vmem:[%s1 + $0x434] sm:$0xf]
    %v212 = vld [vmem:[%s1 + $0x438] sm:$0xff]
    %v213 = vld [vmem:[%s1 + $0x440] sm:$0xf]
    %v214 = vld [vmem:[%s1 + $0x444] sm:$0xff]
    %v215 = vld [vmem:[%s1 + $0x44c] sm:$0xf]
    %v216 = vld [vmem:[%s1 + $0x450] sm:$0xff]
    %v217 = vld [vmem:[%s1 + $0x458] sm:$0xf]
    %v218 = vld [vmem:[%s1 + $0x45c] sm:$0xff]
    %v219 = vld [vmem:[%s1 + $0x464] sm:$0xf]
    %v220 = vld [vmem:[%s1 + $0x468] sm:$0xff]
    %v221 = vld [vmem:[%s1 + $0x470] sm:$0xf]
    %v222 = vld [vmem:[%s1 + $0x474] sm:$0xff]
    %v223 = vld [vmem:[%s1 + $0x47c] sm:$0xf]
    %v224 = vld [vmem:[%s1 + $0x480] sm:$0xff]
    %v225 = vld [vmem:[%s1 + $0x488] sm:$0xf]
    %v226 = vld [vmem:[%s1 + $0x48c] sm:$0xff]
    %v227 = vld [vmem:[%s1 + $0x494] sm:$0xf]
    %v228 = vld [vmem:[%s1 + $0x498] sm:$0xff]
    %v229 = vld [vmem:[%s1 + $0x4a0] sm:$0xf]
    %v230 = vld [vmem:[%s1 + $0x4a4] sm:$0xff]
    %v231 = vld [vmem:[%s1 + $0x4ac] sm:$0xf]
    %v232 = vld [vmem:[%s1 + $0x4b0] sm:$0xff]
    %v233 = vld [vmem:[%s1 + $0x4b8] sm:$0xf]
    %v234 = vld [vmem:[%s1 + $0x4bc] sm:$0xff]
    %v235 = vld [vmem:[%s1 + $0x4c4] sm:$0xf]
    %v236 = vld [vmem:[%s1 + $0x4c8] sm:$0xff]
    %v237 = vld [vmem:[%s1 + $0x4d0] sm:$0xf]
    %v238 = vld [vmem:[%s1 + $0x4d4] sm:$0xff]
    %v239 = vld [vmem:[%s1 + $0x4dc] sm:$0xf]
    %v240 = vld [vmem:[%s1 + $0x4e0] sm:$0xff]
    %v241 = vld [vmem:[%s1 + $0x4e8] sm:$0xf]
    %v242 = vld [vmem:[%s1 + $0x4ec] sm:$0xff]
    %v243 = vld [vmem:[%s1 + $0x4f4] sm:$0xf]
    %v244 = vld [vmem:[%s1 + $0x4f8] sm:$0xff]
    %v245 = vld [vmem:[%s1 + $0x500] sm:$0xf]
    %v246 = vld [vmem:[%s1 + $0x504] sm:$0xff]
    %v247 = vld [vmem:[%s1 + $0x50c] sm:$0xf]
    %v248 = vld [vmem:[%s1 + $0x510] sm:$0xff]
    %v249 = vld [vmem:[%s1 + $0x518] sm:$0xf]
    %v250 = vld [vmem:[%s1 + $0x51c] sm:$0xff]
    %v251 = vld [vmem:[%s1 + $0x524] sm:$0xf]
    %v252 = vld [vmem:[%s1 + $0x528] sm:$0xff]
    %v253 = vld [vmem:[%s1 + $0x530] sm:$0xf]
    %v254 = vld [vmem:[%s1 + $0x534] sm:$0xff]
    %v255 = vld [vmem:[%s1 + $0x53c] sm:$0xf]
    %v256 = vld [vmem:[%s1 + $0x540] sm:$0xff]
    %v257 = vld [vmem:[%s1 + $0x548] sm:$0xf]
    %v258 = vld [vmem:[%s1 + $0x54c] sm:$0xff]
    %v259 = vld [vmem:[%s1 + $0x554] sm:$0xf]
    %v260 = vld [vmem:[%s1 + $0x558] sm:$0xff]
    %v261 = vld [vmem:[%s1 + $0x560] sm:$0xf]
    %v262 = vld [vmem:[%s1 + $0x564] sm:$0xff]
    %v263 = vld [vmem:[%s1 + $0x56c] sm:$0xf]
    %v264 = vld [vmem:[%s1 + $0x570] sm:$0xff]
    %v265 = vld [vmem:[%s1 + $0x578] sm:$0xf]
    %v266 = vld [vmem:[%s1 + $0x57c] sm:$0xff]
    %v267 = vld [vmem:[%s1 + $0x584] sm:$0xf]
    %v268 = vld [vmem:[%s1 + $0x588] sm:$0xff]
    %v269 = vld [vmem:[%s1 + $0x590] sm:$0xf]
    %v270 = vld [vmem:[%s1 + $0x594] sm:$0xff]
    %v271 = vld [vmem:[%s1 + $0x59c] sm:$0xf]
    %v272 = vld [vmem:[%s1 + $0x5a0] sm:$0xff]
    %v273 = vld [vmem:[%s1 + $0x5a8] sm:$0xf]
    %v274 = vld [vmem:[%s1 + $0x5ac] sm:$0xff]
    %v275 = vld [vmem:[%s1 + $0x5b4] sm:$0xf]
    %v276 = vld [vmem:[%s1 + $0x5b8] sm:$0xff]
    %v277 = vld [vmem:[%s1 + $0x5c0] sm:$0xf]
    %v278 = vld [vmem:[%s1 + $0x5c4] sm:$0xff]
    %v279 = vld [vmem:[%s1 + $0x5cc] sm:$0xf]
    %v280 = vld [vmem:[%s1 + $0x5d0] sm:$0xff]
    %v281 = vld [vmem:[%s1 + $0x5d8] sm:$0xf]
    %v282 = vld [vmem:[%s1 + $0x5dc] sm:$0xff]
    %v283 = vld [vmem:[%s1 + $0x5e4] sm:$0xf]
    %v284 = vld [vmem:[%s1 + $0x5e8] sm:$0xff]
    %v285 = vld [vmem:[%s1 + $0x5f0] sm:$0xf]
    %v286 = vld [vmem:[%s1 + $0x5f4] sm:$0xff]
    %v287 = vld [vmem:[%s1 + $0x5fc] sm:$0xf]
    %v288 = vld [vmem:[%s1 + $0x600] sm:$0xff]
    %v289 = vld [vmem:[%s1 + $0x608] sm:$0xf]
    %v290 = vld [vmem:[%s1 + $0x60c] sm:$0xff]
    %v291 = vld [vmem:[%s1 + $0x614] sm:$0xf]
    %v292 = vld [vmem:[%s1 + $0x618] sm:$0xff]
    %v293 = vld [vmem:[%s1 + $0x620] sm:$0xf]
    %v294 = vld [vmem:[%s1 + $0x624] sm:$0xff]
    %v295 = vld [vmem:[%s1 + $0x62c] sm:$0xf]
    %v296 = vld [vmem:[%s1 + $0x630] sm:$0xff]
    %v297 = vld [vmem:[%s1 + $0x638] sm:$0xf]
    %v298 = vld [vmem:[%s1 + $0x63c] sm:$0xff]
    %v299 = vld [vmem:[%s1 + $0x644] sm:$0xf]
    %v300 = vld [vmem:[%s1 + $0x648] sm:$0xff]
    %v301 = vld [vmem:[%s1 + $0x650] sm:$0xf]
    %v302 = vld [vmem:[%s1 + $0x654] sm:$0xff]
    %v303 = vld [vmem:[%s1 + $0x65c] sm:$0xf]
    %v304 = vld [vmem:[%s1 + $0x660] sm:$0xff]
    %v305 = vld [vmem:[%s1 + $0x668] sm:$0xf]
    %v306 = vld [vmem:[%s1 + $0x66c] sm:$0xff]
    %v307 = vld [vmem:[%s1 + $0x674] sm:$0xf]
    %v308 = vld [vmem:[%s1 + $0x678] sm:$0xff]
    %v309 = vld [vmem:[%s1 + $0x680] sm:$0xf]
    %v310 = vld [vmem:[%s1 + $0x684] sm:$0xff]
    %v311 = vld [vmem:[%s1 + $0x68c] sm:$0xf]
    %v312 = vld [vmem:[%s1 + $0x690] sm:$0xff]
    %v313 = vld [vmem:[%s1 + $0x698] sm:$0xf]
    %v314 = vld [vmem:[%s1 + $0x69c] sm:$0xff]
    %v315 = vld [vmem:[%s1 + $0x6a4] sm:$0xf]
    %v316 = vld [vmem:[%s1 + $0x6a8] sm:$0xff]
    %v317 = vld [vmem:[%s1 + $0x6b0] sm:$0xf]
    %v318 = vld [vmem:[%s1 + $0x6b4] sm:$0xff]
    %v319 = vld [vmem:[%s1 + $0x6bc] sm:$0xf]
    %v320 = vld [vmem:[%s1 + $0x6c0] sm:$0xff]
    %v321 = vld [vmem:[%s1 + $0x6c8] sm:$0xf]
    %v322 = vld [vmem:[%s1 + $0x6cc] sm:$0xff]
    %v323 = vld [vmem:[%s1 + $0x6d4] sm:$0xf]
    %v324 = vld [vmem:[%s1 + $0x6d8] sm:$0xff]
    %v325 = vld [vmem:[%s1 + $0x6e0] sm:$0xf]
    %v326 = vld [vmem:[%s1 + $0x6e4] sm:$0xff]
    %v327 = vld [vmem:[%s1 + $0x6ec] sm:$0xf]
    %v328 = vld [vmem:[%s1 + $0x6f0] sm:$0xff]
    %v329 = vld [vmem:[%s1 + $0x6f8] sm:$0xf]
    %v330 = vld [vmem:[%s1 + $0x6fc] sm:$0xff]
    %v331 = vld [vmem:[%s1 + $0x704] sm:$0xf]
    %v332 = vld [vmem:[%s1 + $0x708] sm:$0xff]
    %v333 = vld [vmem:[%s1 + $0x710] sm:$0xf]
    %v334 = vld [vmem:[%s1 + $0x714] sm:$0xff]
    %v335 = vld [vmem:[%s1 + $0x71c] sm:$0xf]
    %v336 = vld [vmem:[%s1 + $0x720] sm:$0xff]
    %v337 = vld [vmem:[%s1 + $0x728] sm:$0xf]
    %v338 = vld [vmem:[%s1 + $0x72c] sm:$0xff]
    %v339 = vld [vmem:[%s1 + $0x734] sm:$0xf]
    %v340 = vld [vmem:[%s1 + $0x738] sm:$0xff]
    %v341 = vld [vmem:[%s1 + $0x740] sm:$0xf]
    %v342 = vld [vmem:[%s1 + $0x744] sm:$0xff]
    %v343 = vld [vmem:[%s1 + $0x74c] sm:$0xf]
    %v344 = vld [vmem:[%s1 + $0x750] sm:$0xff]
    %v345 = vld [vmem:[%s1 + $0x758] sm:$0xf]
    %v346 = vld [vmem:[%s1 + $0x75c] sm:$0xff]
    %v347 = vld [vmem:[%s1 + $0x764] sm:$0xf]
    %v348 = vld [vmem:[%s1 + $0x768] sm:$0xff]
    %v349 = vld [vmem:[%s1 + $0x770] sm:$0xf]
    %v350 = vld [vmem:[%s1 + $0x774] sm:$0xff]
    %v351 = vld [vmem:[%s1 + $0x77c] sm:$0xf]
    %v352 = vld [vmem:[%s1 + $0x780] sm:$0xff]
    %v353 = vld [vmem:[%s1 + $0x788] sm:$0xf]
    %v354 = vld [vmem:[%s1 + $0x78c] sm:$0xff]
    %v355 = vld [vmem:[%s1 + $0x794] sm:$0xf]
    %v356 = vld [vmem:[%s1 + $0x798] sm:$0xff]
    %v357 = vld [vmem:[%s1 + $0x7a0] sm:$0xf]
    %v358 = vld [vmem:[%s1 + $0x7a4] sm:$0xff]
    %v359 = vld [vmem:[%s1 + $0x7ac] sm:$0xf]
    %v360 = vld [vmem:[%s1 + $0x7b0] sm:$0xff]
    %v361 = vld [vmem:[%s1 + $0x7b8] sm:$0xf]
    %v362 = vld [vmem:[%s1 + $0x7bc] sm:$0xff]
    %v363 = vld [vmem:[%s1 + $0x7c4] sm:$0xf]
    %v364 = vld [vmem:[%s1 + $0x7c8] sm:$0xff]
    %v365 = vld [vmem:[%s1 + $0x7d0] sm:$0xf]
    %v366 = vld [vmem:[%s1 + $0x7d4] sm:$0xff]
    %v367 = vld [vmem:[%s1 + $0x7dc] sm:$0xf]
    %v368 = vld [vmem:[%s1 + $0x7e0] sm:$0xff]
    %v369 = vld [vmem:[%s1 + $0x7e8] sm:$0xf]
    %v370 = vld [vmem:[%s1 + $0x7ec] sm:$0xff]
    %v371 = vld [vmem:[%s1 + $0x7f4] sm:$0xf]
    %v372 = vld [vmem:[%s1 + $0x7f8] sm:$0xff]
    %v373 = vld [vmem:[%s1 + $0x800] sm:$0xf]
    %v374 = vld [vmem:[%s1 + $0x804] sm:$0xff]
    %v375 = vld [vmem:[%s1 + $0x80c] sm:$0xf]
    %v376 = vld [vmem:[%s1 + $0x810] sm:$0xff]
    %v377 = vld [vmem:[%s1 + $0x818] sm:$0xf]
    %v378 = vld [vmem:[%s1 + $0x81c] sm:$0xff]
    %v379 = vld [vmem:[%s1 + $0x824] sm:$0xf]
    %v380 = vld [vmem:[%s1 + $0x828] sm:$0xff]
    %v381 = vld [vmem:[%s1 + $0x830] sm:$0xf]
    %v382 = vld [vmem:[%s1 + $0x834] sm:$0xff]
    %v383 = vld [vmem:[%s1 + $0x83c] sm:$0xf]
    %v384 = vld [vmem:[%s1 + $0x840] sm:$0xff]
    %v385 = vld [vmem:[%s1 + $0x848] sm:$0xf]
    %v386 = vld [vmem:[%s1 + $0x84c] sm:$0xff]
    %v387 = vld [vmem:[%s1 + $0x854] sm:$0xf]
    %v388 = vld [vmem:[%s1 + $0x858] sm:$0xff]
    %v389 = vld [vmem:[%s1 + $0x860] sm:$0xf]
    %v390 = vld [vmem:[%s1 + $0x864] sm:$0xff]
    %v391 = vld [vmem:[%s1 + $0x86c] sm:$0xf]
    %v392 = vld [vmem:[%s1 + $0x870] sm:$0xff]
    %v393 = vld [vmem:[%s1 + $0x878] sm:$0xf]
    %v394 = vld [vmem:[%s1 + $0x87c] sm:$0xff]
    %v395 = vld [vmem:[%s1 + $0x884] sm:$0xf]
    %v396 = vld [vmem:[%s1 + $0x888] sm:$0xff]
    %v397 = vld [vmem:[%s1 + $0x890] sm:$0xf]
    %v398 = vld [vmem:[%s1 + $0x894] sm:$0xff]
    %v399 = vld [vmem:[%s1 + $0x89c] sm:$0xf]
    %v400 = vld [vmem:[%s1 + $0x8a0] sm:$0xff]
    %v401 = vld [vmem:[%s1 + $0x8a8] sm:$0xf]
    %v402 = vld [vmem:[%s1 + $0x8ac] sm:$0xff]
    %v403 = vld [vmem:[%s1 + $0x8b4] sm:$0xf]
    %v404 = vld [vmem:[%s1 + $0x8b8] sm:$0xff]
    %v405 = vld [vmem:[%s1 + $0x8c0] sm:$0xf]
    %v406 = vld [vmem:[%s1 + $0x8c4] sm:$0xff]
    %v407 = vld [vmem:[%s1 + $0x8cc] sm:$0xf]
    %v408 = vld [vmem:[%s1 + $0x8d0] sm:$0xff]
    %v409 = vld [vmem:[%s1 + $0x8d8] sm:$0xf]
    %v410 = vld [vmem:[%s1 + $0x8dc] sm:$0xff]
    %v411 = vld [vmem:[%s1 + $0x8e4] sm:$0xf]
    %v412 = vld [vmem:[%s1 + $0x8e8] sm:$0xff]
    %v413 = vld [vmem:[%s1 + $0x8f0] sm:$0xf]
    %v414 = vld [vmem:[%s1 + $0x8f4] sm:$0xff]
    %v415 = vld [vmem:[%s1 + $0x8fc] sm:$0xf]
    %v416 = vld [vmem:[%s1 + $0x900] sm:$0xff]
    %v417 = vld [vmem:[%s1 + $0x908] sm:$0xf]
    %v418 = vld [vmem:[%s1 + $0x90c] sm:$0xff]
    %v419 = vld [vmem:[%s1 + $0x914] sm:$0xf]
    %v420 = vld [vmem:[%s1 + $0x918] sm:$0xff]
    %v421 = vld [vmem:[%s1 + $0x920] sm:$0xf]
    %v422 = vld [vmem:[%s1 + $0x924] sm:$0xff]
    %v423 = vld [vmem:[%s1 + $0x92c] sm:$0xf]
    %v424 = vld [vmem:[%s1 + $0x930] sm:$0xff]
    %v425 = vld [vmem:[%s1 + $0x938] sm:$0xf]
    %v426 = vld [vmem:[%s1 + $0x93c] sm:$0xff]
    %v427 = vld [vmem:[%s1 + $0x944] sm:$0xf]
    %v428 = vld [vmem:[%s1 + $0x948] sm:$0xff]
    %v429 = vld [vmem:[%s1 + $0x950] sm:$0xf]
    %v430 = vld [vmem:[%s1 + $0x954] sm:$0xff]
    %v431 = vld [vmem:[%s1 + $0x95c] sm:$0xf]
    %v432 = vld [vmem:[%s1 + $0x960] sm:$0xff]
    %v433 = vld [vmem:[%s1 + $0x968] sm:$0xf]
    %v434 = vld [vmem:[%s1 + $0x96c] sm:$0xff]
    %v435 = vld [vmem:[%s1 + $0x974] sm:$0xf]
    %v436 = vld [vmem:[%s1 + $0x978] sm:$0xff]
    %v437 = vld [vmem:[%s1 + $0x980] sm:$0xf]
    %v438 = vld [vmem:[%s1 + $0x984] sm:$0xff]
    %v439 = vld [vmem:[%s1 + $0x98c] sm:$0xf]
    %v440 = vld [vmem:[%s1 + $0x990] sm:$0xff]
    %v441 = vld [vmem:[%s1 + $0x998] sm:$0xf]
    %v442 = vld [vmem:[%s1 + $0x99c] sm:$0xff]
    %v443 = vld [vmem:[%s1 + $0x9a4] sm:$0xf]
    %v444 = vld [vmem:[%s1 + $0x9a8] sm:$0xff]
    %v445 = vld [vmem:[%s1 + $0x9b0] sm:$0xf]
    %v446 = vld [vmem:[%s1 + $0x9b4] sm:$0xff]
    %v447 = vld [vmem:[%s1 + $0x9bc] sm:$0xf]
    %v448 = vld [vmem:[%s1 + $0x9c0] sm:$0xff]
    %v449 = vld [vmem:[%s1 + $0x9c8] sm:$0xf]
    %v450 = vld [vmem:[%s1 + $0x9cc] sm:$0xff]
    %v451 = vld [vmem:[%s1 + $0x9d4] sm:$0xf]
    %v452 = vld [vmem:[%s1 + $0x9d8] sm:$0xff]
    %v453 = vld [vmem:[%s1 + $0x9e0] sm:$0xf]
    %v454 = vld [vmem:[%s1 + $0x9e4] sm:$0xff]
    %v455 = vld [vmem:[%s1 + $0x9ec] sm:$0xf]
    %v456 = vld [vmem:[%s1 + $0x9f0] sm:$0xff]
    %v457 = vld [vmem:[%s1 + $0x9f8] sm:$0xf]
    %v458 = vld [vmem:[%s1 + $0x9fc] sm:$0xff]
    %v459 = vld [vmem:[%s1 + $0xa04] sm:$0xf]
    %v460 = vld [vmem:[%s1 + $0xa08] sm:$0xff]
    %v461 = vld [vmem:[%s1 + $0xa10] sm:$0xf]
    %v462 = vld [vmem:[%s1 + $0xa14] sm:$0xff]
    %v463 = vld [vmem:[%s1 + $0xa1c] sm:$0xf]
    %v464 = vld [vmem:[%s1 + $0xa20] sm:$0xff]
    %v465 = vld [vmem:[%s1 + $0xa28] sm:$0xf]
    %v466 = vld [vmem:[%s1 + $0xa2c] sm:$0xff]
    %v467 = vld [vmem:[%s1 + $0xa34] sm:$0xf]
    %v468 = vld [vmem:[%s1 + $0xa38] sm:$0xff]
    %v469 = vld [vmem:[%s1 + $0xa40] sm:$0xf]
    %v470 = vld [vmem:[%s1 + $0xa44] sm:$0xff]
    %v471 = vld [vmem:[%s1 + $0xa4c] sm:$0xf]
    %v472 = vld [vmem:[%s1 + $0xa50] sm:$0xff]
    %v473 = vld [vmem:[%s1 + $0xa58] sm:$0xf]
    %v474 = vld [vmem:[%s1 + $0xa5c] sm:$0xff]
    %v475 = vld [vmem:[%s1 + $0xa64] sm:$0xf]
    %v476 = vld [vmem:[%s1 + $0xa68] sm:$0xff]
    %v477 = vld [vmem:[%s1 + $0xa70] sm:$0xf]
    %v478 = vld [vmem:[%s1 + $0xa74] sm:$0xff]
    %v479 = vld [vmem:[%s1 + $0xa7c] sm:$0xf]
    %v480 = vld [vmem:[%s1 + $0xa80] sm:$0xff]
    %v481 = vld [vmem:[%s1 + $0xa88] sm:$0xf]
    %v482 = vld [vmem:[%s1 + $0xa8c] sm:$0xff]
    %v483 = vld [vmem:[%s1 + $0xa94] sm:$0xf]
    %v484 = vld [vmem:[%s1 + $0xa98] sm:$0xff]
    %v485 = vld [vmem:[%s1 + $0xaa0] sm:$0xf]
    %v486 = vld [vmem:[%s1 + $0xaa4] sm:$0xff]
    %v487 = vld [vmem:[%s1 + $0xaac] sm:$0xf]
    %v488 = vld [vmem:[%s1 + $0xab0] sm:$0xff]
    %v489 = vld [vmem:[%s1 + $0xab8] sm:$0xf]
    %v490 = vld [vmem:[%s1 + $0xabc] sm:$0xff]
    %v491 = vld [vmem:[%s1 + $0xac4] sm:$0xf]
    %v492 = vld [vmem:[%s1 + $0xac8] sm:$0xff]
    %v493 = vld [vmem:[%s1 + $0xad0] sm:$0xf]
    %v494 = vld [vmem:[%s1 + $0xad4] sm:$0xff]
    %v495 = vld [vmem:[%s1 + $0xadc] sm:$0xf]
    %v496 = vld [vmem:[%s1 + $0xae0] sm:$0xff]
    %v497 = vld [vmem:[%s1 + $0xae8] sm:$0xf]
    %v498 = vld [vmem:[%s1 + $0xaec] sm:$0xff]
    %v499 = vld [vmem:[%s1 + $0xaf4] sm:$0xf]
    %v500 = vld [vmem:[%s1 + $0xaf8] sm:$0xff]
    %v501 = vld [vmem:[%s1 + $0xb00] sm:$0xf]
    %v502 = vld [vmem:[%s1 + $0xb04] sm:$0xff]
    %v503 = vld [vmem:[%s1 + $0xb0c] sm:$0xf]
    %v504 = vld [vmem:[%s1 + $0xb10] sm:$0xff]
    %v505 = vld [vmem:[%s1 + $0xb18] sm:$0xf]
    %v506 = vld [vmem:[%s1 + $0xb1c] sm:$0xff]
    %v507 = vld [vmem:[%s1 + $0xb24] sm:$0xf]
    %v508 = vld [vmem:[%s1 + $0xb28] sm:$0xff]
    %v509 = vld [vmem:[%s1 + $0xb30] sm:$0xf]
    %v510 = vld [vmem:[%s1 + $0xb34] sm:$0xff]
    %v511 = vld [vmem:[%s1 + $0xb3c] sm:$0xf]
    %v512 = vld [vmem:[%s1 + $0xb40] sm:$0xff]
    %v513 = vld [vmem:[%s1 + $0xb48] sm:$0xf]
    %v514 = vld [vmem:[%s1 + $0xb4c] sm:$0xff]
    %v515 = vld [vmem:[%s1 + $0xb54] sm:$0xf]
    %v516 = vld [vmem:[%s1 + $0xb58] sm:$0xff]
    %v517 = vld [vmem:[%s1 + $0xb60] sm:$0xf]
    %v518 = vld [vmem:[%s1 + $0xb64] sm:$0xff]
    %v519 = vld [vmem:[%s1 + $0xb6c] sm:$0xf]
    %v520 = vld [vmem:[%s1 + $0xb70] sm:$0xff]
    %v521 = vld [vmem:[%s1 + $0xb78] sm:$0xf]
    %v522 = vld [vmem:[%s1 + $0xb7c] sm:$0xff]
    %v523 = vld [vmem:[%s1 + $0xb84] sm:$0xf]
    %v524 = vld [vmem:[%s1 + $0xb88] sm:$0xff]
    %v525 = vld [vmem:[%s1 + $0xb90] sm:$0xf]
    %v526 = vld [vmem:[%s1 + $0xb94] sm:$0xff]
    %v527 = vld [vmem:[%s1 + $0xb9c] sm:$0xf]
    %v528 = vld [vmem:[%s1 + $0xba0] sm:$0xff]
    %v529 = vld [vmem:[%s1 + $0xba8] sm:$0xf]
    %v530 = vld [vmem:[%s1 + $0xbac] sm:$0xff]
    %v531 = vld [vmem:[%s1 + $0xbb4] sm:$0xf]
    %v532 = vld [vmem:[%s1 + $0xbb8] sm:$0xff]
    %v533 = vld [vmem:[%s1 + $0xbc0] sm:$0xf]
    %v534 = vld [vmem:[%s1 + $0xbc4] sm:$0xff]
    %v535 = vld [vmem:[%s1 + $0xbcc] sm:$0xf]
    %v536 = vld [vmem:[%s1 + $0xbd0] sm:$0xff]
    %v537 = vld [vmem:[%s1 + $0xbd8] sm:$0xf]
    %v538 = vld [vmem:[%s1 + $0xbdc] sm:$0xff]
    %v539 = vld [vmem:[%s1 + $0xbe4] sm:$0xf]
    %v540 = vld [vmem:[%s1 + $0xbe8] sm:$0xff]
    %v541 = vld [vmem:[%s1 + $0xbf0] sm:$0xf]
    %v542 = vld [vmem:[%s1 + $0xbf4] sm:$0xff]
    %v543 = vld [vmem:[%s1 + $0xbfc] sm:$0xf]
    %v544 = vld [vmem:[%s1 + $0xc00] sm:$0xff]
    %v545 = vld [vmem:[%s1 + $0xc08] sm:$0xf]
    %v546 = vld [vmem:[%s1 + $0xc0c] sm:$0xff]
    %v547 = vld [vmem:[%s1 + $0xc14] sm:$0xf]
    %v548 = vld [vmem:[%s1 + $0xc18] sm:$0xff]
    %v549 = vld [vmem:[%s1 + $0xc20] sm:$0xf]
    %v550 = vld [vmem:[%s1 + $0xc24] sm:$0xff]
    %v551 = vld [vmem:[%s1 + $0xc2c] sm:$0xf]
    %v552 = vld [vmem:[%s1 + $0xc30] sm:$0xff]
    %v553 = vld [vmem:[%s1 + $0xc38] sm:$0xf]
    %v554 = vld [vmem:[%s1 + $0xc3c] sm:$0xff]
    %v555 = vld [vmem:[%s1 + $0xc44] sm:$0xf]
    %v556 = vld [vmem:[%s1 + $0xc48] sm:$0xff]
    %v557 = vld [vmem:[%s1 + $0xc50] sm:$0xf]
    %v558 = vld [vmem:[%s1 + $0xc54] sm:$0xff]
    %v559 = vld [vmem:[%s1 + $0xc5c] sm:$0xf]
    %v560 = vld [vmem:[%s1 + $0xc60] sm:$0xff]
    %v561 = vld [vmem:[%s1 + $0xc68] sm:$0xf]
    %v562 = vld [vmem:[%s1 + $0xc6c] sm:$0xff]
    %v563 = vld [vmem:[%s1 + $0xc74] sm:$0xf]
    %v564 = vld [vmem:[%s1 + $0xc78] sm:$0xff]
    %v565 = vld [vmem:[%s1 + $0xc80] sm:$0xf]
    %v566 = vld [vmem:[%s1 + $0xc84] sm:$0xff]
    %v567 = vld [vmem:[%s1 + $0xc8c] sm:$0xf]
    %v568 = vld [vmem:[%s1 + $0xc90] sm:$0xff]
    %v569 = vld [vmem:[%s1 + $0xc98] sm:$0xf]
    %v570 = vld [vmem:[%s1 + $0xc9c] sm:$0xff]
    %v571 = vld [vmem:[%s1 + $0xca4] sm:$0xf]
    %v572 = vld [vmem:[%s1 + $0xca8] sm:$0xff]
    %v573 = vld [vmem:[%s1 + $0xcb0] sm:$0xf]
    %v574 = vld [vmem:[%s1 + $0xcb4] sm:$0xff]
    %v575 = vld [vmem:[%s1 + $0xcbc] sm:$0xf]
    %v576 = vld [vmem:[%s1 + $0xcc0] sm:$0xff]
    %v577 = vld [vmem:[%s1 + $0xcc8] sm:$0xf]
    %v578 = vld [vmem:[%s1 + $0xccc] sm:$0xff]
    %v579 = vld [vmem:[%s1 + $0xcd4] sm:$0xf]
    %v580 = vld [vmem:[%s1 + $0xcd8] sm:$0xff]
    %v581 = vld [vmem:[%s1 + $0xce0] sm:$0xf]
    %v582 = vld [vmem:[%s1 + $0xce4] sm:$0xff]
    %v583 = vld [vmem:[%s1 + $0xcec] sm:$0xf]
    %v584 = vld [vmem:[%s1 + $0xcf0] sm:$0xff]
    %v585 = vld [vmem:[%s1 + $0xcf8] sm:$0xf]
    %v586 = vld [vmem:[%s1 + $0xcfc] sm:$0xff]
    %v587 = vld [vmem:[%s1 + $0xd04] sm:$0xf]
    %v588 = vld [vmem:[%s1 + $0xd08] sm:$0xff]
    %v589 = vld [vmem:[%s1 + $0xd10] sm:$0xf]
    %v590 = vld [vmem:[%s1 + $0xd14] sm:$0xff]
    %v591 = vld [vmem:[%s1 + $0xd1c] sm:$0xf]
    %v592 = vld [vmem:[%s1 + $0xd20] sm:$0xff]
    %v593 = vld [vmem:[%s1 + $0xd28] sm:$0xf]
    %v594 = vld [vmem:[%s1 + $0xd2c] sm:$0xff]
    %v595 = vld [vmem:[%s1 + $0xd34] sm:$0xf]
    %v596 = vld [vmem:[%s1 + $0xd38] sm:$0xff]
    %v597 = vld [vmem:[%s1 + $0xd40] sm:$0xf]
    %v598 = vld [vmem:[%s1 + $0xd44] sm:$0xff]
    %v599 = vld [vmem:[%s1 + $0xd4c] sm:$0xf]
    %v600 = vld [vmem:[%s1 + $0xd50] sm:$0xff]
    %v601 = vld [vmem:[%s1 + $0xd58] sm:$0xf]
    %v602 = vld [vmem:[%s1 + $0xd5c] sm:$0xff]
    %v603 = vld [vmem:[%s1 + $0xd64] sm:$0xf]
    %v604 = vld [vmem:[%s1 + $0xd68] sm:$0xff]
    %v605 = vld [vmem:[%s1 + $0xd70] sm:$0xf]
    %v606 = vld [vmem:[%s1 + $0xd74] sm:$0xff]
    %v607 = vld [vmem:[%s1 + $0xd7c] sm:$0xf]
    %v608 = vld [vmem:[%s1 + $0xd80] sm:$0xff]
    %v609 = vld [vmem:[%s1 + $0xd88] sm:$0xf]
    %v610 = vld [vmem:[%s1 + $0xd8c] sm:$0xff]
    %v611 = vld [vmem:[%s1 + $0xd94] sm:$0xf]
    %v612 = vld [vmem:[%s1 + $0xd98] sm:$0xff]
    %v613 = vld [vmem:[%s1 + $0xda0] sm:$0xf]
    %v614 = vld [vmem:[%s1 + $0xda4] sm:$0xff]
    %v615 = vld [vmem:[%s1 + $0xdac] sm:$0xf]
    %v616 = vld [vmem:[%s1 + $0xdb0] sm:$0xff]
    %v617 = vld [vmem:[%s1 + $0xdb8] sm:$0xf]
    %v618 = vld [vmem:[%s1 + $0xdbc] sm:$0xff]
    %v619 = vld [vmem:[%s1 + $0xdc4] sm:$0xf]
    %v620 = vld [vmem:[%s1 + $0xdc8] sm:$0xff]
    %v621 = vld [vmem:[%s1 + $0xdd0] sm:$0xf]
    %v622 = vld [vmem:[%s1 + $0xdd4] sm:$0xff]
    %v623 = vld [vmem:[%s1 + $0xddc] sm:$0xf]
    %v624 = vld [vmem:[%s1 + $0xde0] sm:$0xff]
    %v625 = vld [vmem:[%s1 + $0xde8] sm:$0xf]
    %v626 = vld [vmem:[%s1 + $0xdec] sm:$0xff]
    %v627 = vld [vmem:[%s1 + $0xdf4] sm:$0xf]
    %v628 = vld [vmem:[%s1 + $0xdf8] sm:$0xff]
    %v629 = vld [vmem:[%s1 + $0xe00] sm:$0xf]
    %v630 = vld [vmem:[%s1 + $0xe04] sm:$0xff]
    %v631 = vld [vmem:[%s1 + $0xe0c] sm:$0xf]
    %v632 = vld [vmem:[%s1 + $0xe10] sm:$0xff]
    %v633 = vld [vmem:[%s1 + $0xe18] sm:$0xf]
    %v634 = vld [vmem:[%s1 + $0xe1c] sm:$0xff]
    %v635 = vld [vmem:[%s1 + $0xe24] sm:$0xf]
    %v636 = vld [vmem:[%s1 + $0xe28] sm:$0xff]
    %v637 = vld [vmem:[%s1 + $0xe30] sm:$0xf]
    %v638 = vld [vmem:[%s1 + $0xe34] sm:$0xff]
    %v639 = vld [vmem:[%s1 + $0xe3c] sm:$0xf]
    %v640 = vld [vmem:[%s1 + $0xe40] sm:$0xff]
    %v641 = vld [vmem:[%s1 + $0xe48] sm:$0xf]
    %v642 = vld [vmem:[%s1 + $0xe4c] sm:$0xff]
    %v643 = vld [vmem:[%s1 + $0xe54] sm:$0xf]
    %v644 = vld [vmem:[%s1 + $0xe58] sm:$0xff]
    %v645 = vld [vmem:[%s1 + $0xe60] sm:$0xf]
    %v646 = vld [vmem:[%s1 + $0xe64] sm:$0xff]
    %v647 = vld [vmem:[%s1 + $0xe6c] sm:$0xf]
    %v648 = vld [vmem:[%s1 + $0xe70] sm:$0xff]
    %v649 = vld [vmem:[%s1 + $0xe78] sm:$0xf]
    %v650 = vld [vmem:[%s1 + $0xe7c] sm:$0xff]
    %v651 = vld [vmem:[%s1 + $0xe84] sm:$0xf]
    %v652 = vld [vmem:[%s1 + $0xe88] sm:$0xff]
    %v653 = vld [vmem:[%s1 + $0xe90] sm:$0xf]
    %v654 = vld [vmem:[%s1 + $0xe94] sm:$0xff]
    %v655 = vld [vmem:[%s1 + $0xe9c] sm:$0xf]
    %v656 = vld [vmem:[%s1 + $0xea0] sm:$0xff]
    %v657 = vld [vmem:[%s1 + $0xea8] sm:$0xf]
    %v658 = vld [vmem:[%s1 + $0xeac] sm:$0xff]
    %v659 = vld [vmem:[%s1 + $0xeb4] sm:$0xf]
    %v660 = vld [vmem:[%s1 + $0xeb8] sm:$0xff]
    %v661 = vld [vmem:[%s1 + $0xec0] sm:$0xf]
    %v662 = vld [vmem:[%s1 + $0xec4] sm:$0xff]
    %v663 = vld [vmem:[%s1 + $0xecc] sm:$0xf]
    %v664 = vld [vmem:[%s1 + $0xed0] sm:$0xff]
    %v665 = vld [vmem:[%s1 + $0xed8] sm:$0xf]
    %v666 = vld [vmem:[%s1 + $0xedc] sm:$0xff]
    %v667 = vld [vmem:[%s1 + $0xee4] sm:$0xf]
    %v668 = vld [vmem:[%s1 + $0xee8] sm:$0xff]
    %v669 = vld [vmem:[%s1 + $0xef0] sm:$0xf]
    %v670 = vld [vmem:[%s1 + $0xef4] sm:$0xff]
    %v671 = vld [vmem:[%s1 + $0xefc] sm:$0xf]
    %v672 = vld [vmem:[%s1 + $0xf00] sm:$0xff]
    %v673 = vld [vmem:[%s1 + $0xf08] sm:$0xf]
    %v674 = vld [vmem:[%s1 + $0xf0c] sm:$0xff]
    %v675 = vld [vmem:[%s1 + $0xf14] sm:$0xf]
    %v676 = vld [vmem:[%s1 + $0xf18] sm:$0xff]
    %v677 = vld [vmem:[%s1 + $0xf20] sm:$0xf]
    %v678 = vld [vmem:[%s1 + $0xf24] sm:$0xff]
    %v679 = vld [vmem:[%s1 + $0xf2c] sm:$0xf]
    %v680 = vld [vmem:[%s1 + $0xf30] sm:$0xff]
    %v681 = vld [vmem:[%s1 + $0xf38] sm:$0xf]
    %v682 = vld [vmem:[%s1 + $0xf3c] sm:$0xff]
    %v683 = vld [vmem:[%s1 + $0xf44] sm:$0xf]
    %v684 = vld [vmem:[%s1 + $0xf48] sm:$0xff]
    %v685 = vld [vmem:[%s1 + $0xf50] sm:$0xf]
    %v686 = vld [vmem:[%s1 + $0xf54] sm:$0xff]
    %v687 = vld [vmem:[%s1 + $0xf5c] sm:$0xf]
    %v688 = vld [vmem:[%s1 + $0xf60] sm:$0xff]
    %v689 = vld [vmem:[%s1 + $0xf68] sm:$0xf]
    %v690 = vld [vmem:[%s1 + $0xf6c] sm:$0xff]
    %v691 = vld [vmem:[%s1 + $0xf74] sm:$0xf]
    %v692 = vld [vmem:[%s1 + $0xf78] sm:$0xff]
    %v693 = vld [vmem:[%s1 + $0xf80] sm:$0xf]
    %v694 = vld [vmem:[%s1 + $0xf84] sm:$0xff]
    %v695 = vld [vmem:[%s1 + $0xf8c] sm:$0xf]
    %v696 = vld [vmem:[%s1 + $0xf90] sm:$0xff]
    %v697 = vld [vmem:[%s1 + $0xf98] sm:$0xf]
    %v698 = vld [vmem:[%s1 + $0xf9c] sm:$0xff]
    %v699 = vld [vmem:[%s1 + $0xfa4] sm:$0xf]
    %v700 = vld [vmem:[%s1 + $0xfa8] sm:$0xff]
    %v701 = vld [vmem:[%s1 + $0xfb0] sm:$0xf]
    %v702 = vld [vmem:[%s1 + $0xfb4] sm:$0xff]
    %v703 = vld [vmem:[%s1 + $0xfbc] sm:$0xf]
    %v704 = vld [vmem:[%s1 + $0xfc0] sm:$0xff]
    %v705 = vld [vmem:[%s1 + $0xfc8] sm:$0xf]
    %v706 = vld [vmem:[%s1 + $0xfcc] sm:$0xff]
    %v707 = vld [vmem:[%s1 + $0xfd4] sm:$0xf]
    %v708 = vld [vmem:[%s1 + $0xfd8] sm:$0xff]
    %v709 = vld [vmem:[%s1 + $0xfe0] sm:$0xf]
    %v710 = vld [vmem:[%s1 + $0xfe4] sm:$0xff]
    %v711 = vld [vmem:[%s1 + $0xfec] sm:$0xf]
    %v712 = vld [vmem:[%s1 + $0xff0] sm:$0xff]
    %v713 = vld [vmem:[%s1 + $0xff8] sm:$0xf]
    %v714 = vld [vmem:[%s1 + $0xffc] sm:$0xff]
    %v715 = vld [vmem:[%s1 + $0x1004] sm:$0xf]
    %v716 = vld [vmem:[%s1 + $0x1008] sm:$0xff]
    %v717 = vld [vmem:[%s1 + $0x1010] sm:$0xf]
    %v718 = vld [vmem:[%s1 + $0x1014] sm:$0xff]
    %v719 = vld [vmem:[%s1 + $0x101c] sm:$0xf]
    %v720 = vld [vmem:[%s1 + $0x1020] sm:$0xff]
    %v721 = vld [vmem:[%s1 + $0x1028] sm:$0xf]
    %v722 = vld [vmem:[%s1 + $0x102c] sm:$0xff]
    %v723 = vld [vmem:[%s1 + $0x1034] sm:$0xf]
    %v724 = vld [vmem:[%s1 + $0x1038] sm:$0xff]
    %v725 = vld [vmem:[%s1 + $0x1040] sm:$0xf]
    %v726 = vld [vmem:[%s1 + $0x1044] sm:$0xff]
    %v727 = vld [vmem:[%s1 + $0x104c] sm:$0xf]
    %v728 = vld [vmem:[%s1 + $0x1050] sm:$0xff]
    %v729 = vld [vmem:[%s1 + $0x1058] sm:$0xf]
    %v730 = vld [vmem:[%s1 + $0x105c] sm:$0xff]
    %v731 = vld [vmem:[%s1 + $0x1064] sm:$0xf]
    %v732 = vld [vmem:[%s1 + $0x1068] sm:$0xff]
    %v733 = vld [vmem:[%s1 + $0x1070] sm:$0xf]
    %v734 = vld [vmem:[%s1 + $0x1074] sm:$0xff]
    %v735 = vld [vmem:[%s1 + $0x107c] sm:$0xf]
    %v736 = vld [vmem:[%s1 + $0x1080] sm:$0xff]
    %v737 = vld [vmem:[%s1 + $0x1088] sm:$0xf]
    %v738 = vld [vmem:[%s1 + $0x108c] sm:$0xff]
    %v739 = vld [vmem:[%s1 + $0x1094] sm:$0xf]
    %v740 = vld [vmem:[%s1 + $0x1098] sm:$0xff]
    %v741 = vld [vmem:[%s1 + $0x10a0] sm:$0xf]
    %v742 = vld [vmem:[%s1 + $0x10a4] sm:$0xff]
    %v743 = vld [vmem:[%s1 + $0x10ac] sm:$0xf]
    %v744 = vld [vmem:[%s1 + $0x10b0] sm:$0xff]
    %v745 = vld [vmem:[%s1 + $0x10b8] sm:$0xf]
    %v746 = vld [vmem:[%s1 + $0x10bc] sm:$0xff]
    %v747 = vld [vmem:[%s1 + $0x10c4] sm:$0xf]
    %v748 = vld [vmem:[%s1 + $0x10c8] sm:$0xff]
    %v749 = vld [vmem:[%s1 + $0x10d0] sm:$0xf]
    %v750 = vld [vmem:[%s1 + $0x10d4] sm:$0xff]
    %v751 = vld [vmem:[%s1 + $0x10dc] sm:$0xf]
    %v752 = vld [vmem:[%s1 + $0x10e0] sm:$0xff]
    %v753 = vld [vmem:[%s1 + $0x10e8] sm:$0xf]
    %v754 = vld [vmem:[%s1 + $0x10ec] sm:$0xff]
    %v755 = vld [vmem:[%s1 + $0x10f4] sm:$0xf]
    %v756 = vld [vmem:[%s1 + $0x10f8] sm:$0xff]
    %v757 = vld [vmem:[%s1 + $0x1100] sm:$0xf]
    %v758 = vld [vmem:[%s1 + $0x1104] sm:$0xff]
    %v759 = vld [vmem:[%s1 + $0x110c] sm:$0xf]
    %v760 = vld [vmem:[%s1 + $0x1110] sm:$0xff]
    %v761 = vld [vmem:[%s1 + $0x1118] sm:$0xf]
    %v762 = vld [vmem:[%s1 + $0x111c] sm:$0xff]
    %v763 = vld [vmem:[%s1 + $0x1124] sm:$0xf]
    %v764 = vld [vmem:[%s1 + $0x1128] sm:$0xff]
    %v765 = vld [vmem:[%s1 + $0x1130] sm:$0xf]
    %v766 = vld [vmem:[%s1 + $0x1134] sm:$0xff]
    %v767 = vld [vmem:[%s1 + $0x113c] sm:$0xf]
    %v768 = vld [vmem:[%s1 + $0x1140] sm:$0xff]
    %v769 = vld [vmem:[%s1 + $0x1148] sm:$0xf]
    %v770 = vld [vmem:[%s1 + $0x114c] sm:$0xff]
    %v771 = vld [vmem:[%s1 + $0x1154] sm:$0xf]
    %v772 = vld [vmem:[%s1 + $0x1158] sm:$0xff]
    %v773 = vld [vmem:[%s1 + $0x1160] sm:$0xf]
    %v774 = vld [vmem:[%s1 + $0x1164] sm:$0xff]
    %v775 = vld [vmem:[%s1 + $0x116c] sm:$0xf]
    %v776 = vld [vmem:[%s1 + $0x1170] sm:$0xff]
    %v777 = vld [vmem:[%s1 + $0x1178] sm:$0xf]
    %v778 = vld [vmem:[%s1 + $0x117c] sm:$0xff]
    %v779 = vld [vmem:[%s1 + $0x1184] sm:$0xf]
    %v780 = vld [vmem:[%s1 + $0x1188] sm:$0xff]
    %v781 = vld [vmem:[%s1 + $0x1190] sm:$0xf]
    %v782 = vld [vmem:[%s1 + $0x1194] sm:$0xff]
    %v783 = vld [vmem:[%s1 + $0x119c] sm:$0xf]
    %v784 = vld [vmem:[%s1 + $0x11a0] sm:$0xff]
    %v785 = vld [vmem:[%s1 + $0x11a8] sm:$0xf]
    %v786 = vld [vmem:[%s1 + $0x11ac] sm:$0xff]
    %v787 = vld [vmem:[%s1 + $0x11b4] sm:$0xf]
    %v788 = vld [vmem:[%s1 + $0x11b8] sm:$0xff]
    %v789 = vld [vmem:[%s1 + $0x11c0] sm:$0xf]
    %v790 = vld [vmem:[%s1 + $0x11c4] sm:$0xff]
    %v791 = vld [vmem:[%s1 + $0x11cc] sm:$0xf]
    %v792 = vld [vmem:[%s1 + $0x11d0] sm:$0xff]
    %v793 = vld [vmem:[%s1 + $0x11d8] sm:$0xf]
    %v794 = vld [vmem:[%s1 + $0x11dc] sm:$0xff]
    %v795 = vld [vmem:[%s1 + $0x11e4] sm:$0xf]
    %v796 = vld [vmem:[%s1 + $0x11e8] sm:$0xff]
    %v797 = vld [vmem:[%s1 + $0x11f0] sm:$0xf]
    %v798 = vld [vmem:[%s1 + $0x11f4] sm:$0xff]
    %v799 = vld [vmem:[%s1 + $0x11fc] sm:$0xf]
    %v800 = vld [vmem:[%s1 + $0x1200] sm:$0xff]
    %v801 = vld [vmem:[%s1 + $0x1208] sm:$0xf]
    %v802 = vld [vmem:[%s1 + $0x120c] sm:$0xff]
    %v803 = vld [vmem:[%s1 + $0x1214] sm:$0xf]
    %v804 = vld [vmem:[%s1 + $0x1218] sm:$0xff]
    %v805 = vld [vmem:[%s1 + $0x1220] sm:$0xf]
    %v806 = vld [vmem:[%s1 + $0x1224] sm:$0xff]
    %v807 = vld [vmem:[%s1 + $0x122c] sm:$0xf]
    %v808 = vld [vmem:[%s1 + $0x1230] sm:$0xff]
    %v809 = vld [vmem:[%s1 + $0x1238] sm:$0xf]
    %v810 = vld [vmem:[%s1 + $0x123c] sm:$0xff]
    %v811 = vld [vmem:[%s1 + $0x1244] sm:$0xf]
    %v812 = vld [vmem:[%s1 + $0x1248] sm:$0xff]
    %v813 = vld [vmem:[%s1 + $0x1250] sm:$0xf]
    %v814 = vld [vmem:[%s1 + $0x1254] sm:$0xff]
    %v815 = vld [vmem:[%s1 + $0x125c] sm:$0xf]
    %v816 = vld [vmem:[%s1 + $0x1260] sm:$0xff]
    %v817 = vld [vmem:[%s1 + $0x1268] sm:$0xf]
    %v818 = vld [vmem:[%s1 + $0x126c] sm:$0xff]
    %v819 = vld [vmem:[%s1 + $0x1274] sm:$0xf]
    %v820 = vld [vmem:[%s1 + $0x1278] sm:$0xff]
    %v821 = vld [vmem:[%s1 + $0x1280] sm:$0xf]
    %v822 = vld [vmem:[%s1 + $0x1284] sm:$0xff]
    %v823 = vld [vmem:[%s1 + $0x128c] sm:$0xf]
    %v824 = vld [vmem:[%s1 + $0x1290] sm:$0xff]
    %v825 = vld [vmem:[%s1 + $0x1298] sm:$0xf]
    %v826 = vld [vmem:[%s1 + $0x129c] sm:$0xff]
    %v827 = vld [vmem:[%s1 + $0x12a4] sm:$0xf]
    %v828 = vld [vmem:[%s1 + $0x12a8] sm:$0xff]
    %v829 = vld [vmem:[%s1 + $0x12b0] sm:$0xf]
    %v830 = vld [vmem:[%s1 + $0x12b4] sm:$0xff]
    %v831 = vld [vmem:[%s1 + $0x12bc] sm:$0xf]
    %v832 = vld [vmem:[%s1 + $0x12c0] sm:$0xff]
    %v833 = vld [vmem:[%s1 + $0x12c8] sm:$0xf]
    %v834 = vld [vmem:[%s1 + $0x12cc] sm:$0xff]
    %v835 = vld [vmem:[%s1 + $0x12d4] sm:$0xf]
    %v836 = vld [vmem:[%s1 + $0x12d8] sm:$0xff]
    %v837 = vld [vmem:[%s1 + $0x12e0] sm:$0xf]
    %v838 = vld [vmem:[%s1 + $0x12e4] sm:$0xff]
    %v839 = vld [vmem:[%s1 + $0x12ec] sm:$0xf]
    %v840 = vld [vmem:[%s1 + $0x12f0] sm:$0xff]
    %v841 = vld [vmem:[%s1 + $0x12f8] sm:$0xf]
    %v842 = vld [vmem:[%s1 + $0x12fc] sm:$0xff]
    %v843 = vld [vmem:[%s1 + $0x1304] sm:$0xf]
    %v844 = vld [vmem:[%s1 + $0x1308] sm:$0xff]
    %v845 = vld [vmem:[%s1 + $0x1310] sm:$0xf]
    %v846 = vld [vmem:[%s1 + $0x1314] sm:$0xff]
    %v847 = vld [vmem:[%s1 + $0x131c] sm:$0xf]
    %v848 = vld [vmem:[%s1 + $0x1320] sm:$0xff]
    %v849 = vld [vmem:[%s1 + $0x1328] sm:$0xf]
    %v850 = vld [vmem:[%s1 + $0x132c] sm:$0xff]
    %v851 = vld [vmem:[%s1 + $0x1334] sm:$0xf]
    %v852 = vld [vmem:[%s1 + $0x1338] sm:$0xff]
    %v853 = vld [vmem:[%s1 + $0x1340] sm:$0xf]
    %v854 = vld [vmem:[%s1 + $0x1344] sm:$0xff]
    %v855 = vld [vmem:[%s1 + $0x134c] sm:$0xf]
    %v856 = vld [vmem:[%s1 + $0x1350] sm:$0xff]
    %v857 = vld [vmem:[%s1 + $0x1358] sm:$0xf]
    %v858 = vld [vmem:[%s1 + $0x135c] sm:$0xff]
    %v859 = vld [vmem:[%s1 + $0x1364] sm:$0xf]
    %v860 = vld [vmem:[%s1 + $0x1368] sm:$0xff]
    %v861 = vld [vmem:[%s1 + $0x1370] sm:$0xf]
    %v862 = vld [vmem:[%s1 + $0x1374] sm:$0xff]
    %v863 = vld [vmem:[%s1 + $0x137c] sm:$0xf]
    %v864 = vld [vmem:[%s1 + $0x1380] sm:$0xff]
    %v865 = vld [vmem:[%s1 + $0x1388] sm:$0xf]
    %v866 = vld [vmem:[%s1 + $0x138c] sm:$0xff]
    %v867 = vld [vmem:[%s1 + $0x1394] sm:$0xf]
    %v868 = vld [vmem:[%s1 + $0x1398] sm:$0xff]
    %v869 = vld [vmem:[%s1 + $0x13a0] sm:$0xf]
    %v870 = vld [vmem:[%s1 + $0x13a4] sm:$0xff]
    %v871 = vld [vmem:[%s1 + $0x13ac] sm:$0xf]
    %v872 = vld [vmem:[%s1 + $0x13b0] sm:$0xff]
    %v873 = vld [vmem:[%s1 + $0x13b8] sm:$0xf]
    %v874 = vld [vmem:[%s1 + $0x13bc] sm:$0xff]
    %v875 = vld [vmem:[%s1 + $0x13c4] sm:$0xf]
    %v876 = vld [vmem:[%s1 + $0x13c8] sm:$0xff]
    %v877 = vld [vmem:[%s1 + $0x13d0] sm:$0xf]
    %v878 = vld [vmem:[%s1 + $0x13d4] sm:$0xff]
    %v879 = vld [vmem:[%s1 + $0x13dc] sm:$0xf]
    %v880 = vld [vmem:[%s1 + $0x13e0] sm:$0xff]
    %v881 = vld [vmem:[%s1 + $0x13e8] sm:$0xf]
    %v882 = vld [vmem:[%s1 + $0x13ec] sm:$0xff]
    %v883 = vld [vmem:[%s1 + $0x13f4] sm:$0xf]
    %v884 = vld [vmem:[%s1 + $0x13f8] sm:$0xff]
    %v885 = vld [vmem:[%s1 + $0x1400] sm:$0xf]
    %v886 = vld [vmem:[%s1 + $0x1404] sm:$0xff]
    %v887 = vld [vmem:[%s1 + $0x140c] sm:$0xf]
    %v888 = vld [vmem:[%s1 + $0x1410] sm:$0xff]
    %v889 = vld [vmem:[%s1 + $0x1418] sm:$0xf]
    %v890 = vld [vmem:[%s1 + $0x141c] sm:$0xff]
    %v891 = vld [vmem:[%s1 + $0x1424] sm:$0xf]
    %v892 = vld [vmem:[%s1 + $0x1428] sm:$0xff]
    %v893 = vld [vmem:[%s1 + $0x1430] sm:$0xf]
    %v894 = vld [vmem:[%s1 + $0x1434] sm:$0xff]
    %v895 = vld [vmem:[%s1 + $0x143c] sm:$0xf]
    %v896 = vld [vmem:[%s1 + $0x1440] sm:$0xff]
    %v897 = vld [vmem:[%s1 + $0x1448] sm:$0xf]
    %v898 = vld [vmem:[%s1 + $0x144c] sm:$0xff]
    %v899 = vld [vmem:[%s1 + $0x1454] sm:$0xf]
    %v900 = vld [vmem:[%s1 + $0x1458] sm:$0xff]
    %v901 = vld [vmem:[%s1 + $0x1460] sm:$0xf]
    %v902 = vld [vmem:[%s1 + $0x1464] sm:$0xff]
    %v903 = vld [vmem:[%s1 + $0x146c] sm:$0xf]
    %v904 = vld [vmem:[%s1 + $0x1470] sm:$0xff]
    %v905 = vld [vmem:[%s1 + $0x1478] sm:$0xf]
    %v906 = vld [vmem:[%s1 + $0x147c] sm:$0xff]
    %v907 = vld [vmem:[%s1 + $0x1484] sm:$0xf]
    %v908 = vld [vmem:[%s1 + $0x1488] sm:$0xff]
    %v909 = vld [vmem:[%s1 + $0x1490] sm:$0xf]
    %v910 = vld [vmem:[%s1 + $0x1494] sm:$0xff]
    %v911 = vld [vmem:[%s1 + $0x149c] sm:$0xf]
    %v912 = vld [vmem:[%s1 + $0x14a0] sm:$0xff]
    %v913 = vld [vmem:[%s1 + $0x14a8] sm:$0xf]
    %v914 = vld [vmem:[%s1 + $0x14ac] sm:$0xff]
    %v915 = vld [vmem:[%s1 + $0x14b4] sm:$0xf]
    %v916 = vld [vmem:[%s1 + $0x14b8] sm:$0xff]
    %v917 = vld [vmem:[%s1 + $0x14c0] sm:$0xf]
    %v918 = vld [vmem:[%s1 + $0x14c4] sm:$0xff]
    %v919 = vld [vmem:[%s1 + $0x14cc] sm:$0xf]
    %v920 = vld [vmem:[%s1 + $0x14d0] sm:$0xff]
    %v921 = vld [vmem:[%s1 + $0x14d8] sm:$0xf]
    %v922 = vld [vmem:[%s1 + $0x14dc] sm:$0xff]
    %v923 = vld [vmem:[%s1 + $0x14e4] sm:$0xf]
    %v924 = vld [vmem:[%s1 + $0x14e8] sm:$0xff]
    %v925 = vld [vmem:[%s1 + $0x14f0] sm:$0xf]
    %v926 = vld [vmem:[%s1 + $0x14f4] sm:$0xff]
    %v927 = vld [vmem:[%s1 + $0x14fc] sm:$0xf]
    %v928 = vld [vmem:[%s1 + $0x1500] sm:$0xff]
    %v929 = vld [vmem:[%s1 + $0x1508] sm:$0xf]
    %v930 = vld [vmem:[%s1 + $0x150c] sm:$0xff]
    %v931 = vld [vmem:[%s1 + $0x1514] sm:$0xf]
    %v932 = vld [vmem:[%s1 + $0x1518] sm:$0xff]
    %v933 = vld [vmem:[%s1 + $0x1520] sm:$0xf]
    %v934 = vld [vmem:[%s1 + $0x1524] sm:$0xff]
    %v935 = vld [vmem:[%s1 + $0x152c] sm:$0xf]
    %v936 = vld [vmem:[%s1 + $0x1530] sm:$0xff]
    %v937 = vld [vmem:[%s1 + $0x1538] sm:$0xf]
    %v938 = vld [vmem:[%s1 + $0x153c] sm:$0xff]
    %v939 = vld [vmem:[%s1 + $0x1544] sm:$0xf]
    %v940 = vld [vmem:[%s1 + $0x1548] sm:$0xff]
    %v941 = vld [vmem:[%s1 + $0x1550] sm:$0xf]
    %v942 = vld [vmem:[%s1 + $0x1554] sm:$0xff]
    %v943 = vld [vmem:[%s1 + $0x155c] sm:$0xf]
    %v944 = vld [vmem:[%s1 + $0x1560] sm:$0xff]
    %v945 = vld [vmem:[%s1 + $0x1568] sm:$0xf]
    %v946 = vld [vmem:[%s1 + $0x156c] sm:$0xff]
    %v947 = vld [vmem:[%s1 + $0x1574] sm:$0xf]
    %v948 = vld [vmem:[%s1 + $0x1578] sm:$0xff]
    %v949 = vld [vmem:[%s1 + $0x1580] sm:$0xf]
    %v950 = vld [vmem:[%s1 + $0x1584] sm:$0xff]
    %v951 = vld [vmem:[%s1 + $0x158c] sm:$0xf]
    %v952 = vld [vmem:[%s1 + $0x1590] sm:$0xff]
    %v953 = vld [vmem:[%s1 + $0x1598] sm:$0xf]
    %v954 = vld [vmem:[%s1 + $0x159c] sm:$0xff]
    %v955 = vld [vmem:[%s1 + $0x15a4] sm:$0xf]
    %v956 = vld [vmem:[%s1 + $0x15a8] sm:$0xff]
    %v957 = vld [vmem:[%s1 + $0x15b0] sm:$0xf]
    %v958 = vld [vmem:[%s1 + $0x15b4] sm:$0xff]
    %v959 = vld [vmem:[%s1 + $0x15bc] sm:$0xf]
    %v960 = vld [vmem:[%s1 + $0x15c0] sm:$0xff]
    %v961 = vld [vmem:[%s1 + $0x15c8] sm:$0xf]
    %v962 = vld [vmem:[%s1 + $0x15cc] sm:$0xff]
    %v963 = vld [vmem:[%s1 + $0x15d4] sm:$0xf]
    %v964 = vld [vmem:[%s1 + $0x15d8] sm:$0xff]
    %v965 = vld [vmem:[%s1 + $0x15e0] sm:$0xf]
    %v966 = vld [vmem:[%s1 + $0x15e4] sm:$0xff]
    %v967 = vld [vmem:[%s1 + $0x15ec] sm:$0xf]
    %v968 = vld [vmem:[%s1 + $0x15f0] sm:$0xff]
    %v969 = vld [vmem:[%s1 + $0x15f8] sm:$0xf]
    %v970 = vld [vmem:[%s1 + $0x15fc] sm:$0xff]
    %v971 = vld [vmem:[%s1 + $0x1604] sm:$0xf]
    %v972 = vld [vmem:[%s1 + $0x1608] sm:$0xff]
    %v973 = vld [vmem:[%s1 + $0x1610] sm:$0xf]
    %v974 = vld [vmem:[%s1 + $0x1614] sm:$0xff]
    %v975 = vld [vmem:[%s1 + $0x161c] sm:$0xf]
    %v976 = vld [vmem:[%s1 + $0x1620] sm:$0xff]
    %v977 = vld [vmem:[%s1 + $0x1628] sm:$0xf]
    %v978 = vld [vmem:[%s1 + $0x162c] sm:$0xff]
    %v979 = vld [vmem:[%s1 + $0x1634] sm:$0xf]
    %v980 = vld [vmem:[%s1 + $0x1638] sm:$0xff]
    %v981 = vld [vmem:[%s1 + $0x1640] sm:$0xf]
    %v982 = vld [vmem:[%s1 + $0x1644] sm:$0xff]
    %v983 = vld [vmem:[%s1 + $0x164c] sm:$0xf]
    %v984 = vld [vmem:[%s1 + $0x1650] sm:$0xff]
    %v985 = vld [vmem:[%s1 + $0x1658] sm:$0xf]
    %v986 = vld [vmem:[%s1 + $0x165c] sm:$0xff]
    %v987 = vld [vmem:[%s1 + $0x1664] sm:$0xf]
    %v988 = vld [vmem:[%s1 + $0x1668] sm:$0xff]
    %v989 = vld [vmem:[%s1 + $0x1670] sm:$0xf]
    %v990 = vld [vmem:[%s1 + $0x1674] sm:$0xff]
    %v991 = vld [vmem:[%s1 + $0x167c] sm:$0xf]
    %v992 = vld [vmem:[%s1 + $0x1680] sm:$0xff]
    %v993 = vld [vmem:[%s1 + $0x1688] sm:$0xf]
    %v994 = vld [vmem:[%s1 + $0x168c] sm:$0xff]
    %v995 = vld [vmem:[%s1 + $0x1694] sm:$0xf]
    %v996 = vld [vmem:[%s1 + $0x1698] sm:$0xff]
    %v997 = vld [vmem:[%s1 + $0x16a0] sm:$0xf]
    %v998 = vld [vmem:[%s1 + $0x16a4] sm:$0xff]
    %v999 = vld [vmem:[%s1 + $0x16ac] sm:$0xf]
    %v1000 = vld [vmem:[%s1 + $0x16b0] sm:$0xff]
    %v1001 = vld [vmem:[%s1 + $0x16b8] sm:$0xf]
    %v1002 = vld [vmem:[%s1 + $0x16bc] sm:$0xff]
    %v1003 = vld [vmem:[%s1 + $0x16c4] sm:$0xf]
    %v1004 = vld [vmem:[%s1 + $0x16c8] sm:$0xff]
    %v1005 = vld [vmem:[%s1 + $0x16d0] sm:$0xf]
    %v1006 = vld [vmem:[%s1 + $0x16d4] sm:$0xff]
    %v1007 = vld [vmem:[%s1 + $0x16dc] sm:$0xf]
    %v1008 = vld [vmem:[%s1 + $0x16e0] sm:$0xff]
    %v1009 = vld [vmem:[%s1 + $0x16e8] sm:$0xf]
    %v1010 = vld [vmem:[%s1 + $0x16ec] sm:$0xff]
    %v1011 = vld [vmem:[%s1 + $0x16f4] sm:$0xf]
    %v1012 = vld [vmem:[%s1 + $0x16f8] sm:$0xff]
    %v1013 = vld [vmem:[%s1 + $0x1700] sm:$0xf]
    %v1014 = vld [vmem:[%s1 + $0x1704] sm:$0xff]
    %v1015 = vld [vmem:[%s1 + $0x170c] sm:$0xf]
    %v1016 = vld [vmem:[%s1 + $0x1710] sm:$0xff]
    %v1017 = vld [vmem:[%s1 + $0x1718] sm:$0xf]
    %v1018 = vld [vmem:[%s1 + $0x171c] sm:$0xff]
    %v1019 = vld [vmem:[%s1 + $0x1724] sm:$0xf]
    %v1020 = vld [vmem:[%s1 + $0x1728] sm:$0xff]
    %v1021 = vld [vmem:[%s1 + $0x1730] sm:$0xf]
    %v1022 = vld [vmem:[%s1 + $0x1734] sm:$0xff]
    %v1023 = vld [vmem:[%s1 + $0x173c] sm:$0xf]
    %v1024 = vld [vmem:[%s1 + $0x1740] sm:$0xff]
    %v1025 = vld [vmem:[%s1 + $0x1748] sm:$0xf]
    %v1026 = vld [vmem:[%s1 + $0x174c] sm:$0xff]
    %v1027 = vld [vmem:[%s1 + $0x1754] sm:$0xf]
    %v1028 = vld [vmem:[%s1 + $0x1758] sm:$0xff]
    %v1029 = vld [vmem:[%s1 + $0x1760] sm:$0xf]
    %v1030 = vld [vmem:[%s1 + $0x1764] sm:$0xff]
    %v1031 = vld [vmem:[%s1 + $0x176c] sm:$0xf]
    %v1032 = vld [vmem:[%s1 + $0x1770] sm:$0xff]
    %v1033 = vld [vmem:[%s1 + $0x1778] sm:$0xf]
    %v1034 = vld [vmem:[%s1 + $0x177c] sm:$0xff]
    %v1035 = vld [vmem:[%s1 + $0x1784] sm:$0xf]
    %v1036 = vld [vmem:[%s1 + $0x1788] sm:$0xff]
    %v1037 = vld [vmem:[%s1 + $0x1790] sm:$0xf]
    %v1038 = vld [vmem:[%s1 + $0x1794] sm:$0xff]
    %v1039 = vld [vmem:[%s1 + $0x179c] sm:$0xf]
    %v1040 = vld [vmem:[%s1 + $0x17a0] sm:$0xff]
    %v1041 = vld [vmem:[%s1 + $0x17a8] sm:$0xf]
    %v1042 = vld [vmem:[%s1 + $0x17ac] sm:$0xff]
    %v1043 = vld [vmem:[%s1 + $0x17b4] sm:$0xf]
    %v1044 = vld [vmem:[%s1 + $0x17b8] sm:$0xff]
    %v1045 = vld [vmem:[%s1 + $0x17c0] sm:$0xf]
    %v1046 = vld [vmem:[%s1 + $0x17c4] sm:$0xff]
    %v1047 = vld [vmem:[%s1 + $0x17cc] sm:$0xf]
    %v1048 = vld [vmem:[%s1 + $0x17d0] sm:$0xff]
    %v1049 = vld [vmem:[%s1 + $0x17d8] sm:$0xf]
    %v1050 = vld [vmem:[%s1 + $0x17dc] sm:$0xff]
    %v1051 = vld [vmem:[%s1 + $0x17e4] sm:$0xf]
    %v1052 = vld [vmem:[%s1 + $0x17e8] sm:$0xff]
    %v1053 = vld [vmem:[%s1 + $0x17f0] sm:$0xf]
    %v1054 = vld [vmem:[%s1 + $0x17f4] sm:$0xff]
    %v1055 = vld [vmem:[%s1 + $0x17fc] sm:$0xf]
    %v1056 = vld [vmem:[%s2] sm:$0x7]
    %v1058 = vlaneseq
    %v1059 = vshrl.u32 %v1058, 7
    %v1060 = vsub.s32 0, %v1059
    %v1061 = vrot.slane %v1056, %v1060
    %v1062 = vlaneseq
    %v1063 = vshrl.u32 %v1062, 7
    %v1064 = vsub.s32 1, %v1063
    %v1065 = vrot.slane %v1056, %v1064
    %v1066 = vlaneseq
    %v1067 = vshrl.u32 %v1066, 7
    %v1068 = vsub.s32 2, %v1067
    %v1069 = vrot.slane %v1056, %v1068
    %v1077 = vcombine.high %v28, %v28
    %v1079 = vunpack.c.l.s4 1966171168
    %v1080 = vunpack.c.0.s8 %v1079
    %v1081 = vlaneseq
    %v1082 = vshrl.u32 %v1081, 7
    %v1083 = vsub.s32 %v1080, %v1082
    %v1084 = vrot.slane %v28, %v1083
    %v1086 = vunpack.c.l.s4 1966171168
    %v1087 = vunpack.c.0.s8 %v1086
    %v1088 = vlaneseq
    %v1089 = vshrl.u32 %v1088, 7
    %v1090 = vsub.s32 %v1087, %v1089
    %v1091 = vrot.slane %v1077, %v1090
    %v1092 = vcombine.high %v1084, %v1084
    %v1093 = vcombine.high %v1091, %v1091
    %v1095 = vunpack.c.l.s4 1966171168
    %v1096 = vunpack.c.0.s8 %v1095
    %v1097 = vlaneseq
    %v1098 = vshrl.u32 %v1097, 7
    %v1099 = vsub.s32 %v1096, %v1098
    %v1100 = vrot.slane %v1084, %v1099
    %v1102 = vunpack.c.l.s4 1966171168
    %v1103 = vunpack.c.0.s8 %v1102
    %v1104 = vlaneseq
    %v1105 = vshrl.u32 %v1104, 7
    %v1106 = vsub.s32 %v1103, %v1105
    %v1107 = vrot.slane %v1091, %v1106
    %v1109 = vunpack.c.l.s4 1966171168
    %v1110 = vunpack.c.0.s8 %v1109
    %v1111 = vlaneseq
    %v1112 = vshrl.u32 %v1111, 7
    %v1113 = vsub.s32 %v1110, %v1112
    %v1114 = vrot.slane %v1092, %v1113
    %v1116 = vunpack.c.l.s4 1966171168
    %v1117 = vunpack.c.0.s8 %v1116
    %v1118 = vlaneseq
    %v1119 = vshrl.u32 %v1118, 7
    %v1120 = vsub.s32 %v1117, %v1119
    %v1121 = vrot.slane %v1093, %v1120
    %v1122 = vcombine.high %v1100, %v1100
    %v1123 = vcombine.high %v1107, %v1107
    %v1124 = vcombine.high %v1114, %v1114
    %v1125 = vcombine.high %v1121, %v1121
    %v1126 = vcombine.high %v29, %v29
    %v1128 = vunpack.c.l.s4 1966171168
    %v1129 = vunpack.c.0.s8 %v1128
    %v1130 = vlaneseq
    %v1131 = vshrl.u32 %v1130, 7
    %v1132 = vsub.s32 %v1129, %v1131
    %v1133 = vrot.slane %v29, %v1132
    %v1135 = vunpack.c.l.s4 1966171168
    %v1136 = vunpack.c.0.s8 %v1135
    %v1137 = vlaneseq
    %v1138 = vshrl.u32 %v1137, 7
    %v1139 = vsub.s32 %v1136, %v1138
    %v1140 = vrot.slane %v1126, %v1139
    %v1141 = vcombine.high %v1133, %v1133
    %v1142 = vcombine.high %v1140, %v1140
    %v1144 = vunpack.c.l.s4 1966171168
    %v1145 = vunpack.c.0.s8 %v1144
    %v1146 = vlaneseq
    %v1147 = vshrl.u32 %v1146, 7
    %v1148 = vsub.s32 %v1145, %v1147
    %v1149 = vrot.slane %v1133, %v1148
    %v1151 = vunpack.c.l.s4 1966171168
    %v1152 = vunpack.c.0.s8 %v1151
    %v1153 = vlaneseq
    %v1154 = vshrl.u32 %v1153, 7
    %v1155 = vsub.s32 %v1152, %v1154
    %v1156 = vrot.slane %v1140, %v1155
    %v1158 = vunpack.c.l.s4 1966171168
    %v1159 = vunpack.c.0.s8 %v1158
    %v1160 = vlaneseq
    %v1161 = vshrl.u32 %v1160, 7
    %v1162 = vsub.s32 %v1159, %v1161
    %v1163 = vrot.slane %v1141, %v1162
    %v1165 = vunpack.c.l.s4 1966171168
    %v1166 = vunpack.c.0.s8 %v1165
    %v1167 = vlaneseq
    %v1168 = vshrl.u32 %v1167, 7
    %v1169 = vsub.s32 %v1166, %v1168
    %v1170 = vrot.slane %v1142, %v1169
    %v1171 = vcombine.high %v1149, %v1149
    %v1172 = vcombine.high %v1156, %v1156
    %v1173 = vcombine.high %v1163, %v1163
    %v1174 = vcombine.high %v1170, %v1170
    %v1175 = vcombine.high %v30, %v30
    %v1177 = vunpack.c.l.s4 1966171168
    %v1178 = vunpack.c.0.s8 %v1177
    %v1179 = vlaneseq
    %v1180 = vshrl.u32 %v1179, 7
    %v1181 = vsub.s32 %v1178, %v1180
    %v1182 = vrot.slane %v30, %v1181
    %v1184 = vunpack.c.l.s4 1966171168
    %v1185 = vunpack.c.0.s8 %v1184
    %v1186 = vlaneseq
    %v1187 = vshrl.u32 %v1186, 7
    %v1188 = vsub.s32 %v1185, %v1187
    %v1189 = vrot.slane %v1175, %v1188
    %v1190 = vcombine.high %v1182, %v1182
    %v1191 = vcombine.high %v1189, %v1189
    %v1193 = vunpack.c.l.s4 1966171168
    %v1194 = vunpack.c.0.s8 %v1193
    %v1195 = vlaneseq
    %v1196 = vshrl.u32 %v1195, 7
    %v1197 = vsub.s32 %v1194, %v1196
    %v1198 = vrot.slane %v1182, %v1197
    %v1200 = vunpack.c.l.s4 1966171168
    %v1201 = vunpack.c.0.s8 %v1200
    %v1202 = vlaneseq
    %v1203 = vshrl.u32 %v1202, 7
    %v1204 = vsub.s32 %v1201, %v1203
    %v1205 = vrot.slane %v1189, %v1204
    %v1207 = vunpack.c.l.s4 1966171168
    %v1208 = vunpack.c.0.s8 %v1207
    %v1209 = vlaneseq
    %v1210 = vshrl.u32 %v1209, 7
    %v1211 = vsub.s32 %v1208, %v1210
    %v1212 = vrot.slane %v1190, %v1211
    %v1214 = vunpack.c.l.s4 1966171168
    %v1215 = vunpack.c.0.s8 %v1214
    %v1216 = vlaneseq
    %v1217 = vshrl.u32 %v1216, 7
    %v1218 = vsub.s32 %v1215, %v1217
    %v1219 = vrot.slane %v1191, %v1218
    %v1220 = vcombine.high %v1198, %v1198
    %v1221 = vcombine.high %v1205, %v1205
    %v1222 = vcombine.high %v1212, %v1212
    %v1223 = vcombine.high %v1219, %v1219
    %v1224 = vcombine.high %v31, %v31
    %v1226 = vunpack.c.l.s4 1966171168
    %v1227 = vunpack.c.0.s8 %v1226
    %v1228 = vlaneseq
    %v1229 = vshrl.u32 %v1228, 7
    %v1230 = vsub.s32 %v1227, %v1229
    %v1231 = vrot.slane %v31, %v1230
    %v1233 = vunpack.c.l.s4 1966171168
    %v1234 = vunpack.c.0.s8 %v1233
    %v1235 = vlaneseq
    %v1236 = vshrl.u32 %v1235, 7
    %v1237 = vsub.s32 %v1234, %v1236
    %v1238 = vrot.slane %v1224, %v1237
    %v1239 = vcombine.high %v1231, %v1231
    %v1240 = vcombine.high %v1238, %v1238
    %v1242 = vunpack.c.l.s4 1966171168
    %v1243 = vunpack.c.0.s8 %v1242
    %v1244 = vlaneseq
    %v1245 = vshrl.u32 %v1244, 7
    %v1246 = vsub.s32 %v1243, %v1245
    %v1247 = vrot.slane %v1231, %v1246
    %v1249 = vunpack.c.l.s4 1966171168
    %v1250 = vunpack.c.0.s8 %v1249
    %v1251 = vlaneseq
    %v1252 = vshrl.u32 %v1251, 7
    %v1253 = vsub.s32 %v1250, %v1252
    %v1254 = vrot.slane %v1238, %v1253
    %v1256 = vunpack.c.l.s4 1966171168
    %v1257 = vunpack.c.0.s8 %v1256
    %v1258 = vlaneseq
    %v1259 = vshrl.u32 %v1258, 7
    %v1260 = vsub.s32 %v1257, %v1259
    %v1261 = vrot.slane %v1239, %v1260
    %v1263 = vunpack.c.l.s4 1966171168
    %v1264 = vunpack.c.0.s8 %v1263
    %v1265 = vlaneseq
    %v1266 = vshrl.u32 %v1265, 7
    %v1267 = vsub.s32 %v1264, %v1266
    %v1268 = vrot.slane %v1240, %v1267
    %v1269 = vcombine.high %v1247, %v1247
    %v1270 = vcombine.high %v1254, %v1254
    %v1271 = vcombine.high %v1261, %v1261
    %v1272 = vcombine.high %v1268, %v1268
    %v2329 = vunpack.c.l.b16 %v32
    %v2330 = vunpack.c.h.b16 %v32
    %v2331 = vunpack.c.l.b16 %v33
    %v2332 = vunpack.c.l.b16 %v34
    %v2333 = vunpack.c.h.b16 %v34
    %v2334 = vunpack.c.l.b16 %v35
    %v2335 = vunpack.c.l.b16 %v36
    %v2336 = vunpack.c.h.b16 %v36
    %v2337 = vunpack.c.l.b16 %v37
    %v2338 = vunpack.c.l.b16 %v38
    %v2339 = vunpack.c.h.b16 %v38
    %v2340 = vunpack.c.l.b16 %v39
    %v2341 = vunpack.c.l.b16 %v40
    %v2342 = vunpack.c.h.b16 %v40
    %v2343 = vunpack.c.l.b16 %v41
    %v2344 = vunpack.c.l.b16 %v42
    %v2345 = vunpack.c.h.b16 %v42
    %v2346 = vunpack.c.l.b16 %v43
    %v2347 = vunpack.c.l.b16 %v44
    %v2348 = vunpack.c.h.b16 %v44
    %v2349 = vunpack.c.l.b16 %v45
    %v2350 = vunpack.c.l.b16 %v46
    %v2351 = vunpack.c.h.b16 %v46
    %v2352 = vunpack.c.l.b16 %v47
    %v2353 = vunpack.c.l.b16 %v48
    %v2354 = vunpack.c.h.b16 %v48
    %v2355 = vunpack.c.l.b16 %v49
    %v2356 = vunpack.c.l.b16 %v50
    %v2357 = vunpack.c.h.b16 %v50
    %v2358 = vunpack.c.l.b16 %v51
    %v2359 = vunpack.c.l.b16 %v52
    %v2360 = vunpack.c.h.b16 %v52
    %v2361 = vunpack.c.l.b16 %v53
    %v2362 = vunpack.c.l.b16 %v54
    %v2363 = vunpack.c.h.b16 %v54
    %v2364 = vunpack.c.l.b16 %v55
    %v2365 = vunpack.c.l.b16 %v56
    %v2366 = vunpack.c.h.b16 %v56
    %v2367 = vunpack.c.l.b16 %v57
    %v2368 = vunpack.c.l.b16 %v58
    %v2369 = vunpack.c.h.b16 %v58
    %v2370 = vunpack.c.l.b16 %v59
    %v2371 = vunpack.c.l.b16 %v60
    %v2372 = vunpack.c.h.b16 %v60
    %v2373 = vunpack.c.l.b16 %v61
    %v2374 = vunpack.c.l.b16 %v62
    %v2375 = vunpack.c.h.b16 %v62
    %v2376 = vunpack.c.l.b16 %v63
    %v2377 = vunpack.c.l.b16 %v64
    %v2378 = vunpack.c.h.b16 %v64
    %v2379 = vunpack.c.l.b16 %v65
    %v2380 = vunpack.c.l.b16 %v66
    %v2381 = vunpack.c.h.b16 %v66
    %v2382 = vunpack.c.l.b16 %v67
    %v2383 = vunpack.c.l.b16 %v68
    %v2384 = vunpack.c.h.b16 %v68
    %v2385 = vunpack.c.l.b16 %v69
    %v2386 = vunpack.c.l.b16 %v70
    %v2387 = vunpack.c.h.b16 %v70
    %v2388 = vunpack.c.l.b16 %v71
    %v2389 = vunpack.c.l.b16 %v72
    %v2390 = vunpack.c.h.b16 %v72
    %v2391 = vunpack.c.l.b16 %v73
    %v2392 = vunpack.c.l.b16 %v74
    %v2393 = vunpack.c.h.b16 %v74
    %v2394 = vunpack.c.l.b16 %v75
    %v2395 = vunpack.c.l.b16 %v76
    %v2396 = vunpack.c.h.b16 %v76
    %v2397 = vunpack.c.l.b16 %v77
    %v2398 = vunpack.c.l.b16 %v78
    %v2399 = vunpack.c.h.b16 %v78
    %v2400 = vunpack.c.l.b16 %v79
    %v2401 = vunpack.c.l.b16 %v80
    %v2402 = vunpack.c.h.b16 %v80
    %v2403 = vunpack.c.l.b16 %v81
    %v2404 = vunpack.c.l.b16 %v82
    %v2405 = vunpack.c.h.b16 %v82
    %v2406 = vunpack.c.l.b16 %v83
    %v2407 = vunpack.c.l.b16 %v84
    %v2408 = vunpack.c.h.b16 %v84
    %v2409 = vunpack.c.l.b16 %v85
    %v2410 = vunpack.c.l.b16 %v86
    %v2411 = vunpack.c.h.b16 %v86
    %v2412 = vunpack.c.l.b16 %v87
    %v2413 = vunpack.c.l.b16 %v88
    %v2414 = vunpack.c.h.b16 %v88
    %v2415 = vunpack.c.l.b16 %v89
    %v2416 = vunpack.c.l.b16 %v90
    %v2417 = vunpack.c.h.b16 %v90
    %v2418 = vunpack.c.l.b16 %v91
    %v2419 = vunpack.c.l.b16 %v92
    %v2420 = vunpack.c.h.b16 %v92
    %v2421 = vunpack.c.l.b16 %v93
    %v2422 = vunpack.c.l.b16 %v94
    %v2423 = vunpack.c.h.b16 %v94
    %v2424 = vunpack.c.l.b16 %v95
    %v2425 = vunpack.c.l.b16 %v96
    %v2426 = vunpack.c.h.b16 %v96
    %v2427 = vunpack.c.l.b16 %v97
    %v2428 = vunpack.c.l.b16 %v98
    %v2429 = vunpack.c.h.b16 %v98
    %v2430 = vunpack.c.l.b16 %v99
    %v2431 = vunpack.c.l.b16 %v100
    %v2432 = vunpack.c.h.b16 %v100
    %v2433 = vunpack.c.l.b16 %v101
    %v2434 = vunpack.c.l.b16 %v102
    %v2435 = vunpack.c.h.b16 %v102
    %v2436 = vunpack.c.l.b16 %v103
    %v2437 = vunpack.c.l.b16 %v104
    %v2438 = vunpack.c.h.b16 %v104
    %v2439 = vunpack.c.l.b16 %v105
    %v2440 = vunpack.c.l.b16 %v106
    %v2441 = vunpack.c.h.b16 %v106
    %v2442 = vunpack.c.l.b16 %v107
    %v2443 = vunpack.c.l.b16 %v108
    %v2444 = vunpack.c.h.b16 %v108
    %v2445 = vunpack.c.l.b16 %v109
    %v2446 = vunpack.c.l.b16 %v110
    %v2447 = vunpack.c.h.b16 %v110
    %v2448 = vunpack.c.l.b16 %v111
    %v2449 = vunpack.c.l.b16 %v112
    %v2450 = vunpack.c.h.b16 %v112
    %v2451 = vunpack.c.l.b16 %v113
    %v2452 = vunpack.c.l.b16 %v114
    %v2453 = vunpack.c.h.b16 %v114
    %v2454 = vunpack.c.l.b16 %v115
    %v2455 = vunpack.c.l.b16 %v116
    %v2456 = vunpack.c.h.b16 %v116
    %v2457 = vunpack.c.l.b16 %v117
    %v2458 = vunpack.c.l.b16 %v118
    %v2459 = vunpack.c.h.b16 %v118
    %v2460 = vunpack.c.l.b16 %v119
    %v2461 = vunpack.c.l.b16 %v120
    %v2462 = vunpack.c.h.b16 %v120
    %v2463 = vunpack.c.l.b16 %v121
    %v2464 = vunpack.c.l.b16 %v122
    %v2465 = vunpack.c.h.b16 %v122
    %v2466 = vunpack.c.l.b16 %v123
    %v2467 = vunpack.c.l.b16 %v124
    %v2468 = vunpack.c.h.b16 %v124
    %v2469 = vunpack.c.l.b16 %v125
    %v2470 = vunpack.c.l.b16 %v126
    %v2471 = vunpack.c.h.b16 %v126
    %v2472 = vunpack.c.l.b16 %v127
    %v2473 = vunpack.c.l.b16 %v128
    %v2474 = vunpack.c.h.b16 %v128
    %v2475 = vunpack.c.l.b16 %v129
    %v2476 = vunpack.c.l.b16 %v130
    %v2477 = vunpack.c.h.b16 %v130
    %v2478 = vunpack.c.l.b16 %v131
    %v2479 = vunpack.c.l.b16 %v132
    %v2480 = vunpack.c.h.b16 %v132
    %v2481 = vunpack.c.l.b16 %v133
    %v2482 = vunpack.c.l.b16 %v134
    %v2483 = vunpack.c.h.b16 %v134
    %v2484 = vunpack.c.l.b16 %v135
    %v2485 = vunpack.c.l.b16 %v136
    %v2486 = vunpack.c.h.b16 %v136
    %v2487 = vunpack.c.l.b16 %v137
    %v2488 = vunpack.c.l.b16 %v138
    %v2489 = vunpack.c.h.b16 %v138
    %v2490 = vunpack.c.l.b16 %v139
    %v2491 = vunpack.c.l.b16 %v140
    %v2492 = vunpack.c.h.b16 %v140
    %v2493 = vunpack.c.l.b16 %v141
    %v2494 = vunpack.c.l.b16 %v142
    %v2495 = vunpack.c.h.b16 %v142
    %v2496 = vunpack.c.l.b16 %v143
    %v2497 = vunpack.c.l.b16 %v144
    %v2498 = vunpack.c.h.b16 %v144
    %v2499 = vunpack.c.l.b16 %v145
    %v2500 = vunpack.c.l.b16 %v146
    %v2501 = vunpack.c.h.b16 %v146
    %v2502 = vunpack.c.l.b16 %v147
    %v2503 = vunpack.c.l.b16 %v148
    %v2504 = vunpack.c.h.b16 %v148
    %v2505 = vunpack.c.l.b16 %v149
    %v2506 = vunpack.c.l.b16 %v150
    %v2507 = vunpack.c.h.b16 %v150
    %v2508 = vunpack.c.l.b16 %v151
    %v2509 = vunpack.c.l.b16 %v152
    %v2510 = vunpack.c.h.b16 %v152
    %v2511 = vunpack.c.l.b16 %v153
    %v2512 = vunpack.c.l.b16 %v154
    %v2513 = vunpack.c.h.b16 %v154
    %v2514 = vunpack.c.l.b16 %v155
    %v2515 = vunpack.c.l.b16 %v156
    %v2516 = vunpack.c.h.b16 %v156
    %v2517 = vunpack.c.l.b16 %v157
    %v2518 = vunpack.c.l.b16 %v158
    %v2519 = vunpack.c.h.b16 %v158
    %v2520 = vunpack.c.l.b16 %v159
    %v2521 = vunpack.c.l.b16 %v160
    %v2522 = vunpack.c.h.b16 %v160
    %v2523 = vunpack.c.l.b16 %v161
    %v2524 = vunpack.c.l.b16 %v162
    %v2525 = vunpack.c.h.b16 %v162
    %v2526 = vunpack.c.l.b16 %v163
    %v2527 = vunpack.c.l.b16 %v164
    %v2528 = vunpack.c.h.b16 %v164
    %v2529 = vunpack.c.l.b16 %v165
    %v2530 = vunpack.c.l.b16 %v166
    %v2531 = vunpack.c.h.b16 %v166
    %v2532 = vunpack.c.l.b16 %v167
    %v2533 = vunpack.c.l.b16 %v168
    %v2534 = vunpack.c.h.b16 %v168
    %v2535 = vunpack.c.l.b16 %v169
    %v2536 = vunpack.c.l.b16 %v170
    %v2537 = vunpack.c.h.b16 %v170
    %v2538 = vunpack.c.l.b16 %v171
    %v2539 = vunpack.c.l.b16 %v172
    %v2540 = vunpack.c.h.b16 %v172
    %v2541 = vunpack.c.l.b16 %v173
    %v2542 = vunpack.c.l.b16 %v174
    %v2543 = vunpack.c.h.b16 %v174
    %v2544 = vunpack.c.l.b16 %v175
    %v2545 = vunpack.c.l.b16 %v176
    %v2546 = vunpack.c.h.b16 %v176
    %v2547 = vunpack.c.l.b16 %v177
    %v2548 = vunpack.c.l.b16 %v178
    %v2549 = vunpack.c.h.b16 %v178
    %v2550 = vunpack.c.l.b16 %v179
    %v2551 = vunpack.c.l.b16 %v180
    %v2552 = vunpack.c.h.b16 %v180
    %v2553 = vunpack.c.l.b16 %v181
    %v2554 = vunpack.c.l.b16 %v182
    %v2555 = vunpack.c.h.b16 %v182
    %v2556 = vunpack.c.l.b16 %v183
    %v2557 = vunpack.c.l.b16 %v184
    %v2558 = vunpack.c.h.b16 %v184
    %v2559 = vunpack.c.l.b16 %v185
    %v2560 = vunpack.c.l.b16 %v186
    %v2561 = vunpack.c.h.b16 %v186
    %v2562 = vunpack.c.l.b16 %v187
    %v2563 = vunpack.c.l.b16 %v188
    %v2564 = vunpack.c.h.b16 %v188
    %v2565 = vunpack.c.l.b16 %v189
    %v2566 = vunpack.c.l.b16 %v190
    %v2567 = vunpack.c.h.b16 %v190
    %v2568 = vunpack.c.l.b16 %v191
    %v2569 = vunpack.c.l.b16 %v192
    %v2570 = vunpack.c.h.b16 %v192
    %v2571 = vunpack.c.l.b16 %v193
    %v2572 = vunpack.c.l.b16 %v194
    %v2573 = vunpack.c.h.b16 %v194
    %v2574 = vunpack.c.l.b16 %v195
    %v2575 = vunpack.c.l.b16 %v196
    %v2576 = vunpack.c.h.b16 %v196
    %v2577 = vunpack.c.l.b16 %v197
    %v2578 = vunpack.c.l.b16 %v198
    %v2579 = vunpack.c.h.b16 %v198
    %v2580 = vunpack.c.l.b16 %v199
    %v2581 = vunpack.c.l.b16 %v200
    %v2582 = vunpack.c.h.b16 %v200
    %v2583 = vunpack.c.l.b16 %v201
    %v2584 = vunpack.c.l.b16 %v202
    %v2585 = vunpack.c.h.b16 %v202
    %v2586 = vunpack.c.l.b16 %v203
    %v2587 = vunpack.c.l.b16 %v204
    %v2588 = vunpack.c.h.b16 %v204
    %v2589 = vunpack.c.l.b16 %v205
    %v2590 = vunpack.c.l.b16 %v206
    %v2591 = vunpack.c.h.b16 %v206
    %v2592 = vunpack.c.l.b16 %v207
    %v2593 = vunpack.c.l.b16 %v208
    %v2594 = vunpack.c.h.b16 %v208
    %v2595 = vunpack.c.l.b16 %v209
    %v2596 = vunpack.c.l.b16 %v210
    %v2597 = vunpack.c.h.b16 %v210
    %v2598 = vunpack.c.l.b16 %v211
    %v2599 = vunpack.c.l.b16 %v212
    %v2600 = vunpack.c.h.b16 %v212
    %v2601 = vunpack.c.l.b16 %v213
    %v2602 = vunpack.c.l.b16 %v214
    %v2603 = vunpack.c.h.b16 %v214
    %v2604 = vunpack.c.l.b16 %v215
    %v2605 = vunpack.c.l.b16 %v216
    %v2606 = vunpack.c.h.b16 %v216
    %v2607 = vunpack.c.l.b16 %v217
    %v2608 = vunpack.c.l.b16 %v218
    %v2609 = vunpack.c.h.b16 %v218
    %v2610 = vunpack.c.l.b16 %v219
    %v2611 = vunpack.c.l.b16 %v220
    %v2612 = vunpack.c.h.b16 %v220
    %v2613 = vunpack.c.l.b16 %v221
    %v2614 = vunpack.c.l.b16 %v222
    %v2615 = vunpack.c.h.b16 %v222
    %v2616 = vunpack.c.l.b16 %v223
    %v2617 = vunpack.c.l.b16 %v224
    %v2618 = vunpack.c.h.b16 %v224
    %v2619 = vunpack.c.l.b16 %v225
    %v2620 = vunpack.c.l.b16 %v226
    %v2621 = vunpack.c.h.b16 %v226
    %v2622 = vunpack.c.l.b16 %v227
    %v2623 = vunpack.c.l.b16 %v228
    %v2624 = vunpack.c.h.b16 %v228
    %v2625 = vunpack.c.l.b16 %v229
    %v2626 = vunpack.c.l.b16 %v230
    %v2627 = vunpack.c.h.b16 %v230
    %v2628 = vunpack.c.l.b16 %v231
    %v2629 = vunpack.c.l.b16 %v232
    %v2630 = vunpack.c.h.b16 %v232
    %v2631 = vunpack.c.l.b16 %v233
    %v2632 = vunpack.c.l.b16 %v234
    %v2633 = vunpack.c.h.b16 %v234
    %v2634 = vunpack.c.l.b16 %v235
    %v2635 = vunpack.c.l.b16 %v236
    %v2636 = vunpack.c.h.b16 %v236
    %v2637 = vunpack.c.l.b16 %v237
    %v2638 = vunpack.c.l.b16 %v238
    %v2639 = vunpack.c.h.b16 %v238
    %v2640 = vunpack.c.l.b16 %v239
    %v2641 = vunpack.c.l.b16 %v240
    %v2642 = vunpack.c.h.b16 %v240
    %v2643 = vunpack.c.l.b16 %v241
    %v2644 = vunpack.c.l.b16 %v242
    %v2645 = vunpack.c.h.b16 %v242
    %v2646 = vunpack.c.l.b16 %v243
    %v2647 = vunpack.c.l.b16 %v244
    %v2648 = vunpack.c.h.b16 %v244
    %v2649 = vunpack.c.l.b16 %v245
    %v2650 = vunpack.c.l.b16 %v246
    %v2651 = vunpack.c.h.b16 %v246
    %v2652 = vunpack.c.l.b16 %v247
    %v2653 = vunpack.c.l.b16 %v248
    %v2654 = vunpack.c.h.b16 %v248
    %v2655 = vunpack.c.l.b16 %v249
    %v2656 = vunpack.c.l.b16 %v250
    %v2657 = vunpack.c.h.b16 %v250
    %v2658 = vunpack.c.l.b16 %v251
    %v2659 = vunpack.c.l.b16 %v252
    %v2660 = vunpack.c.h.b16 %v252
    %v2661 = vunpack.c.l.b16 %v253
    %v2662 = vunpack.c.l.b16 %v254
    %v2663 = vunpack.c.h.b16 %v254
    %v2664 = vunpack.c.l.b16 %v255
    %v2665 = vunpack.c.l.b16 %v256
    %v2666 = vunpack.c.h.b16 %v256
    %v2667 = vunpack.c.l.b16 %v257
    %v2668 = vunpack.c.l.b16 %v258
    %v2669 = vunpack.c.h.b16 %v258
    %v2670 = vunpack.c.l.b16 %v259
    %v2671 = vunpack.c.l.b16 %v260
    %v2672 = vunpack.c.h.b16 %v260
    %v2673 = vunpack.c.l.b16 %v261
    %v2674 = vunpack.c.l.b16 %v262
    %v2675 = vunpack.c.h.b16 %v262
    %v2676 = vunpack.c.l.b16 %v263
    %v2677 = vunpack.c.l.b16 %v264
    %v2678 = vunpack.c.h.b16 %v264
    %v2679 = vunpack.c.l.b16 %v265
    %v2680 = vunpack.c.l.b16 %v266
    %v2681 = vunpack.c.h.b16 %v266
    %v2682 = vunpack.c.l.b16 %v267
    %v2683 = vunpack.c.l.b16 %v268
    %v2684 = vunpack.c.h.b16 %v268
    %v2685 = vunpack.c.l.b16 %v269
    %v2686 = vunpack.c.l.b16 %v270
    %v2687 = vunpack.c.h.b16 %v270
    %v2688 = vunpack.c.l.b16 %v271
    %v2689 = vunpack.c.l.b16 %v272
    %v2690 = vunpack.c.h.b16 %v272
    %v2691 = vunpack.c.l.b16 %v273
    %v2692 = vunpack.c.l.b16 %v274
    %v2693 = vunpack.c.h.b16 %v274
    %v2694 = vunpack.c.l.b16 %v275
    %v2695 = vunpack.c.l.b16 %v276
    %v2696 = vunpack.c.h.b16 %v276
    %v2697 = vunpack.c.l.b16 %v277
    %v2698 = vunpack.c.l.b16 %v278
    %v2699 = vunpack.c.h.b16 %v278
    %v2700 = vunpack.c.l.b16 %v279
    %v2701 = vunpack.c.l.b16 %v280
    %v2702 = vunpack.c.h.b16 %v280
    %v2703 = vunpack.c.l.b16 %v281
    %v2704 = vunpack.c.l.b16 %v282
    %v2705 = vunpack.c.h.b16 %v282
    %v2706 = vunpack.c.l.b16 %v283
    %v2707 = vunpack.c.l.b16 %v284
    %v2708 = vunpack.c.h.b16 %v284
    %v2709 = vunpack.c.l.b16 %v285
    %v2710 = vunpack.c.l.b16 %v286
    %v2711 = vunpack.c.h.b16 %v286
    %v2712 = vunpack.c.l.b16 %v287
    %v2713 = vunpack.c.l.b16 %v288
    %v2714 = vunpack.c.h.b16 %v288
    %v2715 = vunpack.c.l.b16 %v289
    %v2716 = vunpack.c.l.b16 %v290
    %v2717 = vunpack.c.h.b16 %v290
    %v2718 = vunpack.c.l.b16 %v291
    %v2719 = vunpack.c.l.b16 %v292
    %v2720 = vunpack.c.h.b16 %v292
    %v2721 = vunpack.c.l.b16 %v293
    %v2722 = vunpack.c.l.b16 %v294
    %v2723 = vunpack.c.h.b16 %v294
    %v2724 = vunpack.c.l.b16 %v295
    %v2725 = vunpack.c.l.b16 %v296
    %v2726 = vunpack.c.h.b16 %v296
    %v2727 = vunpack.c.l.b16 %v297
    %v2728 = vunpack.c.l.b16 %v298
    %v2729 = vunpack.c.h.b16 %v298
    %v2730 = vunpack.c.l.b16 %v299
    %v2731 = vunpack.c.l.b16 %v300
    %v2732 = vunpack.c.h.b16 %v300
    %v2733 = vunpack.c.l.b16 %v301
    %v2734 = vunpack.c.l.b16 %v302
    %v2735 = vunpack.c.h.b16 %v302
    %v2736 = vunpack.c.l.b16 %v303
    %v2737 = vunpack.c.l.b16 %v304
    %v2738 = vunpack.c.h.b16 %v304
    %v2739 = vunpack.c.l.b16 %v305
    %v2740 = vunpack.c.l.b16 %v306
    %v2741 = vunpack.c.h.b16 %v306
    %v2742 = vunpack.c.l.b16 %v307
    %v2743 = vunpack.c.l.b16 %v308
    %v2744 = vunpack.c.h.b16 %v308
    %v2745 = vunpack.c.l.b16 %v309
    %v2746 = vunpack.c.l.b16 %v310
    %v2747 = vunpack.c.h.b16 %v310
    %v2748 = vunpack.c.l.b16 %v311
    %v2749 = vunpack.c.l.b16 %v312
    %v2750 = vunpack.c.h.b16 %v312
    %v2751 = vunpack.c.l.b16 %v313
    %v2752 = vunpack.c.l.b16 %v314
    %v2753 = vunpack.c.h.b16 %v314
    %v2754 = vunpack.c.l.b16 %v315
    %v2755 = vunpack.c.l.b16 %v316
    %v2756 = vunpack.c.h.b16 %v316
    %v2757 = vunpack.c.l.b16 %v317
    %v2758 = vunpack.c.l.b16 %v318
    %v2759 = vunpack.c.h.b16 %v318
    %v2760 = vunpack.c.l.b16 %v319
    %v2761 = vunpack.c.l.b16 %v320
    %v2762 = vunpack.c.h.b16 %v320
    %v2763 = vunpack.c.l.b16 %v321
    %v2764 = vunpack.c.l.b16 %v322
    %v2765 = vunpack.c.h.b16 %v322
    %v2766 = vunpack.c.l.b16 %v323
    %v2767 = vunpack.c.l.b16 %v324
    %v2768 = vunpack.c.h.b16 %v324
    %v2769 = vunpack.c.l.b16 %v325
    %v2770 = vunpack.c.l.b16 %v326
    %v2771 = vunpack.c.h.b16 %v326
    %v2772 = vunpack.c.l.b16 %v327
    %v2773 = vunpack.c.l.b16 %v328
    %v2774 = vunpack.c.h.b16 %v328
    %v2775 = vunpack.c.l.b16 %v329
    %v2776 = vunpack.c.l.b16 %v330
    %v2777 = vunpack.c.h.b16 %v330
    %v2778 = vunpack.c.l.b16 %v331
    %v2779 = vunpack.c.l.b16 %v332
    %v2780 = vunpack.c.h.b16 %v332
    %v2781 = vunpack.c.l.b16 %v333
    %v2782 = vunpack.c.l.b16 %v334
    %v2783 = vunpack.c.h.b16 %v334
    %v2784 = vunpack.c.l.b16 %v335
    %v2785 = vunpack.c.l.b16 %v336
    %v2786 = vunpack.c.h.b16 %v336
    %v2787 = vunpack.c.l.b16 %v337
    %v2788 = vunpack.c.l.b16 %v338
    %v2789 = vunpack.c.h.b16 %v338
    %v2790 = vunpack.c.l.b16 %v339
    %v2791 = vunpack.c.l.b16 %v340
    %v2792 = vunpack.c.h.b16 %v340
    %v2793 = vunpack.c.l.b16 %v341
    %v2794 = vunpack.c.l.b16 %v342
    %v2795 = vunpack.c.h.b16 %v342
    %v2796 = vunpack.c.l.b16 %v343
    %v2797 = vunpack.c.l.b16 %v344
    %v2798 = vunpack.c.h.b16 %v344
    %v2799 = vunpack.c.l.b16 %v345
    %v2800 = vunpack.c.l.b16 %v346
    %v2801 = vunpack.c.h.b16 %v346
    %v2802 = vunpack.c.l.b16 %v347
    %v2803 = vunpack.c.l.b16 %v348
    %v2804 = vunpack.c.h.b16 %v348
    %v2805 = vunpack.c.l.b16 %v349
    %v2806 = vunpack.c.l.b16 %v350
    %v2807 = vunpack.c.h.b16 %v350
    %v2808 = vunpack.c.l.b16 %v351
    %v2809 = vunpack.c.l.b16 %v352
    %v2810 = vunpack.c.h.b16 %v352
    %v2811 = vunpack.c.l.b16 %v353
    %v2812 = vunpack.c.l.b16 %v354
    %v2813 = vunpack.c.h.b16 %v354
    %v2814 = vunpack.c.l.b16 %v355
    %v2815 = vunpack.c.l.b16 %v356
    %v2816 = vunpack.c.h.b16 %v356
    %v2817 = vunpack.c.l.b16 %v357
    %v2818 = vunpack.c.l.b16 %v358
    %v2819 = vunpack.c.h.b16 %v358
    %v2820 = vunpack.c.l.b16 %v359
    %v2821 = vunpack.c.l.b16 %v360
    %v2822 = vunpack.c.h.b16 %v360
    %v2823 = vunpack.c.l.b16 %v361
    %v2824 = vunpack.c.l.b16 %v362
    %v2825 = vunpack.c.h.b16 %v362
    %v2826 = vunpack.c.l.b16 %v363
    %v2827 = vunpack.c.l.b16 %v364
    %v2828 = vunpack.c.h.b16 %v364
    %v2829 = vunpack.c.l.b16 %v365
    %v2830 = vunpack.c.l.b16 %v366
    %v2831 = vunpack.c.h.b16 %v366
    %v2832 = vunpack.c.l.b16 %v367
    %v2833 = vunpack.c.l.b16 %v368
    %v2834 = vunpack.c.h.b16 %v368
    %v2835 = vunpack.c.l.b16 %v369
    %v2836 = vunpack.c.l.b16 %v370
    %v2837 = vunpack.c.h.b16 %v370
    %v2838 = vunpack.c.l.b16 %v371
    %v2839 = vunpack.c.l.b16 %v372
    %v2840 = vunpack.c.h.b16 %v372
    %v2841 = vunpack.c.l.b16 %v373
    %v2842 = vunpack.c.l.b16 %v374
    %v2843 = vunpack.c.h.b16 %v374
    %v2844 = vunpack.c.l.b16 %v375
    %v2845 = vunpack.c.l.b16 %v376
    %v2846 = vunpack.c.h.b16 %v376
    %v2847 = vunpack.c.l.b16 %v377
    %v2848 = vunpack.c.l.b16 %v378
    %v2849 = vunpack.c.h.b16 %v378
    %v2850 = vunpack.c.l.b16 %v379
    %v2851 = vunpack.c.l.b16 %v380
    %v2852 = vunpack.c.h.b16 %v380
    %v2853 = vunpack.c.l.b16 %v381
    %v2854 = vunpack.c.l.b16 %v382
    %v2855 = vunpack.c.h.b16 %v382
    %v2856 = vunpack.c.l.b16 %v383
    %v2857 = vunpack.c.l.b16 %v384
    %v2858 = vunpack.c.h.b16 %v384
    %v2859 = vunpack.c.l.b16 %v385
    %v2860 = vunpack.c.l.b16 %v386
    %v2861 = vunpack.c.h.b16 %v386
    %v2862 = vunpack.c.l.b16 %v387
    %v2863 = vunpack.c.l.b16 %v388
    %v2864 = vunpack.c.h.b16 %v388
    %v2865 = vunpack.c.l.b16 %v389
    %v2866 = vunpack.c.l.b16 %v390
    %v2867 = vunpack.c.h.b16 %v390
    %v2868 = vunpack.c.l.b16 %v391
    %v2869 = vunpack.c.l.b16 %v392
    %v2870 = vunpack.c.h.b16 %v392
    %v2871 = vunpack.c.l.b16 %v393
    %v2872 = vunpack.c.l.b16 %v394
    %v2873 = vunpack.c.h.b16 %v394
    %v2874 = vunpack.c.l.b16 %v395
    %v2875 = vunpack.c.l.b16 %v396
    %v2876 = vunpack.c.h.b16 %v396
    %v2877 = vunpack.c.l.b16 %v397
    %v2878 = vunpack.c.l.b16 %v398
    %v2879 = vunpack.c.h.b16 %v398
    %v2880 = vunpack.c.l.b16 %v399
    %v2881 = vunpack.c.l.b16 %v400
    %v2882 = vunpack.c.h.b16 %v400
    %v2883 = vunpack.c.l.b16 %v401
    %v2884 = vunpack.c.l.b16 %v402
    %v2885 = vunpack.c.h.b16 %v402
    %v2886 = vunpack.c.l.b16 %v403
    %v2887 = vunpack.c.l.b16 %v404
    %v2888 = vunpack.c.h.b16 %v404
    %v2889 = vunpack.c.l.b16 %v405
    %v2890 = vunpack.c.l.b16 %v406
    %v2891 = vunpack.c.h.b16 %v406
    %v2892 = vunpack.c.l.b16 %v407
    %v2893 = vunpack.c.l.b16 %v408
    %v2894 = vunpack.c.h.b16 %v408
    %v2895 = vunpack.c.l.b16 %v409
    %v2896 = vunpack.c.l.b16 %v410
    %v2897 = vunpack.c.h.b16 %v410
    %v2898 = vunpack.c.l.b16 %v411
    %v2899 = vunpack.c.l.b16 %v412
    %v2900 = vunpack.c.h.b16 %v412
    %v2901 = vunpack.c.l.b16 %v413
    %v2902 = vunpack.c.l.b16 %v414
    %v2903 = vunpack.c.h.b16 %v414
    %v2904 = vunpack.c.l.b16 %v415
    %v2905 = vunpack.c.l.b16 %v416
    %v2906 = vunpack.c.h.b16 %v416
    %v2907 = vunpack.c.l.b16 %v417
    %v2908 = vunpack.c.l.b16 %v418
    %v2909 = vunpack.c.h.b16 %v418
    %v2910 = vunpack.c.l.b16 %v419
    %v2911 = vunpack.c.l.b16 %v420
    %v2912 = vunpack.c.h.b16 %v420
    %v2913 = vunpack.c.l.b16 %v421
    %v2914 = vunpack.c.l.b16 %v422
    %v2915 = vunpack.c.h.b16 %v422
    %v2916 = vunpack.c.l.b16 %v423
    %v2917 = vunpack.c.l.b16 %v424
    %v2918 = vunpack.c.h.b16 %v424
    %v2919 = vunpack.c.l.b16 %v425
    %v2920 = vunpack.c.l.b16 %v426
    %v2921 = vunpack.c.h.b16 %v426
    %v2922 = vunpack.c.l.b16 %v427
    %v2923 = vunpack.c.l.b16 %v428
    %v2924 = vunpack.c.h.b16 %v428
    %v2925 = vunpack.c.l.b16 %v429
    %v2926 = vunpack.c.l.b16 %v430
    %v2927 = vunpack.c.h.b16 %v430
    %v2928 = vunpack.c.l.b16 %v431
    %v2929 = vunpack.c.l.b16 %v432
    %v2930 = vunpack.c.h.b16 %v432
    %v2931 = vunpack.c.l.b16 %v433
    %v2932 = vunpack.c.l.b16 %v434
    %v2933 = vunpack.c.h.b16 %v434
    %v2934 = vunpack.c.l.b16 %v435
    %v2935 = vunpack.c.l.b16 %v436
    %v2936 = vunpack.c.h.b16 %v436
    %v2937 = vunpack.c.l.b16 %v437
    %v2938 = vunpack.c.l.b16 %v438
    %v2939 = vunpack.c.h.b16 %v438
    %v2940 = vunpack.c.l.b16 %v439
    %v2941 = vunpack.c.l.b16 %v440
    %v2942 = vunpack.c.h.b16 %v440
    %v2943 = vunpack.c.l.b16 %v441
    %v2944 = vunpack.c.l.b16 %v442
    %v2945 = vunpack.c.h.b16 %v442
    %v2946 = vunpack.c.l.b16 %v443
    %v2947 = vunpack.c.l.b16 %v444
    %v2948 = vunpack.c.h.b16 %v444
    %v2949 = vunpack.c.l.b16 %v445
    %v2950 = vunpack.c.l.b16 %v446
    %v2951 = vunpack.c.h.b16 %v446
    %v2952 = vunpack.c.l.b16 %v447
    %v2953 = vunpack.c.l.b16 %v448
    %v2954 = vunpack.c.h.b16 %v448
    %v2955 = vunpack.c.l.b16 %v449
    %v2956 = vunpack.c.l.b16 %v450
    %v2957 = vunpack.c.h.b16 %v450
    %v2958 = vunpack.c.l.b16 %v451
    %v2959 = vunpack.c.l.b16 %v452
    %v2960 = vunpack.c.h.b16 %v452
    %v2961 = vunpack.c.l.b16 %v453
    %v2962 = vunpack.c.l.b16 %v454
    %v2963 = vunpack.c.h.b16 %v454
    %v2964 = vunpack.c.l.b16 %v455
    %v2965 = vunpack.c.l.b16 %v456
    %v2966 = vunpack.c.h.b16 %v456
    %v2967 = vunpack.c.l.b16 %v457
    %v2968 = vunpack.c.l.b16 %v458
    %v2969 = vunpack.c.h.b16 %v458
    %v2970 = vunpack.c.l.b16 %v459
    %v2971 = vunpack.c.l.b16 %v460
    %v2972 = vunpack.c.h.b16 %v460
    %v2973 = vunpack.c.l.b16 %v461
    %v2974 = vunpack.c.l.b16 %v462
    %v2975 = vunpack.c.h.b16 %v462
    %v2976 = vunpack.c.l.b16 %v463
    %v2977 = vunpack.c.l.b16 %v464
    %v2978 = vunpack.c.h.b16 %v464
    %v2979 = vunpack.c.l.b16 %v465
    %v2980 = vunpack.c.l.b16 %v466
    %v2981 = vunpack.c.h.b16 %v466
    %v2982 = vunpack.c.l.b16 %v467
    %v2983 = vunpack.c.l.b16 %v468
    %v2984 = vunpack.c.h.b16 %v468
    %v2985 = vunpack.c.l.b16 %v469
    %v2986 = vunpack.c.l.b16 %v470
    %v2987 = vunpack.c.h.b16 %v470
    %v2988 = vunpack.c.l.b16 %v471
    %v2989 = vunpack.c.l.b16 %v472
    %v2990 = vunpack.c.h.b16 %v472
    %v2991 = vunpack.c.l.b16 %v473
    %v2992 = vunpack.c.l.b16 %v474
    %v2993 = vunpack.c.h.b16 %v474
    %v2994 = vunpack.c.l.b16 %v475
    %v2995 = vunpack.c.l.b16 %v476
    %v2996 = vunpack.c.h.b16 %v476
    %v2997 = vunpack.c.l.b16 %v477
    %v2998 = vunpack.c.l.b16 %v478
    %v2999 = vunpack.c.h.b16 %v478
    %v3000 = vunpack.c.l.b16 %v479
    %v3001 = vunpack.c.l.b16 %v480
    %v3002 = vunpack.c.h.b16 %v480
    %v3003 = vunpack.c.l.b16 %v481
    %v3004 = vunpack.c.l.b16 %v482
    %v3005 = vunpack.c.h.b16 %v482
    %v3006 = vunpack.c.l.b16 %v483
    %v3007 = vunpack.c.l.b16 %v484
    %v3008 = vunpack.c.h.b16 %v484
    %v3009 = vunpack.c.l.b16 %v485
    %v3010 = vunpack.c.l.b16 %v486
    %v3011 = vunpack.c.h.b16 %v486
    %v3012 = vunpack.c.l.b16 %v487
    %v3013 = vunpack.c.l.b16 %v488
    %v3014 = vunpack.c.h.b16 %v488
    %v3015 = vunpack.c.l.b16 %v489
    %v3016 = vunpack.c.l.b16 %v490
    %v3017 = vunpack.c.h.b16 %v490
    %v3018 = vunpack.c.l.b16 %v491
    %v3019 = vunpack.c.l.b16 %v492
    %v3020 = vunpack.c.h.b16 %v492
    %v3021 = vunpack.c.l.b16 %v493
    %v3022 = vunpack.c.l.b16 %v494
    %v3023 = vunpack.c.h.b16 %v494
    %v3024 = vunpack.c.l.b16 %v495
    %v3025 = vunpack.c.l.b16 %v496
    %v3026 = vunpack.c.h.b16 %v496
    %v3027 = vunpack.c.l.b16 %v497
    %v3028 = vunpack.c.l.b16 %v498
    %v3029 = vunpack.c.h.b16 %v498
    %v3030 = vunpack.c.l.b16 %v499
    %v3031 = vunpack.c.l.b16 %v500
    %v3032 = vunpack.c.h.b16 %v500
    %v3033 = vunpack.c.l.b16 %v501
    %v3034 = vunpack.c.l.b16 %v502
    %v3035 = vunpack.c.h.b16 %v502
    %v3036 = vunpack.c.l.b16 %v503
    %v3037 = vunpack.c.l.b16 %v504
    %v3038 = vunpack.c.h.b16 %v504
    %v3039 = vunpack.c.l.b16 %v505
    %v3040 = vunpack.c.l.b16 %v506
    %v3041 = vunpack.c.h.b16 %v506
    %v3042 = vunpack.c.l.b16 %v507
    %v3043 = vunpack.c.l.b16 %v508
    %v3044 = vunpack.c.h.b16 %v508
    %v3045 = vunpack.c.l.b16 %v509
    %v3046 = vunpack.c.l.b16 %v510
    %v3047 = vunpack.c.h.b16 %v510
    %v3048 = vunpack.c.l.b16 %v511
    %v3049 = vunpack.c.l.b16 %v512
    %v3050 = vunpack.c.h.b16 %v512
    %v3051 = vunpack.c.l.b16 %v513
    %v3052 = vunpack.c.l.b16 %v514
    %v3053 = vunpack.c.h.b16 %v514
    %v3054 = vunpack.c.l.b16 %v515
    %v3055 = vunpack.c.l.b16 %v516
    %v3056 = vunpack.c.h.b16 %v516
    %v3057 = vunpack.c.l.b16 %v517
    %v3058 = vunpack.c.l.b16 %v518
    %v3059 = vunpack.c.h.b16 %v518
    %v3060 = vunpack.c.l.b16 %v519
    %v3061 = vunpack.c.l.b16 %v520
    %v3062 = vunpack.c.h.b16 %v520
    %v3063 = vunpack.c.l.b16 %v521
    %v3064 = vunpack.c.l.b16 %v522
    %v3065 = vunpack.c.h.b16 %v522
    %v3066 = vunpack.c.l.b16 %v523
    %v3067 = vunpack.c.l.b16 %v524
    %v3068 = vunpack.c.h.b16 %v524
    %v3069 = vunpack.c.l.b16 %v525
    %v3070 = vunpack.c.l.b16 %v526
    %v3071 = vunpack.c.h.b16 %v526
    %v3072 = vunpack.c.l.b16 %v527
    %v3073 = vunpack.c.l.b16 %v528
    %v3074 = vunpack.c.h.b16 %v528
    %v3075 = vunpack.c.l.b16 %v529
    %v3076 = vunpack.c.l.b16 %v530
    %v3077 = vunpack.c.h.b16 %v530
    %v3078 = vunpack.c.l.b16 %v531
    %v3079 = vunpack.c.l.b16 %v532
    %v3080 = vunpack.c.h.b16 %v532
    %v3081 = vunpack.c.l.b16 %v533
    %v3082 = vunpack.c.l.b16 %v534
    %v3083 = vunpack.c.h.b16 %v534
    %v3084 = vunpack.c.l.b16 %v535
    %v3085 = vunpack.c.l.b16 %v536
    %v3086 = vunpack.c.h.b16 %v536
    %v3087 = vunpack.c.l.b16 %v537
    %v3088 = vunpack.c.l.b16 %v538
    %v3089 = vunpack.c.h.b16 %v538
    %v3090 = vunpack.c.l.b16 %v539
    %v3091 = vunpack.c.l.b16 %v540
    %v3092 = vunpack.c.h.b16 %v540
    %v3093 = vunpack.c.l.b16 %v541
    %v3094 = vunpack.c.l.b16 %v542
    %v3095 = vunpack.c.h.b16 %v542
    %v3096 = vunpack.c.l.b16 %v543
    %v3097 = vunpack.c.l.b16 %v544
    %v3098 = vunpack.c.h.b16 %v544
    %v3099 = vunpack.c.l.b16 %v545
    %v3100 = vunpack.c.l.b16 %v546
    %v3101 = vunpack.c.h.b16 %v546
    %v3102 = vunpack.c.l.b16 %v547
    %v3103 = vunpack.c.l.b16 %v548
    %v3104 = vunpack.c.h.b16 %v548
    %v3105 = vunpack.c.l.b16 %v549
    %v3106 = vunpack.c.l.b16 %v550
    %v3107 = vunpack.c.h.b16 %v550
    %v3108 = vunpack.c.l.b16 %v551
    %v3109 = vunpack.c.l.b16 %v552
    %v3110 = vunpack.c.h.b16 %v552
    %v3111 = vunpack.c.l.b16 %v553
    %v3112 = vunpack.c.l.b16 %v554
    %v3113 = vunpack.c.h.b16 %v554
    %v3114 = vunpack.c.l.b16 %v555
    %v3115 = vunpack.c.l.b16 %v556
    %v3116 = vunpack.c.h.b16 %v556
    %v3117 = vunpack.c.l.b16 %v557
    %v3118 = vunpack.c.l.b16 %v558
    %v3119 = vunpack.c.h.b16 %v558
    %v3120 = vunpack.c.l.b16 %v559
    %v3121 = vunpack.c.l.b16 %v560
    %v3122 = vunpack.c.h.b16 %v560
    %v3123 = vunpack.c.l.b16 %v561
    %v3124 = vunpack.c.l.b16 %v562
    %v3125 = vunpack.c.h.b16 %v562
    %v3126 = vunpack.c.l.b16 %v563
    %v3127 = vunpack.c.l.b16 %v564
    %v3128 = vunpack.c.h.b16 %v564
    %v3129 = vunpack.c.l.b16 %v565
    %v3130 = vunpack.c.l.b16 %v566
    %v3131 = vunpack.c.h.b16 %v566
    %v3132 = vunpack.c.l.b16 %v567
    %v3133 = vunpack.c.l.b16 %v568
    %v3134 = vunpack.c.h.b16 %v568
    %v3135 = vunpack.c.l.b16 %v569
    %v3136 = vunpack.c.l.b16 %v570
    %v3137 = vunpack.c.h.b16 %v570
    %v3138 = vunpack.c.l.b16 %v571
    %v3139 = vunpack.c.l.b16 %v572
    %v3140 = vunpack.c.h.b16 %v572
    %v3141 = vunpack.c.l.b16 %v573
    %v3142 = vunpack.c.l.b16 %v574
    %v3143 = vunpack.c.h.b16 %v574
    %v3144 = vunpack.c.l.b16 %v575
    %v3145 = vunpack.c.l.b16 %v576
    %v3146 = vunpack.c.h.b16 %v576
    %v3147 = vunpack.c.l.b16 %v577
    %v3148 = vunpack.c.l.b16 %v578
    %v3149 = vunpack.c.h.b16 %v578
    %v3150 = vunpack.c.l.b16 %v579
    %v3151 = vunpack.c.l.b16 %v580
    %v3152 = vunpack.c.h.b16 %v580
    %v3153 = vunpack.c.l.b16 %v581
    %v3154 = vunpack.c.l.b16 %v582
    %v3155 = vunpack.c.h.b16 %v582
    %v3156 = vunpack.c.l.b16 %v583
    %v3157 = vunpack.c.l.b16 %v584
    %v3158 = vunpack.c.h.b16 %v584
    %v3159 = vunpack.c.l.b16 %v585
    %v3160 = vunpack.c.l.b16 %v586
    %v3161 = vunpack.c.h.b16 %v586
    %v3162 = vunpack.c.l.b16 %v587
    %v3163 = vunpack.c.l.b16 %v588
    %v3164 = vunpack.c.h.b16 %v588
    %v3165 = vunpack.c.l.b16 %v589
    %v3166 = vunpack.c.l.b16 %v590
    %v3167 = vunpack.c.h.b16 %v590
    %v3168 = vunpack.c.l.b16 %v591
    %v3169 = vunpack.c.l.b16 %v592
    %v3170 = vunpack.c.h.b16 %v592
    %v3171 = vunpack.c.l.b16 %v593
    %v3172 = vunpack.c.l.b16 %v594
    %v3173 = vunpack.c.h.b16 %v594
    %v3174 = vunpack.c.l.b16 %v595
    %v3175 = vunpack.c.l.b16 %v596
    %v3176 = vunpack.c.h.b16 %v596
    %v3177 = vunpack.c.l.b16 %v597
    %v3178 = vunpack.c.l.b16 %v598
    %v3179 = vunpack.c.h.b16 %v598
    %v3180 = vunpack.c.l.b16 %v599
    %v3181 = vunpack.c.l.b16 %v600
    %v3182 = vunpack.c.h.b16 %v600
    %v3183 = vunpack.c.l.b16 %v601
    %v3184 = vunpack.c.l.b16 %v602
    %v3185 = vunpack.c.h.b16 %v602
    %v3186 = vunpack.c.l.b16 %v603
    %v3187 = vunpack.c.l.b16 %v604
    %v3188 = vunpack.c.h.b16 %v604
    %v3189 = vunpack.c.l.b16 %v605
    %v3190 = vunpack.c.l.b16 %v606
    %v3191 = vunpack.c.h.b16 %v606
    %v3192 = vunpack.c.l.b16 %v607
    %v3193 = vunpack.c.l.b16 %v608
    %v3194 = vunpack.c.h.b16 %v608
    %v3195 = vunpack.c.l.b16 %v609
    %v3196 = vunpack.c.l.b16 %v610
    %v3197 = vunpack.c.h.b16 %v610
    %v3198 = vunpack.c.l.b16 %v611
    %v3199 = vunpack.c.l.b16 %v612
    %v3200 = vunpack.c.h.b16 %v612
    %v3201 = vunpack.c.l.b16 %v613
    %v3202 = vunpack.c.l.b16 %v614
    %v3203 = vunpack.c.h.b16 %v614
    %v3204 = vunpack.c.l.b16 %v615
    %v3205 = vunpack.c.l.b16 %v616
    %v3206 = vunpack.c.h.b16 %v616
    %v3207 = vunpack.c.l.b16 %v617
    %v3208 = vunpack.c.l.b16 %v618
    %v3209 = vunpack.c.h.b16 %v618
    %v3210 = vunpack.c.l.b16 %v619
    %v3211 = vunpack.c.l.b16 %v620
    %v3212 = vunpack.c.h.b16 %v620
    %v3213 = vunpack.c.l.b16 %v621
    %v3214 = vunpack.c.l.b16 %v622
    %v3215 = vunpack.c.h.b16 %v622
    %v3216 = vunpack.c.l.b16 %v623
    %v3217 = vunpack.c.l.b16 %v624
    %v3218 = vunpack.c.h.b16 %v624
    %v3219 = vunpack.c.l.b16 %v625
    %v3220 = vunpack.c.l.b16 %v626
    %v3221 = vunpack.c.h.b16 %v626
    %v3222 = vunpack.c.l.b16 %v627
    %v3223 = vunpack.c.l.b16 %v628
    %v3224 = vunpack.c.h.b16 %v628
    %v3225 = vunpack.c.l.b16 %v629
    %v3226 = vunpack.c.l.b16 %v630
    %v3227 = vunpack.c.h.b16 %v630
    %v3228 = vunpack.c.l.b16 %v631
    %v3229 = vunpack.c.l.b16 %v632
    %v3230 = vunpack.c.h.b16 %v632
    %v3231 = vunpack.c.l.b16 %v633
    %v3232 = vunpack.c.l.b16 %v634
    %v3233 = vunpack.c.h.b16 %v634
    %v3234 = vunpack.c.l.b16 %v635
    %v3235 = vunpack.c.l.b16 %v636
    %v3236 = vunpack.c.h.b16 %v636
    %v3237 = vunpack.c.l.b16 %v637
    %v3238 = vunpack.c.l.b16 %v638
    %v3239 = vunpack.c.h.b16 %v638
    %v3240 = vunpack.c.l.b16 %v639
    %v3241 = vunpack.c.l.b16 %v640
    %v3242 = vunpack.c.h.b16 %v640
    %v3243 = vunpack.c.l.b16 %v641
    %v3244 = vunpack.c.l.b16 %v642
    %v3245 = vunpack.c.h.b16 %v642
    %v3246 = vunpack.c.l.b16 %v643
    %v3247 = vunpack.c.l.b16 %v644
    %v3248 = vunpack.c.h.b16 %v644
    %v3249 = vunpack.c.l.b16 %v645
    %v3250 = vunpack.c.l.b16 %v646
    %v3251 = vunpack.c.h.b16 %v646
    %v3252 = vunpack.c.l.b16 %v647
    %v3253 = vunpack.c.l.b16 %v648
    %v3254 = vunpack.c.h.b16 %v648
    %v3255 = vunpack.c.l.b16 %v649
    %v3256 = vunpack.c.l.b16 %v650
    %v3257 = vunpack.c.h.b16 %v650
    %v3258 = vunpack.c.l.b16 %v651
    %v3259 = vunpack.c.l.b16 %v652
    %v3260 = vunpack.c.h.b16 %v652
    %v3261 = vunpack.c.l.b16 %v653
    %v3262 = vunpack.c.l.b16 %v654
    %v3263 = vunpack.c.h.b16 %v654
    %v3264 = vunpack.c.l.b16 %v655
    %v3265 = vunpack.c.l.b16 %v656
    %v3266 = vunpack.c.h.b16 %v656
    %v3267 = vunpack.c.l.b16 %v657
    %v3268 = vunpack.c.l.b16 %v658
    %v3269 = vunpack.c.h.b16 %v658
    %v3270 = vunpack.c.l.b16 %v659
    %v3271 = vunpack.c.l.b16 %v660
    %v3272 = vunpack.c.h.b16 %v660
    %v3273 = vunpack.c.l.b16 %v661
    %v3274 = vunpack.c.l.b16 %v662
    %v3275 = vunpack.c.h.b16 %v662
    %v3276 = vunpack.c.l.b16 %v663
    %v3277 = vunpack.c.l.b16 %v664
    %v3278 = vunpack.c.h.b16 %v664
    %v3279 = vunpack.c.l.b16 %v665
    %v3280 = vunpack.c.l.b16 %v666
    %v3281 = vunpack.c.h.b16 %v666
    %v3282 = vunpack.c.l.b16 %v667
    %v3283 = vunpack.c.l.b16 %v668
    %v3284 = vunpack.c.h.b16 %v668
    %v3285 = vunpack.c.l.b16 %v669
    %v3286 = vunpack.c.l.b16 %v670
    %v3287 = vunpack.c.h.b16 %v670
    %v3288 = vunpack.c.l.b16 %v671
    %v3289 = vunpack.c.l.b16 %v672
    %v3290 = vunpack.c.h.b16 %v672
    %v3291 = vunpack.c.l.b16 %v673
    %v3292 = vunpack.c.l.b16 %v674
    %v3293 = vunpack.c.h.b16 %v674
    %v3294 = vunpack.c.l.b16 %v675
    %v3295 = vunpack.c.l.b16 %v676
    %v3296 = vunpack.c.h.b16 %v676
    %v3297 = vunpack.c.l.b16 %v677
    %v3298 = vunpack.c.l.b16 %v678
    %v3299 = vunpack.c.h.b16 %v678
    %v3300 = vunpack.c.l.b16 %v679
    %v3301 = vunpack.c.l.b16 %v680
    %v3302 = vunpack.c.h.b16 %v680
    %v3303 = vunpack.c.l.b16 %v681
    %v3304 = vunpack.c.l.b16 %v682
    %v3305 = vunpack.c.h.b16 %v682
    %v3306 = vunpack.c.l.b16 %v683
    %v3307 = vunpack.c.l.b16 %v684
    %v3308 = vunpack.c.h.b16 %v684
    %v3309 = vunpack.c.l.b16 %v685
    %v3310 = vunpack.c.l.b16 %v686
    %v3311 = vunpack.c.h.b16 %v686
    %v3312 = vunpack.c.l.b16 %v687
    %v3313 = vunpack.c.l.b16 %v688
    %v3314 = vunpack.c.h.b16 %v688
    %v3315 = vunpack.c.l.b16 %v689
    %v3316 = vunpack.c.l.b16 %v690
    %v3317 = vunpack.c.h.b16 %v690
    %v3318 = vunpack.c.l.b16 %v691
    %v3319 = vunpack.c.l.b16 %v692
    %v3320 = vunpack.c.h.b16 %v692
    %v3321 = vunpack.c.l.b16 %v693
    %v3322 = vunpack.c.l.b16 %v694
    %v3323 = vunpack.c.h.b16 %v694
    %v3324 = vunpack.c.l.b16 %v695
    %v3325 = vunpack.c.l.b16 %v696
    %v3326 = vunpack.c.h.b16 %v696
    %v3327 = vunpack.c.l.b16 %v697
    %v3328 = vunpack.c.l.b16 %v698
    %v3329 = vunpack.c.h.b16 %v698
    %v3330 = vunpack.c.l.b16 %v699
    %v3331 = vunpack.c.l.b16 %v700
    %v3332 = vunpack.c.h.b16 %v700
    %v3333 = vunpack.c.l.b16 %v701
    %v3334 = vunpack.c.l.b16 %v702
    %v3335 = vunpack.c.h.b16 %v702
    %v3336 = vunpack.c.l.b16 %v703
    %v3337 = vunpack.c.l.b16 %v704
    %v3338 = vunpack.c.h.b16 %v704
    %v3339 = vunpack.c.l.b16 %v705
    %v3340 = vunpack.c.l.b16 %v706
    %v3341 = vunpack.c.h.b16 %v706
    %v3342 = vunpack.c.l.b16 %v707
    %v3343 = vunpack.c.l.b16 %v708
    %v3344 = vunpack.c.h.b16 %v708
    %v3345 = vunpack.c.l.b16 %v709
    %v3346 = vunpack.c.l.b16 %v710
    %v3347 = vunpack.c.h.b16 %v710
    %v3348 = vunpack.c.l.b16 %v711
    %v3349 = vunpack.c.l.b16 %v712
    %v3350 = vunpack.c.h.b16 %v712
    %v3351 = vunpack.c.l.b16 %v713
    %v3352 = vunpack.c.l.b16 %v714
    %v3353 = vunpack.c.h.b16 %v714
    %v3354 = vunpack.c.l.b16 %v715
    %v3355 = vunpack.c.l.b16 %v716
    %v3356 = vunpack.c.h.b16 %v716
    %v3357 = vunpack.c.l.b16 %v717
    %v3358 = vunpack.c.l.b16 %v718
    %v3359 = vunpack.c.h.b16 %v718
    %v3360 = vunpack.c.l.b16 %v719
    %v3361 = vunpack.c.l.b16 %v720
    %v3362 = vunpack.c.h.b16 %v720
    %v3363 = vunpack.c.l.b16 %v721
    %v3364 = vunpack.c.l.b16 %v722
    %v3365 = vunpack.c.h.b16 %v722
    %v3366 = vunpack.c.l.b16 %v723
    %v3367 = vunpack.c.l.b16 %v724
    %v3368 = vunpack.c.h.b16 %v724
    %v3369 = vunpack.c.l.b16 %v725
    %v3370 = vunpack.c.l.b16 %v726
    %v3371 = vunpack.c.h.b16 %v726
    %v3372 = vunpack.c.l.b16 %v727
    %v3373 = vunpack.c.l.b16 %v728
    %v3374 = vunpack.c.h.b16 %v728
    %v3375 = vunpack.c.l.b16 %v729
    %v3376 = vunpack.c.l.b16 %v730
    %v3377 = vunpack.c.h.b16 %v730
    %v3378 = vunpack.c.l.b16 %v731
    %v3379 = vunpack.c.l.b16 %v732
    %v3380 = vunpack.c.h.b16 %v732
    %v3381 = vunpack.c.l.b16 %v733
    %v3382 = vunpack.c.l.b16 %v734
    %v3383 = vunpack.c.h.b16 %v734
    %v3384 = vunpack.c.l.b16 %v735
    %v3385 = vunpack.c.l.b16 %v736
    %v3386 = vunpack.c.h.b16 %v736
    %v3387 = vunpack.c.l.b16 %v737
    %v3388 = vunpack.c.l.b16 %v738
    %v3389 = vunpack.c.h.b16 %v738
    %v3390 = vunpack.c.l.b16 %v739
    %v3391 = vunpack.c.l.b16 %v740
    %v3392 = vunpack.c.h.b16 %v740
    %v3393 = vunpack.c.l.b16 %v741
    %v3394 = vunpack.c.l.b16 %v742
    %v3395 = vunpack.c.h.b16 %v742
    %v3396 = vunpack.c.l.b16 %v743
    %v3397 = vunpack.c.l.b16 %v744
    %v3398 = vunpack.c.h.b16 %v744
    %v3399 = vunpack.c.l.b16 %v745
    %v3400 = vunpack.c.l.b16 %v746
    %v3401 = vunpack.c.h.b16 %v746
    %v3402 = vunpack.c.l.b16 %v747
    %v3403 = vunpack.c.l.b16 %v748
    %v3404 = vunpack.c.h.b16 %v748
    %v3405 = vunpack.c.l.b16 %v749
    %v3406 = vunpack.c.l.b16 %v750
    %v3407 = vunpack.c.h.b16 %v750
    %v3408 = vunpack.c.l.b16 %v751
    %v3409 = vunpack.c.l.b16 %v752
    %v3410 = vunpack.c.h.b16 %v752
    %v3411 = vunpack.c.l.b16 %v753
    %v3412 = vunpack.c.l.b16 %v754
    %v3413 = vunpack.c.h.b16 %v754
    %v3414 = vunpack.c.l.b16 %v755
    %v3415 = vunpack.c.l.b16 %v756
    %v3416 = vunpack.c.h.b16 %v756
    %v3417 = vunpack.c.l.b16 %v757
    %v3418 = vunpack.c.l.b16 %v758
    %v3419 = vunpack.c.h.b16 %v758
    %v3420 = vunpack.c.l.b16 %v759
    %v3421 = vunpack.c.l.b16 %v760
    %v3422 = vunpack.c.h.b16 %v760
    %v3423 = vunpack.c.l.b16 %v761
    %v3424 = vunpack.c.l.b16 %v762
    %v3425 = vunpack.c.h.b16 %v762
    %v3426 = vunpack.c.l.b16 %v763
    %v3427 = vunpack.c.l.b16 %v764
    %v3428 = vunpack.c.h.b16 %v764
    %v3429 = vunpack.c.l.b16 %v765
    %v3430 = vunpack.c.l.b16 %v766
    %v3431 = vunpack.c.h.b16 %v766
    %v3432 = vunpack.c.l.b16 %v767
    %v3433 = vunpack.c.l.b16 %v768
    %v3434 = vunpack.c.h.b16 %v768
    %v3435 = vunpack.c.l.b16 %v769
    %v3436 = vunpack.c.l.b16 %v770
    %v3437 = vunpack.c.h.b16 %v770
    %v3438 = vunpack.c.l.b16 %v771
    %v3439 = vunpack.c.l.b16 %v772
    %v3440 = vunpack.c.h.b16 %v772
    %v3441 = vunpack.c.l.b16 %v773
    %v3442 = vunpack.c.l.b16 %v774
    %v3443 = vunpack.c.h.b16 %v774
    %v3444 = vunpack.c.l.b16 %v775
    %v3445 = vunpack.c.l.b16 %v776
    %v3446 = vunpack.c.h.b16 %v776
    %v3447 = vunpack.c.l.b16 %v777
    %v3448 = vunpack.c.l.b16 %v778
    %v3449 = vunpack.c.h.b16 %v778
    %v3450 = vunpack.c.l.b16 %v779
    %v3451 = vunpack.c.l.b16 %v780
    %v3452 = vunpack.c.h.b16 %v780
    %v3453 = vunpack.c.l.b16 %v781
    %v3454 = vunpack.c.l.b16 %v782
    %v3455 = vunpack.c.h.b16 %v782
    %v3456 = vunpack.c.l.b16 %v783
    %v3457 = vunpack.c.l.b16 %v784
    %v3458 = vunpack.c.h.b16 %v784
    %v3459 = vunpack.c.l.b16 %v785
    %v3460 = vunpack.c.l.b16 %v786
    %v3461 = vunpack.c.h.b16 %v786
    %v3462 = vunpack.c.l.b16 %v787
    %v3463 = vunpack.c.l.b16 %v788
    %v3464 = vunpack.c.h.b16 %v788
    %v3465 = vunpack.c.l.b16 %v789
    %v3466 = vunpack.c.l.b16 %v790
    %v3467 = vunpack.c.h.b16 %v790
    %v3468 = vunpack.c.l.b16 %v791
    %v3469 = vunpack.c.l.b16 %v792
    %v3470 = vunpack.c.h.b16 %v792
    %v3471 = vunpack.c.l.b16 %v793
    %v3472 = vunpack.c.l.b16 %v794
    %v3473 = vunpack.c.h.b16 %v794
    %v3474 = vunpack.c.l.b16 %v795
    %v3475 = vunpack.c.l.b16 %v796
    %v3476 = vunpack.c.h.b16 %v796
    %v3477 = vunpack.c.l.b16 %v797
    %v3478 = vunpack.c.l.b16 %v798
    %v3479 = vunpack.c.h.b16 %v798
    %v3480 = vunpack.c.l.b16 %v799
    %v3481 = vunpack.c.l.b16 %v800
    %v3482 = vunpack.c.h.b16 %v800
    %v3483 = vunpack.c.l.b16 %v801
    %v3484 = vunpack.c.l.b16 %v802
    %v3485 = vunpack.c.h.b16 %v802
    %v3486 = vunpack.c.l.b16 %v803
    %v3487 = vunpack.c.l.b16 %v804
    %v3488 = vunpack.c.h.b16 %v804
    %v3489 = vunpack.c.l.b16 %v805
    %v3490 = vunpack.c.l.b16 %v806
    %v3491 = vunpack.c.h.b16 %v806
    %v3492 = vunpack.c.l.b16 %v807
    %v3493 = vunpack.c.l.b16 %v808
    %v3494 = vunpack.c.h.b16 %v808
    %v3495 = vunpack.c.l.b16 %v809
    %v3496 = vunpack.c.l.b16 %v810
    %v3497 = vunpack.c.h.b16 %v810
    %v3498 = vunpack.c.l.b16 %v811
    %v3499 = vunpack.c.l.b16 %v812
    %v3500 = vunpack.c.h.b16 %v812
    %v3501 = vunpack.c.l.b16 %v813
    %v3502 = vunpack.c.l.b16 %v814
    %v3503 = vunpack.c.h.b16 %v814
    %v3504 = vunpack.c.l.b16 %v815
    %v3505 = vunpack.c.l.b16 %v816
    %v3506 = vunpack.c.h.b16 %v816
    %v3507 = vunpack.c.l.b16 %v817
    %v3508 = vunpack.c.l.b16 %v818
    %v3509 = vunpack.c.h.b16 %v818
    %v3510 = vunpack.c.l.b16 %v819
    %v3511 = vunpack.c.l.b16 %v820
    %v3512 = vunpack.c.h.b16 %v820
    %v3513 = vunpack.c.l.b16 %v821
    %v3514 = vunpack.c.l.b16 %v822
    %v3515 = vunpack.c.h.b16 %v822
    %v3516 = vunpack.c.l.b16 %v823
    %v3517 = vunpack.c.l.b16 %v824
    %v3518 = vunpack.c.h.b16 %v824
    %v3519 = vunpack.c.l.b16 %v825
    %v3520 = vunpack.c.l.b16 %v826
    %v3521 = vunpack.c.h.b16 %v826
    %v3522 = vunpack.c.l.b16 %v827
    %v3523 = vunpack.c.l.b16 %v828
    %v3524 = vunpack.c.h.b16 %v828
    %v3525 = vunpack.c.l.b16 %v829
    %v3526 = vunpack.c.l.b16 %v830
    %v3527 = vunpack.c.h.b16 %v830
    %v3528 = vunpack.c.l.b16 %v831
    %v3529 = vunpack.c.l.b16 %v832
    %v3530 = vunpack.c.h.b16 %v832
    %v3531 = vunpack.c.l.b16 %v833
    %v3532 = vunpack.c.l.b16 %v834
    %v3533 = vunpack.c.h.b16 %v834
    %v3534 = vunpack.c.l.b16 %v835
    %v3535 = vunpack.c.l.b16 %v836
    %v3536 = vunpack.c.h.b16 %v836
    %v3537 = vunpack.c.l.b16 %v837
    %v3538 = vunpack.c.l.b16 %v838
    %v3539 = vunpack.c.h.b16 %v838
    %v3540 = vunpack.c.l.b16 %v839
    %v3541 = vunpack.c.l.b16 %v840
    %v3542 = vunpack.c.h.b16 %v840
    %v3543 = vunpack.c.l.b16 %v841
    %v3544 = vunpack.c.l.b16 %v842
    %v3545 = vunpack.c.h.b16 %v842
    %v3546 = vunpack.c.l.b16 %v843
    %v3547 = vunpack.c.l.b16 %v844
    %v3548 = vunpack.c.h.b16 %v844
    %v3549 = vunpack.c.l.b16 %v845
    %v3550 = vunpack.c.l.b16 %v846
    %v3551 = vunpack.c.h.b16 %v846
    %v3552 = vunpack.c.l.b16 %v847
    %v3553 = vunpack.c.l.b16 %v848
    %v3554 = vunpack.c.h.b16 %v848
    %v3555 = vunpack.c.l.b16 %v849
    %v3556 = vunpack.c.l.b16 %v850
    %v3557 = vunpack.c.h.b16 %v850
    %v3558 = vunpack.c.l.b16 %v851
    %v3559 = vunpack.c.l.b16 %v852
    %v3560 = vunpack.c.h.b16 %v852
    %v3561 = vunpack.c.l.b16 %v853
    %v3562 = vunpack.c.l.b16 %v854
    %v3563 = vunpack.c.h.b16 %v854
    %v3564 = vunpack.c.l.b16 %v855
    %v3565 = vunpack.c.l.b16 %v856
    %v3566 = vunpack.c.h.b16 %v856
    %v3567 = vunpack.c.l.b16 %v857
    %v3568 = vunpack.c.l.b16 %v858
    %v3569 = vunpack.c.h.b16 %v858
    %v3570 = vunpack.c.l.b16 %v859
    %v3571 = vunpack.c.l.b16 %v860
    %v3572 = vunpack.c.h.b16 %v860
    %v3573 = vunpack.c.l.b16 %v861
    %v3574 = vunpack.c.l.b16 %v862
    %v3575 = vunpack.c.h.b16 %v862
    %v3576 = vunpack.c.l.b16 %v863
    %v3577 = vunpack.c.l.b16 %v864
    %v3578 = vunpack.c.h.b16 %v864
    %v3579 = vunpack.c.l.b16 %v865
    %v3580 = vunpack.c.l.b16 %v866
    %v3581 = vunpack.c.h.b16 %v866
    %v3582 = vunpack.c.l.b16 %v867
    %v3583 = vunpack.c.l.b16 %v868
    %v3584 = vunpack.c.h.b16 %v868
    %v3585 = vunpack.c.l.b16 %v869
    %v3586 = vunpack.c.l.b16 %v870
    %v3587 = vunpack.c.h.b16 %v870
    %v3588 = vunpack.c.l.b16 %v871
    %v3589 = vunpack.c.l.b16 %v872
    %v3590 = vunpack.c.h.b16 %v872
    %v3591 = vunpack.c.l.b16 %v873
    %v3592 = vunpack.c.l.b16 %v874
    %v3593 = vunpack.c.h.b16 %v874
    %v3594 = vunpack.c.l.b16 %v875
    %v3595 = vunpack.c.l.b16 %v876
    %v3596 = vunpack.c.h.b16 %v876
    %v3597 = vunpack.c.l.b16 %v877
    %v3598 = vunpack.c.l.b16 %v878
    %v3599 = vunpack.c.h.b16 %v878
    %v3600 = vunpack.c.l.b16 %v879
    %v3601 = vunpack.c.l.b16 %v880
    %v3602 = vunpack.c.h.b16 %v880
    %v3603 = vunpack.c.l.b16 %v881
    %v3604 = vunpack.c.l.b16 %v882
    %v3605 = vunpack.c.h.b16 %v882
    %v3606 = vunpack.c.l.b16 %v883
    %v3607 = vunpack.c.l.b16 %v884
    %v3608 = vunpack.c.h.b16 %v884
    %v3609 = vunpack.c.l.b16 %v885
    %v3610 = vunpack.c.l.b16 %v886
    %v3611 = vunpack.c.h.b16 %v886
    %v3612 = vunpack.c.l.b16 %v887
    %v3613 = vunpack.c.l.b16 %v888
    %v3614 = vunpack.c.h.b16 %v888
    %v3615 = vunpack.c.l.b16 %v889
    %v3616 = vunpack.c.l.b16 %v890
    %v3617 = vunpack.c.h.b16 %v890
    %v3618 = vunpack.c.l.b16 %v891
    %v3619 = vunpack.c.l.b16 %v892
    %v3620 = vunpack.c.h.b16 %v892
    %v3621 = vunpack.c.l.b16 %v893
    %v3622 = vunpack.c.l.b16 %v894
    %v3623 = vunpack.c.h.b16 %v894
    %v3624 = vunpack.c.l.b16 %v895
    %v3625 = vunpack.c.l.b16 %v896
    %v3626 = vunpack.c.h.b16 %v896
    %v3627 = vunpack.c.l.b16 %v897
    %v3628 = vunpack.c.l.b16 %v898
    %v3629 = vunpack.c.h.b16 %v898
    %v3630 = vunpack.c.l.b16 %v899
    %v3631 = vunpack.c.l.b16 %v900
    %v3632 = vunpack.c.h.b16 %v900
    %v3633 = vunpack.c.l.b16 %v901
    %v3634 = vunpack.c.l.b16 %v902
    %v3635 = vunpack.c.h.b16 %v902
    %v3636 = vunpack.c.l.b16 %v903
    %v3637 = vunpack.c.l.b16 %v904
    %v3638 = vunpack.c.h.b16 %v904
    %v3639 = vunpack.c.l.b16 %v905
    %v3640 = vunpack.c.l.b16 %v906
    %v3641 = vunpack.c.h.b16 %v906
    %v3642 = vunpack.c.l.b16 %v907
    %v3643 = vunpack.c.l.b16 %v908
    %v3644 = vunpack.c.h.b16 %v908
    %v3645 = vunpack.c.l.b16 %v909
    %v3646 = vunpack.c.l.b16 %v910
    %v3647 = vunpack.c.h.b16 %v910
    %v3648 = vunpack.c.l.b16 %v911
    %v3649 = vunpack.c.l.b16 %v912
    %v3650 = vunpack.c.h.b16 %v912
    %v3651 = vunpack.c.l.b16 %v913
    %v3652 = vunpack.c.l.b16 %v914
    %v3653 = vunpack.c.h.b16 %v914
    %v3654 = vunpack.c.l.b16 %v915
    %v3655 = vunpack.c.l.b16 %v916
    %v3656 = vunpack.c.h.b16 %v916
    %v3657 = vunpack.c.l.b16 %v917
    %v3658 = vunpack.c.l.b16 %v918
    %v3659 = vunpack.c.h.b16 %v918
    %v3660 = vunpack.c.l.b16 %v919
    %v3661 = vunpack.c.l.b16 %v920
    %v3662 = vunpack.c.h.b16 %v920
    %v3663 = vunpack.c.l.b16 %v921
    %v3664 = vunpack.c.l.b16 %v922
    %v3665 = vunpack.c.h.b16 %v922
    %v3666 = vunpack.c.l.b16 %v923
    %v3667 = vunpack.c.l.b16 %v924
    %v3668 = vunpack.c.h.b16 %v924
    %v3669 = vunpack.c.l.b16 %v925
    %v3670 = vunpack.c.l.b16 %v926
    %v3671 = vunpack.c.h.b16 %v926
    %v3672 = vunpack.c.l.b16 %v927
    %v3673 = vunpack.c.l.b16 %v928
    %v3674 = vunpack.c.h.b16 %v928
    %v3675 = vunpack.c.l.b16 %v929
    %v3676 = vunpack.c.l.b16 %v930
    %v3677 = vunpack.c.h.b16 %v930
    %v3678 = vunpack.c.l.b16 %v931
    %v3679 = vunpack.c.l.b16 %v932
    %v3680 = vunpack.c.h.b16 %v932
    %v3681 = vunpack.c.l.b16 %v933
    %v3682 = vunpack.c.l.b16 %v934
    %v3683 = vunpack.c.h.b16 %v934
    %v3684 = vunpack.c.l.b16 %v935
    %v3685 = vunpack.c.l.b16 %v936
    %v3686 = vunpack.c.h.b16 %v936
    %v3687 = vunpack.c.l.b16 %v937
    %v3688 = vunpack.c.l.b16 %v938
    %v3689 = vunpack.c.h.b16 %v938
    %v3690 = vunpack.c.l.b16 %v939
    %v3691 = vunpack.c.l.b16 %v940
    %v3692 = vunpack.c.h.b16 %v940
    %v3693 = vunpack.c.l.b16 %v941
    %v3694 = vunpack.c.l.b16 %v942
    %v3695 = vunpack.c.h.b16 %v942
    %v3696 = vunpack.c.l.b16 %v943
    %v3697 = vunpack.c.l.b16 %v944
    %v3698 = vunpack.c.h.b16 %v944
    %v3699 = vunpack.c.l.b16 %v945
    %v3700 = vunpack.c.l.b16 %v946
    %v3701 = vunpack.c.h.b16 %v946
    %v3702 = vunpack.c.l.b16 %v947
    %v3703 = vunpack.c.l.b16 %v948
    %v3704 = vunpack.c.h.b16 %v948
    %v3705 = vunpack.c.l.b16 %v949
    %v3706 = vunpack.c.l.b16 %v950
    %v3707 = vunpack.c.h.b16 %v950
    %v3708 = vunpack.c.l.b16 %v951
    %v3709 = vunpack.c.l.b16 %v952
    %v3710 = vunpack.c.h.b16 %v952
    %v3711 = vunpack.c.l.b16 %v953
    %v3712 = vunpack.c.l.b16 %v954
    %v3713 = vunpack.c.h.b16 %v954
    %v3714 = vunpack.c.l.b16 %v955
    %v3715 = vunpack.c.l.b16 %v956
    %v3716 = vunpack.c.h.b16 %v956
    %v3717 = vunpack.c.l.b16 %v957
    %v3718 = vunpack.c.l.b16 %v958
    %v3719 = vunpack.c.h.b16 %v958
    %v3720 = vunpack.c.l.b16 %v959
    %v3721 = vunpack.c.l.b16 %v960
    %v3722 = vunpack.c.h.b16 %v960
    %v3723 = vunpack.c.l.b16 %v961
    %v3724 = vunpack.c.l.b16 %v962
    %v3725 = vunpack.c.h.b16 %v962
    %v3726 = vunpack.c.l.b16 %v963
    %v3727 = vunpack.c.l.b16 %v964
    %v3728 = vunpack.c.h.b16 %v964
    %v3729 = vunpack.c.l.b16 %v965
    %v3730 = vunpack.c.l.b16 %v966
    %v3731 = vunpack.c.h.b16 %v966
    %v3732 = vunpack.c.l.b16 %v967
    %v3733 = vunpack.c.l.b16 %v968
    %v3734 = vunpack.c.h.b16 %v968
    %v3735 = vunpack.c.l.b16 %v969
    %v3736 = vunpack.c.l.b16 %v970
    %v3737 = vunpack.c.h.b16 %v970
    %v3738 = vunpack.c.l.b16 %v971
    %v3739 = vunpack.c.l.b16 %v972
    %v3740 = vunpack.c.h.b16 %v972
    %v3741 = vunpack.c.l.b16 %v973
    %v3742 = vunpack.c.l.b16 %v974
    %v3743 = vunpack.c.h.b16 %v974
    %v3744 = vunpack.c.l.b16 %v975
    %v3745 = vunpack.c.l.b16 %v976
    %v3746 = vunpack.c.h.b16 %v976
    %v3747 = vunpack.c.l.b16 %v977
    %v3748 = vunpack.c.l.b16 %v978
    %v3749 = vunpack.c.h.b16 %v978
    %v3750 = vunpack.c.l.b16 %v979
    %v3751 = vunpack.c.l.b16 %v980
    %v3752 = vunpack.c.h.b16 %v980
    %v3753 = vunpack.c.l.b16 %v981
    %v3754 = vunpack.c.l.b16 %v982
    %v3755 = vunpack.c.h.b16 %v982
    %v3756 = vunpack.c.l.b16 %v983
    %v3757 = vunpack.c.l.b16 %v984
    %v3758 = vunpack.c.h.b16 %v984
    %v3759 = vunpack.c.l.b16 %v985
    %v3760 = vunpack.c.l.b16 %v986
    %v3761 = vunpack.c.h.b16 %v986
    %v3762 = vunpack.c.l.b16 %v987
    %v3763 = vunpack.c.l.b16 %v988
    %v3764 = vunpack.c.h.b16 %v988
    %v3765 = vunpack.c.l.b16 %v989
    %v3766 = vunpack.c.l.b16 %v990
    %v3767 = vunpack.c.h.b16 %v990
    %v3768 = vunpack.c.l.b16 %v991
    %v3769 = vunpack.c.l.b16 %v992
    %v3770 = vunpack.c.h.b16 %v992
    %v3771 = vunpack.c.l.b16 %v993
    %v3772 = vunpack.c.l.b16 %v994
    %v3773 = vunpack.c.h.b16 %v994
    %v3774 = vunpack.c.l.b16 %v995
    %v3775 = vunpack.c.l.b16 %v996
    %v3776 = vunpack.c.h.b16 %v996
    %v3777 = vunpack.c.l.b16 %v997
    %v3778 = vunpack.c.l.b16 %v998
    %v3779 = vunpack.c.h.b16 %v998
    %v3780 = vunpack.c.l.b16 %v999
    %v3781 = vunpack.c.l.b16 %v1000
    %v3782 = vunpack.c.h.b16 %v1000
    %v3783 = vunpack.c.l.b16 %v1001
    %v3784 = vunpack.c.l.b16 %v1002
    %v3785 = vunpack.c.h.b16 %v1002
    %v3786 = vunpack.c.l.b16 %v1003
    %v3787 = vunpack.c.l.b16 %v1004
    %v3788 = vunpack.c.h.b16 %v1004
    %v3789 = vunpack.c.l.b16 %v1005
    %v3790 = vunpack.c.l.b16 %v1006
    %v3791 = vunpack.c.h.b16 %v1006
    %v3792 = vunpack.c.l.b16 %v1007
    %v3793 = vunpack.c.l.b16 %v1008
    %v3794 = vunpack.c.h.b16 %v1008
    %v3795 = vunpack.c.l.b16 %v1009
    %v3796 = vunpack.c.l.b16 %v1010
    %v3797 = vunpack.c.h.b16 %v1010
    %v3798 = vunpack.c.l.b16 %v1011
    %v3799 = vunpack.c.l.b16 %v1012
    %v3800 = vunpack.c.h.b16 %v1012
    %v3801 = vunpack.c.l.b16 %v1013
    %v3802 = vunpack.c.l.b16 %v1014
    %v3803 = vunpack.c.h.b16 %v1014
    %v3804 = vunpack.c.l.b16 %v1015
    %v3805 = vunpack.c.l.b16 %v1016
    %v3806 = vunpack.c.h.b16 %v1016
    %v3807 = vunpack.c.l.b16 %v1017
    %v3808 = vunpack.c.l.b16 %v1018
    %v3809 = vunpack.c.h.b16 %v1018
    %v3810 = vunpack.c.l.b16 %v1019
    %v3811 = vunpack.c.l.b16 %v1020
    %v3812 = vunpack.c.h.b16 %v1020
    %v3813 = vunpack.c.l.b16 %v1021
    %v3814 = vunpack.c.l.b16 %v1022
    %v3815 = vunpack.c.h.b16 %v1022
    %v3816 = vunpack.c.l.b16 %v1023
    %v3817 = vunpack.c.l.b16 %v1024
    %v3818 = vunpack.c.h.b16 %v1024
    %v3819 = vunpack.c.l.b16 %v1025
    %v3820 = vunpack.c.l.b16 %v1026
    %v3821 = vunpack.c.h.b16 %v1026
    %v3822 = vunpack.c.l.b16 %v1027
    %v3823 = vunpack.c.l.b16 %v1028
    %v3824 = vunpack.c.h.b16 %v1028
    %v3825 = vunpack.c.l.b16 %v1029
    %v3826 = vunpack.c.l.b16 %v1030
    %v3827 = vunpack.c.h.b16 %v1030
    %v3828 = vunpack.c.l.b16 %v1031
    %v3829 = vunpack.c.l.b16 %v1032
    %v3830 = vunpack.c.h.b16 %v1032
    %v3831 = vunpack.c.l.b16 %v1033
    %v3832 = vunpack.c.l.b16 %v1034
    %v3833 = vunpack.c.h.b16 %v1034
    %v3834 = vunpack.c.l.b16 %v1035
    %v3835 = vunpack.c.l.b16 %v1036
    %v3836 = vunpack.c.h.b16 %v1036
    %v3837 = vunpack.c.l.b16 %v1037
    %v3838 = vunpack.c.l.b16 %v1038
    %v3839 = vunpack.c.h.b16 %v1038
    %v3840 = vunpack.c.l.b16 %v1039
    %v3841 = vunpack.c.l.b16 %v1040
    %v3842 = vunpack.c.h.b16 %v1040
    %v3843 = vunpack.c.l.b16 %v1041
    %v3844 = vunpack.c.l.b16 %v1042
    %v3845 = vunpack.c.h.b16 %v1042
    %v3846 = vunpack.c.l.b16 %v1043
    %v3847 = vunpack.c.l.b16 %v1044
    %v3848 = vunpack.c.h.b16 %v1044
    %v3849 = vunpack.c.l.b16 %v1045
    %v3850 = vunpack.c.l.b16 %v1046
    %v3851 = vunpack.c.h.b16 %v1046
    %v3852 = vunpack.c.l.b16 %v1047
    %v3853 = vunpack.c.l.b16 %v1048
    %v3854 = vunpack.c.h.b16 %v1048
    %v3855 = vunpack.c.l.b16 %v1049
    %v3856 = vunpack.c.l.b16 %v1050
    %v3857 = vunpack.c.h.b16 %v1050
    %v3858 = vunpack.c.l.b16 %v1051
    %v3859 = vunpack.c.l.b16 %v1052
    %v3860 = vunpack.c.h.b16 %v1052
    %v3861 = vunpack.c.l.b16 %v1053
    %v3862 = vunpack.c.l.b16 %v1054
    %v3863 = vunpack.c.h.b16 %v1054
    %v3864 = vunpack.c.l.b16 %v1055
    %v3865 = vpack.c.b16 %v2332, %v2329
    %v3866 = vpack.c.b16 %v2333, %v2330
    %v3867 = vpack.c.b16 %v2334, %v2331
    %v3868 = vpack.c.b16 %v2338, %v2335
    %v3869 = vpack.c.b16 %v2339, %v2336
    %v3870 = vpack.c.b16 %v2340, %v2337
    %v3871 = vpack.c.b16 %v2344, %v2341
    %v3872 = vpack.c.b16 %v2345, %v2342
    %v3873 = vpack.c.b16 %v2346, %v2343
    %v3874 = vpack.c.b16 %v2350, %v2347
    %v3875 = vpack.c.b16 %v2351, %v2348
    %v3876 = vpack.c.b16 %v2352, %v2349
    %v3877 = vpack.c.b16 %v2356, %v2353
    %v3878 = vpack.c.b16 %v2357, %v2354
    %v3879 = vpack.c.b16 %v2358, %v2355
    %v3880 = vpack.c.b16 %v2362, %v2359
    %v3881 = vpack.c.b16 %v2363, %v2360
    %v3882 = vpack.c.b16 %v2364, %v2361
    %v3883 = vpack.c.b16 %v2368, %v2365
    %v3884 = vpack.c.b16 %v2369, %v2366
    %v3885 = vpack.c.b16 %v2370, %v2367
    %v3886 = vpack.c.b16 %v2374, %v2371
    %v3887 = vpack.c.b16 %v2375, %v2372
    %v3888 = vpack.c.b16 %v2376, %v2373
    %v3889 = vpack.c.b16 %v2380, %v2377
    %v3890 = vpack.c.b16 %v2381, %v2378
    %v3891 = vpack.c.b16 %v2382, %v2379
    %v3892 = vpack.c.b16 %v2386, %v2383
    %v3893 = vpack.c.b16 %v2387, %v2384
    %v3894 = vpack.c.b16 %v2388, %v2385
    %v3895 = vpack.c.b16 %v2392, %v2389
    %v3896 = vpack.c.b16 %v2393, %v2390
    %v3897 = vpack.c.b16 %v2394, %v2391
    %v3898 = vpack.c.b16 %v2398, %v2395
    %v3899 = vpack.c.b16 %v2399, %v2396
    %v3900 = vpack.c.b16 %v2400, %v2397
    %v3901 = vpack.c.b16 %v2404, %v2401
    %v3902 = vpack.c.b16 %v2405, %v2402
    %v3903 = vpack.c.b16 %v2406, %v2403
    %v3904 = vpack.c.b16 %v2410, %v2407
    %v3905 = vpack.c.b16 %v2411, %v2408
    %v3906 = vpack.c.b16 %v2412, %v2409
    %v3907 = vpack.c.b16 %v2416, %v2413
    %v3908 = vpack.c.b16 %v2417, %v2414
    %v3909 = vpack.c.b16 %v2418, %v2415
    %v3910 = vpack.c.b16 %v2422, %v2419
    %v3911 = vpack.c.b16 %v2423, %v2420
    %v3912 = vpack.c.b16 %v2424, %v2421
    %v3913 = vpack.c.b16 %v2428, %v2425
    %v3914 = vpack.c.b16 %v2429, %v2426
    %v3915 = vpack.c.b16 %v2430, %v2427
    %v3916 = vpack.c.b16 %v2434, %v2431
    %v3917 = vpack.c.b16 %v2435, %v2432
    %v3918 = vpack.c.b16 %v2436, %v2433
    %v3919 = vpack.c.b16 %v2440, %v2437
    %v3920 = vpack.c.b16 %v2441, %v2438
    %v3921 = vpack.c.b16 %v2442, %v2439
    %v3922 = vpack.c.b16 %v2446, %v2443
    %v3923 = vpack.c.b16 %v2447, %v2444
    %v3924 = vpack.c.b16 %v2448, %v2445
    %v3925 = vpack.c.b16 %v2452, %v2449
    %v3926 = vpack.c.b16 %v2453, %v2450
    %v3927 = vpack.c.b16 %v2454, %v2451
    %v3928 = vpack.c.b16 %v2458, %v2455
    %v3929 = vpack.c.b16 %v2459, %v2456
    %v3930 = vpack.c.b16 %v2460, %v2457
    %v3931 = vpack.c.b16 %v2464, %v2461
    %v3932 = vpack.c.b16 %v2465, %v2462
    %v3933 = vpack.c.b16 %v2466, %v2463
    %v3934 = vpack.c.b16 %v2470, %v2467
    %v3935 = vpack.c.b16 %v2471, %v2468
    %v3936 = vpack.c.b16 %v2472, %v2469
    %v3937 = vpack.c.b16 %v2476, %v2473
    %v3938 = vpack.c.b16 %v2477, %v2474
    %v3939 = vpack.c.b16 %v2478, %v2475
    %v3940 = vpack.c.b16 %v2482, %v2479
    %v3941 = vpack.c.b16 %v2483, %v2480
    %v3942 = vpack.c.b16 %v2484, %v2481
    %v3943 = vpack.c.b16 %v2488, %v2485
    %v3944 = vpack.c.b16 %v2489, %v2486
    %v3945 = vpack.c.b16 %v2490, %v2487
    %v3946 = vpack.c.b16 %v2494, %v2491
    %v3947 = vpack.c.b16 %v2495, %v2492
    %v3948 = vpack.c.b16 %v2496, %v2493
    %v3949 = vpack.c.b16 %v2500, %v2497
    %v3950 = vpack.c.b16 %v2501, %v2498
    %v3951 = vpack.c.b16 %v2502, %v2499
    %v3952 = vpack.c.b16 %v2506, %v2503
    %v3953 = vpack.c.b16 %v2507, %v2504
    %v3954 = vpack.c.b16 %v2508, %v2505
    %v3955 = vpack.c.b16 %v2512, %v2509
    %v3956 = vpack.c.b16 %v2513, %v2510
    %v3957 = vpack.c.b16 %v2514, %v2511
    %v3958 = vpack.c.b16 %v2518, %v2515
    %v3959 = vpack.c.b16 %v2519, %v2516
    %v3960 = vpack.c.b16 %v2520, %v2517
    %v3961 = vpack.c.b16 %v2524, %v2521
    %v3962 = vpack.c.b16 %v2525, %v2522
    %v3963 = vpack.c.b16 %v2526, %v2523
    %v3964 = vpack.c.b16 %v2530, %v2527
    %v3965 = vpack.c.b16 %v2531, %v2528
    %v3966 = vpack.c.b16 %v2532, %v2529
    %v3967 = vpack.c.b16 %v2536, %v2533
    %v3968 = vpack.c.b16 %v2537, %v2534
    %v3969 = vpack.c.b16 %v2538, %v2535
    %v3970 = vpack.c.b16 %v2542, %v2539
    %v3971 = vpack.c.b16 %v2543, %v2540
    %v3972 = vpack.c.b16 %v2544, %v2541
    %v3973 = vpack.c.b16 %v2548, %v2545
    %v3974 = vpack.c.b16 %v2549, %v2546
    %v3975 = vpack.c.b16 %v2550, %v2547
    %v3976 = vpack.c.b16 %v2554, %v2551
    %v3977 = vpack.c.b16 %v2555, %v2552
    %v3978 = vpack.c.b16 %v2556, %v2553
    %v3979 = vpack.c.b16 %v2560, %v2557
    %v3980 = vpack.c.b16 %v2561, %v2558
    %v3981 = vpack.c.b16 %v2562, %v2559
    %v3982 = vpack.c.b16 %v2566, %v2563
    %v3983 = vpack.c.b16 %v2567, %v2564
    %v3984 = vpack.c.b16 %v2568, %v2565
    %v3985 = vpack.c.b16 %v2572, %v2569
    %v3986 = vpack.c.b16 %v2573, %v2570
    %v3987 = vpack.c.b16 %v2574, %v2571
    %v3988 = vpack.c.b16 %v2578, %v2575
    %v3989 = vpack.c.b16 %v2579, %v2576
    %v3990 = vpack.c.b16 %v2580, %v2577
    %v3991 = vpack.c.b16 %v2584, %v2581
    %v3992 = vpack.c.b16 %v2585, %v2582
    %v3993 = vpack.c.b16 %v2586, %v2583
    %v3994 = vpack.c.b16 %v2590, %v2587
    %v3995 = vpack.c.b16 %v2591, %v2588
    %v3996 = vpack.c.b16 %v2592, %v2589
    %v3997 = vpack.c.b16 %v2596, %v2593
    %v3998 = vpack.c.b16 %v2597, %v2594
    %v3999 = vpack.c.b16 %v2598, %v2595
    %v4000 = vpack.c.b16 %v2602, %v2599
    %v4001 = vpack.c.b16 %v2603, %v2600
    %v4002 = vpack.c.b16 %v2604, %v2601
    %v4003 = vpack.c.b16 %v2608, %v2605
    %v4004 = vpack.c.b16 %v2609, %v2606
    %v4005 = vpack.c.b16 %v2610, %v2607
    %v4006 = vpack.c.b16 %v2614, %v2611
    %v4007 = vpack.c.b16 %v2615, %v2612
    %v4008 = vpack.c.b16 %v2616, %v2613
    %v4009 = vpack.c.b16 %v2620, %v2617
    %v4010 = vpack.c.b16 %v2621, %v2618
    %v4011 = vpack.c.b16 %v2622, %v2619
    %v4012 = vpack.c.b16 %v2626, %v2623
    %v4013 = vpack.c.b16 %v2627, %v2624
    %v4014 = vpack.c.b16 %v2628, %v2625
    %v4015 = vpack.c.b16 %v2632, %v2629
    %v4016 = vpack.c.b16 %v2633, %v2630
    %v4017 = vpack.c.b16 %v2634, %v2631
    %v4018 = vpack.c.b16 %v2638, %v2635
    %v4019 = vpack.c.b16 %v2639, %v2636
    %v4020 = vpack.c.b16 %v2640, %v2637
    %v4021 = vpack.c.b16 %v2644, %v2641
    %v4022 = vpack.c.b16 %v2645, %v2642
    %v4023 = vpack.c.b16 %v2646, %v2643
    %v4024 = vpack.c.b16 %v2650, %v2647
    %v4025 = vpack.c.b16 %v2651, %v2648
    %v4026 = vpack.c.b16 %v2652, %v2649
    %v4027 = vpack.c.b16 %v2656, %v2653
    %v4028 = vpack.c.b16 %v2657, %v2654
    %v4029 = vpack.c.b16 %v2658, %v2655
    %v4030 = vpack.c.b16 %v2662, %v2659
    %v4031 = vpack.c.b16 %v2663, %v2660
    %v4032 = vpack.c.b16 %v2664, %v2661
    %v4033 = vpack.c.b16 %v2668, %v2665
    %v4034 = vpack.c.b16 %v2669, %v2666
    %v4035 = vpack.c.b16 %v2670, %v2667
    %v4036 = vpack.c.b16 %v2674, %v2671
    %v4037 = vpack.c.b16 %v2675, %v2672
    %v4038 = vpack.c.b16 %v2676, %v2673
    %v4039 = vpack.c.b16 %v2680, %v2677
    %v4040 = vpack.c.b16 %v2681, %v2678
    %v4041 = vpack.c.b16 %v2682, %v2679
    %v4042 = vpack.c.b16 %v2686, %v2683
    %v4043 = vpack.c.b16 %v2687, %v2684
    %v4044 = vpack.c.b16 %v2688, %v2685
    %v4045 = vpack.c.b16 %v2692, %v2689
    %v4046 = vpack.c.b16 %v2693, %v2690
    %v4047 = vpack.c.b16 %v2694, %v2691
    %v4048 = vpack.c.b16 %v2698, %v2695
    %v4049 = vpack.c.b16 %v2699, %v2696
    %v4050 = vpack.c.b16 %v2700, %v2697
    %v4051 = vpack.c.b16 %v2704, %v2701
    %v4052 = vpack.c.b16 %v2705, %v2702
    %v4053 = vpack.c.b16 %v2706, %v2703
    %v4054 = vpack.c.b16 %v2710, %v2707
    %v4055 = vpack.c.b16 %v2711, %v2708
    %v4056 = vpack.c.b16 %v2712, %v2709
    %v4057 = vpack.c.b16 %v2716, %v2713
    %v4058 = vpack.c.b16 %v2717, %v2714
    %v4059 = vpack.c.b16 %v2718, %v2715
    %v4060 = vpack.c.b16 %v2722, %v2719
    %v4061 = vpack.c.b16 %v2723, %v2720
    %v4062 = vpack.c.b16 %v2724, %v2721
    %v4063 = vpack.c.b16 %v2728, %v2725
    %v4064 = vpack.c.b16 %v2729, %v2726
    %v4065 = vpack.c.b16 %v2730, %v2727
    %v4066 = vpack.c.b16 %v2734, %v2731
    %v4067 = vpack.c.b16 %v2735, %v2732
    %v4068 = vpack.c.b16 %v2736, %v2733
    %v4069 = vpack.c.b16 %v2740, %v2737
    %v4070 = vpack.c.b16 %v2741, %v2738
    %v4071 = vpack.c.b16 %v2742, %v2739
    %v4072 = vpack.c.b16 %v2746, %v2743
    %v4073 = vpack.c.b16 %v2747, %v2744
    %v4074 = vpack.c.b16 %v2748, %v2745
    %v4075 = vpack.c.b16 %v2752, %v2749
    %v4076 = vpack.c.b16 %v2753, %v2750
    %v4077 = vpack.c.b16 %v2754, %v2751
    %v4078 = vpack.c.b16 %v2758, %v2755
    %v4079 = vpack.c.b16 %v2759, %v2756
    %v4080 = vpack.c.b16 %v2760, %v2757
    %v4081 = vpack.c.b16 %v2764, %v2761
    %v4082 = vpack.c.b16 %v2765, %v2762
    %v4083 = vpack.c.b16 %v2766, %v2763
    %v4084 = vpack.c.b16 %v2770, %v2767
    %v4085 = vpack.c.b16 %v2771, %v2768
    %v4086 = vpack.c.b16 %v2772, %v2769
    %v4087 = vpack.c.b16 %v2776, %v2773
    %v4088 = vpack.c.b16 %v2777, %v2774
    %v4089 = vpack.c.b16 %v2778, %v2775
    %v4090 = vpack.c.b16 %v2782, %v2779
    %v4091 = vpack.c.b16 %v2783, %v2780
    %v4092 = vpack.c.b16 %v2784, %v2781
    %v4093 = vpack.c.b16 %v2788, %v2785
    %v4094 = vpack.c.b16 %v2789, %v2786
    %v4095 = vpack.c.b16 %v2790, %v2787
    %v4096 = vpack.c.b16 %v2794, %v2791
    %v4097 = vpack.c.b16 %v2795, %v2792
    %v4098 = vpack.c.b16 %v2796, %v2793
    %v4099 = vpack.c.b16 %v2800, %v2797
    %v4100 = vpack.c.b16 %v2801, %v2798
    %v4101 = vpack.c.b16 %v2802, %v2799
    %v4102 = vpack.c.b16 %v2806, %v2803
    %v4103 = vpack.c.b16 %v2807, %v2804
    %v4104 = vpack.c.b16 %v2808, %v2805
    %v4105 = vpack.c.b16 %v2812, %v2809
    %v4106 = vpack.c.b16 %v2813, %v2810
    %v4107 = vpack.c.b16 %v2814, %v2811
    %v4108 = vpack.c.b16 %v2818, %v2815
    %v4109 = vpack.c.b16 %v2819, %v2816
    %v4110 = vpack.c.b16 %v2820, %v2817
    %v4111 = vpack.c.b16 %v2824, %v2821
    %v4112 = vpack.c.b16 %v2825, %v2822
    %v4113 = vpack.c.b16 %v2826, %v2823
    %v4114 = vpack.c.b16 %v2830, %v2827
    %v4115 = vpack.c.b16 %v2831, %v2828
    %v4116 = vpack.c.b16 %v2832, %v2829
    %v4117 = vpack.c.b16 %v2836, %v2833
    %v4118 = vpack.c.b16 %v2837, %v2834
    %v4119 = vpack.c.b16 %v2838, %v2835
    %v4120 = vpack.c.b16 %v2842, %v2839
    %v4121 = vpack.c.b16 %v2843, %v2840
    %v4122 = vpack.c.b16 %v2844, %v2841
    %v4123 = vpack.c.b16 %v2848, %v2845
    %v4124 = vpack.c.b16 %v2849, %v2846
    %v4125 = vpack.c.b16 %v2850, %v2847
    %v4126 = vpack.c.b16 %v2854, %v2851
    %v4127 = vpack.c.b16 %v2855, %v2852
    %v4128 = vpack.c.b16 %v2856, %v2853
    %v4129 = vpack.c.b16 %v2860, %v2857
    %v4130 = vpack.c.b16 %v2861, %v2858
    %v4131 = vpack.c.b16 %v2862, %v2859
    %v4132 = vpack.c.b16 %v2866, %v2863
    %v4133 = vpack.c.b16 %v2867, %v2864
    %v4134 = vpack.c.b16 %v2868, %v2865
    %v4135 = vpack.c.b16 %v2872, %v2869
    %v4136 = vpack.c.b16 %v2873, %v2870
    %v4137 = vpack.c.b16 %v2874, %v2871
    %v4138 = vpack.c.b16 %v2878, %v2875
    %v4139 = vpack.c.b16 %v2879, %v2876
    %v4140 = vpack.c.b16 %v2880, %v2877
    %v4141 = vpack.c.b16 %v2884, %v2881
    %v4142 = vpack.c.b16 %v2885, %v2882
    %v4143 = vpack.c.b16 %v2886, %v2883
    %v4144 = vpack.c.b16 %v2890, %v2887
    %v4145 = vpack.c.b16 %v2891, %v2888
    %v4146 = vpack.c.b16 %v2892, %v2889
    %v4147 = vpack.c.b16 %v2896, %v2893
    %v4148 = vpack.c.b16 %v2897, %v2894
    %v4149 = vpack.c.b16 %v2898, %v2895
    %v4150 = vpack.c.b16 %v2902, %v2899
    %v4151 = vpack.c.b16 %v2903, %v2900
    %v4152 = vpack.c.b16 %v2904, %v2901
    %v4153 = vpack.c.b16 %v2908, %v2905
    %v4154 = vpack.c.b16 %v2909, %v2906
    %v4155 = vpack.c.b16 %v2910, %v2907
    %v4156 = vpack.c.b16 %v2914, %v2911
    %v4157 = vpack.c.b16 %v2915, %v2912
    %v4158 = vpack.c.b16 %v2916, %v2913
    %v4159 = vpack.c.b16 %v2920, %v2917
    %v4160 = vpack.c.b16 %v2921, %v2918
    %v4161 = vpack.c.b16 %v2922, %v2919
    %v4162 = vpack.c.b16 %v2926, %v2923
    %v4163 = vpack.c.b16 %v2927, %v2924
    %v4164 = vpack.c.b16 %v2928, %v2925
    %v4165 = vpack.c.b16 %v2932, %v2929
    %v4166 = vpack.c.b16 %v2933, %v2930
    %v4167 = vpack.c.b16 %v2934, %v2931
    %v4168 = vpack.c.b16 %v2938, %v2935
    %v4169 = vpack.c.b16 %v2939, %v2936
    %v4170 = vpack.c.b16 %v2940, %v2937
    %v4171 = vpack.c.b16 %v2944, %v2941
    %v4172 = vpack.c.b16 %v2945, %v2942
    %v4173 = vpack.c.b16 %v2946, %v2943
    %v4174 = vpack.c.b16 %v2950, %v2947
    %v4175 = vpack.c.b16 %v2951, %v2948
    %v4176 = vpack.c.b16 %v2952, %v2949
    %v4177 = vpack.c.b16 %v2956, %v2953
    %v4178 = vpack.c.b16 %v2957, %v2954
    %v4179 = vpack.c.b16 %v2958, %v2955
    %v4180 = vpack.c.b16 %v2962, %v2959
    %v4181 = vpack.c.b16 %v2963, %v2960
    %v4182 = vpack.c.b16 %v2964, %v2961
    %v4183 = vpack.c.b16 %v2968, %v2965
    %v4184 = vpack.c.b16 %v2969, %v2966
    %v4185 = vpack.c.b16 %v2970, %v2967
    %v4186 = vpack.c.b16 %v2974, %v2971
    %v4187 = vpack.c.b16 %v2975, %v2972
    %v4188 = vpack.c.b16 %v2976, %v2973
    %v4189 = vpack.c.b16 %v2980, %v2977
    %v4190 = vpack.c.b16 %v2981, %v2978
    %v4191 = vpack.c.b16 %v2982, %v2979
    %v4192 = vpack.c.b16 %v2986, %v2983
    %v4193 = vpack.c.b16 %v2987, %v2984
    %v4194 = vpack.c.b16 %v2988, %v2985
    %v4195 = vpack.c.b16 %v2992, %v2989
    %v4196 = vpack.c.b16 %v2993, %v2990
    %v4197 = vpack.c.b16 %v2994, %v2991
    %v4198 = vpack.c.b16 %v2998, %v2995
    %v4199 = vpack.c.b16 %v2999, %v2996
    %v4200 = vpack.c.b16 %v3000, %v2997
    %v4201 = vpack.c.b16 %v3004, %v3001
    %v4202 = vpack.c.b16 %v3005, %v3002
    %v4203 = vpack.c.b16 %v3006, %v3003
    %v4204 = vpack.c.b16 %v3010, %v3007
    %v4205 = vpack.c.b16 %v3011, %v3008
    %v4206 = vpack.c.b16 %v3012, %v3009
    %v4207 = vpack.c.b16 %v3016, %v3013
    %v4208 = vpack.c.b16 %v3017, %v3014
    %v4209 = vpack.c.b16 %v3018, %v3015
    %v4210 = vpack.c.b16 %v3022, %v3019
    %v4211 = vpack.c.b16 %v3023, %v3020
    %v4212 = vpack.c.b16 %v3024, %v3021
    %v4213 = vpack.c.b16 %v3028, %v3025
    %v4214 = vpack.c.b16 %v3029, %v3026
    %v4215 = vpack.c.b16 %v3030, %v3027
    %v4216 = vpack.c.b16 %v3034, %v3031
    %v4217 = vpack.c.b16 %v3035, %v3032
    %v4218 = vpack.c.b16 %v3036, %v3033
    %v4219 = vpack.c.b16 %v3040, %v3037
    %v4220 = vpack.c.b16 %v3041, %v3038
    %v4221 = vpack.c.b16 %v3042, %v3039
    %v4222 = vpack.c.b16 %v3046, %v3043
    %v4223 = vpack.c.b16 %v3047, %v3044
    %v4224 = vpack.c.b16 %v3048, %v3045
    %v4225 = vpack.c.b16 %v3052, %v3049
    %v4226 = vpack.c.b16 %v3053, %v3050
    %v4227 = vpack.c.b16 %v3054, %v3051
    %v4228 = vpack.c.b16 %v3058, %v3055
    %v4229 = vpack.c.b16 %v3059, %v3056
    %v4230 = vpack.c.b16 %v3060, %v3057
    %v4231 = vpack.c.b16 %v3064, %v3061
    %v4232 = vpack.c.b16 %v3065, %v3062
    %v4233 = vpack.c.b16 %v3066, %v3063
    %v4234 = vpack.c.b16 %v3070, %v3067
    %v4235 = vpack.c.b16 %v3071, %v3068
    %v4236 = vpack.c.b16 %v3072, %v3069
    %v4237 = vpack.c.b16 %v3076, %v3073
    %v4238 = vpack.c.b16 %v3077, %v3074
    %v4239 = vpack.c.b16 %v3078, %v3075
    %v4240 = vpack.c.b16 %v3082, %v3079
    %v4241 = vpack.c.b16 %v3083, %v3080
    %v4242 = vpack.c.b16 %v3084, %v3081
    %v4243 = vpack.c.b16 %v3088, %v3085
    %v4244 = vpack.c.b16 %v3089, %v3086
    %v4245 = vpack.c.b16 %v3090, %v3087
    %v4246 = vpack.c.b16 %v3094, %v3091
    %v4247 = vpack.c.b16 %v3095, %v3092
    %v4248 = vpack.c.b16 %v3096, %v3093
    %v4249 = vpack.c.b16 %v3100, %v3097
    %v4250 = vpack.c.b16 %v3101, %v3098
    %v4251 = vpack.c.b16 %v3102, %v3099
    %v4252 = vpack.c.b16 %v3106, %v3103
    %v4253 = vpack.c.b16 %v3107, %v3104
    %v4254 = vpack.c.b16 %v3108, %v3105
    %v4255 = vpack.c.b16 %v3112, %v3109
    %v4256 = vpack.c.b16 %v3113, %v3110
    %v4257 = vpack.c.b16 %v3114, %v3111
    %v4258 = vpack.c.b16 %v3118, %v3115
    %v4259 = vpack.c.b16 %v3119, %v3116
    %v4260 = vpack.c.b16 %v3120, %v3117
    %v4261 = vpack.c.b16 %v3124, %v3121
    %v4262 = vpack.c.b16 %v3125, %v3122
    %v4263 = vpack.c.b16 %v3126, %v3123
    %v4264 = vpack.c.b16 %v3130, %v3127
    %v4265 = vpack.c.b16 %v3131, %v3128
    %v4266 = vpack.c.b16 %v3132, %v3129
    %v4267 = vpack.c.b16 %v3136, %v3133
    %v4268 = vpack.c.b16 %v3137, %v3134
    %v4269 = vpack.c.b16 %v3138, %v3135
    %v4270 = vpack.c.b16 %v3142, %v3139
    %v4271 = vpack.c.b16 %v3143, %v3140
    %v4272 = vpack.c.b16 %v3144, %v3141
    %v4273 = vpack.c.b16 %v3148, %v3145
    %v4274 = vpack.c.b16 %v3149, %v3146
    %v4275 = vpack.c.b16 %v3150, %v3147
    %v4276 = vpack.c.b16 %v3154, %v3151
    %v4277 = vpack.c.b16 %v3155, %v3152
    %v4278 = vpack.c.b16 %v3156, %v3153
    %v4279 = vpack.c.b16 %v3160, %v3157
    %v4280 = vpack.c.b16 %v3161, %v3158
    %v4281 = vpack.c.b16 %v3162, %v3159
    %v4282 = vpack.c.b16 %v3166, %v3163
    %v4283 = vpack.c.b16 %v3167, %v3164
    %v4284 = vpack.c.b16 %v3168, %v3165
    %v4285 = vpack.c.b16 %v3172, %v3169
    %v4286 = vpack.c.b16 %v3173, %v3170
    %v4287 = vpack.c.b16 %v3174, %v3171
    %v4288 = vpack.c.b16 %v3178, %v3175
    %v4289 = vpack.c.b16 %v3179, %v3176
    %v4290 = vpack.c.b16 %v3180, %v3177
    %v4291 = vpack.c.b16 %v3184, %v3181
    %v4292 = vpack.c.b16 %v3185, %v3182
    %v4293 = vpack.c.b16 %v3186, %v3183
    %v4294 = vpack.c.b16 %v3190, %v3187
    %v4295 = vpack.c.b16 %v3191, %v3188
    %v4296 = vpack.c.b16 %v3192, %v3189
    %v4297 = vpack.c.b16 %v3196, %v3193
    %v4298 = vpack.c.b16 %v3197, %v3194
    %v4299 = vpack.c.b16 %v3198, %v3195
    %v4300 = vpack.c.b16 %v3202, %v3199
    %v4301 = vpack.c.b16 %v3203, %v3200
    %v4302 = vpack.c.b16 %v3204, %v3201
    %v4303 = vpack.c.b16 %v3208, %v3205
    %v4304 = vpack.c.b16 %v3209, %v3206
    %v4305 = vpack.c.b16 %v3210, %v3207
    %v4306 = vpack.c.b16 %v3214, %v3211
    %v4307 = vpack.c.b16 %v3215, %v3212
    %v4308 = vpack.c.b16 %v3216, %v3213
    %v4309 = vpack.c.b16 %v3220, %v3217
    %v4310 = vpack.c.b16 %v3221, %v3218
    %v4311 = vpack.c.b16 %v3222, %v3219
    %v4312 = vpack.c.b16 %v3226, %v3223
    %v4313 = vpack.c.b16 %v3227, %v3224
    %v4314 = vpack.c.b16 %v3228, %v3225
    %v4315 = vpack.c.b16 %v3232, %v3229
    %v4316 = vpack.c.b16 %v3233, %v3230
    %v4317 = vpack.c.b16 %v3234, %v3231
    %v4318 = vpack.c.b16 %v3238, %v3235
    %v4319 = vpack.c.b16 %v3239, %v3236
    %v4320 = vpack.c.b16 %v3240, %v3237
    %v4321 = vpack.c.b16 %v3244, %v3241
    %v4322 = vpack.c.b16 %v3245, %v3242
    %v4323 = vpack.c.b16 %v3246, %v3243
    %v4324 = vpack.c.b16 %v3250, %v3247
    %v4325 = vpack.c.b16 %v3251, %v3248
    %v4326 = vpack.c.b16 %v3252, %v3249
    %v4327 = vpack.c.b16 %v3256, %v3253
    %v4328 = vpack.c.b16 %v3257, %v3254
    %v4329 = vpack.c.b16 %v3258, %v3255
    %v4330 = vpack.c.b16 %v3262, %v3259
    %v4331 = vpack.c.b16 %v3263, %v3260
    %v4332 = vpack.c.b16 %v3264, %v3261
    %v4333 = vpack.c.b16 %v3268, %v3265
    %v4334 = vpack.c.b16 %v3269, %v3266
    %v4335 = vpack.c.b16 %v3270, %v3267
    %v4336 = vpack.c.b16 %v3274, %v3271
    %v4337 = vpack.c.b16 %v3275, %v3272
    %v4338 = vpack.c.b16 %v3276, %v3273
    %v4339 = vpack.c.b16 %v3280, %v3277
    %v4340 = vpack.c.b16 %v3281, %v3278
    %v4341 = vpack.c.b16 %v3282, %v3279
    %v4342 = vpack.c.b16 %v3286, %v3283
    %v4343 = vpack.c.b16 %v3287, %v3284
    %v4344 = vpack.c.b16 %v3288, %v3285
    %v4345 = vpack.c.b16 %v3292, %v3289
    %v4346 = vpack.c.b16 %v3293, %v3290
    %v4347 = vpack.c.b16 %v3294, %v3291
    %v4348 = vpack.c.b16 %v3298, %v3295
    %v4349 = vpack.c.b16 %v3299, %v3296
    %v4350 = vpack.c.b16 %v3300, %v3297
    %v4351 = vpack.c.b16 %v3304, %v3301
    %v4352 = vpack.c.b16 %v3305, %v3302
    %v4353 = vpack.c.b16 %v3306, %v3303
    %v4354 = vpack.c.b16 %v3310, %v3307
    %v4355 = vpack.c.b16 %v3311, %v3308
    %v4356 = vpack.c.b16 %v3312, %v3309
    %v4357 = vpack.c.b16 %v3316, %v3313
    %v4358 = vpack.c.b16 %v3317, %v3314
    %v4359 = vpack.c.b16 %v3318, %v3315
    %v4360 = vpack.c.b16 %v3322, %v3319
    %v4361 = vpack.c.b16 %v3323, %v3320
    %v4362 = vpack.c.b16 %v3324, %v3321
    %v4363 = vpack.c.b16 %v3328, %v3325
    %v4364 = vpack.c.b16 %v3329, %v3326
    %v4365 = vpack.c.b16 %v3330, %v3327
    %v4366 = vpack.c.b16 %v3334, %v3331
    %v4367 = vpack.c.b16 %v3335, %v3332
    %v4368 = vpack.c.b16 %v3336, %v3333
    %v4369 = vpack.c.b16 %v3340, %v3337
    %v4370 = vpack.c.b16 %v3341, %v3338
    %v4371 = vpack.c.b16 %v3342, %v3339
    %v4372 = vpack.c.b16 %v3346, %v3343
    %v4373 = vpack.c.b16 %v3347, %v3344
    %v4374 = vpack.c.b16 %v3348, %v3345
    %v4375 = vpack.c.b16 %v3352, %v3349
    %v4376 = vpack.c.b16 %v3353, %v3350
    %v4377 = vpack.c.b16 %v3354, %v3351
    %v4378 = vpack.c.b16 %v3358, %v3355
    %v4379 = vpack.c.b16 %v3359, %v3356
    %v4380 = vpack.c.b16 %v3360, %v3357
    %v4381 = vpack.c.b16 %v3364, %v3361
    %v4382 = vpack.c.b16 %v3365, %v3362
    %v4383 = vpack.c.b16 %v3366, %v3363
    %v4384 = vpack.c.b16 %v3370, %v3367
    %v4385 = vpack.c.b16 %v3371, %v3368
    %v4386 = vpack.c.b16 %v3372, %v3369
    %v4387 = vpack.c.b16 %v3376, %v3373
    %v4388 = vpack.c.b16 %v3377, %v3374
    %v4389 = vpack.c.b16 %v3378, %v3375
    %v4390 = vpack.c.b16 %v3382, %v3379
    %v4391 = vpack.c.b16 %v3383, %v3380
    %v4392 = vpack.c.b16 %v3384, %v3381
    %v4393 = vpack.c.b16 %v3388, %v3385
    %v4394 = vpack.c.b16 %v3389, %v3386
    %v4395 = vpack.c.b16 %v3390, %v3387
    %v4396 = vpack.c.b16 %v3394, %v3391
    %v4397 = vpack.c.b16 %v3395, %v3392
    %v4398 = vpack.c.b16 %v3396, %v3393
    %v4399 = vpack.c.b16 %v3400, %v3397
    %v4400 = vpack.c.b16 %v3401, %v3398
    %v4401 = vpack.c.b16 %v3402, %v3399
    %v4402 = vpack.c.b16 %v3406, %v3403
    %v4403 = vpack.c.b16 %v3407, %v3404
    %v4404 = vpack.c.b16 %v3408, %v3405
    %v4405 = vpack.c.b16 %v3412, %v3409
    %v4406 = vpack.c.b16 %v3413, %v3410
    %v4407 = vpack.c.b16 %v3414, %v3411
    %v4408 = vpack.c.b16 %v3418, %v3415
    %v4409 = vpack.c.b16 %v3419, %v3416
    %v4410 = vpack.c.b16 %v3420, %v3417
    %v4411 = vpack.c.b16 %v3424, %v3421
    %v4412 = vpack.c.b16 %v3425, %v3422
    %v4413 = vpack.c.b16 %v3426, %v3423
    %v4414 = vpack.c.b16 %v3430, %v3427
    %v4415 = vpack.c.b16 %v3431, %v3428
    %v4416 = vpack.c.b16 %v3432, %v3429
    %v4417 = vpack.c.b16 %v3436, %v3433
    %v4418 = vpack.c.b16 %v3437, %v3434
    %v4419 = vpack.c.b16 %v3438, %v3435
    %v4420 = vpack.c.b16 %v3442, %v3439
    %v4421 = vpack.c.b16 %v3443, %v3440
    %v4422 = vpack.c.b16 %v3444, %v3441
    %v4423 = vpack.c.b16 %v3448, %v3445
    %v4424 = vpack.c.b16 %v3449, %v3446
    %v4425 = vpack.c.b16 %v3450, %v3447
    %v4426 = vpack.c.b16 %v3454, %v3451
    %v4427 = vpack.c.b16 %v3455, %v3452
    %v4428 = vpack.c.b16 %v3456, %v3453
    %v4429 = vpack.c.b16 %v3460, %v3457
    %v4430 = vpack.c.b16 %v3461, %v3458
    %v4431 = vpack.c.b16 %v3462, %v3459
    %v4432 = vpack.c.b16 %v3466, %v3463
    %v4433 = vpack.c.b16 %v3467, %v3464
    %v4434 = vpack.c.b16 %v3468, %v3465
    %v4435 = vpack.c.b16 %v3472, %v3469
    %v4436 = vpack.c.b16 %v3473, %v3470
    %v4437 = vpack.c.b16 %v3474, %v3471
    %v4438 = vpack.c.b16 %v3478, %v3475
    %v4439 = vpack.c.b16 %v3479, %v3476
    %v4440 = vpack.c.b16 %v3480, %v3477
    %v4441 = vpack.c.b16 %v3484, %v3481
    %v4442 = vpack.c.b16 %v3485, %v3482
    %v4443 = vpack.c.b16 %v3486, %v3483
    %v4444 = vpack.c.b16 %v3490, %v3487
    %v4445 = vpack.c.b16 %v3491, %v3488
    %v4446 = vpack.c.b16 %v3492, %v3489
    %v4447 = vpack.c.b16 %v3496, %v3493
    %v4448 = vpack.c.b16 %v3497, %v3494
    %v4449 = vpack.c.b16 %v3498, %v3495
    %v4450 = vpack.c.b16 %v3502, %v3499
    %v4451 = vpack.c.b16 %v3503, %v3500
    %v4452 = vpack.c.b16 %v3504, %v3501
    %v4453 = vpack.c.b16 %v3508, %v3505
    %v4454 = vpack.c.b16 %v3509, %v3506
    %v4455 = vpack.c.b16 %v3510, %v3507
    %v4456 = vpack.c.b16 %v3514, %v3511
    %v4457 = vpack.c.b16 %v3515, %v3512
    %v4458 = vpack.c.b16 %v3516, %v3513
    %v4459 = vpack.c.b16 %v3520, %v3517
    %v4460 = vpack.c.b16 %v3521, %v3518
    %v4461 = vpack.c.b16 %v3522, %v3519
    %v4462 = vpack.c.b16 %v3526, %v3523
    %v4463 = vpack.c.b16 %v3527, %v3524
    %v4464 = vpack.c.b16 %v3528, %v3525
    %v4465 = vpack.c.b16 %v3532, %v3529
    %v4466 = vpack.c.b16 %v3533, %v3530
    %v4467 = vpack.c.b16 %v3534, %v3531
    %v4468 = vpack.c.b16 %v3538, %v3535
    %v4469 = vpack.c.b16 %v3539, %v3536
    %v4470 = vpack.c.b16 %v3540, %v3537
    %v4471 = vpack.c.b16 %v3544, %v3541
    %v4472 = vpack.c.b16 %v3545, %v3542
    %v4473 = vpack.c.b16 %v3546, %v3543
    %v4474 = vpack.c.b16 %v3550, %v3547
    %v4475 = vpack.c.b16 %v3551, %v3548
    %v4476 = vpack.c.b16 %v3552, %v3549
    %v4477 = vpack.c.b16 %v3556, %v3553
    %v4478 = vpack.c.b16 %v3557, %v3554
    %v4479 = vpack.c.b16 %v3558, %v3555
    %v4480 = vpack.c.b16 %v3562, %v3559
    %v4481 = vpack.c.b16 %v3563, %v3560
    %v4482 = vpack.c.b16 %v3564, %v3561
    %v4483 = vpack.c.b16 %v3568, %v3565
    %v4484 = vpack.c.b16 %v3569, %v3566
    %v4485 = vpack.c.b16 %v3570, %v3567
    %v4486 = vpack.c.b16 %v3574, %v3571
    %v4487 = vpack.c.b16 %v3575, %v3572
    %v4488 = vpack.c.b16 %v3576, %v3573
    %v4489 = vpack.c.b16 %v3580, %v3577
    %v4490 = vpack.c.b16 %v3581, %v3578
    %v4491 = vpack.c.b16 %v3582, %v3579
    %v4492 = vpack.c.b16 %v3586, %v3583
    %v4493 = vpack.c.b16 %v3587, %v3584
    %v4494 = vpack.c.b16 %v3588, %v3585
    %v4495 = vpack.c.b16 %v3592, %v3589
    %v4496 = vpack.c.b16 %v3593, %v3590
    %v4497 = vpack.c.b16 %v3594, %v3591
    %v4498 = vpack.c.b16 %v3598, %v3595
    %v4499 = vpack.c.b16 %v3599, %v3596
    %v4500 = vpack.c.b16 %v3600, %v3597
    %v4501 = vpack.c.b16 %v3604, %v3601
    %v4502 = vpack.c.b16 %v3605, %v3602
    %v4503 = vpack.c.b16 %v3606, %v3603
    %v4504 = vpack.c.b16 %v3610, %v3607
    %v4505 = vpack.c.b16 %v3611, %v3608
    %v4506 = vpack.c.b16 %v3612, %v3609
    %v4507 = vpack.c.b16 %v3616, %v3613
    %v4508 = vpack.c.b16 %v3617, %v3614
    %v4509 = vpack.c.b16 %v3618, %v3615
    %v4510 = vpack.c.b16 %v3622, %v3619
    %v4511 = vpack.c.b16 %v3623, %v3620
    %v4512 = vpack.c.b16 %v3624, %v3621
    %v4513 = vpack.c.b16 %v3628, %v3625
    %v4514 = vpack.c.b16 %v3629, %v3626
    %v4515 = vpack.c.b16 %v3630, %v3627
    %v4516 = vpack.c.b16 %v3634, %v3631
    %v4517 = vpack.c.b16 %v3635, %v3632
    %v4518 = vpack.c.b16 %v3636, %v3633
    %v4519 = vpack.c.b16 %v3640, %v3637
    %v4520 = vpack.c.b16 %v3641, %v3638
    %v4521 = vpack.c.b16 %v3642, %v3639
    %v4522 = vpack.c.b16 %v3646, %v3643
    %v4523 = vpack.c.b16 %v3647, %v3644
    %v4524 = vpack.c.b16 %v3648, %v3645
    %v4525 = vpack.c.b16 %v3652, %v3649
    %v4526 = vpack.c.b16 %v3653, %v3650
    %v4527 = vpack.c.b16 %v3654, %v3651
    %v4528 = vpack.c.b16 %v3658, %v3655
    %v4529 = vpack.c.b16 %v3659, %v3656
    %v4530 = vpack.c.b16 %v3660, %v3657
    %v4531 = vpack.c.b16 %v3664, %v3661
    %v4532 = vpack.c.b16 %v3665, %v3662
    %v4533 = vpack.c.b16 %v3666, %v3663
    %v4534 = vpack.c.b16 %v3670, %v3667
    %v4535 = vpack.c.b16 %v3671, %v3668
    %v4536 = vpack.c.b16 %v3672, %v3669
    %v4537 = vpack.c.b16 %v3676, %v3673
    %v4538 = vpack.c.b16 %v3677, %v3674
    %v4539 = vpack.c.b16 %v3678, %v3675
    %v4540 = vpack.c.b16 %v3682, %v3679
    %v4541 = vpack.c.b16 %v3683, %v3680
    %v4542 = vpack.c.b16 %v3684, %v3681
    %v4543 = vpack.c.b16 %v3688, %v3685
    %v4544 = vpack.c.b16 %v3689, %v3686
    %v4545 = vpack.c.b16 %v3690, %v3687
    %v4546 = vpack.c.b16 %v3694, %v3691
    %v4547 = vpack.c.b16 %v3695, %v3692
    %v4548 = vpack.c.b16 %v3696, %v3693
    %v4549 = vpack.c.b16 %v3700, %v3697
    %v4550 = vpack.c.b16 %v3701, %v3698
    %v4551 = vpack.c.b16 %v3702, %v3699
    %v4552 = vpack.c.b16 %v3706, %v3703
    %v4553 = vpack.c.b16 %v3707, %v3704
    %v4554 = vpack.c.b16 %v3708, %v3705
    %v4555 = vpack.c.b16 %v3712, %v3709
    %v4556 = vpack.c.b16 %v3713, %v3710
    %v4557 = vpack.c.b16 %v3714, %v3711
    %v4558 = vpack.c.b16 %v3718, %v3715
    %v4559 = vpack.c.b16 %v3719, %v3716
    %v4560 = vpack.c.b16 %v3720, %v3717
    %v4561 = vpack.c.b16 %v3724, %v3721
    %v4562 = vpack.c.b16 %v3725, %v3722
    %v4563 = vpack.c.b16 %v3726, %v3723
    %v4564 = vpack.c.b16 %v3730, %v3727
    %v4565 = vpack.c.b16 %v3731, %v3728
    %v4566 = vpack.c.b16 %v3732, %v3729
    %v4567 = vpack.c.b16 %v3736, %v3733
    %v4568 = vpack.c.b16 %v3737, %v3734
    %v4569 = vpack.c.b16 %v3738, %v3735
    %v4570 = vpack.c.b16 %v3742, %v3739
    %v4571 = vpack.c.b16 %v3743, %v3740
    %v4572 = vpack.c.b16 %v3744, %v3741
    %v4573 = vpack.c.b16 %v3748, %v3745
    %v4574 = vpack.c.b16 %v3749, %v3746
    %v4575 = vpack.c.b16 %v3750, %v3747
    %v4576 = vpack.c.b16 %v3754, %v3751
    %v4577 = vpack.c.b16 %v3755, %v3752
    %v4578 = vpack.c.b16 %v3756, %v3753
    %v4579 = vpack.c.b16 %v3760, %v3757
    %v4580 = vpack.c.b16 %v3761, %v3758
    %v4581 = vpack.c.b16 %v3762, %v3759
    %v4582 = vpack.c.b16 %v3766, %v3763
    %v4583 = vpack.c.b16 %v3767, %v3764
    %v4584 = vpack.c.b16 %v3768, %v3765
    %v4585 = vpack.c.b16 %v3772, %v3769
    %v4586 = vpack.c.b16 %v3773, %v3770
    %v4587 = vpack.c.b16 %v3774, %v3771
    %v4588 = vpack.c.b16 %v3778, %v3775
    %v4589 = vpack.c.b16 %v3779, %v3776
    %v4590 = vpack.c.b16 %v3780, %v3777
    %v4591 = vpack.c.b16 %v3784, %v3781
    %v4592 = vpack.c.b16 %v3785, %v3782
    %v4593 = vpack.c.b16 %v3786, %v3783
    %v4594 = vpack.c.b16 %v3790, %v3787
    %v4595 = vpack.c.b16 %v3791, %v3788
    %v4596 = vpack.c.b16 %v3792, %v3789
    %v4597 = vpack.c.b16 %v3796, %v3793
    %v4598 = vpack.c.b16 %v3797, %v3794
    %v4599 = vpack.c.b16 %v3798, %v3795
    %v4600 = vpack.c.b16 %v3802, %v3799
    %v4601 = vpack.c.b16 %v3803, %v3800
    %v4602 = vpack.c.b16 %v3804, %v3801
    %v4603 = vpack.c.b16 %v3808, %v3805
    %v4604 = vpack.c.b16 %v3809, %v3806
    %v4605 = vpack.c.b16 %v3810, %v3807
    %v4606 = vpack.c.b16 %v3814, %v3811
    %v4607 = vpack.c.b16 %v3815, %v3812
    %v4608 = vpack.c.b16 %v3816, %v3813
    %v4609 = vpack.c.b16 %v3820, %v3817
    %v4610 = vpack.c.b16 %v3821, %v3818
    %v4611 = vpack.c.b16 %v3822, %v3819
    %v4612 = vpack.c.b16 %v3826, %v3823
    %v4613 = vpack.c.b16 %v3827, %v3824
    %v4614 = vpack.c.b16 %v3828, %v3825
    %v4615 = vpack.c.b16 %v3832, %v3829
    %v4616 = vpack.c.b16 %v3833, %v3830
    %v4617 = vpack.c.b16 %v3834, %v3831
    %v4618 = vpack.c.b16 %v3838, %v3835
    %v4619 = vpack.c.b16 %v3839, %v3836
    %v4620 = vpack.c.b16 %v3840, %v3837
    %v4621 = vpack.c.b16 %v3844, %v3841
    %v4622 = vpack.c.b16 %v3845, %v3842
    %v4623 = vpack.c.b16 %v3846, %v3843
    %v4624 = vpack.c.b16 %v3850, %v3847
    %v4625 = vpack.c.b16 %v3851, %v3848
    %v4626 = vpack.c.b16 %v3852, %v3849
    %v4627 = vpack.c.b16 %v3856, %v3853
    %v4628 = vpack.c.b16 %v3857, %v3854
    %v4629 = vpack.c.b16 %v3858, %v3855
    %v4630 = vpack.c.b16 %v3862, %v3859
    %v4631 = vpack.c.b16 %v3863, %v3860
    %v4632 = vpack.c.b16 %v3864, %v3861
    %5401 = vmatprep.subr.bf16.mxu0 %v3866
    %5402 = vmatpush1.bf16.msra.mxu0 %v3865
    %5403 = vmatprep.subr.bf16.mxu0 %v3869
    %5404 = vmatpush1.bf16.msra.mxu0 %v3868
    %5405 = vmatprep.subr.bf16.mxu0 %v3872
    %5406 = vmatpush1.bf16.msra.mxu0 %v3871
    %5407 = vmatprep.subr.bf16.mxu0 %v3875
    %5408 = vmatpush1.bf16.msra.mxu0 %v3874
    %5409 = vmatprep.subr.bf16.mxu0 %v3878
    %5410 = vmatpush1.bf16.msra.mxu0 %v3877
    %5411 = vmatprep.subr.bf16.mxu0 %v3881
    %5412 = vmatpush1.bf16.msra.mxu0 %v3880
    %5413 = vmatprep.subr.bf16.mxu0 %v3884
    %5414 = vmatpush1.bf16.msra.mxu0 %v3883
    %5415 = vmatprep.subr.bf16.mxu0 %v3887
    %5416 = vmatpush1.bf16.msra.mxu0 %v3886
    %5417 = vmatprep.subr.bf16.mxu0 %v3890
    %5418 = vmatpush1.bf16.msra.mxu0 %v3889
    %5419 = vmatprep.subr.bf16.mxu0 %v3893
    %5420 = vmatpush1.bf16.msra.mxu0 %v3892
    %5421 = vmatprep.subr.bf16.mxu0 %v3896
    %5422 = vmatpush1.bf16.msra.mxu0 %v3895
    %5423 = vmatprep.subr.bf16.mxu0 %v3899
    %5424 = vmatpush1.bf16.msra.mxu0 %v3898
    %5425 = vmatprep.subr.bf16.mxu0 %v3902
    %5426 = vmatpush1.bf16.msra.mxu0 %v3901
    %5427 = vmatprep.subr.bf16.mxu0 %v3905
    %5428 = vmatpush1.bf16.msra.mxu0 %v3904
    %5429 = vmatprep.subr.bf16.mxu0 %v3908
    %5430 = vmatpush1.bf16.msra.mxu0 %v3907
    %5431 = vmatprep.subr.bf16.mxu0 %v3911
    %5432 = vmatpush1.bf16.msra.mxu0 %v3910
    %5433 = vmatprep.mubr.bf16.mxu0 %v1114
    %5434 = vmatmul.mubr.bf16.gmra.mrb[0].mxu0 %v1100
    %v5435 = vpop.f32.mrb[0].mxu0
    %v5436 = vadd.f32 %v1061, %v5435
    %v5437 = vpop.f32.mrb[0].mxu0
    %v5438 = vadd.f32 %v1065, %v5437
    %v5439 = vpop.f32.mrb[0].mxu0
    %v5440 = vpop.f32.mrb[0].mxu0
    %5441 = vdwg.mxu0
    %5442 = vmatprep.subr.bf16.mxu0 %v3914
    %5443 = vmatpush1.bf16.msra.mxu0 %v3913
    %5444 = vmatprep.subr.bf16.mxu0 %v3917
    %5445 = vmatpush1.bf16.msra.mxu0 %v3916
    %5446 = vmatprep.subr.bf16.mxu0 %v3920
    %5447 = vmatpush1.bf16.msra.mxu0 %v3919
    %5448 = vmatprep.subr.bf16.mxu0 %v3923
    %5449 = vmatpush1.bf16.msra.mxu0 %v3922
    %5450 = vmatprep.subr.bf16.mxu0 %v3926
    %5451 = vmatpush1.bf16.msra.mxu0 %v3925
    %5452 = vmatprep.subr.bf16.mxu0 %v3929
    %5453 = vmatpush1.bf16.msra.mxu0 %v3928
    %5454 = vmatprep.subr.bf16.mxu0 %v3932
    %5455 = vmatpush1.bf16.msra.mxu0 %v3931
    %5456 = vmatprep.subr.bf16.mxu0 %v3935
    %5457 = vmatpush1.bf16.msra.mxu0 %v3934
    %5458 = vmatprep.subr.bf16.mxu0 %v3938
    %5459 = vmatpush1.bf16.msra.mxu0 %v3937
    %5460 = vmatprep.subr.bf16.mxu0 %v3941
    %5461 = vmatpush1.bf16.msra.mxu0 %v3940
    %5462 = vmatprep.subr.bf16.mxu0 %v3944
    %5463 = vmatpush1.bf16.msra.mxu0 %v3943
    %5464 = vmatprep.subr.bf16.mxu0 %v3947
    %5465 = vmatpush1.bf16.msra.mxu0 %v3946
    %5466 = vmatprep.subr.bf16.mxu0 %v3950
    %5467 = vmatpush1.bf16.msra.mxu0 %v3949
    %5468 = vmatprep.subr.bf16.mxu0 %v3953
    %5469 = vmatpush1.bf16.msra.mxu0 %v3952
    %5470 = vmatprep.subr.bf16.mxu0 %v3956
    %5471 = vmatpush1.bf16.msra.mxu0 %v3955
    %5472 = vmatprep.subr.bf16.mxu0 %v3959
    %5473 = vmatpush1.bf16.msra.mxu0 %v3958
    %5474 = vmatprep.mubr.bf16.mxu0 %v1124
    %5475 = vmatmul.mubr.bf16.gmra.mrb[0].mxu0 %v1122
    %v5476 = vpop.f32.mrb[0].mxu0
    %v5477 = vadd.f32 %v5436, %v5476
    %v5478 = vpop.f32.mrb[0].mxu0
    %v5479 = vadd.f32 %v5438, %v5478
    %v5480 = vpop.f32.mrb[0].mxu0
    %v5481 = vpop.f32.mrb[0].mxu0
    %5482 = vdwg.mxu0
    %5483 = vmatprep.subr.bf16.mxu0 %v3962
    %5484 = vmatpush1.bf16.msra.mxu0 %v3961
    %5485 = vmatprep.subr.bf16.mxu0 %v3965
    %5486 = vmatpush1.bf16.msra.mxu0 %v3964
    %5487 = vmatprep.subr.bf16.mxu0 %v3968
    %5488 = vmatpush1.bf16.msra.mxu0 %v3967
    %5489 = vmatprep.subr.bf16.mxu0 %v3971
    %5490 = vmatpush1.bf16.msra.mxu0 %v3970
    %5491 = vmatprep.subr.bf16.mxu0 %v3974
    %5492 = vmatpush1.bf16.msra.mxu0 %v3973
    %5493 = vmatprep.subr.bf16.mxu0 %v3977
    %5494 = vmatpush1.bf16.msra.mxu0 %v3976
    %5495 = vmatprep.subr.bf16.mxu0 %v3980
    %5496 = vmatpush1.bf16.msra.mxu0 %v3979
    %5497 = vmatprep.subr.bf16.mxu0 %v3983
    %5498 = vmatpush1.bf16.msra.mxu0 %v3982
    %5499 = vmatprep.subr.bf16.mxu0 %v3986
    %5500 = vmatpush1.bf16.msra.mxu0 %v3985
    %5501 = vmatprep.subr.bf16.mxu0 %v3989
    %5502 = vmatpush1.bf16.msra.mxu0 %v3988
    %5503 = vmatprep.subr.bf16.mxu0 %v3992
    %5504 = vmatpush1.bf16.msra.mxu0 %v3991
    %5505 = vmatprep.subr.bf16.mxu0 %v3995
    %5506 = vmatpush1.bf16.msra.mxu0 %v3994
    %5507 = vmatprep.subr.bf16.mxu0 %v3998
    %5508 = vmatpush1.bf16.msra.mxu0 %v3997
    %5509 = vmatprep.subr.bf16.mxu0 %v4001
    %5510 = vmatpush1.bf16.msra.mxu0 %v4000
    %5511 = vmatprep.subr.bf16.mxu0 %v4004
    %5512 = vmatpush1.bf16.msra.mxu0 %v4003
    %5513 = vmatprep.subr.bf16.mxu0 %v4007
    %5514 = vmatpush1.bf16.msra.mxu0 %v4006
    %5515 = vmatprep.mubr.bf16.mxu0 %v1121
    %5516 = vmatmul.mubr.bf16.gmra.mrb[0].mxu0 %v1107
    %v5517 = vpop.f32.mrb[0].mxu0
    %v5518 = vadd.f32 %v5477, %v5517
    %v5519 = vpop.f32.mrb[0].mxu0
    %v5520 = vadd.f32 %v5479, %v5519
    %v5521 = vpop.f32.mrb[0].mxu0
    %v5522 = vpop.f32.mrb[0].mxu0
    %5523 = vdwg.mxu0
    %5524 = vmatprep.subr.bf16.mxu0 %v4010
    %5525 = vmatpush1.bf16.msra.mxu0 %v4009
    %5526 = vmatprep.subr.bf16.mxu0 %v4013
    %5527 = vmatpush1.bf16.msra.mxu0 %v4012
    %5528 = vmatprep.subr.bf16.mxu0 %v4016
    %5529 = vmatpush1.bf16.msra.mxu0 %v4015
    %5530 = vmatprep.subr.bf16.mxu0 %v4019
    %5531 = vmatpush1.bf16.msra.mxu0 %v4018
    %5532 = vmatprep.subr.bf16.mxu0 %v4022
    %5533 = vmatpush1.bf16.msra.mxu0 %v4021
    %5534 = vmatprep.subr.bf16.mxu0 %v4025
    %5535 = vmatpush1.bf16.msra.mxu0 %v4024
    %5536 = vmatprep.subr.bf16.mxu0 %v4028
    %5537 = vmatpush1.bf16.msra.mxu0 %v4027
    %5538 = vmatprep.subr.bf16.mxu0 %v4031
    %5539 = vmatpush1.bf16.msra.mxu0 %v4030
    %5540 = vmatprep.subr.bf16.mxu0 %v4034
    %5541 = vmatpush1.bf16.msra.mxu0 %v4033
    %5542 = vmatprep.subr.bf16.mxu0 %v4037
    %5543 = vmatpush1.bf16.msra.mxu0 %v4036
    %5544 = vmatprep.subr.bf16.mxu0 %v4040
    %5545 = vmatpush1.bf16.msra.mxu0 %v4039
    %5546 = vmatprep.subr.bf16.mxu0 %v4043
    %5547 = vmatpush1.bf16.msra.mxu0 %v4042
    %5548 = vmatprep.subr.bf16.mxu0 %v4046
    %5549 = vmatpush1.bf16.msra.mxu0 %v4045
    %5550 = vmatprep.subr.bf16.mxu0 %v4049
    %5551 = vmatpush1.bf16.msra.mxu0 %v4048
    %5552 = vmatprep.subr.bf16.mxu0 %v4052
    %5553 = vmatpush1.bf16.msra.mxu0 %v4051
    %5554 = vmatprep.subr.bf16.mxu0 %v4055
    %5555 = vmatpush1.bf16.msra.mxu0 %v4054
    %5556 = vmatprep.mubr.bf16.mxu0 %v1125
    %5557 = vmatmul.mubr.bf16.gmra.mrb[0].mxu0 %v1123
    %v5558 = vpop.f32.mrb[0].mxu0
    %v5559 = vadd.f32 %v5518, %v5558
    %v5560 = vpop.f32.mrb[0].mxu0
    %v5561 = vadd.f32 %v5520, %v5560
    %v5562 = vpop.f32.mrb[0].mxu0
    %v5563 = vpop.f32.mrb[0].mxu0
    %5564 = vdwg.mxu0
    %5565 = vmatprep.subr.bf16.mxu0 %v4058
    %5566 = vmatpush1.bf16.msra.mxu0 %v4057
    %5567 = vmatprep.subr.bf16.mxu0 %v4061
    %5568 = vmatpush1.bf16.msra.mxu0 %v4060
    %5569 = vmatprep.subr.bf16.mxu0 %v4064
    %5570 = vmatpush1.bf16.msra.mxu0 %v4063
    %5571 = vmatprep.subr.bf16.mxu0 %v4067
    %5572 = vmatpush1.bf16.msra.mxu0 %v4066
    %5573 = vmatprep.subr.bf16.mxu0 %v4070
    %5574 = vmatpush1.bf16.msra.mxu0 %v4069
    %5575 = vmatprep.subr.bf16.mxu0 %v4073
    %5576 = vmatpush1.bf16.msra.mxu0 %v4072
    %5577 = vmatprep.subr.bf16.mxu0 %v4076
    %5578 = vmatpush1.bf16.msra.mxu0 %v4075
    %5579 = vmatprep.subr.bf16.mxu0 %v4079
    %5580 = vmatpush1.bf16.msra.mxu0 %v4078
    %5581 = vmatprep.subr.bf16.mxu0 %v4082
    %5582 = vmatpush1.bf16.msra.mxu0 %v4081
    %5583 = vmatprep.subr.bf16.mxu0 %v4085
    %5584 = vmatpush1.bf16.msra.mxu0 %v4084
    %5585 = vmatprep.subr.bf16.mxu0 %v4088
    %5586 = vmatpush1.bf16.msra.mxu0 %v4087
    %5587 = vmatprep.subr.bf16.mxu0 %v4091
    %5588 = vmatpush1.bf16.msra.mxu0 %v4090
    %5589 = vmatprep.subr.bf16.mxu0 %v4094
    %5590 = vmatpush1.bf16.msra.mxu0 %v4093
    %5591 = vmatprep.subr.bf16.mxu0 %v4097
    %5592 = vmatpush1.bf16.msra.mxu0 %v4096
    %5593 = vmatprep.subr.bf16.mxu0 %v4100
    %5594 = vmatpush1.bf16.msra.mxu0 %v4099
    %5595 = vmatprep.subr.bf16.mxu0 %v4103
    %5596 = vmatpush1.bf16.msra.mxu0 %v4102
    %5597 = vmatprep.mubr.bf16.mxu0 %v1163
    %5598 = vmatmul.mubr.bf16.gmra.mrb[0].mxu0 %v1149
    %v5599 = vpop.f32.mrb[0].mxu0
    %v5600 = vadd.f32 %v5559, %v5599
    %v5601 = vpop.f32.mrb[0].mxu0
    %v5602 = vadd.f32 %v5561, %v5601
    %v5603 = vpop.f32.mrb[0].mxu0
    %v5604 = vpop.f32.mrb[0].mxu0
    %5605 = vdwg.mxu0
    %5606 = vmatprep.subr.bf16.mxu0 %v4106
    %5607 = vmatpush1.bf16.msra.mxu0 %v4105
    %5608 = vmatprep.subr.bf16.mxu0 %v4109
    %5609 = vmatpush1.bf16.msra.mxu0 %v4108
    %5610 = vmatprep.subr.bf16.mxu0 %v4112
    %5611 = vmatpush1.bf16.msra.mxu0 %v4111
    %5612 = vmatprep.subr.bf16.mxu0 %v4115
    %5613 = vmatpush1.bf16.msra.mxu0 %v4114
    %5614 = vmatprep.subr.bf16.mxu0 %v4118
    %5615 = vmatpush1.bf16.msra.mxu0 %v4117
    %5616 = vmatprep.subr.bf16.mxu0 %v4121
    %5617 = vmatpush1.bf16.msra.mxu0 %v4120
    %5618 = vmatprep.subr.bf16.mxu0 %v4124
    %5619 = vmatpush1.bf16.msra.mxu0 %v4123
    %5620 = vmatprep.subr.bf16.mxu0 %v4127
    %5621 = vmatpush1.bf16.msra.mxu0 %v4126
    %5622 = vmatprep.subr.bf16.mxu0 %v4130
    %5623 = vmatpush1.bf16.msra.mxu0 %v4129
    %5624 = vmatprep.subr.bf16.mxu0 %v4133
    %5625 = vmatpush1.bf16.msra.mxu0 %v4132
    %5626 = vmatprep.subr.bf16.mxu0 %v4136
    %5627 = vmatpush1.bf16.msra.mxu0 %v4135
    %5628 = vmatprep.subr.bf16.mxu0 %v4139
    %5629 = vmatpush1.bf16.msra.mxu0 %v4138
    %5630 = vmatprep.subr.bf16.mxu0 %v4142
    %5631 = vmatpush1.bf16.msra.mxu0 %v4141
    %5632 = vmatprep.subr.bf16.mxu0 %v4145
    %5633 = vmatpush1.bf16.msra.mxu0 %v4144
    %5634 = vmatprep.subr.bf16.mxu0 %v4148
    %5635 = vmatpush1.bf16.msra.mxu0 %v4147
    %5636 = vmatprep.subr.bf16.mxu0 %v4151
    %5637 = vmatpush1.bf16.msra.mxu0 %v4150
    %5638 = vmatprep.mubr.bf16.mxu0 %v1173
    %5639 = vmatmul.mubr.bf16.gmra.mrb[0].mxu0 %v1171
    %v5640 = vpop.f32.mrb[0].mxu0
    %v5641 = vadd.f32 %v5600, %v5640
    %v5642 = vpop.f32.mrb[0].mxu0
    %v5643 = vadd.f32 %v5602, %v5642
    %v5644 = vpop.f32.mrb[0].mxu0
    %v5645 = vpop.f32.mrb[0].mxu0
    %5646 = vdwg.mxu0
    %5647 = vmatprep.subr.bf16.mxu0 %v4154
    %5648 = vmatpush1.bf16.msra.mxu0 %v4153
    %5649 = vmatprep.subr.bf16.mxu0 %v4157
    %5650 = vmatpush1.bf16.msra.mxu0 %v4156
    %5651 = vmatprep.subr.bf16.mxu0 %v4160
    %5652 = vmatpush1.bf16.msra.mxu0 %v4159
    %5653 = vmatprep.subr.bf16.mxu0 %v4163
    %5654 = vmatpush1.bf16.msra.mxu0 %v4162
    %5655 = vmatprep.subr.bf16.mxu0 %v4166
    %5656 = vmatpush1.bf16.msra.mxu0 %v4165
    %5657 = vmatprep.subr.bf16.mxu0 %v4169
    %5658 = vmatpush1.bf16.msra.mxu0 %v4168
    %5659 = vmatprep.subr.bf16.mxu0 %v4172
    %5660 = vmatpush1.bf16.msra.mxu0 %v4171
    %5661 = vmatprep.subr.bf16.mxu0 %v4175
    %5662 = vmatpush1.bf16.msra.mxu0 %v4174
    %5663 = vmatprep.subr.bf16.mxu0 %v4178
    %5664 = vmatpush1.bf16.msra.mxu0 %v4177
    %5665 = vmatprep.subr.bf16.mxu0 %v4181
    %5666 = vmatpush1.bf16.msra.mxu0 %v4180
    %5667 = vmatprep.subr.bf16.mxu0 %v4184
    %5668 = vmatpush1.bf16.msra.mxu0 %v4183
    %5669 = vmatprep.subr.bf16.mxu0 %v4187
    %5670 = vmatpush1.bf16.msra.mxu0 %v4186
    %5671 = vmatprep.subr.bf16.mxu0 %v4190
    %5672 = vmatpush1.bf16.msra.mxu0 %v4189
    %5673 = vmatprep.subr.bf16.mxu0 %v4193
    %5674 = vmatpush1.bf16.msra.mxu0 %v4192
    %5675 = vmatprep.subr.bf16.mxu0 %v4196
    %5676 = vmatpush1.bf16.msra.mxu0 %v4195
    %5677 = vmatprep.subr.bf16.mxu0 %v4199
    %5678 = vmatpush1.bf16.msra.mxu0 %v4198
    %5679 = vmatprep.mubr.bf16.mxu0 %v1170
    %5680 = vmatmul.mubr.bf16.gmra.mrb[0].mxu0 %v1156
    %v5681 = vpop.f32.mrb[0].mxu0
    %v5682 = vadd.f32 %v5641, %v5681
    %v5683 = vpop.f32.mrb[0].mxu0
    %v5684 = vadd.f32 %v5643, %v5683
    %v5685 = vpop.f32.mrb[0].mxu0
    %v5686 = vpop.f32.mrb[0].mxu0
    %5687 = vdwg.mxu0
    %5688 = vmatprep.subr.bf16.mxu0 %v4202
    %5689 = vmatpush1.bf16.msra.mxu0 %v4201
    %5690 = vmatprep.subr.bf16.mxu0 %v4205
    %5691 = vmatpush1.bf16.msra.mxu0 %v4204
    %5692 = vmatprep.subr.bf16.mxu0 %v4208
    %5693 = vmatpush1.bf16.msra.mxu0 %v4207
    %5694 = vmatprep.subr.bf16.mxu0 %v4211
    %5695 = vmatpush1.bf16.msra.mxu0 %v4210
    %5696 = vmatprep.subr.bf16.mxu0 %v4214
    %5697 = vmatpush1.bf16.msra.mxu0 %v4213
    %5698 = vmatprep.subr.bf16.mxu0 %v4217
    %5699 = vmatpush1.bf16.msra.mxu0 %v4216
    %5700 = vmatprep.subr.bf16.mxu0 %v4220
    %5701 = vmatpush1.bf16.msra.mxu0 %v4219
    %5702 = vmatprep.subr.bf16.mxu0 %v4223
    %5703 = vmatpush1.bf16.msra.mxu0 %v4222
    %5704 = vmatprep.subr.bf16.mxu0 %v4226
    %5705 = vmatpush1.bf16.msra.mxu0 %v4225
    %5706 = vmatprep.subr.bf16.mxu0 %v4229
    %5707 = vmatpush1.bf16.msra.mxu0 %v4228
    %5708 = vmatprep.subr.bf16.mxu0 %v4232
    %5709 = vmatpush1.bf16.msra.mxu0 %v4231
    %5710 = vmatprep.subr.bf16.mxu0 %v4235
    %5711 = vmatpush1.bf16.msra.mxu0 %v4234
    %5712 = vmatprep.subr.bf16.mxu0 %v4238
    %5713 = vmatpush1.bf16.msra.mxu0 %v4237
    %5714 = vmatprep.subr.bf16.mxu0 %v4241
    %5715 = vmatpush1.bf16.msra.mxu0 %v4240
    %5716 = vmatprep.subr.bf16.mxu0 %v4244
    %5717 = vmatpush1.bf16.msra.mxu0 %v4243
    %5718 = vmatprep.subr.bf16.mxu0 %v4247
    %5719 = vmatpush1.bf16.msra.mxu0 %v4246
    %5720 = vmatprep.mubr.bf16.mxu0 %v1174
    %5721 = vmatmul.mubr.bf16.gmra.mrb[0].mxu0 %v1172
    %v5722 = vpop.f32.mrb[0].mxu0
    %v5723 = vadd.f32 %v5682, %v5722
    %v5724 = vpop.f32.mrb[0].mxu0
    %v5725 = vadd.f32 %v5684, %v5724
    %v5726 = vpop.f32.mrb[0].mxu0
    %v5727 = vpop.f32.mrb[0].mxu0
    %5728 = vdwg.mxu0
    %5729 = vmatprep.subr.bf16.mxu0 %v4250
    %5730 = vmatpush1.bf16.msra.mxu0 %v4249
    %5731 = vmatprep.subr.bf16.mxu0 %v4253
    %5732 = vmatpush1.bf16.msra.mxu0 %v4252
    %5733 = vmatprep.subr.bf16.mxu0 %v4256
    %5734 = vmatpush1.bf16.msra.mxu0 %v4255
    %5735 = vmatprep.subr.bf16.mxu0 %v4259
    %5736 = vmatpush1.bf16.msra.mxu0 %v4258
    %5737 = vmatprep.subr.bf16.mxu0 %v4262
    %5738 = vmatpush1.bf16.msra.mxu0 %v4261
    %5739 = vmatprep.subr.bf16.mxu0 %v4265
    %5740 = vmatpush1.bf16.msra.mxu0 %v4264
    %5741 = vmatprep.subr.bf16.mxu0 %v4268
    %5742 = vmatpush1.bf16.msra.mxu0 %v4267
    %5743 = vmatprep.subr.bf16.mxu0 %v4271
    %5744 = vmatpush1.bf16.msra.mxu0 %v4270
    %5745 = vmatprep.subr.bf16.mxu0 %v4274
    %5746 = vmatpush1.bf16.msra.mxu0 %v4273
    %5747 = vmatprep.subr.bf16.mxu0 %v4277
    %5748 = vmatpush1.bf16.msra.mxu0 %v4276
    %5749 = vmatprep.subr.bf16.mxu0 %v4280
    %5750 = vmatpush1.bf16.msra.mxu0 %v4279
    %5751 = vmatprep.subr.bf16.mxu0 %v4283
    %5752 = vmatpush1.bf16.msra.mxu0 %v4282
    %5753 = vmatprep.subr.bf16.mxu0 %v4286
    %5754 = vmatpush1.bf16.msra.mxu0 %v4285
    %5755 = vmatprep.subr.bf16.mxu0 %v4289
    %5756 = vmatpush1.bf16.msra.mxu0 %v4288
    %5757 = vmatprep.subr.bf16.mxu0 %v4292
    %5758 = vmatpush1.bf16.msra.mxu0 %v4291
    %5759 = vmatprep.subr.bf16.mxu0 %v4295
    %5760 = vmatpush1.bf16.msra.mxu0 %v4294
    %5761 = vmatprep.mubr.bf16.mxu0 %v1212
    %5762 = vmatmul.mubr.bf16.gmra.mrb[0].mxu0 %v1198
    %v5763 = vpop.f32.mrb[0].mxu0
    %v5764 = vadd.f32 %v5723, %v5763
    %v5765 = vpop.f32.mrb[0].mxu0
    %v5766 = vadd.f32 %v5725, %v5765
    %v5767 = vpop.f32.mrb[0].mxu0
    %v5768 = vpop.f32.mrb[0].mxu0
    %5769 = vdwg.mxu0
    %5770 = vmatprep.subr.bf16.mxu0 %v4298
    %5771 = vmatpush1.bf16.msra.mxu0 %v4297
    %5772 = vmatprep.subr.bf16.mxu0 %v4301
    %5773 = vmatpush1.bf16.msra.mxu0 %v4300
    %5774 = vmatprep.subr.bf16.mxu0 %v4304
    %5775 = vmatpush1.bf16.msra.mxu0 %v4303
    %5776 = vmatprep.subr.bf16.mxu0 %v4307
    %5777 = vmatpush1.bf16.msra.mxu0 %v4306
    %5778 = vmatprep.subr.bf16.mxu0 %v4310
    %5779 = vmatpush1.bf16.msra.mxu0 %v4309
    %5780 = vmatprep.subr.bf16.mxu0 %v4313
    %5781 = vmatpush1.bf16.msra.mxu0 %v4312
    %5782 = vmatprep.subr.bf16.mxu0 %v4316
    %5783 = vmatpush1.bf16.msra.mxu0 %v4315
    %5784 = vmatprep.subr.bf16.mxu0 %v4319
    %5785 = vmatpush1.bf16.msra.mxu0 %v4318
    %5786 = vmatprep.subr.bf16.mxu0 %v4322
    %5787 = vmatpush1.bf16.msra.mxu0 %v4321
    %5788 = vmatprep.subr.bf16.mxu0 %v4325
    %5789 = vmatpush1.bf16.msra.mxu0 %v4324
    %5790 = vmatprep.subr.bf16.mxu0 %v4328
    %5791 = vmatpush1.bf16.msra.mxu0 %v4327
    %5792 = vmatprep.subr.bf16.mxu0 %v4331
    %5793 = vmatpush1.bf16.msra.mxu0 %v4330
    %5794 = vmatprep.subr.bf16.mxu0 %v4334
    %5795 = vmatpush1.bf16.msra.mxu0 %v4333
    %5796 = vmatprep.subr.bf16.mxu0 %v4337
    %5797 = vmatpush1.bf16.msra.mxu0 %v4336
    %5798 = vmatprep.subr.bf16.mxu0 %v4340
    %5799 = vmatpush1.bf16.msra.mxu0 %v4339
    %5800 = vmatprep.subr.bf16.mxu0 %v4343
    %5801 = vmatpush1.bf16.msra.mxu0 %v4342
    %5802 = vmatprep.mubr.bf16.mxu0 %v1222
    %5803 = vmatmul.mubr.bf16.gmra.mrb[0].mxu0 %v1220
    %v5804 = vpop.f32.mrb[0].mxu0
    %v5805 = vadd.f32 %v5764, %v5804
    %v5806 = vpop.f32.mrb[0].mxu0
    %v5807 = vadd.f32 %v5766, %v5806
    %v5808 = vpop.f32.mrb[0].mxu0
    %v5809 = vpop.f32.mrb[0].mxu0
    %5810 = vdwg.mxu0
    %5811 = vmatprep.subr.bf16.mxu0 %v4346
    %5812 = vmatpush1.bf16.msra.mxu0 %v4345
    %5813 = vmatprep.subr.bf16.mxu0 %v4349
    %5814 = vmatpush1.bf16.msra.mxu0 %v4348
    %5815 = vmatprep.subr.bf16.mxu0 %v4352
    %5816 = vmatpush1.bf16.msra.mxu0 %v4351
    %5817 = vmatprep.subr.bf16.mxu0 %v4355
    %5818 = vmatpush1.bf16.msra.mxu0 %v4354
    %5819 = vmatprep.subr.bf16.mxu0 %v4358
    %5820 = vmatpush1.bf16.msra.mxu0 %v4357
    %5821 = vmatprep.subr.bf16.mxu0 %v4361
    %5822 = vmatpush1.bf16.msra.mxu0 %v4360
    %5823 = vmatprep.subr.bf16.mxu0 %v4364
    %5824 = vmatpush1.bf16.msra.mxu0 %v4363
    %5825 = vmatprep.subr.bf16.mxu0 %v4367
    %5826 = vmatpush1.bf16.msra.mxu0 %v4366
    %5827 = vmatprep.subr.bf16.mxu0 %v4370
    %5828 = vmatpush1.bf16.msra.mxu0 %v4369
    %5829 = vmatprep.subr.bf16.mxu0 %v4373
    %5830 = vmatpush1.bf16.msra.mxu0 %v4372
    %5831 = vmatprep.subr.bf16.mxu0 %v4376
    %5832 = vmatpush1.bf16.msra.mxu0 %v4375
    %5833 = vmatprep.subr.bf16.mxu0 %v4379
    %5834 = vmatpush1.bf16.msra.mxu0 %v4378
    %5835 = vmatprep.subr.bf16.mxu0 %v4382
    %5836 = vmatpush1.bf16.msra.mxu0 %v4381
    %5837 = vmatprep.subr.bf16.mxu0 %v4385
    %5838 = vmatpush1.bf16.msra.mxu0 %v4384
    %5839 = vmatprep.subr.bf16.mxu0 %v4388
    %5840 = vmatpush1.bf16.msra.mxu0 %v4387
    %5841 = vmatprep.subr.bf16.mxu0 %v4391
    %5842 = vmatpush1.bf16.msra.mxu0 %v4390
    %5843 = vmatprep.mubr.bf16.mxu0 %v1219
    %5844 = vmatmul.mubr.bf16.gmra.mrb[0].mxu0 %v1205
    %v5845 = vpop.f32.mrb[0].mxu0
    %v5846 = vadd.f32 %v5805, %v5845
    %v5847 = vpop.f32.mrb[0].mxu0
    %v5848 = vadd.f32 %v5807, %v5847
    %v5849 = vpop.f32.mrb[0].mxu0
    %v5850 = vpop.f32.mrb[0].mxu0
    %5851 = vdwg.mxu0
    %5852 = vmatprep.subr.bf16.mxu0 %v4394
    %5853 = vmatpush1.bf16.msra.mxu0 %v4393
    %5854 = vmatprep.subr.bf16.mxu0 %v4397
    %5855 = vmatpush1.bf16.msra.mxu0 %v4396
    %5856 = vmatprep.subr.bf16.mxu0 %v4400
    %5857 = vmatpush1.bf16.msra.mxu0 %v4399
    %5858 = vmatprep.subr.bf16.mxu0 %v4403
    %5859 = vmatpush1.bf16.msra.mxu0 %v4402
    %5860 = vmatprep.subr.bf16.mxu0 %v4406
    %5861 = vmatpush1.bf16.msra.mxu0 %v4405
    %5862 = vmatprep.subr.bf16.mxu0 %v4409
    %5863 = vmatpush1.bf16.msra.mxu0 %v4408
    %5864 = vmatprep.subr.bf16.mxu0 %v4412
    %5865 = vmatpush1.bf16.msra.mxu0 %v4411
    %5866 = vmatprep.subr.bf16.mxu0 %v4415
    %5867 = vmatpush1.bf16.msra.mxu0 %v4414
    %5868 = vmatprep.subr.bf16.mxu0 %v4418
    %5869 = vmatpush1.bf16.msra.mxu0 %v4417
    %5870 = vmatprep.subr.bf16.mxu0 %v4421
    %5871 = vmatpush1.bf16.msra.mxu0 %v4420
    %5872 = vmatprep.subr.bf16.mxu0 %v4424
    %5873 = vmatpush1.bf16.msra.mxu0 %v4423
    %5874 = vmatprep.subr.bf16.mxu0 %v4427
    %5875 = vmatpush1.bf16.msra.mxu0 %v4426
    %5876 = vmatprep.subr.bf16.mxu0 %v4430
    %5877 = vmatpush1.bf16.msra.mxu0 %v4429
    %5878 = vmatprep.subr.bf16.mxu0 %v4433
    %5879 = vmatpush1.bf16.msra.mxu0 %v4432
    %5880 = vmatprep.subr.bf16.mxu0 %v4436
    %5881 = vmatpush1.bf16.msra.mxu0 %v4435
    %5882 = vmatprep.subr.bf16.mxu0 %v4439
    %5883 = vmatpush1.bf16.msra.mxu0 %v4438
    %5884 = vmatprep.mubr.bf16.mxu0 %v1223
    %5885 = vmatmul.mubr.bf16.gmra.mrb[0].mxu0 %v1221
    %v5886 = vpop.f32.mrb[0].mxu0
    %v5887 = vadd.f32 %v5846, %v5886
    %v5888 = vpop.f32.mrb[0].mxu0
    %v5889 = vadd.f32 %v5848, %v5888
    %v5890 = vpop.f32.mrb[0].mxu0
    %v5891 = vpop.f32.mrb[0].mxu0
    %5892 = vdwg.mxu0
    %5893 = vmatprep.subr.bf16.mxu0 %v4442
    %5894 = vmatpush1.bf16.msra.mxu0 %v4441
    %5895 = vmatprep.subr.bf16.mxu0 %v4445
    %5896 = vmatpush1.bf16.msra.mxu0 %v4444
    %5897 = vmatprep.subr.bf16.mxu0 %v4448
    %5898 = vmatpush1.bf16.msra.mxu0 %v4447
    %5899 = vmatprep.subr.bf16.mxu0 %v4451
    %5900 = vmatpush1.bf16.msra.mxu0 %v4450
    %5901 = vmatprep.subr.bf16.mxu0 %v4454
    %5902 = vmatpush1.bf16.msra.mxu0 %v4453
    %5903 = vmatprep.subr.bf16.mxu0 %v4457
    %5904 = vmatpush1.bf16.msra.mxu0 %v4456
    %5905 = vmatprep.subr.bf16.mxu0 %v4460
    %5906 = vmatpush1.bf16.msra.mxu0 %v4459
    %5907 = vmatprep.subr.bf16.mxu0 %v4463
    %5908 = vmatpush1.bf16.msra.mxu0 %v4462
    %5909 = vmatprep.subr.bf16.mxu0 %v4466
    %5910 = vmatpush1.bf16.msra.mxu0 %v4465
    %5911 = vmatprep.subr.bf16.mxu0 %v4469
    %5912 = vmatpush1.bf16.msra.mxu0 %v4468
    %5913 = vmatprep.subr.bf16.mxu0 %v4472
    %5914 = vmatpush1.bf16.msra.mxu0 %v4471
    %5915 = vmatprep.subr.bf16.mxu0 %v4475
    %5916 = vmatpush1.bf16.msra.mxu0 %v4474
    %5917 = vmatprep.subr.bf16.mxu0 %v4478
    %5918 = vmatpush1.bf16.msra.mxu0 %v4477
    %5919 = vmatprep.subr.bf16.mxu0 %v4481
    %5920 = vmatpush1.bf16.msra.mxu0 %v4480
    %5921 = vmatprep.subr.bf16.mxu0 %v4484
    %5922 = vmatpush1.bf16.msra.mxu0 %v4483
    %5923 = vmatprep.subr.bf16.mxu0 %v4487
    %5924 = vmatpush1.bf16.msra.mxu0 %v4486
    %5925 = vmatprep.mubr.bf16.mxu0 %v1261
    %5926 = vmatmul.mubr.bf16.gmra.mrb[0].mxu0 %v1247
    %v5927 = vpop.f32.mrb[0].mxu0
    %v5928 = vadd.f32 %v5887, %v5927
    %v5929 = vpop.f32.mrb[0].mxu0
    %v5930 = vadd.f32 %v5889, %v5929
    %v5931 = vpop.f32.mrb[0].mxu0
    %v5932 = vpop.f32.mrb[0].mxu0
    %5933 = vdwg.mxu0
    %5934 = vmatprep.subr.bf16.mxu0 %v4490
    %5935 = vmatpush1.bf16.msra.mxu0 %v4489
    %5936 = vmatprep.subr.bf16.mxu0 %v4493
    %5937 = vmatpush1.bf16.msra.mxu0 %v4492
    %5938 = vmatprep.subr.bf16.mxu0 %v4496
    %5939 = vmatpush1.bf16.msra.mxu0 %v4495
    %5940 = vmatprep.subr.bf16.mxu0 %v4499
    %5941 = vmatpush1.bf16.msra.mxu0 %v4498
    %5942 = vmatprep.subr.bf16.mxu0 %v4502
    %5943 = vmatpush1.bf16.msra.mxu0 %v4501
    %5944 = vmatprep.subr.bf16.mxu0 %v4505
    %5945 = vmatpush1.bf16.msra.mxu0 %v4504
    %5946 = vmatprep.subr.bf16.mxu0 %v4508
    %5947 = vmatpush1.bf16.msra.mxu0 %v4507
    %5948 = vmatprep.subr.bf16.mxu0 %v4511
    %5949 = vmatpush1.bf16.msra.mxu0 %v4510
    %5950 = vmatprep.subr.bf16.mxu0 %v4514
    %5951 = vmatpush1.bf16.msra.mxu0 %v4513
    %5952 = vmatprep.subr.bf16.mxu0 %v4517
    %5953 = vmatpush1.bf16.msra.mxu0 %v4516
    %5954 = vmatprep.subr.bf16.mxu0 %v4520
    %5955 = vmatpush1.bf16.msra.mxu0 %v4519
    %5956 = vmatprep.subr.bf16.mxu0 %v4523
    %5957 = vmatpush1.bf16.msra.mxu0 %v4522
    %5958 = vmatprep.subr.bf16.mxu0 %v4526
    %5959 = vmatpush1.bf16.msra.mxu0 %v4525
    %5960 = vmatprep.subr.bf16.mxu0 %v4529
    %5961 = vmatpush1.bf16.msra.mxu0 %v4528
    %5962 = vmatprep.subr.bf16.mxu0 %v4532
    %5963 = vmatpush1.bf16.msra.mxu0 %v4531
    %5964 = vmatprep.subr.bf16.mxu0 %v4535
    %5965 = vmatpush1.bf16.msra.mxu0 %v4534
    %5966 = vmatprep.mubr.bf16.mxu0 %v1271
    %5967 = vmatmul.mubr.bf16.gmra.mrb[0].mxu0 %v1269
    %v5968 = vpop.f32.mrb[0].mxu0
    %v5969 = vadd.f32 %v5928, %v5968
    %v5970 = vpop.f32.mrb[0].mxu0
    %v5971 = vadd.f32 %v5930, %v5970
    %v5972 = vpop.f32.mrb[0].mxu0
    %v5973 = vpop.f32.mrb[0].mxu0
    %5974 = vdwg.mxu0
    %5975 = vmatprep.subr.bf16.mxu0 %v4538
    %5976 = vmatpush1.bf16.msra.mxu0 %v4537
    %5977 = vmatprep.subr.bf16.mxu0 %v4541
    %5978 = vmatpush1.bf16.msra.mxu0 %v4540
    %5979 = vmatprep.subr.bf16.mxu0 %v4544
    %5980 = vmatpush1.bf16.msra.mxu0 %v4543
    %5981 = vmatprep.subr.bf16.mxu0 %v4547
    %5982 = vmatpush1.bf16.msra.mxu0 %v4546
    %5983 = vmatprep.subr.bf16.mxu0 %v4550
    %5984 = vmatpush1.bf16.msra.mxu0 %v4549
    %5985 = vmatprep.subr.bf16.mxu0 %v4553
    %5986 = vmatpush1.bf16.msra.mxu0 %v4552
    %5987 = vmatprep.subr.bf16.mxu0 %v4556
    %5988 = vmatpush1.bf16.msra.mxu0 %v4555
    %5989 = vmatprep.subr.bf16.mxu0 %v4559
    %5990 = vmatpush1.bf16.msra.mxu0 %v4558
    %5991 = vmatprep.subr.bf16.mxu0 %v4562
    %5992 = vmatpush1.bf16.msra.mxu0 %v4561
    %5993 = vmatprep.subr.bf16.mxu0 %v4565
    %5994 = vmatpush1.bf16.msra.mxu0 %v4564
    %5995 = vmatprep.subr.bf16.mxu0 %v4568
    %5996 = vmatpush1.bf16.msra.mxu0 %v4567
    %5997 = vmatprep.subr.bf16.mxu0 %v4571
    %5998 = vmatpush1.bf16.msra.mxu0 %v4570
    %5999 = vmatprep.subr.bf16.mxu0 %v4574
    %6000 = vmatpush1.bf16.msra.mxu0 %v4573
    %6001 = vmatprep.subr.bf16.mxu0 %v4577
    %6002 = vmatpush1.bf16.msra.mxu0 %v4576
    %6003 = vmatprep.subr.bf16.mxu0 %v4580
    %6004 = vmatpush1.bf16.msra.mxu0 %v4579
    %6005 = vmatprep.subr.bf16.mxu0 %v4583
    %6006 = vmatpush1.bf16.msra.mxu0 %v4582
    %6007 = vmatprep.mubr.bf16.mxu0 %v1268
    %6008 = vmatmul.mubr.bf16.gmra.mrb[0].mxu0 %v1254
    %v6009 = vpop.f32.mrb[0].mxu0
    %v6010 = vadd.f32 %v5969, %v6009
    %v6011 = vpop.f32.mrb[0].mxu0
    %v6012 = vadd.f32 %v5971, %v6011
    %v6013 = vpop.f32.mrb[0].mxu0
    %v6014 = vpop.f32.mrb[0].mxu0
    %6015 = vdwg.mxu0
    %6016 = vmatprep.subr.bf16.mxu0 %v4586
    %6017 = vmatpush1.bf16.msra.mxu0 %v4585
    %6018 = vmatprep.subr.bf16.mxu0 %v4589
    %6019 = vmatpush1.bf16.msra.mxu0 %v4588
    %6020 = vmatprep.subr.bf16.mxu0 %v4592
    %6021 = vmatpush1.bf16.msra.mxu0 %v4591
    %6022 = vmatprep.subr.bf16.mxu0 %v4595
    %6023 = vmatpush1.bf16.msra.mxu0 %v4594
    %6024 = vmatprep.subr.bf16.mxu0 %v4598
    %6025 = vmatpush1.bf16.msra.mxu0 %v4597
    %6026 = vmatprep.subr.bf16.mxu0 %v4601
    %6027 = vmatpush1.bf16.msra.mxu0 %v4600
    %6028 = vmatprep.subr.bf16.mxu0 %v4604
    %6029 = vmatpush1.bf16.msra.mxu0 %v4603
    %6030 = vmatprep.subr.bf16.mxu0 %v4607
    %6031 = vmatpush1.bf16.msra.mxu0 %v4606
    %6032 = vmatprep.subr.bf16.mxu0 %v4610
    %6033 = vmatpush1.bf16.msra.mxu0 %v4609
    %6034 = vmatprep.subr.bf16.mxu0 %v4613
    %6035 = vmatpush1.bf16.msra.mxu0 %v4612
    %6036 = vmatprep.subr.bf16.mxu0 %v4616
    %6037 = vmatpush1.bf16.msra.mxu0 %v4615
    %6038 = vmatprep.subr.bf16.mxu0 %v4619
    %6039 = vmatpush1.bf16.msra.mxu0 %v4618
    %6040 = vmatprep.subr.bf16.mxu0 %v4622
    %6041 = vmatpush1.bf16.msra.mxu0 %v4621
    %6042 = vmatprep.subr.bf16.mxu0 %v4625
    %6043 = vmatpush1.bf16.msra.mxu0 %v4624
    %6044 = vmatprep.subr.bf16.mxu0 %v4628
    %6045 = vmatpush1.bf16.msra.mxu0 %v4627
    %6046 = vmatprep.subr.bf16.mxu0 %v4631
    %6047 = vmatpush1.bf16.msra.mxu0 %v4630
    %6048 = vmatprep.mubr.bf16.mxu0 %v1272
    %6049 = vmatmul.mubr.bf16.gmra.mrb[0].mxu0 %v1270
    %v6050 = vpop.f32.mrb[0].mxu0
    %v6051 = vadd.f32 %v6010, %v6050
    %v6052 = vpop.f32.mrb[0].mxu0
    %v6053 = vadd.f32 %v6012, %v6052
    %v6054 = vpop.f32.mrb[0].mxu0
    %v6055 = vpop.f32.mrb[0].mxu0
    %6056 = vdwg.mxu0
    %6057 = vmatprep.subr.bf16.mxu0 0
    %6058 = vmatpush1.bf16.msra.mxu0 %v3867
    %6059 = vmatprep.subr.bf16.mxu0 0
    %6060 = vmatpush1.bf16.msra.mxu0 %v3870
    %6061 = vmatprep.subr.bf16.mxu0 0
    %6062 = vmatpush1.bf16.msra.mxu0 %v3873
    %6063 = vmatprep.subr.bf16.mxu0 0
    %6064 = vmatpush1.bf16.msra.mxu0 %v3876
    %6065 = vmatprep.subr.bf16.mxu0 0
    %6066 = vmatpush1.bf16.msra.mxu0 %v3879
    %6067 = vmatprep.subr.bf16.mxu0 0
    %6068 = vmatpush1.bf16.msra.mxu0 %v3882
    %6069 = vmatprep.subr.bf16.mxu0 0
    %6070 = vmatpush1.bf16.msra.mxu0 %v3885
    %6071 = vmatprep.subr.bf16.mxu0 0
    %6072 = vmatpush1.bf16.msra.mxu0 %v3888
    %6073 = vmatprep.subr.bf16.mxu0 0
    %6074 = vmatpush1.bf16.msra.mxu0 %v3891
    %6075 = vmatprep.subr.bf16.mxu0 0
    %6076 = vmatpush1.bf16.msra.mxu0 %v3894
    %6077 = vmatprep.subr.bf16.mxu0 0
    %6078 = vmatpush1.bf16.msra.mxu0 %v3897
    %6079 = vmatprep.subr.bf16.mxu0 0
    %6080 = vmatpush1.bf16.msra.mxu0 %v3900
    %6081 = vmatprep.subr.bf16.mxu0 0
    %6082 = vmatpush1.bf16.msra.mxu0 %v3903
    %6083 = vmatprep.subr.bf16.mxu0 0
    %6084 = vmatpush1.bf16.msra.mxu0 %v3906
    %6085 = vmatprep.subr.bf16.mxu0 0
    %6086 = vmatpush1.bf16.msra.mxu0 %v3909
    %6087 = vmatprep.subr.bf16.mxu0 0
    %6088 = vmatpush1.bf16.msra.mxu0 %v3912
    %6089 = vmatprep.mubr.bf16.mxu0 %v1114
    %6090 = vmatmul.mubr.bf16.gmra.mrb[0].mxu0 %v1100
    %v6091 = vpop.f32.mrb[0].mxu0
    %v6092 = vadd.f32 %v1069, %v6091
    %v6093 = vpop.f32.mrb[0].mxu0
    %v6094 = vpop.f32.mrb[0].mxu0
    %v6095 = vpop.f32.mrb[0].mxu0
    %6096 = vdwg.mxu0
    %6097 = vmatprep.subr.bf16.mxu0 0
    %6098 = vmatpush1.bf16.msra.mxu0 %v3915
    %6099 = vmatprep.subr.bf16.mxu0 0
    %6100 = vmatpush1.bf16.msra.mxu0 %v3918
    %6101 = vmatprep.subr.bf16.mxu0 0
    %6102 = vmatpush1.bf16.msra.mxu0 %v3921
    %6103 = vmatprep.subr.bf16.mxu0 0
    %6104 = vmatpush1.bf16.msra.mxu0 %v3924
    %6105 = vmatprep.subr.bf16.mxu0 0
    %6106 = vmatpush1.bf16.msra.mxu0 %v3927
    %6107 = vmatprep.subr.bf16.mxu0 0
    %6108 = vmatpush1.bf16.msra.mxu0 %v3930
    %6109 = vmatprep.subr.bf16.mxu0 0
    %6110 = vmatpush1.bf16.msra.mxu0 %v3933
    %6111 = vmatprep.subr.bf16.mxu0 0
    %6112 = vmatpush1.bf16.msra.mxu0 %v3936
    %6113 = vmatprep.subr.bf16.mxu0 0
    %6114 = vmatpush1.bf16.msra.mxu0 %v3939
    %6115 = vmatprep.subr.bf16.mxu0 0
    %6116 = vmatpush1.bf16.msra.mxu0 %v3942
    %6117 = vmatprep.subr.bf16.mxu0 0
    %6118 = vmatpush1.bf16.msra.mxu0 %v3945
    %6119 = vmatprep.subr.bf16.mxu0 0
    %6120 = vmatpush1.bf16.msra.mxu0 %v3948
    %6121 = vmatprep.subr.bf16.mxu0 0
    %6122 = vmatpush1.bf16.msra.mxu0 %v3951
    %6123 = vmatprep.subr.bf16.mxu0 0
    %6124 = vmatpush1.bf16.msra.mxu0 %v3954
    %6125 = vmatprep.subr.bf16.mxu0 0
    %6126 = vmatpush1.bf16.msra.mxu0 %v3957
    %6127 = vmatprep.subr.bf16.mxu0 0
    %6128 = vmatpush1.bf16.msra.mxu0 %v3960
    %6129 = vmatprep.mubr.bf16.mxu0 %v1124
    %6130 = vmatmul.mubr.bf16.gmra.mrb[0].mxu0 %v1122
    %v6131 = vpop.f32.mrb[0].mxu0
    %v6132 = vadd.f32 %v6092, %v6131
    %v6133 = vpop.f32.mrb[0].mxu0
    %v6134 = vpop.f32.mrb[0].mxu0
    %v6135 = vpop.f32.mrb[0].mxu0
    %6136 = vdwg.mxu0
    %6137 = vmatprep.subr.bf16.mxu0 0
    %6138 = vmatpush1.bf16.msra.mxu0 %v3963
    %6139 = vmatprep.subr.bf16.mxu0 0
    %6140 = vmatpush1.bf16.msra.mxu0 %v3966
    %6141 = vmatprep.subr.bf16.mxu0 0
    %6142 = vmatpush1.bf16.msra.mxu0 %v3969
    %6143 = vmatprep.subr.bf16.mxu0 0
    %6144 = vmatpush1.bf16.msra.mxu0 %v3972
    %6145 = vmatprep.subr.bf16.mxu0 0
    %6146 = vmatpush1.bf16.msra.mxu0 %v3975
    %6147 = vmatprep.subr.bf16.mxu0 0
    %6148 = vmatpush1.bf16.msra.mxu0 %v3978
    %6149 = vmatprep.subr.bf16.mxu0 0
    %6150 = vmatpush1.bf16.msra.mxu0 %v3981
    %6151 = vmatprep.subr.bf16.mxu0 0
    %6152 = vmatpush1.bf16.msra.mxu0 %v3984
    %6153 = vmatprep.subr.bf16.mxu0 0
    %6154 = vmatpush1.bf16.msra.mxu0 %v3987
    %6155 = vmatprep.subr.bf16.mxu0 0
    %6156 = vmatpush1.bf16.msra.mxu0 %v3990
    %6157 = vmatprep.subr.bf16.mxu0 0
    %6158 = vmatpush1.bf16.msra.mxu0 %v3993
    %6159 = vmatprep.subr.bf16.mxu0 0
    %6160 = vmatpush1.bf16.msra.mxu0 %v3996
    %6161 = vmatprep.subr.bf16.mxu0 0
    %6162 = vmatpush1.bf16.msra.mxu0 %v3999
    %6163 = vmatprep.subr.bf16.mxu0 0
    %6164 = vmatpush1.bf16.msra.mxu0 %v4002
    %6165 = vmatprep.subr.bf16.mxu0 0
    %6166 = vmatpush1.bf16.msra.mxu0 %v4005
    %6167 = vmatprep.subr.bf16.mxu0 0
    %6168 = vmatpush1.bf16.msra.mxu0 %v4008
    %6169 = vmatprep.mubr.bf16.mxu0 %v1121
    %6170 = vmatmul.mubr.bf16.gmra.mrb[0].mxu0 %v1107
    %v6171 = vpop.f32.mrb[0].mxu0
    %v6172 = vadd.f32 %v6132, %v6171
    %v6173 = vpop.f32.mrb[0].mxu0
    %v6174 = vpop.f32.mrb[0].mxu0
    %v6175 = vpop.f32.mrb[0].mxu0
    %6176 = vdwg.mxu0
    %6177 = vmatprep.subr.bf16.mxu0 0
    %6178 = vmatpush1.bf16.msra.mxu0 %v4011
    %6179 = vmatprep.subr.bf16.mxu0 0
    %6180 = vmatpush1.bf16.msra.mxu0 %v4014
    %6181 = vmatprep.subr.bf16.mxu0 0
    %6182 = vmatpush1.bf16.msra.mxu0 %v4017
    %6183 = vmatprep.subr.bf16.mxu0 0
    %6184 = vmatpush1.bf16.msra.mxu0 %v4020
    %6185 = vmatprep.subr.bf16.mxu0 0
    %6186 = vmatpush1.bf16.msra.mxu0 %v4023
    %6187 = vmatprep.subr.bf16.mxu0 0
    %6188 = vmatpush1.bf16.msra.mxu0 %v4026
    %6189 = vmatprep.subr.bf16.mxu0 0
    %6190 = vmatpush1.bf16.msra.mxu0 %v4029
    %6191 = vmatprep.subr.bf16.mxu0 0
    %6192 = vmatpush1.bf16.msra.mxu0 %v4032
    %6193 = vmatprep.subr.bf16.mxu0 0
    %6194 = vmatpush1.bf16.msra.mxu0 %v4035
    %6195 = vmatprep.subr.bf16.mxu0 0
    %6196 = vmatpush1.bf16.msra.mxu0 %v4038
    %6197 = vmatprep.subr.bf16.mxu0 0
    %6198 = vmatpush1.bf16.msra.mxu0 %v4041
    %6199 = vmatprep.subr.bf16.mxu0 0
    %6200 = vmatpush1.bf16.msra.mxu0 %v4044
    %6201 = vmatprep.subr.bf16.mxu0 0
    %6202 = vmatpush1.bf16.msra.mxu0 %v4047
    %6203 = vmatprep.subr.bf16.mxu0 0
    %6204 = vmatpush1.bf16.msra.mxu0 %v4050
    %6205 = vmatprep.subr.bf16.mxu0 0
    %6206 = vmatpush1.bf16.msra.mxu0 %v4053
    %6207 = vmatprep.subr.bf16.mxu0 0
    %6208 = vmatpush1.bf16.msra.mxu0 %v4056
    %6209 = vmatprep.mubr.bf16.mxu0 %v1125
    %6210 = vmatmul.mubr.bf16.gmra.mrb[0].mxu0 %v1123
    %v6211 = vpop.f32.mrb[0].mxu0
    %v6212 = vadd.f32 %v6172, %v6211
    %v6213 = vpop.f32.mrb[0].mxu0
    %v6214 = vpop.f32.mrb[0].mxu0
    %v6215 = vpop.f32.mrb[0].mxu0
    %6216 = vdwg.mxu0
    %6217 = vmatprep.subr.bf16.mxu0 0
    %6218 = vmatpush1.bf16.msra.mxu0 %v4059
    %6219 = vmatprep.subr.bf16.mxu0 0
    %6220 = vmatpush1.bf16.msra.mxu0 %v4062
    %6221 = vmatprep.subr.bf16.mxu0 0
    %6222 = vmatpush1.bf16.msra.mxu0 %v4065
    %6223 = vmatprep.subr.bf16.mxu0 0
    %6224 = vmatpush1.bf16.msra.mxu0 %v4068
    %6225 = vmatprep.subr.bf16.mxu0 0
    %6226 = vmatpush1.bf16.msra.mxu0 %v4071
    %6227 = vmatprep.subr.bf16.mxu0 0
    %6228 = vmatpush1.bf16.msra.mxu0 %v4074
    %6229 = vmatprep.subr.bf16.mxu0 0
    %6230 = vmatpush1.bf16.msra.mxu0 %v4077
    %6231 = vmatprep.subr.bf16.mxu0 0
    %6232 = vmatpush1.bf16.msra.mxu0 %v4080
    %6233 = vmatprep.subr.bf16.mxu0 0
    %6234 = vmatpush1.bf16.msra.mxu0 %v4083
    %6235 = vmatprep.subr.bf16.mxu0 0
    %6236 = vmatpush1.bf16.msra.mxu0 %v4086
    %6237 = vmatprep.subr.bf16.mxu0 0
    %6238 = vmatpush1.bf16.msra.mxu0 %v4089
    %6239 = vmatprep.subr.bf16.mxu0 0
    %6240 = vmatpush1.bf16.msra.mxu0 %v4092
    %6241 = vmatprep.subr.bf16.mxu0 0
    %6242 = vmatpush1.bf16.msra.mxu0 %v4095
    %6243 = vmatprep.subr.bf16.mxu0 0
    %6244 = vmatpush1.bf16.msra.mxu0 %v4098
    %6245 = vmatprep.subr.bf16.mxu0 0
    %6246 = vmatpush1.bf16.msra.mxu0 %v4101
    %6247 = vmatprep.subr.bf16.mxu0 0
    %6248 = vmatpush1.bf16.msra.mxu0 %v4104
    %6249 = vmatprep.mubr.bf16.mxu0 %v1163
    %6250 = vmatmul.mubr.bf16.gmra.mrb[0].mxu0 %v1149
    %v6251 = vpop.f32.mrb[0].mxu0
    %v6252 = vadd.f32 %v6212, %v6251
    %v6253 = vpop.f32.mrb[0].mxu0
    %v6254 = vpop.f32.mrb[0].mxu0
    %v6255 = vpop.f32.mrb[0].mxu0
    %6256 = vdwg.mxu0
    %6257 = vmatprep.subr.bf16.mxu0 0
    %6258 = vmatpush1.bf16.msra.mxu0 %v4107
    %6259 = vmatprep.subr.bf16.mxu0 0
    %6260 = vmatpush1.bf16.msra.mxu0 %v4110
    %6261 = vmatprep.subr.bf16.mxu0 0
    %6262 = vmatpush1.bf16.msra.mxu0 %v4113
    %6263 = vmatprep.subr.bf16.mxu0 0
    %6264 = vmatpush1.bf16.msra.mxu0 %v4116
    %6265 = vmatprep.subr.bf16.mxu0 0
    %6266 = vmatpush1.bf16.msra.mxu0 %v4119
    %6267 = vmatprep.subr.bf16.mxu0 0
    %6268 = vmatpush1.bf16.msra.mxu0 %v4122
    %6269 = vmatprep.subr.bf16.mxu0 0
    %6270 = vmatpush1.bf16.msra.mxu0 %v4125
    %6271 = vmatprep.subr.bf16.mxu0 0
    %6272 = vmatpush1.bf16.msra.mxu0 %v4128
    %6273 = vmatprep.subr.bf16.mxu0 0
    %6274 = vmatpush1.bf16.msra.mxu0 %v4131
    %6275 = vmatprep.subr.bf16.mxu0 0
    %6276 = vmatpush1.bf16.msra.mxu0 %v4134
    %6277 = vmatprep.subr.bf16.mxu0 0
    %6278 = vmatpush1.bf16.msra.mxu0 %v4137
    %6279 = vmatprep.subr.bf16.mxu0 0
    %6280 = vmatpush1.bf16.msra.mxu0 %v4140
    %6281 = vmatprep.subr.bf16.mxu0 0
    %6282 = vmatpush1.bf16.msra.mxu0 %v4143
    %6283 = vmatprep.subr.bf16.mxu0 0
    %6284 = vmatpush1.bf16.msra.mxu0 %v4146
    %6285 = vmatprep.subr.bf16.mxu0 0
    %6286 = vmatpush1.bf16.msra.mxu0 %v4149
    %6287 = vmatprep.subr.bf16.mxu0 0
    %6288 = vmatpush1.bf16.msra.mxu0 %v4152
    %6289 = vmatprep.mubr.bf16.mxu0 %v1173
    %6290 = vmatmul.mubr.bf16.gmra.mrb[0].mxu0 %v1171
    %v6291 = vpop.f32.mrb[0].mxu0
    %v6292 = vadd.f32 %v6252, %v6291
    %v6293 = vpop.f32.mrb[0].mxu0
    %v6294 = vpop.f32.mrb[0].mxu0
    %v6295 = vpop.f32.mrb[0].mxu0
    %6296 = vdwg.mxu0
    %6297 = vmatprep.subr.bf16.mxu0 0
    %6298 = vmatpush1.bf16.msra.mxu0 %v4155
    %6299 = vmatprep.subr.bf16.mxu0 0
    %6300 = vmatpush1.bf16.msra.mxu0 %v4158
    %6301 = vmatprep.subr.bf16.mxu0 0
    %6302 = vmatpush1.bf16.msra.mxu0 %v4161
    %6303 = vmatprep.subr.bf16.mxu0 0
    %6304 = vmatpush1.bf16.msra.mxu0 %v4164
    %6305 = vmatprep.subr.bf16.mxu0 0
    %6306 = vmatpush1.bf16.msra.mxu0 %v4167
    %6307 = vmatprep.subr.bf16.mxu0 0
    %6308 = vmatpush1.bf16.msra.mxu0 %v4170
    %6309 = vmatprep.subr.bf16.mxu0 0
    %6310 = vmatpush1.bf16.msra.mxu0 %v4173
    %6311 = vmatprep.subr.bf16.mxu0 0
    %6312 = vmatpush1.bf16.msra.mxu0 %v4176
    %6313 = vmatprep.subr.bf16.mxu0 0
    %6314 = vmatpush1.bf16.msra.mxu0 %v4179
    %6315 = vmatprep.subr.bf16.mxu0 0
    %6316 = vmatpush1.bf16.msra.mxu0 %v4182
    %6317 = vmatprep.subr.bf16.mxu0 0
    %6318 = vmatpush1.bf16.msra.mxu0 %v4185
    %6319 = vmatprep.subr.bf16.mxu0 0
    %6320 = vmatpush1.bf16.msra.mxu0 %v4188
    %6321 = vmatprep.subr.bf16.mxu0 0
    %6322 = vmatpush1.bf16.msra.mxu0 %v4191
    %6323 = vmatprep.subr.bf16.mxu0 0
    %6324 = vmatpush1.bf16.msra.mxu0 %v4194
    %6325 = vmatprep.subr.bf16.mxu0 0
    %6326 = vmatpush1.bf16.msra.mxu0 %v4197
    %6327 = vmatprep.subr.bf16.mxu0 0
    %6328 = vmatpush1.bf16.msra.mxu0 %v4200
    %6329 = vmatprep.mubr.bf16.mxu0 %v1170
    %6330 = vmatmul.mubr.bf16.gmra.mrb[0].mxu0 %v1156
    %v6331 = vpop.f32.mrb[0].mxu0
    %v6332 = vadd.f32 %v6292, %v6331
    %v6333 = vpop.f32.mrb[0].mxu0
    %v6334 = vpop.f32.mrb[0].mxu0
    %v6335 = vpop.f32.mrb[0].mxu0
    %6336 = vdwg.mxu0
    %6337 = vmatprep.subr.bf16.mxu0 0
    %6338 = vmatpush1.bf16.msra.mxu0 %v4203
    %6339 = vmatprep.subr.bf16.mxu0 0
    %6340 = vmatpush1.bf16.msra.mxu0 %v4206
    %6341 = vmatprep.subr.bf16.mxu0 0
    %6342 = vmatpush1.bf16.msra.mxu0 %v4209
    %6343 = vmatprep.subr.bf16.mxu0 0
    %6344 = vmatpush1.bf16.msra.mxu0 %v4212
    %6345 = vmatprep.subr.bf16.mxu0 0
    %6346 = vmatpush1.bf16.msra.mxu0 %v4215
    %6347 = vmatprep.subr.bf16.mxu0 0
    %6348 = vmatpush1.bf16.msra.mxu0 %v4218
    %6349 = vmatprep.subr.bf16.mxu0 0
    %6350 = vmatpush1.bf16.msra.mxu0 %v4221
    %6351 = vmatprep.subr.bf16.mxu0 0
    %6352 = vmatpush1.bf16.msra.mxu0 %v4224
    %6353 = vmatprep.subr.bf16.mxu0 0
    %6354 = vmatpush1.bf16.msra.mxu0 %v4227
    %6355 = vmatprep.subr.bf16.mxu0 0
    %6356 = vmatpush1.bf16.msra.mxu0 %v4230
    %6357 = vmatprep.subr.bf16.mxu0 0
    %6358 = vmatpush1.bf16.msra.mxu0 %v4233
    %6359 = vmatprep.subr.bf16.mxu0 0
    %6360 = vmatpush1.bf16.msra.mxu0 %v4236
    %6361 = vmatprep.subr.bf16.mxu0 0
    %6362 = vmatpush1.bf16.msra.mxu0 %v4239
    %6363 = vmatprep.subr.bf16.mxu0 0
    %6364 = vmatpush1.bf16.msra.mxu0 %v4242
    %6365 = vmatprep.subr.bf16.mxu0 0
    %6366 = vmatpush1.bf16.msra.mxu0 %v4245
    %6367 = vmatprep.subr.bf16.mxu0 0
    %6368 = vmatpush1.bf16.msra.mxu0 %v4248
    %6369 = vmatprep.mubr.bf16.mxu0 %v1174
    %6370 = vmatmul.mubr.bf16.gmra.mrb[0].mxu0 %v1172
    %v6371 = vpop.f32.mrb[0].mxu0
    %v6372 = vadd.f32 %v6332, %v6371
    %v6373 = vpop.f32.mrb[0].mxu0
    %v6374 = vpop.f32.mrb[0].mxu0
    %v6375 = vpop.f32.mrb[0].mxu0
    %6376 = vdwg.mxu0
    %6377 = vmatprep.subr.bf16.mxu0 0
    %6378 = vmatpush1.bf16.msra.mxu0 %v4251
    %6379 = vmatprep.subr.bf16.mxu0 0
    %6380 = vmatpush1.bf16.msra.mxu0 %v4254
    %6381 = vmatprep.subr.bf16.mxu0 0
    %6382 = vmatpush1.bf16.msra.mxu0 %v4257
    %6383 = vmatprep.subr.bf16.mxu0 0
    %6384 = vmatpush1.bf16.msra.mxu0 %v4260
    %6385 = vmatprep.subr.bf16.mxu0 0
    %6386 = vmatpush1.bf16.msra.mxu0 %v4263
    %6387 = vmatprep.subr.bf16.mxu0 0
    %6388 = vmatpush1.bf16.msra.mxu0 %v4266
    %6389 = vmatprep.subr.bf16.mxu0 0
    %6390 = vmatpush1.bf16.msra.mxu0 %v4269
    %6391 = vmatprep.subr.bf16.mxu0 0
    %6392 = vmatpush1.bf16.msra.mxu0 %v4272
    %6393 = vmatprep.subr.bf16.mxu0 0
    %6394 = vmatpush1.bf16.msra.mxu0 %v4275
    %6395 = vmatprep.subr.bf16.mxu0 0
    %6396 = vmatpush1.bf16.msra.mxu0 %v4278
    %6397 = vmatprep.subr.bf16.mxu0 0
    %6398 = vmatpush1.bf16.msra.mxu0 %v4281
    %6399 = vmatprep.subr.bf16.mxu0 0
    %6400 = vmatpush1.bf16.msra.mxu0 %v4284
    %6401 = vmatprep.subr.bf16.mxu0 0
    %6402 = vmatpush1.bf16.msra.mxu0 %v4287
    %6403 = vmatprep.subr.bf16.mxu0 0
    %6404 = vmatpush1.bf16.msra.mxu0 %v4290
    %6405 = vmatprep.subr.bf16.mxu0 0
    %6406 = vmatpush1.bf16.msra.mxu0 %v4293
    %6407 = vmatprep.subr.bf16.mxu0 0
    %6408 = vmatpush1.bf16.msra.mxu0 %v4296
    %6409 = vmatprep.mubr.bf16.mxu0 %v1212
    %6410 = vmatmul.mubr.bf16.gmra.mrb[0].mxu0 %v1198
    %v6411 = vpop.f32.mrb[0].mxu0
    %v6412 = vadd.f32 %v6372, %v6411
    %v6413 = vpop.f32.mrb[0].mxu0
    %v6414 = vpop.f32.mrb[0].mxu0
    %v6415 = vpop.f32.mrb[0].mxu0
    %6416 = vdwg.mxu0
    %6417 = vmatprep.subr.bf16.mxu0 0
    %6418 = vmatpush1.bf16.msra.mxu0 %v4299
    %6419 = vmatprep.subr.bf16.mxu0 0
    %6420 = vmatpush1.bf16.msra.mxu0 %v4302
    %6421 = vmatprep.subr.bf16.mxu0 0
    %6422 = vmatpush1.bf16.msra.mxu0 %v4305
    %6423 = vmatprep.subr.bf16.mxu0 0
    %6424 = vmatpush1.bf16.msra.mxu0 %v4308
    %6425 = vmatprep.subr.bf16.mxu0 0
    %6426 = vmatpush1.bf16.msra.mxu0 %v4311
    %6427 = vmatprep.subr.bf16.mxu0 0
    %6428 = vmatpush1.bf16.msra.mxu0 %v4314
    %6429 = vmatprep.subr.bf16.mxu0 0
    %6430 = vmatpush1.bf16.msra.mxu0 %v4317
    %6431 = vmatprep.subr.bf16.mxu0 0
    %6432 = vmatpush1.bf16.msra.mxu0 %v4320
    %6433 = vmatprep.subr.bf16.mxu0 0
    %6434 = vmatpush1.bf16.msra.mxu0 %v4323
    %6435 = vmatprep.subr.bf16.mxu0 0
    %6436 = vmatpush1.bf16.msra.mxu0 %v4326
    %6437 = vmatprep.subr.bf16.mxu0 0
    %6438 = vmatpush1.bf16.msra.mxu0 %v4329
    %6439 = vmatprep.subr.bf16.mxu0 0
    %6440 = vmatpush1.bf16.msra.mxu0 %v4332
    %6441 = vmatprep.subr.bf16.mxu0 0
    %6442 = vmatpush1.bf16.msra.mxu0 %v4335
    %6443 = vmatprep.subr.bf16.mxu0 0
    %6444 = vmatpush1.bf16.msra.mxu0 %v4338
    %6445 = vmatprep.subr.bf16.mxu0 0
    %6446 = vmatpush1.bf16.msra.mxu0 %v4341
    %6447 = vmatprep.subr.bf16.mxu0 0
    %6448 = vmatpush1.bf16.msra.mxu0 %v4344
    %6449 = vmatprep.mubr.bf16.mxu0 %v1222
    %6450 = vmatmul.mubr.bf16.gmra.mrb[0].mxu0 %v1220
    %v6451 = vpop.f32.mrb[0].mxu0
    %v6452 = vadd.f32 %v6412, %v6451
    %v6453 = vpop.f32.mrb[0].mxu0
    %v6454 = vpop.f32.mrb[0].mxu0
    %v6455 = vpop.f32.mrb[0].mxu0
    %6456 = vdwg.mxu0
    %6457 = vmatprep.subr.bf16.mxu0 0
    %6458 = vmatpush1.bf16.msra.mxu0 %v4347
    %6459 = vmatprep.subr.bf16.mxu0 0
    %6460 = vmatpush1.bf16.msra.mxu0 %v4350
    %6461 = vmatprep.subr.bf16.mxu0 0
    %6462 = vmatpush1.bf16.msra.mxu0 %v4353
    %6463 = vmatprep.subr.bf16.mxu0 0
    %6464 = vmatpush1.bf16.msra.mxu0 %v4356
    %6465 = vmatprep.subr.bf16.mxu0 0
    %6466 = vmatpush1.bf16.msra.mxu0 %v4359
    %6467 = vmatprep.subr.bf16.mxu0 0
    %6468 = vmatpush1.bf16.msra.mxu0 %v4362
    %6469 = vmatprep.subr.bf16.mxu0 0
    %6470 = vmatpush1.bf16.msra.mxu0 %v4365
    %6471 = vmatprep.subr.bf16.mxu0 0
    %6472 = vmatpush1.bf16.msra.mxu0 %v4368
    %6473 = vmatprep.subr.bf16.mxu0 0
    %6474 = vmatpush1.bf16.msra.mxu0 %v4371
    %6475 = vmatprep.subr.bf16.mxu0 0
    %6476 = vmatpush1.bf16.msra.mxu0 %v4374
    %6477 = vmatprep.subr.bf16.mxu0 0
    %6478 = vmatpush1.bf16.msra.mxu0 %v4377
    %6479 = vmatprep.subr.bf16.mxu0 0
    %6480 = vmatpush1.bf16.msra.mxu0 %v4380
    %6481 = vmatprep.subr.bf16.mxu0 0
    %6482 = vmatpush1.bf16.msra.mxu0 %v4383
    %6483 = vmatprep.subr.bf16.mxu0 0
    %6484 = vmatpush1.bf16.msra.mxu0 %v4386
    %6485 = vmatprep.subr.bf16.mxu0 0
    %6486 = vmatpush1.bf16.msra.mxu0 %v4389
    %6487 = vmatprep.subr.bf16.mxu0 0
    %6488 = vmatpush1.bf16.msra.mxu0 %v4392
    %6489 = vmatprep.mubr.bf16.mxu0 %v1219
    %6490 = vmatmul.mubr.bf16.gmra.mrb[0].mxu0 %v1205
    %v6491 = vpop.f32.mrb[0].mxu0
    %v6492 = vadd.f32 %v6452, %v6491
    %v6493 = vpop.f32.mrb[0].mxu0
    %v6494 = vpop.f32.mrb[0].mxu0
    %v6495 = vpop.f32.mrb[0].mxu0
    %6496 = vdwg.mxu0
    %6497 = vmatprep.subr.bf16.mxu0 0
    %6498 = vmatpush1.bf16.msra.mxu0 %v4395
    %6499 = vmatprep.subr.bf16.mxu0 0
    %6500 = vmatpush1.bf16.msra.mxu0 %v4398
    %6501 = vmatprep.subr.bf16.mxu0 0
    %6502 = vmatpush1.bf16.msra.mxu0 %v4401
    %6503 = vmatprep.subr.bf16.mxu0 0
    %6504 = vmatpush1.bf16.msra.mxu0 %v4404
    %6505 = vmatprep.subr.bf16.mxu0 0
    %6506 = vmatpush1.bf16.msra.mxu0 %v4407
    %6507 = vmatprep.subr.bf16.mxu0 0
    %6508 = vmatpush1.bf16.msra.mxu0 %v4410
    %6509 = vmatprep.subr.bf16.mxu0 0
    %6510 = vmatpush1.bf16.msra.mxu0 %v4413
    %6511 = vmatprep.subr.bf16.mxu0 0
    %6512 = vmatpush1.bf16.msra.mxu0 %v4416
    %6513 = vmatprep.subr.bf16.mxu0 0
    %6514 = vmatpush1.bf16.msra.mxu0 %v4419
    %6515 = vmatprep.subr.bf16.mxu0 0
    %6516 = vmatpush1.bf16.msra.mxu0 %v4422
    %6517 = vmatprep.subr.bf16.mxu0 0
    %6518 = vmatpush1.bf16.msra.mxu0 %v4425
    %6519 = vmatprep.subr.bf16.mxu0 0
    %6520 = vmatpush1.bf16.msra.mxu0 %v4428
    %6521 = vmatprep.subr.bf16.mxu0 0
    %6522 = vmatpush1.bf16.msra.mxu0 %v4431
    %6523 = vmatprep.subr.bf16.mxu0 0
    %6524 = vmatpush1.bf16.msra.mxu0 %v4434
    %6525 = vmatprep.subr.bf16.mxu0 0
    %6526 = vmatpush1.bf16.msra.mxu0 %v4437
    %6527 = vmatprep.subr.bf16.mxu0 0
    %6528 = vmatpush1.bf16.msra.mxu0 %v4440
    %6529 = vmatprep.mubr.bf16.mxu0 %v1223
    %6530 = vmatmul.mubr.bf16.gmra.mrb[0].mxu0 %v1221
    %v6531 = vpop.f32.mrb[0].mxu0
    %v6532 = vadd.f32 %v6492, %v6531
    %v6533 = vpop.f32.mrb[0].mxu0
    %v6534 = vpop.f32.mrb[0].mxu0
    %v6535 = vpop.f32.mrb[0].mxu0
    %6536 = vdwg.mxu0
    %6537 = vmatprep.subr.bf16.mxu0 0
    %6538 = vmatpush1.bf16.msra.mxu0 %v4443
    %6539 = vmatprep.subr.bf16.mxu0 0
    %6540 = vmatpush1.bf16.msra.mxu0 %v4446
    %6541 = vmatprep.subr.bf16.mxu0 0
    %6542 = vmatpush1.bf16.msra.mxu0 %v4449
    %6543 = vmatprep.subr.bf16.mxu0 0
    %6544 = vmatpush1.bf16.msra.mxu0 %v4452
    %6545 = vmatprep.subr.bf16.mxu0 0
    %6546 = vmatpush1.bf16.msra.mxu0 %v4455
    %6547 = vmatprep.subr.bf16.mxu0 0
    %6548 = vmatpush1.bf16.msra.mxu0 %v4458
    %6549 = vmatprep.subr.bf16.mxu0 0
    %6550 = vmatpush1.bf16.msra.mxu0 %v4461
    %6551 = vmatprep.subr.bf16.mxu0 0
    %6552 = vmatpush1.bf16.msra.mxu0 %v4464
    %6553 = vmatprep.subr.bf16.mxu0 0
    %6554 = vmatpush1.bf16.msra.mxu0 %v4467
    %6555 = vmatprep.subr.bf16.mxu0 0
    %6556 = vmatpush1.bf16.msra.mxu0 %v4470
    %6557 = vmatprep.subr.bf16.mxu0 0
    %6558 = vmatpush1.bf16.msra.mxu0 %v4473
    %6559 = vmatprep.subr.bf16.mxu0 0
    %6560 = vmatpush1.bf16.msra.mxu0 %v4476
    %6561 = vmatprep.subr.bf16.mxu0 0
    %6562 = vmatpush1.bf16.msra.mxu0 %v4479
    %6563 = vmatprep.subr.bf16.mxu0 0
    %6564 = vmatpush1.bf16.msra.mxu0 %v4482
    %6565 = vmatprep.subr.bf16.mxu0 0
    %6566 = vmatpush1.bf16.msra.mxu0 %v4485
    %6567 = vmatprep.subr.bf16.mxu0 0
    %6568 = vmatpush1.bf16.msra.mxu0 %v4488
    %6569 = vmatprep.mubr.bf16.mxu0 %v1261
    %6570 = vmatmul.mubr.bf16.gmra.mrb[0].mxu0 %v1247
    %v6571 = vpop.f32.mrb[0].mxu0
    %v6572 = vadd.f32 %v6532, %v6571
    %v6573 = vpop.f32.mrb[0].mxu0
    %v6574 = vpop.f32.mrb[0].mxu0
    %v6575 = vpop.f32.mrb[0].mxu0
    %6576 = vdwg.mxu0
    %6577 = vmatprep.subr.bf16.mxu0 0
    %6578 = vmatpush1.bf16.msra.mxu0 %v4491
    %6579 = vmatprep.subr.bf16.mxu0 0
    %6580 = vmatpush1.bf16.msra.mxu0 %v4494
    %6581 = vmatprep.subr.bf16.mxu0 0
    %6582 = vmatpush1.bf16.msra.mxu0 %v4497
    %6583 = vmatprep.subr.bf16.mxu0 0
    %6584 = vmatpush1.bf16.msra.mxu0 %v4500
    %6585 = vmatprep.subr.bf16.mxu0 0
    %6586 = vmatpush1.bf16.msra.mxu0 %v4503
    %6587 = vmatprep.subr.bf16.mxu0 0
    %6588 = vmatpush1.bf16.msra.mxu0 %v4506
    %6589 = vmatprep.subr.bf16.mxu0 0
    %6590 = vmatpush1.bf16.msra.mxu0 %v4509
    %6591 = vmatprep.subr.bf16.mxu0 0
    %6592 = vmatpush1.bf16.msra.mxu0 %v4512
    %6593 = vmatprep.subr.bf16.mxu0 0
    %6594 = vmatpush1.bf16.msra.mxu0 %v4515
    %6595 = vmatprep.subr.bf16.mxu0 0
    %6596 = vmatpush1.bf16.msra.mxu0 %v4518
    %6597 = vmatprep.subr.bf16.mxu0 0
    %6598 = vmatpush1.bf16.msra.mxu0 %v4521
    %6599 = vmatprep.subr.bf16.mxu0 0
    %6600 = vmatpush1.bf16.msra.mxu0 %v4524
    %6601 = vmatprep.subr.bf16.mxu0 0
    %6602 = vmatpush1.bf16.msra.mxu0 %v4527
    %6603 = vmatprep.subr.bf16.mxu0 0
    %6604 = vmatpush1.bf16.msra.mxu0 %v4530
    %6605 = vmatprep.subr.bf16.mxu0 0
    %6606 = vmatpush1.bf16.msra.mxu0 %v4533
    %6607 = vmatprep.subr.bf16.mxu0 0
    %6608 = vmatpush1.bf16.msra.mxu0 %v4536
    %6609 = vmatprep.mubr.bf16.mxu0 %v1271
    %6610 = vmatmul.mubr.bf16.gmra.mrb[0].mxu0 %v1269
    %v6611 = vpop.f32.mrb[0].mxu0
    %v6612 = vadd.f32 %v6572, %v6611
    %v6613 = vpop.f32.mrb[0].mxu0
    %v6614 = vpop.f32.mrb[0].mxu0
    %v6615 = vpop.f32.mrb[0].mxu0
    %6616 = vdwg.mxu0
    %6617 = vmatprep.subr.bf16.mxu0 0
    %6618 = vmatpush1.bf16.msra.mxu0 %v4539
    %6619 = vmatprep.subr.bf16.mxu0 0
    %6620 = vmatpush1.bf16.msra.mxu0 %v4542
    %6621 = vmatprep.subr.bf16.mxu0 0
    %6622 = vmatpush1.bf16.msra.mxu0 %v4545
    %6623 = vmatprep.subr.bf16.mxu0 0
    %6624 = vmatpush1.bf16.msra.mxu0 %v4548
    %6625 = vmatprep.subr.bf16.mxu0 0
    %6626 = vmatpush1.bf16.msra.mxu0 %v4551
    %6627 = vmatprep.subr.bf16.mxu0 0
    %6628 = vmatpush1.bf16.msra.mxu0 %v4554
    %6629 = vmatprep.subr.bf16.mxu0 0
    %6630 = vmatpush1.bf16.msra.mxu0 %v4557
    %6631 = vmatprep.subr.bf16.mxu0 0
    %6632 = vmatpush1.bf16.msra.mxu0 %v4560
    %6633 = vmatprep.subr.bf16.mxu0 0
    %6634 = vmatpush1.bf16.msra.mxu0 %v4563
    %6635 = vmatprep.subr.bf16.mxu0 0
    %6636 = vmatpush1.bf16.msra.mxu0 %v4566
    %6637 = vmatprep.subr.bf16.mxu0 0
    %6638 = vmatpush1.bf16.msra.mxu0 %v4569
    %6639 = vmatprep.subr.bf16.mxu0 0
    %6640 = vmatpush1.bf16.msra.mxu0 %v4572
    %6641 = vmatprep.subr.bf16.mxu0 0
    %6642 = vmatpush1.bf16.msra.mxu0 %v4575
    %6643 = vmatprep.subr.bf16.mxu0 0
    %6644 = vmatpush1.bf16.msra.mxu0 %v4578
    %6645 = vmatprep.subr.bf16.mxu0 0
    %6646 = vmatpush1.bf16.msra.mxu0 %v4581
    %6647 = vmatprep.subr.bf16.mxu0 0
    %6648 = vmatpush1.bf16.msra.mxu0 %v4584
    %6649 = vmatprep.mubr.bf16.mxu0 %v1268
    %6650 = vmatmul.mubr.bf16.gmra.mrb[0].mxu0 %v1254
    %v6651 = vpop.f32.mrb[0].mxu0
    %v6652 = vadd.f32 %v6612, %v6651
    %v6653 = vpop.f32.mrb[0].mxu0
    %v6654 = vpop.f32.mrb[0].mxu0
    %v6655 = vpop.f32.mrb[0].mxu0
    %6656 = vdwg.mxu0
    %6657 = vmatprep.subr.bf16.mxu0 0
    %6658 = vmatpush1.bf16.msra.mxu0 %v4587
    %6659 = vmatprep.subr.bf16.mxu0 0
    %6660 = vmatpush1.bf16.msra.mxu0 %v4590
    %6661 = vmatprep.subr.bf16.mxu0 0
    %6662 = vmatpush1.bf16.msra.mxu0 %v4593
    %6663 = vmatprep.subr.bf16.mxu0 0
    %6664 = vmatpush1.bf16.msra.mxu0 %v4596
    %6665 = vmatprep.subr.bf16.mxu0 0
    %6666 = vmatpush1.bf16.msra.mxu0 %v4599
    %6667 = vmatprep.subr.bf16.mxu0 0
    %6668 = vmatpush1.bf16.msra.mxu0 %v4602
    %6669 = vmatprep.subr.bf16.mxu0 0
    %6670 = vmatpush1.bf16.msra.mxu0 %v4605
    %6671 = vmatprep.subr.bf16.mxu0 0
    %6672 = vmatpush1.bf16.msra.mxu0 %v4608
    %6673 = vmatprep.subr.bf16.mxu0 0
    %6674 = vmatpush1.bf16.msra.mxu0 %v4611
    %6675 = vmatprep.subr.bf16.mxu0 0
    %6676 = vmatpush1.bf16.msra.mxu0 %v4614
    %6677 = vmatprep.subr.bf16.mxu0 0
    %6678 = vmatpush1.bf16.msra.mxu0 %v4617
    %6679 = vmatprep.subr.bf16.mxu0 0
    %6680 = vmatpush1.bf16.msra.mxu0 %v4620
    %6681 = vmatprep.subr.bf16.mxu0 0
    %6682 = vmatpush1.bf16.msra.mxu0 %v4623
    %6683 = vmatprep.subr.bf16.mxu0 0
    %6684 = vmatpush1.bf16.msra.mxu0 %v4626
    %6685 = vmatprep.subr.bf16.mxu0 0
    %6686 = vmatpush1.bf16.msra.mxu0 %v4629
    %6687 = vmatprep.subr.bf16.mxu0 0
    %6688 = vmatpush1.bf16.msra.mxu0 %v4632
    %6689 = vmatprep.mubr.bf16.mxu0 %v1272
    %6690 = vmatmul.mubr.bf16.gmra.mrb[0].mxu0 %v1270
    %v6691 = vpop.f32.mrb[0].mxu0
    %v6692 = vadd.f32 %v6652, %v6691
    %v6693 = vpop.f32.mrb[0].mxu0
    %v6694 = vpop.f32.mrb[0].mxu0
    %v6695 = vpop.f32.mrb[0].mxu0
    %6696 = vdwg.mxu0
    %v6697 = vmax.f32 %v6051, 0.0
    %v6698 = vmax.f32 %v6053, 0.0
    %v6699 = vmax.f32 %v6692, 0.0
    %v6700 = vpack.c.bf16 %v6697, %v6697
    %v6701 = vpack.c.bf16 %v6698, %v6698
    %v6702 = vpack.c.bf16 %v6699, %v6699
    %v6703 = vld [vmem:[%s3] sm:$0xff]
    %v6704 = vld [vmem:[%s3 + $0x8] sm:$0xff]
    %v6705 = vld [vmem:[%s3 + $0x10] sm:$0xff]
    %v6706 = vld [vmem:[%s3 + $0x18] sm:$0xff]
    %v6707 = vld [vmem:[%s3 + $0x20] sm:$0xff]
    %v6708 = vld [vmem:[%s3 + $0x28] sm:$0xff]
    %v6709 = vld [vmem:[%s3 + $0x30] sm:$0xff]
    %v6710 = vld [vmem:[%s3 + $0x38] sm:$0xff]
    %v6711 = vld [vmem:[%s3 + $0x40] sm:$0xff]
    %v6712 = vld [vmem:[%s3 + $0x48] sm:$0xff]
    %v6713 = vld [vmem:[%s3 + $0x50] sm:$0xff]
    %v6714 = vld [vmem:[%s3 + $0x58] sm:$0xff]
    %v6715 = vld [vmem:[%s3 + $0x60] sm:$0xff]
    %v6716 = vld [vmem:[%s3 + $0x68] sm:$0xff]
    %v6717 = vld [vmem:[%s3 + $0x70] sm:$0xff]
    %v6718 = vld [vmem:[%s3 + $0x78] sm:$0xff]
    %v6719 = vld [vmem:[%s3 + $0x80] sm:$0xff]
    %v6720 = vld [vmem:[%s3 + $0x88] sm:$0xff]
    %v6721 = vld [vmem:[%s3 + $0x90] sm:$0xff]
    %v6722 = vld [vmem:[%s3 + $0x98] sm:$0xff]
    %v6723 = vld [vmem:[%s3 + $0xa0] sm:$0xff]
    %v6724 = vld [vmem:[%s3 + $0xa8] sm:$0xff]
    %v6725 = vld [vmem:[%s3 + $0xb0] sm:$0xff]
    %v6726 = vld [vmem:[%s3 + $0xb8] sm:$0xff]
    %v6727 = vld [vmem:[%s3 + $0xc0] sm:$0xff]
    %v6728 = vld [vmem:[%s3 + $0xc8] sm:$0xff]
    %v6729 = vld [vmem:[%s3 + $0xd0] sm:$0xff]
    %v6730 = vld [vmem:[%s3 + $0xd8] sm:$0xff]
    %v6731 = vld [vmem:[%s3 + $0xe0] sm:$0xff]
    %v6732 = vld [vmem:[%s3 + $0xe8] sm:$0xff]
    %v6733 = vld [vmem:[%s3 + $0xf0] sm:$0xff]
    %v6734 = vld [vmem:[%s3 + $0xf8] sm:$0xff]
    %v6735 = vld [vmem:[%s3 + $0x100] sm:$0xff]
    %v6736 = vld [vmem:[%s3 + $0x108] sm:$0xff]
    %v6737 = vld [vmem:[%s3 + $0x110] sm:$0xff]
    %v6738 = vld [vmem:[%s3 + $0x118] sm:$0xff]
    %v6739 = vld [vmem:[%s3 + $0x120] sm:$0xff]
    %v6740 = vld [vmem:[%s3 + $0x128] sm:$0xff]
    %v6741 = vld [vmem:[%s3 + $0x130] sm:$0xff]
    %v6742 = vld [vmem:[%s3 + $0x138] sm:$0xff]
    %v6743 = vld [vmem:[%s3 + $0x140] sm:$0xff]
    %v6744 = vld [vmem:[%s3 + $0x148] sm:$0xff]
    %v6745 = vld [vmem:[%s3 + $0x150] sm:$0xff]
    %v6746 = vld [vmem:[%s3 + $0x158] sm:$0xff]
    %v6747 = vld [vmem:[%s3 + $0x160] sm:$0xff]
    %v6748 = vld [vmem:[%s3 + $0x168] sm:$0xff]
    %v6749 = vld [vmem:[%s3 + $0x170] sm:$0xff]
    %v6750 = vld [vmem:[%s3 + $0x178] sm:$0xff]
    %v6751 = vld [vmem:[%s4] sm:$0x3]
    %v6753 = vlaneseq
    %v6754 = vshrl.u32 %v6753, 7
    %v6755 = vsub.s32 0, %v6754
    %v6756 = vrot.slane %v6751, %v6755
    %v6757 = vlaneseq
    %v6758 = vshrl.u32 %v6757, 7
    %v6759 = vsub.s32 1, %v6758
    %v6760 = vrot.slane %v6751, %v6759
    %v6811 = vunpack.c.l.b16 %v6703
    %v6812 = vunpack.c.h.b16 %v6703
    %v6813 = vunpack.c.l.b16 %v6704
    %v6814 = vunpack.c.h.b16 %v6704
    %v6815 = vunpack.c.l.b16 %v6705
    %v6816 = vunpack.c.h.b16 %v6705
    %v6817 = vunpack.c.l.b16 %v6706
    %v6818 = vunpack.c.h.b16 %v6706
    %v6819 = vunpack.c.l.b16 %v6707
    %v6820 = vunpack.c.h.b16 %v6707
    %v6821 = vunpack.c.l.b16 %v6708
    %v6822 = vunpack.c.h.b16 %v6708
    %v6823 = vunpack.c.l.b16 %v6709
    %v6824 = vunpack.c.h.b16 %v6709
    %v6825 = vunpack.c.l.b16 %v6710
    %v6826 = vunpack.c.h.b16 %v6710
    %v6827 = vunpack.c.l.b16 %v6711
    %v6828 = vunpack.c.h.b16 %v6711
    %v6829 = vunpack.c.l.b16 %v6712
    %v6830 = vunpack.c.h.b16 %v6712
    %v6831 = vunpack.c.l.b16 %v6713
    %v6832 = vunpack.c.h.b16 %v6713
    %v6833 = vunpack.c.l.b16 %v6714
    %v6834 = vunpack.c.h.b16 %v6714
    %v6835 = vunpack.c.l.b16 %v6715
    %v6836 = vunpack.c.h.b16 %v6715
    %v6837 = vunpack.c.l.b16 %v6716
    %v6838 = vunpack.c.h.b16 %v6716
    %v6839 = vunpack.c.l.b16 %v6717
    %v6840 = vunpack.c.h.b16 %v6717
    %v6841 = vunpack.c.l.b16 %v6718
    %v6842 = vunpack.c.h.b16 %v6718
    %v6843 = vunpack.c.l.b16 %v6719
    %v6844 = vunpack.c.h.b16 %v6719
    %v6845 = vunpack.c.l.b16 %v6720
    %v6846 = vunpack.c.h.b16 %v6720
    %v6847 = vunpack.c.l.b16 %v6721
    %v6848 = vunpack.c.h.b16 %v6721
    %v6849 = vunpack.c.l.b16 %v6722
    %v6850 = vunpack.c.h.b16 %v6722
    %v6851 = vunpack.c.l.b16 %v6723
    %v6852 = vunpack.c.h.b16 %v6723
    %v6853 = vunpack.c.l.b16 %v6724
    %v6854 = vunpack.c.h.b16 %v6724
    %v6855 = vunpack.c.l.b16 %v6725
    %v6856 = vunpack.c.h.b16 %v6725
    %v6857 = vunpack.c.l.b16 %v6726
    %v6858 = vunpack.c.h.b16 %v6726
    %v6859 = vunpack.c.l.b16 %v6727
    %v6860 = vunpack.c.h.b16 %v6727
    %v6861 = vunpack.c.l.b16 %v6728
    %v6862 = vunpack.c.h.b16 %v6728
    %v6863 = vunpack.c.l.b16 %v6729
    %v6864 = vunpack.c.h.b16 %v6729
    %v6865 = vunpack.c.l.b16 %v6730
    %v6866 = vunpack.c.h.b16 %v6730
    %v6867 = vunpack.c.l.b16 %v6731
    %v6868 = vunpack.c.h.b16 %v6731
    %v6869 = vunpack.c.l.b16 %v6732
    %v6870 = vunpack.c.h.b16 %v6732
    %v6871 = vunpack.c.l.b16 %v6733
    %v6872 = vunpack.c.h.b16 %v6733
    %v6873 = vunpack.c.l.b16 %v6734
    %v6874 = vunpack.c.h.b16 %v6734
    %v6875 = vunpack.c.l.b16 %v6735
    %v6876 = vunpack.c.h.b16 %v6735
    %v6877 = vunpack.c.l.b16 %v6736
    %v6878 = vunpack.c.h.b16 %v6736
    %v6879 = vunpack.c.l.b16 %v6737
    %v6880 = vunpack.c.h.b16 %v6737
    %v6881 = vunpack.c.l.b16 %v6738
    %v6882 = vunpack.c.h.b16 %v6738
    %v6883 = vunpack.c.l.b16 %v6739
    %v6884 = vunpack.c.h.b16 %v6739
    %v6885 = vunpack.c.l.b16 %v6740
    %v6886 = vunpack.c.h.b16 %v6740
    %v6887 = vunpack.c.l.b16 %v6741
    %v6888 = vunpack.c.h.b16 %v6741
    %v6889 = vunpack.c.l.b16 %v6742
    %v6890 = vunpack.c.h.b16 %v6742
    %v6891 = vunpack.c.l.b16 %v6743
    %v6892 = vunpack.c.h.b16 %v6743
    %v6893 = vunpack.c.l.b16 %v6744
    %v6894 = vunpack.c.h.b16 %v6744
    %v6895 = vunpack.c.l.b16 %v6745
    %v6896 = vunpack.c.h.b16 %v6745
    %v6897 = vunpack.c.l.b16 %v6746
    %v6898 = vunpack.c.h.b16 %v6746
    %v6899 = vunpack.c.l.b16 %v6747
    %v6900 = vunpack.c.h.b16 %v6747
    %v6901 = vunpack.c.l.b16 %v6748
    %v6902 = vunpack.c.h.b16 %v6748
    %v6903 = vunpack.c.l.b16 %v6749
    %v6904 = vunpack.c.h.b16 %v6749
    %v6905 = vunpack.c.l.b16 %v6750
    %v6906 = vunpack.c.h.b16 %v6750
    %v6907 = vpack.c.b16 %v6813, %v6811
    %v6908 = vpack.c.b16 %v6814, %v6812
    %v6909 = vpack.c.b16 %v6817, %v6815
    %v6910 = vpack.c.b16 %v6818, %v6816
    %v6911 = vpack.c.b16 %v6821, %v6819
    %v6912 = vpack.c.b16 %v6822, %v6820
    %v6913 = vpack.c.b16 %v6825, %v6823
    %v6914 = vpack.c.b16 %v6826, %v6824
    %v6915 = vpack.c.b16 %v6829, %v6827
    %v6916 = vpack.c.b16 %v6830, %v6828
    %v6917 = vpack.c.b16 %v6833, %v6831
    %v6918 = vpack.c.b16 %v6834, %v6832
    %v6919 = vpack.c.b16 %v6837, %v6835
    %v6920 = vpack.c.b16 %v6838, %v6836
    %v6921 = vpack.c.b16 %v6841, %v6839
    %v6922 = vpack.c.b16 %v6842, %v6840
    %v6923 = vpack.c.b16 %v6845, %v6843
    %v6924 = vpack.c.b16 %v6846, %v6844
    %v6925 = vpack.c.b16 %v6849, %v6847
    %v6926 = vpack.c.b16 %v6850, %v6848
    %v6927 = vpack.c.b16 %v6853, %v6851
    %v6928 = vpack.c.b16 %v6854, %v6852
    %v6929 = vpack.c.b16 %v6857, %v6855
    %v6930 = vpack.c.b16 %v6858, %v6856
    %v6931 = vpack.c.b16 %v6861, %v6859
    %v6932 = vpack.c.b16 %v6862, %v6860
    %v6933 = vpack.c.b16 %v6865, %v6863
    %v6934 = vpack.c.b16 %v6866, %v6864
    %v6935 = vpack.c.b16 %v6869, %v6867
    %v6936 = vpack.c.b16 %v6870, %v6868
    %v6937 = vpack.c.b16 %v6873, %v6871
    %v6938 = vpack.c.b16 %v6874, %v6872
    %v6939 = vpack.c.b16 %v6877, %v6875
    %v6940 = vpack.c.b16 %v6878, %v6876
    %v6941 = vpack.c.b16 %v6881, %v6879
    %v6942 = vpack.c.b16 %v6882, %v6880
    %v6943 = vpack.c.b16 %v6885, %v6883
    %v6944 = vpack.c.b16 %v6886, %v6884
    %v6945 = vpack.c.b16 %v6889, %v6887
    %v6946 = vpack.c.b16 %v6890, %v6888
    %v6947 = vpack.c.b16 %v6893, %v6891
    %v6948 = vpack.c.b16 %v6894, %v6892
    %v6949 = vpack.c.b16 %v6897, %v6895
    %v6950 = vpack.c.b16 %v6898, %v6896
    %v6951 = vpack.c.b16 %v6901, %v6899
    %v6952 = vpack.c.b16 %v6902, %v6900
    %v6953 = vpack.c.b16 %v6905, %v6903
    %v6954 = vpack.c.b16 %v6906, %v6904
    %7003 = vmatprep.subr.bf16.mxu0 %v6908
    %7004 = vmatpush1.bf16.msra.mxu0 %v6907
    %7005 = vmatprep.subr.bf16.mxu0 %v6910
    %7006 = vmatpush1.bf16.msra.mxu0 %v6909
    %7007 = vmatprep.subr.bf16.mxu0 %v6912
    %7008 = vmatpush1.bf16.msra.mxu0 %v6911
    %7009 = vmatprep.subr.bf16.mxu0 %v6914
    %7010 = vmatpush1.bf16.msra.mxu0 %v6913
    %7011 = vmatprep.subr.bf16.mxu0 %v6916
    %7012 = vmatpush1.bf16.msra.mxu0 %v6915
    %7013 = vmatprep.subr.bf16.mxu0 %v6918
    %7014 = vmatpush1.bf16.msra.mxu0 %v6917
    %7015 = vmatprep.subr.bf16.mxu0 %v6920
    %7016 = vmatpush1.bf16.msra.mxu0 %v6919
    %7017 = vmatprep.subr.bf16.mxu0 %v6922
    %7018 = vmatpush1.bf16.msra.mxu0 %v6921
    %7019 = vmatprep.subr.bf16.mxu0 %v6924
    %7020 = vmatpush1.bf16.msra.mxu0 %v6923
    %7021 = vmatprep.subr.bf16.mxu0 %v6926
    %7022 = vmatpush1.bf16.msra.mxu0 %v6925
    %7023 = vmatprep.subr.bf16.mxu0 %v6928
    %7024 = vmatpush1.bf16.msra.mxu0 %v6927
    %7025 = vmatprep.subr.bf16.mxu0 %v6930
    %7026 = vmatpush1.bf16.msra.mxu0 %v6929
    %7027 = vmatprep.subr.bf16.mxu0 %v6932
    %7028 = vmatpush1.bf16.msra.mxu0 %v6931
    %7029 = vmatprep.subr.bf16.mxu0 %v6934
    %7030 = vmatpush1.bf16.msra.mxu0 %v6933
    %7031 = vmatprep.subr.bf16.mxu0 %v6936
    %7032 = vmatpush1.bf16.msra.mxu0 %v6935
    %7033 = vmatprep.subr.bf16.mxu0 %v6938
    %7034 = vmatpush1.bf16.msra.mxu0 %v6937
    %7035 = vmatprep.mubr.bf16.mxu0 %v6701
    %7036 = vmatmul.mubr.bf16.gmra.mrb[0].mxu0 %v6700
    %v7037 = vpop.f32.mrb[0].mxu0
    %v7038 = vadd.f32 %v6756, %v7037
    %v7039 = vpop.f32.mrb[0].mxu0
    %v7040 = vadd.f32 %v6760, %v7039
    %v7041 = vpop.f32.mrb[0].mxu0
    %v7042 = vpop.f32.mrb[0].mxu0
    %7043 = vdwg.mxu0
    %7044 = vmatprep.subr.bf16.mxu0 %v6940
    %7045 = vmatpush1.bf16.msra.mxu0 %v6939
    %7046 = vmatprep.subr.bf16.mxu0 %v6942
    %7047 = vmatpush1.bf16.msra.mxu0 %v6941
    %7048 = vmatprep.subr.bf16.mxu0 %v6944
    %7049 = vmatpush1.bf16.msra.mxu0 %v6943
    %7050 = vmatprep.subr.bf16.mxu0 %v6946
    %7051 = vmatpush1.bf16.msra.mxu0 %v6945
    %7052 = vmatprep.subr.bf16.mxu0 %v6948
    %7053 = vmatpush1.bf16.msra.mxu0 %v6947
    %7054 = vmatprep.subr.bf16.mxu0 %v6950
    %7055 = vmatpush1.bf16.msra.mxu0 %v6949
    %7056 = vmatprep.subr.bf16.mxu0 %v6952
    %7057 = vmatpush1.bf16.msra.mxu0 %v6951
    %7058 = vmatprep.subr.bf16.mxu0 %v6954
    %7059 = vmatpush1.bf16.msra.mxu0 %v6953
    %7060 = vmatprep.subr.bf16.mxu0 0
    %7061 = vmatpush1.bf16.msra.mxu0 0
    %7062 = vmatprep.subr.bf16.mxu0 0
    %7063 = vmatpush1.bf16.msra.mxu0 0
    %7064 = vmatprep.subr.bf16.mxu0 0
    %7065 = vmatpush1.bf16.msra.mxu0 0
    %7066 = vmatprep.subr.bf16.mxu0 0
    %7067 = vmatpush1.bf16.msra.mxu0 0
    %7068 = vmatprep.subr.bf16.mxu0 0
    %7069 = vmatpush1.bf16.msra.mxu0 0
    %7070 = vmatprep.subr.bf16.mxu0 0
    %7071 = vmatpush1.bf16.msra.mxu0 0
    %7072 = vmatprep.subr.bf16.mxu0 0
    %7073 = vmatpush1.bf16.msra.mxu0 0
    %7074 = vmatprep.subr.bf16.mxu0 0
    %7075 = vmatpush1.bf16.msra.mxu0 0
    %7076 = vmatprep.mubr.bf16.mxu0 0
    %7077 = vmatmul.mubr.bf16.gmra.mrb[0].mxu0 %v6702
    %v7078 = vpop.f32.mrb[0].mxu0
    %v7079 = vadd.f32 %v7038, %v7078
    %v7080 = vpop.f32.mrb[0].mxu0
    %v7081 = vadd.f32 %v7040, %v7080
    %v7082 = vpop.f32.mrb[0].mxu0
    %v7083 = vpop.f32.mrb[0].mxu0
    %7084 = vdwg.mxu0
    %v7085 = vmax.f32 %v7079, 0.0
    %v7086 = vmax.f32 %v7081, 0.0
    %v7087 = vpack.c.bf16 %v7085, %v7085
    %v7088 = vpack.c.bf16 %v7086, %v7086
    %v7089 = vld [vmem:[%s5] sm:$0xf]
    %v7090 = vld [vmem:[%s5 + $0x4] sm:$0xf]
    %v7091 = vld [vmem:[%s5 + $0x8] sm:$0xf]
    %v7092 = vld [vmem:[%s5 + $0xc] sm:$0xf]
    %v7093 = vld [vmem:[%s5 + $0x10] sm:$0xf]
    %v7094 = vld [vmem:[%s5 + $0x14] sm:$0xf]
    %v7095 = vld [vmem:[%s5 + $0x18] sm:$0xf]
    %v7096 = vld [vmem:[%s5 + $0x1c] sm:$0xf]
    %v7097 = vld [vmem:[%s5 + $0x20] sm:$0xf]
    %v7098 = vld [vmem:[%s5 + $0x24] sm:$0xf]
    %v7099 = vld [vmem:[%s5 + $0x28] sm:$0xf]
    %v7100 = vld [vmem:[%s5 + $0x2c] sm:$0xf]
    %v7101 = vld [vmem:[%s5 + $0x30] sm:$0xf]
    %v7102 = vld [vmem:[%s5 + $0x34] sm:$0xf]
    %v7103 = vld [vmem:[%s5 + $0x38] sm:$0xf]
    %v7104 = vld [vmem:[%s5 + $0x3c] sm:$0xf]
    %v7105 = vld [vmem:[%s5 + $0x40] sm:$0xf]
    %v7106 = vld [vmem:[%s5 + $0x44] sm:$0xf]
    %v7107 = vld [vmem:[%s5 + $0x48] sm:$0xf]
    %v7108 = vld [vmem:[%s5 + $0x4c] sm:$0xf]
    %v7109 = vld [vmem:[%s5 + $0x50] sm:$0xf]
    %v7110 = vld [vmem:[%s5 + $0x54] sm:$0xf]
    %v7111 = vld [vmem:[%s5 + $0x58] sm:$0xf]
    %v7112 = vld [vmem:[%s5 + $0x5c] sm:$0xf]
    %v7113 = vld [vmem:[%s6] sm:$0x1]
    %v7115 = vlaneseq
    %v7116 = vshrl.u32 %v7115, 7
    %v7117 = vsub.s32 0, %v7116
    %v7118 = vrot.slane %v7113, %v7117
    %v7144 = vunpack.c.l.b16 %v7089
    %v7145 = vunpack.c.l.b16 %v7090
    %v7146 = vunpack.c.l.b16 %v7091
    %v7147 = vunpack.c.l.b16 %v7092
    %v7148 = vunpack.c.l.b16 %v7093
    %v7149 = vunpack.c.l.b16 %v7094
    %v7150 = vunpack.c.l.b16 %v7095
    %v7151 = vunpack.c.l.b16 %v7096
    %v7152 = vunpack.c.l.b16 %v7097
    %v7153 = vunpack.c.l.b16 %v7098
    %v7154 = vunpack.c.l.b16 %v7099
    %v7155 = vunpack.c.l.b16 %v7100
    %v7156 = vunpack.c.l.b16 %v7101
    %v7157 = vunpack.c.l.b16 %v7102
    %v7158 = vunpack.c.l.b16 %v7103
    %v7159 = vunpack.c.l.b16 %v7104
    %v7160 = vunpack.c.l.b16 %v7105
    %v7161 = vunpack.c.l.b16 %v7106
    %v7162 = vunpack.c.l.b16 %v7107
    %v7163 = vunpack.c.l.b16 %v7108
    %v7164 = vunpack.c.l.b16 %v7109
    %v7165 = vunpack.c.l.b16 %v7110
    %v7166 = vunpack.c.l.b16 %v7111
    %v7167 = vunpack.c.l.b16 %v7112
    %v7168 = vpack.c.b16 %v7145, %v7144
    %v7169 = vpack.c.b16 %v7147, %v7146
    %v7170 = vpack.c.b16 %v7149, %v7148
    %v7171 = vpack.c.b16 %v7151, %v7150
    %v7172 = vpack.c.b16 %v7153, %v7152
    %v7173 = vpack.c.b16 %v7155, %v7154
    %v7174 = vpack.c.b16 %v7157, %v7156
    %v7175 = vpack.c.b16 %v7159, %v7158
    %v7176 = vpack.c.b16 %v7161, %v7160
    %v7177 = vpack.c.b16 %v7163, %v7162
    %v7178 = vpack.c.b16 %v7165, %v7164
    %v7179 = vpack.c.b16 %v7167, %v7166
    %vm7192 = vcmask 523264
    %v7194 = vsel %vm7192, %v7088, 0
    %7196 = vmatprep.subr.bf16.mxu0 0
    %7197 = vmatpush1.bf16.msra.mxu0 %v7168
    %7198 = vmatprep.subr.bf16.mxu0 0
    %7199 = vmatpush1.bf16.msra.mxu0 %v7169
    %7200 = vmatprep.subr.bf16.mxu0 0
    %7201 = vmatpush1.bf16.msra.mxu0 %v7170
    %7202 = vmatprep.subr.bf16.mxu0 0
    %7203 = vmatpush1.bf16.msra.mxu0 %v7171
    %7204 = vmatprep.subr.bf16.mxu0 0
    %7205 = vmatpush1.bf16.msra.mxu0 %v7172
    %7206 = vmatprep.subr.bf16.mxu0 0
    %7207 = vmatpush1.bf16.msra.mxu0 %v7173
    %7208 = vmatprep.subr.bf16.mxu0 0
    %7209 = vmatpush1.bf16.msra.mxu0 %v7174
    %7210 = vmatprep.subr.bf16.mxu0 0
    %7211 = vmatpush1.bf16.msra.mxu0 %v7175
    %7212 = vmatprep.subr.bf16.mxu0 0
    %7213 = vmatpush1.bf16.msra.mxu0 %v7176
    %7214 = vmatprep.subr.bf16.mxu0 0
    %7215 = vmatpush1.bf16.msra.mxu0 %v7177
    %7216 = vmatprep.subr.bf16.mxu0 0
    %7217 = vmatpush1.bf16.msra.mxu0 %v7178
    %7218 = vmatprep.subr.bf16.mxu0 0
    %7219 = vmatpush1.bf16.msra.mxu0 %v7179
    %7220 = vmatprep.subr.bf16.mxu0 0
    %7221 = vmatpush1.bf16.msra.mxu0 0
    %7222 = vmatprep.subr.bf16.mxu0 0
    %7223 = vmatpush1.bf16.msra.mxu0 0
    %7224 = vmatprep.subr.bf16.mxu0 0
    %7225 = vmatpush1.bf16.msra.mxu0 0
    %7226 = vmatprep.subr.bf16.mxu0 0
    %7227 = vmatpush1.bf16.msra.mxu0 0
    %7228 = vmatprep.mubr.bf16.mxu0 %v7194
    %7229 = vmatmul.mubr.bf16.gmra.mrb[0].mxu0 %v7087
    %v7230 = vpop.f32.mrb[0].mxu0
    %v7231 = vadd.f32 %v7118, %v7230
    %v7232 = vpop.f32.mrb[0].mxu0
    %v7233 = vpop.f32.mrb[0].mxu0
    %v7234 = vpop.f32.mrb[0].mxu0
    %7235 = vdwg.mxu0
    %vm7236 = vcmask 74752
    %7237 = vst.msk [vmem:[#allocation2] sm:$0x3] %vm7236, %v7231
    // Predicated region
    $region30: #{forward.9} parent=1 // pred_check
      _
    $region31: #{forward.9} parent=1 // pred_check_branch
      %7239 = sbr.rel (0) target = $region33
    $region32: #{forward.9} parent=1 // pred_region
      %s7241 = ssub.s32 32, 32
      %7242 = vsyncadd [#allocation3], %s7241
      %s7244 = sshll.u32 [#allocation2], 4
      %s7245 = int_to_ptr.vmem [resolvable:$true] %s7244
      %7247 = dma.vmem_to_hbm [thread:$0]  %s7245, 32, %s7, [#allocation3]
    $region33: #{forward.9} parent=1 // pred_fallthru
      _
    // Predicated region
    $region34: #{forward.9} parent=1 // pred_check
      _
    $region35: #{forward.9} parent=1 // pred_check_branch
      %7249 = sbr.rel (0) target = $region37
    $region36: #{forward.9} parent=1 // pred_region
      %7250 = dma.done [#allocation3], 32
    $region37: #{forward.9} parent=1 // pred_fallthru
      _
    %7251 = vsyncpa [#allocation3], 1

</llo_original>
